<compile_context>
chip_gen: v5e
topology: v5e:2x2
jax: 0.10.0
libtpu: 0.0.40
codegen_flags: <defaults>
</compile_context>

<pallas_src>
import functools

import jax
import jax.numpy as jnp
from jax.experimental import pallas as pl
from jax.experimental.pallas import tpu as pltpu

NEG_INF = -1e30                 # stand-in for torch key_padding_mask -inf
MATMUL_DTYPE = jnp.bfloat16     # MXU operand dtype; accumulation stays f32


def _round_up(x, m):
    return (x + m - 1) // m * m


# --------------------------------------------------------------------------
# Generation-aware configuration (VMEM budget, megacore, matmul row target).
# --------------------------------------------------------------------------
def _chip_config():
    kind = ""
    try:
        kind = jax.devices()[0].device_kind.lower()
    except Exception:
        pass
    is_v7 = "v7" in kind
    big_vmem = ("v4" in kind) or ("v5" in kind) or ("v6" in kind)

    vmem_cap = None
    try:
        vmem_cap = int(pltpu.get_tpu_info().vmem_capacity_bytes)
    except Exception:
        vmem_cap = None
    if vmem_cap is None:
        # v5e/v6e: 128 MiB physical; v7x (and unknown -> conservative): 64 MiB.
        vmem_cap = (128 if big_vmem else 64) * 1024 * 1024

    vmem_limit = min(vmem_cap * 3 // 4, 110 * 1024 * 1024)
    return {
        "vmem_limit": vmem_limit,          # CompilerParams scoped-VMEM limit
        "act_budget": vmem_limit // 2,     # rough activation working-set budget
        "min_grid": 2 if is_v7 else 1,     # v7x: 2 TensorCores; v5e/v6e: 1
        "target_rows": 1024 if is_v7 else 2048,
    }


# --------------------------------------------------------------------------
# Block-size selection: sequences per grid step (multiple of 8 so the
# (bblk, E_pad) output block is sublane-dense).
# --------------------------------------------------------------------------
def _pick_block(n_seq, s_p, ein_p, eh_p, a_p, dh_p, *,
                vmem_budget, target_rows, min_grid):
    per_seq = (s_p * ein_p * 10          # x (2x bf16 double-buffer) + attn f32/bf16
               + s_p * eh_p * 18         # qkv f32 + per-head bf16 q/k/v views
               + s_p * s_p * 12          # scores / exp / broadcast key-mask (f32)
               + s_p * dh_p * 6          # per-head context
               + s_p * a_p * 4           # additive-attention projection
               + ein_p * 8)              # pooled output (f32, double-buffered)
    cap = max(1, min(vmem_budget // per_seq, max(target_rows // s_p, 1)))
    n_up = _round_up(n_seq, 8)
    bblk = min(max(cap // 8 * 8, 8), n_up)
    if min_grid > 1:                     # keep >= 2 steps for v7x's two cores
        per_core = n_up // min_grid // 8 * 8
        if per_core >= 8:
            bblk = min(bblk, per_core)
    grid = -(-n_up // bblk)
    bblk = _round_up(-(-n_up // grid), 8)   # re-balance so steps are even
    return bblk, bblk * grid


# --------------------------------------------------------------------------
# Weight padding: zero-pad + rearrange so every per-head slice in the kernel
# is a 128-lane-aligned view (dh -> dh_p, E -> ein_p, A -> a_p).
# --------------------------------------------------------------------------
def _pad_encoder_params(p, *, E, A, H, dh, dh_p, ein_p, a_p):
    WqkvT, bqkv = p["WqkvT"], p["bqkv"]          # [E, 3E], [1, 3E]

    def pad_head_cols(wT, b):                    # wT: [E, E], columns grouped per head
        wT = wT.reshape(E, H, dh)
        wT = jnp.pad(wT, ((0, ein_p - E), (0, 0), (0, dh_p - dh)))
        b = jnp.pad(b.reshape(H, dh), ((0, 0), (0, dh_p - dh)))
        return wT.reshape(ein_p, H * dh_p), b.reshape(1, H * dh_p)

    ws, bs = zip(*(pad_head_cols(WqkvT[:, i * E:(i + 1) * E],
                                 bqkv[:, i * E:(i + 1) * E]) for i in range(3)))
    wqkv = jnp.concatenate(ws, axis=1)           # [ein_p, 3*H*dh_p]
    bqkv_p = jnp.concatenate(bs, axis=1)         # [1, 3*H*dh_p]

    wo = jnp.pad(p["WoT"].reshape(H, dh, E),
                 ((0, 0), (0, dh_p - dh), (0, ein_p - E))).reshape(H * dh_p, ein_p)
    bo = jnp.pad(p["bo"], ((0, 0), (0, ein_p - E)))
    vw = jnp.pad(p["VwT"], ((0, ein_p - E), (0, a_p - A)))
    vb = jnp.pad(p["vb"], ((0, 0), (0, a_p - A)))
    qw = jnp.pad(p["qwT"], ((0, a_p - A), (0, 0)))
    return wqkv, bqkv_p, wo, bo, vw, vb, qw


def _const_spec(shape, single_buffer):
    """BlockSpec for a grid-invariant operand (same block every step)."""
    if single_buffer:
        return pl.BlockSpec(shape, lambda *_: (0,) * len(shape),
                            pipeline_mode=pl.Buffered(1))
    return pl.BlockSpec(shape, lambda *_: (0,) * len(shape))


# --------------------------------------------------------------------------
# Encoder kernel: one grid step == bblk sequences, everything 128-lane /
# 8-sublane aligned by construction.
#   x_ref     : (bblk, S, Ein)   embedded tokens / news reprs (bf16, padded)
#   mask_ref  : (bblk, S)        additive key-padding mask (0 / NEG_INF), f32
#   pmask_ref : (1, S, 1)        additive pooling mask for wrapper S-padding
#   weights   : per-head padded, pre-transposed projections + biases
#   out_ref   : (bblk, Ein)      pooled representations (f32)
# --------------------------------------------------------------------------
def encoder_kernel(x_ref, mask_ref, pmask_ref, wqkv_ref, bqkv_ref, wo_ref,
                   bo_ref, vw_ref, vb_ref, qw_ref, out_ref, *,
                   num_heads, dh_pad, scale):
    bblk, S, Ein = x_ref.shape
    Eh = wo_ref.shape[0]                         # num_heads * dh_pad
    cdt = x_ref.dtype                            # bf16 MXU operand dtype

    x2d = x_ref[...].reshape(bblk * S, Ein)                        # [M, Ein]

    # ---- fused QKV in-projection: one [M, Ein] x [Ein, 3*Eh] MXU matmul ----
    qkv = jnp.dot(x2d, wqkv_ref[...], preferred_element_type=jnp.float32)
    qkv = qkv + bqkv_ref[...]                                      # f32 [M, 3*Eh]
    q = qkv[:, :Eh].reshape(bblk, S, Eh)
    k = qkv[:, Eh:2 * Eh].reshape(bblk, S, Eh)
    v = qkv[:, 2 * Eh:].reshape(bblk, S, Eh)

    # key-padding mask broadcast ONCE (broadcast_in_dim is not CSE'd)
    kmask = jnp.broadcast_to(mask_ref[...][:, None, :], (bblk, S, S))
    wo = wo_ref[...]                                               # [Eh, Ein] bf16

    # ---- multi-head attention --------------------------------------------
    # Heads are a short static unroll, but dh is padded to dh_pad (a multiple
    # of 128) so every slice below is an aligned zero-cost view and each
    # matmul is full-width (K = dh_pad).  The head concat is eliminated by
    # accumulating the out-projection per head (same FLOPs as one big matmul,
    # no relayouts).  A 'bqhd,bkhd->bhqk' einsum would require a multi-batch
    # dot_general / minor-major transpose that Mosaic does not lower.
    attn = jnp.zeros((bblk * S, Ein), jnp.float32)
    for h in range(num_heads):
        lo = h * dh_pad
        qh = q[:, :, lo:lo + dh_pad].astype(cdt)
        kh = k[:, :, lo:lo + dh_pad].astype(cdt)
        vh = v[:, :, lo:lo + dh_pad].astype(cdt)
        s = jnp.einsum('bqd,bkd->bqk', qh, kh,
                       preferred_element_type=jnp.float32) * scale
        s = s + kmask
        m = jnp.max(s, axis=-1, keepdims=True)
        e = jnp.exp(s - m)
        p = e * pl.reciprocal(jnp.sum(e, axis=-1, keepdims=True), approx=True)
        ctx = jnp.einsum('bqk,bkd->bqd', p.astype(cdt), vh,
                         preferred_element_type=jnp.float32)       # [bblk,S,dh_pad]
        attn = attn + jnp.dot(ctx.reshape(bblk * S, dh_pad).astype(cdt),
                              wo[lo:lo + dh_pad, :],
                              preferred_element_type=jnp.float32)
    attn = attn + bo_ref[...]                                      # f32 [M, Ein]

    # ---- additive attention pooling (small f32 matmuls) --------------------
    proj = jnp.tanh(jnp.dot(attn, vw_ref[...],
                            preferred_element_type=jnp.float32) + vb_ref[...])
    scores = jnp.dot(proj, qw_ref[...],
                     preferred_element_type=jnp.float32)           # [M, 1]
    scores = scores.reshape(bblk, S, 1) + pmask_ref[...]           # drop wrapper S-pad
    m2 = jnp.max(scores, axis=1, keepdims=True)
    e2 = jnp.exp(scores - m2)
    w = e2 * pl.reciprocal(jnp.sum(e2, axis=1, keepdims=True), approx=True)
    out_ref[...] = jnp.sum(w * attn.reshape(bblk, S, Ein), axis=1)  # [bblk, Ein]


# --------------------------------------------------------------------------
# Encoder wrapper: pad to hardware tiles, launch one blocked pallas_call.
# --------------------------------------------------------------------------
def encode(x_seq, add_mask, p, num_heads, cfg):
    """x_seq: [N, S, E] float, add_mask: [N, S] additive mask -> [N, E] f32."""
    N, S, E = x_seq.shape
    A = p["VwT"].shape[-1]
    dh = E // num_heads
    dh_p = _round_up(dh, 128)            # per-head width -> lane-aligned slices
    Eh_p = num_heads * dh_p              # padded q/k/v width
    Ein_p = _round_up(E, 128)            # padded model/feature width
    Ap = _round_up(A, 128)               # padded additive-attention width
    Sp = _round_up(S, 16)                # sublane-dense (bf16) sequence length

    bblk, Np = _pick_block(N, Sp, Ein_p, Eh_p, Ap, dh_p,
                           vmem_budget=cfg["act_budget"],
                           target_rows=cfg["target_rows"],
                           min_grid=cfg["min_grid"])
    grid = Np // bblk

    # ---- zero-pad activations (lane-dense E, sublane-dense S, block-mult. N)
    x = jnp.pad(x_seq.astype(MATMUL_DTYPE),
                ((0, Np - N), (0, Sp - S), (0, Ein_p - E)))
    mask = jnp.pad(add_mask.astype(jnp.float32), ((0, 0), (0, Sp - S)),
                   constant_values=NEG_INF)            # padded keys masked out
    mask = jnp.pad(mask, ((0, Np - N), (0, 0)))
    # Pooling mask: wrapper-added sequence positions are excluded from the
    # additive-attention softmax; real token-padding positions stay included
    # (matches the torch module, which does not mask the pooling).
    pool_mask = jnp.where(jnp.arange(Sp) < S, 0.0, NEG_INF)
    pool_mask = pool_mask.astype(jnp.float32).reshape(1, Sp, 1)

    # ---- pad / rearrange weights to the per-head-aligned layout ------------
    wqkv, bqkv, wo, bo, vw, vb, qw = _pad_encoder_params(
        p, E=E, A=A, H=num_heads, dh=dh, dh_p=dh_p, ein_p=Ein_p, a_p=Ap)
    wqkv = wqkv.astype(MATMUL_DTYPE)
    wo = wo.astype(MATMUL_DTYPE)

    kernel = functools.partial(encoder_kernel, num_heads=num_heads,
                               dh_pad=dh_p, scale=1.0 / (dh ** 0.5))

    def call(single_buffer_consts):
        cs = lambda shape: _const_spec(shape, single_buffer_consts)
        return pl.pallas_call(
            kernel,
            out_shape=jax.ShapeDtypeStruct((Np, Ein_p), jnp.float32),
            grid=(grid,),
            in_specs=[
                pl.BlockSpec((bblk, Sp, Ein_p), lambda b: (b, 0, 0)),  # x block
                pl.BlockSpec((bblk, Sp), lambda b: (b, 0)),            # key mask
                cs((1, Sp, 1)),                                        # pooling mask
                cs((Ein_p, 3 * Eh_p)),                                 # fused Wqkv^T
                cs((1, 3 * Eh_p)),                                     # fused qkv bias
                cs((Eh_p, Ein_p)),                                     # Wo^T
                cs((1, Ein_p)),                                        # bo
                cs((Ein_p, Ap)),                                       # Vw^T
                cs((1, Ap)),                                           # vb
                cs((Ap, 1)),                                           # q_w as [A, 1]
            ],
            out_specs=pl.BlockSpec((bblk, Ein_p), lambda b: (b, 0)),
            compiler_params=pltpu.CompilerParams(
                # "parallel" lets the grid axis shard across v7x's two
                # TensorCores; neutral on single-core v5e/v6e.
                # TODO(synk): if an xprof trace shows no cross-core sharding
                # on v7x, switch this axis to pltpu.CORE_PARALLEL.
                dimension_semantics=("parallel",),
                vmem_limit_bytes=cfg["vmem_limit"],
            ),
        )(x, mask, pool_mask, wqkv, bqkv, wo, bo, vw, vb, qw)

    try:
        out = call(True)     # grid-invariant weights single-buffered
    except Exception:        # pl.Buffered(1) unsupported in this JAX version
        out = call(False)

    return out[:N, :E]


# --------------------------------------------------------------------------
# Parameter init (deterministic; mirrors the torch module's shapes/defaults)
# --------------------------------------------------------------------------
def init_encoder_params(key, E, A):
    ks = jax.random.split(key, 4)
    lim = (6.0 / (E + E)) ** 0.5                    # xavier_uniform-style
    in_proj = jax.random.uniform(ks[0], (3 * E, E), jnp.float32, -lim, lim)
    out_w = jax.random.uniform(ks[1], (E, E), jnp.float32, -lim, lim)
    lim_v = (6.0 / (E + A)) ** 0.5
    vw = jax.random.uniform(ks[2], (A, E), jnp.float32, -lim_v, lim_v)
    qw = jax.random.uniform(ks[3], (A,), jnp.float32, -0.01, 0.01)
    return dict(
        WqkvT=in_proj.T,                             # [E, 3E] fused q|k|v
        bqkv=jnp.zeros((1, 3 * E), jnp.float32),     # torch MHA biases init to 0
        WoT=out_w.T, bo=jnp.zeros((1, E), jnp.float32),
        VwT=vw.T, vb=jnp.zeros((1, A), jnp.float32),
        qwT=qw.reshape(A, 1),
    )


# --------------------------------------------------------------------------
# Full NRMS forward
# --------------------------------------------------------------------------
def nrms_forward(browsed_news, candidate_news, word_emb, news_p, user_p, heads):
    B, NB, S = browsed_news.shape
    NC = candidate_news.shape[1]
    E = word_emb.shape[1]
    cfg = _chip_config()

    # One merged news-encoder launch over candidate + browsed tokens.
    tokens = jnp.concatenate([candidate_news.reshape(B * NC, S),
                              browsed_news.reshape(B * NB, S)], axis=0)
    emb = word_emb[tokens]                           # gather: plain-JAX glue
    mask = jnp.where(tokens == 0, NEG_INF, 0.0).astype(jnp.float32)
    news_repr = encode(emb, mask, news_p, heads, cfg)          # [B*(NC+NB), E]
    cand_repr = news_repr[:B * NC].reshape(B, NC, E)
    brow_repr = news_repr[B * NC:].reshape(B, NB, E)

    # UserEncoder's key_padding_mask = isnan(repr).all(-1) is all-zeros here
    # (the finite NEG_INF mask never produces NaN representations), so feed a
    # zero additive mask directly.  Semantics differ from torch only if a
    # browsed item is 100% padding (torch would NaN-mask that slot).
    user_mask = jnp.zeros((B, NB), jnp.float32)
    user_repr = encode(brow_repr, user_mask, user_p, heads, cfg)       # [B, E]

    # Scoring: tiny [B, NC] dot + softmax over dim 0 -- plain jnp (XLA fuses
    # it; a dedicated kernel launch would cost more than the math).
    scores = jnp.einsum('be,bne->bn', user_repr, cand_repr)
    return jax.nn.softmax(scores, axis=0)


if __name__ == "__main__":
    VOCAB, EMBED, HEADS, ATT_DIM = 50, 32, 2, 16
    B, N_BROWSED, N_CAND, SEQ = 2, 4, 3, 8

    key = jax.random.PRNGKey(0)
    k_emb, k_news, k_user, k_b, k_c = jax.random.split(key, 5)

    word_emb = jax.random.normal(k_emb, (VOCAB, EMBED), jnp.float32) * 0.1
    word_emb = word_emb.at[0].set(0.0)               # padding_idx = 0

    news_params = init_encoder_params(k_news, EMBED, ATT_DIM)
    user_params = init_encoder_params(k_user, EMBED, ATT_DIM)

    browsed = jax.random.randint(k_b, (B, N_BROWSED, SEQ), 1, VOCAB, jnp.int32)
    browsed = browsed.at[..., -2:].set(0)            # some padding tokens
    candidate = jax.random.randint(k_c, (B, N_CAND, SEQ), 1, VOCAB, jnp.int32)
    candidate = candidate.at[..., -1:].set(0)

    probs = nrms_forward(browsed, candidate, word_emb, news_params,
                         user_params, HEADS)
    jax.block_until_ready(probs)
    assert probs.shape == (B, N_CAND)
    assert bool(jnp.all(jnp.isfinite(probs)))
    # softmax over dim=0 -> columns sum to 1
    assert bool(jnp.allclose(jnp.sum(probs, axis=0), 1.0, atol=1e-5))
    print("KERNEL_OK")
</pallas_src>

<mosaic_0001>
module attributes {stable_mosaic.version = 11 : i64} {
  func.func @encoder_kernel(%arg0: i32, %arg1: memref<16x16x128xbf16, #tpu.memory_space<vmem>>, %arg2: memref<16x16xf32, #tpu.memory_space<vmem>>, %arg3: memref<1x16x1xf32, #tpu.memory_space<vmem>>, %arg4: memref<128x768xbf16, #tpu.memory_space<vmem>>, %arg5: memref<1x768xf32, #tpu.memory_space<vmem>>, %arg6: memref<256x128xbf16, #tpu.memory_space<vmem>>, %arg7: memref<1x128xf32, #tpu.memory_space<vmem>>, %arg8: memref<128x128xf32, #tpu.memory_space<vmem>>, %arg9: memref<1x128xf32, #tpu.memory_space<vmem>>, %arg10: memref<128x1xf32, #tpu.memory_space<vmem>>, %arg11: memref<16x128xf32, #tpu.memory_space<vmem>>) attributes {dimension_semantics = [#tpu.dimension_semantics<parallel>], iteration_bounds = array<i64: 1>, scalar_prefetch = 0 : i64, scratch_operands = 0 : i64, tpu.core_type = #tpu.core_type<tc>, window_params = [{transform_indices = @transform_0, window_bounds = array<i64: 16, 16, 128>}, {transform_indices = @transform_1, window_bounds = array<i64: 16, 16>}, {pipeline_mode = #tpu.pipeline_mode<synchronous>, transform_indices = @transform_2, window_bounds = array<i64: 1, 16, 1>}, {pipeline_mode = #tpu.pipeline_mode<synchronous>, transform_indices = @transform_3, window_bounds = array<i64: 128, 768>}, {pipeline_mode = #tpu.pipeline_mode<synchronous>, transform_indices = @transform_4, window_bounds = array<i64: 1, 768>}, {pipeline_mode = #tpu.pipeline_mode<synchronous>, transform_indices = @transform_5, window_bounds = array<i64: 256, 128>}, {pipeline_mode = #tpu.pipeline_mode<synchronous>, transform_indices = @transform_6, window_bounds = array<i64: 1, 128>}, {pipeline_mode = #tpu.pipeline_mode<synchronous>, transform_indices = @transform_7, window_bounds = array<i64: 128, 128>}, {pipeline_mode = #tpu.pipeline_mode<synchronous>, transform_indices = @transform_8, window_bounds = array<i64: 1, 128>}, {pipeline_mode = #tpu.pipeline_mode<synchronous>, transform_indices = @transform_9, window_bounds = array<i64: 128, 1>}, {transform_indices = @transform_10, window_bounds = array<i64: 16, 128>}]} {
    %c0 = arith.constant 0 : index
    %c0_0 = arith.constant 0 : index
    %c0_1 = arith.constant 0 : index
    %0 = vector.load %arg1[%c0, %c0_0, %c0_1] : memref<16x16x128xbf16, #tpu.memory_space<vmem>>, vector<16x16x128xbf16>
    %1 = vector.shape_cast %0 : vector<16x16x128xbf16> to vector<256x128xbf16>
    %c0_2 = arith.constant 0 : index
    %c0_3 = arith.constant 0 : index
    %2 = vector.load %arg4[%c0_2, %c0_3] : memref<128x768xbf16, #tpu.memory_space<vmem>>, vector<128x768xbf16>
    %cst = arith.constant dense<0.000000e+00> : vector<256x768xf32>
    %3 = tpu.matmul %1, %2, %cst {dimension_numbers = #tpu.dot_dimension_numbers<[1], [0], [0], [1], [0, 0, 1, 1], [], []>} : vector<256x128xbf16>, vector<128x768xbf16>, vector<256x768xf32> -> vector<256x768xf32>
    %c0_4 = arith.constant 0 : index
    %c0_5 = arith.constant 0 : index
    %4 = vector.load %arg5[%c0_4, %c0_5] : memref<1x768xf32, #tpu.memory_space<vmem>>, vector<1x768xf32>
    %5 = vector.broadcast %4 : vector<1x768xf32> to vector<256x768xf32>
    %6 = arith.addf %3, %5 : vector<256x768xf32>
    %7 = vector.extract_strided_slice %6 {offsets = [0, 0], sizes = [256, 256], strides = [1, 1]} : vector<256x768xf32> to vector<256x256xf32>
    %8 = vector.shape_cast %7 : vector<256x256xf32> to vector<16x16x256xf32>
    %9 = vector.extract_strided_slice %6 {offsets = [0, 256], sizes = [256, 256], strides = [1, 1]} : vector<256x768xf32> to vector<256x256xf32>
    %10 = vector.shape_cast %9 : vector<256x256xf32> to vector<16x16x256xf32>
    %11 = vector.extract_strided_slice %6 {offsets = [0, 512], sizes = [256, 256], strides = [1, 1]} : vector<256x768xf32> to vector<256x256xf32>
    %12 = vector.shape_cast %11 : vector<256x256xf32> to vector<16x16x256xf32>
    %c0_6 = arith.constant 0 : index
    %c0_7 = arith.constant 0 : index
    %13 = vector.load %arg2[%c0_6, %c0_7] : memref<16x16xf32, #tpu.memory_space<vmem>>, vector<16x16xf32>
    %14 = vector.shape_cast %13 : vector<16x16xf32> to vector<16x1x16xf32>
    %15 = vector.shape_cast %14 : vector<16x1x16xf32> to vector<16x1x16xf32>
    %16 = vector.broadcast %15 : vector<16x1x16xf32> to vector<16x16x16xf32>
    %c0_8 = arith.constant 0 : index
    %c0_9 = arith.constant 0 : index
    %17 = vector.load %arg6[%c0_8, %c0_9] : memref<256x128xbf16, #tpu.memory_space<vmem>>, vector<256x128xbf16>
    %cst_10 = arith.constant 0.000000e+00 : f32
    %18 = vector.broadcast %cst_10 : f32 to vector<256x128xf32>
    %19 = vector.extract_strided_slice %8 {offsets = [0, 0, 0], sizes = [16, 16, 128], strides = [1, 1, 1]} : vector<16x16x256xf32> to vector<16x16x128xf32>
    %20 = arith.truncf %19 : vector<16x16x128xf32> to vector<16x16x128xbf16>
    %21 = vector.extract_strided_slice %10 {offsets = [0, 0, 0], sizes = [16, 16, 128], strides = [1, 1, 1]} : vector<16x16x256xf32> to vector<16x16x128xf32>
    %22 = arith.truncf %21 : vector<16x16x128xf32> to vector<16x16x128xbf16>
    %23 = vector.extract_strided_slice %12 {offsets = [0, 0, 0], sizes = [16, 16, 128], strides = [1, 1, 1]} : vector<16x16x256xf32> to vector<16x16x128xf32>
    %24 = arith.truncf %23 : vector<16x16x128xf32> to vector<16x16x128xbf16>
    "tpu.trace_start"() <{level = 10 : i32, message = "bqd,bkd->bqk"}> : () -> ()
    %cst_11 = arith.constant dense<0.000000e+00> : vector<16x16x16xf32>
    %25 = tpu.matmul %20, %22, %cst_11 {dimension_numbers = #tpu.dot_dimension_numbers<[2], [2], [1], [1], [0, 0, 0, 1, 1, 1], [0], [0]>} : vector<16x16x128xbf16>, vector<16x16x128xbf16>, vector<16x16x16xf32> -> vector<16x16x16xf32>
    "tpu.trace_stop"() : () -> ()
    %cst_12 = arith.constant 2.500000e-01 : f32
    %26 = vector.broadcast %cst_12 : f32 to vector<16x16x16xf32>
    %27 = arith.mulf %25, %26 : vector<16x16x16xf32>
    %28 = arith.addf %27, %16 : vector<16x16x16xf32>
    %cst_13 = arith.constant dense<0xFF800000> : vector<16x16xf32>
    %29 = vector.multi_reduction <maximumf>, %28, %cst_13 [2] : vector<16x16x16xf32> to vector<16x16xf32>
    %30 = vector.shape_cast %29 : vector<16x16xf32> to vector<16x16x1xf32>
    %31 = vector.broadcast %30 : vector<16x16x1xf32> to vector<16x16x16xf32>
    %32 = arith.subf %28, %31 : vector<16x16x16xf32>
    %33 = math.exp %32 : vector<16x16x16xf32>
    %cst_14 = arith.constant dense<0.000000e+00> : vector<16x16xf32>
    %34 = vector.multi_reduction <add>, %33, %cst_14 [2] : vector<16x16x16xf32> to vector<16x16xf32>
    %35 = vector.shape_cast %34 : vector<16x16xf32> to vector<16x16x1xf32>
    %36 = tpu.reciprocal %35 {approx = true} : vector<16x16x1xf32> -> vector<16x16x1xf32>
    %37 = vector.broadcast %36 : vector<16x16x1xf32> to vector<16x16x16xf32>
    %38 = arith.mulf %33, %37 : vector<16x16x16xf32>
    %39 = arith.truncf %38 : vector<16x16x16xf32> to vector<16x16x16xbf16>
    "tpu.trace_start"() <{level = 10 : i32, message = "bqk,bkd->bqd"}> : () -> ()
    %cst_15 = arith.constant dense<0.000000e+00> : vector<16x16x128xf32>
    %40 = tpu.matmul %39, %24, %cst_15 {dimension_numbers = #tpu.dot_dimension_numbers<[2], [1], [1], [2], [0, 0, 0, 1, 1, 2], [0], [0]>} : vector<16x16x16xbf16>, vector<16x16x128xbf16>, vector<16x16x128xf32> -> vector<16x16x128xf32>
    "tpu.trace_stop"() : () -> ()
    %41 = vector.shape_cast %40 : vector<16x16x128xf32> to vector<256x128xf32>
    %42 = arith.truncf %41 : vector<256x128xf32> to vector<256x128xbf16>
    %43 = vector.extract_strided_slice %17 {offsets = [0, 0], sizes = [128, 128], strides = [1, 1]} : vector<256x128xbf16> to vector<128x128xbf16>
    %cst_16 = arith.constant dense<0.000000e+00> : vector<256x128xf32>
    %44 = tpu.matmul %42, %43, %cst_16 {dimension_numbers = #tpu.dot_dimension_numbers<[1], [0], [0], [1], [0, 0, 1, 1], [], []>} : vector<256x128xbf16>, vector<128x128xbf16>, vector<256x128xf32> -> vector<256x128xf32>
    %45 = arith.addf %18, %44 : vector<256x128xf32>
    %46 = vector.extract_strided_slice %8 {offsets = [0, 0, 128], sizes = [16, 16, 128], strides = [1, 1, 1]} : vector<16x16x256xf32> to vector<16x16x128xf32>
    %47 = arith.truncf %46 : vector<16x16x128xf32> to vector<16x16x128xbf16>
    %48 = vector.extract_strided_slice %10 {offsets = [0, 0, 128], sizes = [16, 16, 128], strides = [1, 1, 1]} : vector<16x16x256xf32> to vector<16x16x128xf32>
    %49 = arith.truncf %48 : vector<16x16x128xf32> to vector<16x16x128xbf16>
    %50 = vector.extract_strided_slice %12 {offsets = [0, 0, 128], sizes = [16, 16, 128], strides = [1, 1, 1]} : vector<16x16x256xf32> to vector<16x16x128xf32>
    %51 = arith.truncf %50 : vector<16x16x128xf32> to vector<16x16x128xbf16>
    "tpu.trace_start"() <{level = 10 : i32, message = "bqd,bkd->bqk"}> : () -> ()
    %cst_17 = arith.constant dense<0.000000e+00> : vector<16x16x16xf32>
    %52 = tpu.matmul %47, %49, %cst_17 {dimension_numbers = #tpu.dot_dimension_numbers<[2], [2], [1], [1], [0, 0, 0, 1, 1, 1], [0], [0]>} : vector<16x16x128xbf16>, vector<16x16x128xbf16>, vector<16x16x16xf32> -> vector<16x16x16xf32>
    "tpu.trace_stop"() : () -> ()
    %cst_18 = arith.constant 2.500000e-01 : f32
    %53 = vector.broadcast %cst_18 : f32 to vector<16x16x16xf32>
    %54 = arith.mulf %52, %53 : vector<16x16x16xf32>
    %55 = arith.addf %54, %16 : vector<16x16x16xf32>
    %cst_19 = arith.constant dense<0xFF800000> : vector<16x16xf32>
    %56 = vector.multi_reduction <maximumf>, %55, %cst_19 [2] : vector<16x16x16xf32> to vector<16x16xf32>
    %57 = vector.shape_cast %56 : vector<16x16xf32> to vector<16x16x1xf32>
    %58 = vector.broadcast %57 : vector<16x16x1xf32> to vector<16x16x16xf32>
    %59 = arith.subf %55, %58 : vector<16x16x16xf32>
    %60 = math.exp %59 : vector<16x16x16xf32>
    %cst_20 = arith.constant dense<0.000000e+00> : vector<16x16xf32>
    %61 = vector.multi_reduction <add>, %60, %cst_20 [2] : vector<16x16x16xf32> to vector<16x16xf32>
    %62 = vector.shape_cast %61 : vector<16x16xf32> to vector<16x16x1xf32>
    %63 = tpu.reciprocal %62 {approx = true} : vector<16x16x1xf32> -> vector<16x16x1xf32>
    %64 = vector.broadcast %63 : vector<16x16x1xf32> to vector<16x16x16xf32>
    %65 = arith.mulf %60, %64 : vector<16x16x16xf32>
    %66 = arith.truncf %65 : vector<16x16x16xf32> to vector<16x16x16xbf16>
    "tpu.trace_start"() <{level = 10 : i32, message = "bqk,bkd->bqd"}> : () -> ()
    %cst_21 = arith.constant dense<0.000000e+00> : vector<16x16x128xf32>
    %67 = tpu.matmul %66, %51, %cst_21 {dimension_numbers = #tpu.dot_dimension_numbers<[2], [1], [1], [2], [0, 0, 0, 1, 1, 2], [0], [0]>} : vector<16x16x16xbf16>, vector<16x16x128xbf16>, vector<16x16x128xf32> -> vector<16x16x128xf32>
    "tpu.trace_stop"() : () -> ()
    %68 = vector.shape_cast %67 : vector<16x16x128xf32> to vector<256x128xf32>
    %69 = arith.truncf %68 : vector<256x128xf32> to vector<256x128xbf16>
    %70 = vector.extract_strided_slice %17 {offsets = [128, 0], sizes = [128, 128], strides = [1, 1]} : vector<256x128xbf16> to vector<128x128xbf16>
    %cst_22 = arith.constant dense<0.000000e+00> : vector<256x128xf32>
    %71 = tpu.matmul %69, %70, %cst_22 {dimension_numbers = #tpu.dot_dimension_numbers<[1], [0], [0], [1], [0, 0, 1, 1], [], []>} : vector<256x128xbf16>, vector<128x128xbf16>, vector<256x128xf32> -> vector<256x128xf32>
    %72 = arith.addf %45, %71 : vector<256x128xf32>
    %c0_23 = arith.constant 0 : index
    %c0_24 = arith.constant 0 : index
    %73 = vector.load %arg7[%c0_23, %c0_24] : memref<1x128xf32, #tpu.memory_space<vmem>>, vector<1x128xf32>
    %74 = vector.broadcast %73 : vector<1x128xf32> to vector<256x128xf32>
    %75 = arith.addf %72, %74 : vector<256x128xf32>
    %c0_25 = arith.constant 0 : index
    %c0_26 = arith.constant 0 : index
    %76 = vector.load %arg8[%c0_25, %c0_26] : memref<128x128xf32, #tpu.memory_space<vmem>>, vector<128x128xf32>
    %cst_27 = arith.constant dense<0.000000e+00> : vector<256x128xf32>
    %77 = tpu.matmul %75, %76, %cst_27 {dimension_numbers = #tpu.dot_dimension_numbers<[1], [0], [0], [1], [0, 0, 1, 1], [], []>} : vector<256x128xf32>, vector<128x128xf32>, vector<256x128xf32> -> vector<256x128xf32>
    %c0_28 = arith.constant 0 : index
    %c0_29 = arith.constant 0 : index
    %78 = vector.load %arg9[%c0_28, %c0_29] : memref<1x128xf32, #tpu.memory_space<vmem>>, vector<1x128xf32>
    %79 = vector.broadcast %78 : vector<1x128xf32> to vector<256x128xf32>
    %80 = arith.addf %77, %79 : vector<256x128xf32>
    %81 = math.tanh %80 : vector<256x128xf32>
    %c0_30 = arith.constant 0 : index
    %c0_31 = arith.constant 0 : index
    %82 = vector.load %arg10[%c0_30, %c0_31] : memref<128x1xf32, #tpu.memory_space<vmem>>, vector<128x1xf32>
    %cst_32 = arith.constant dense<0.000000e+00> : vector<256x1xf32>
    %83 = tpu.matmul %81, %82, %cst_32 {dimension_numbers = #tpu.dot_dimension_numbers<[1], [0], [0], [1], [0, 0, 1, 1], [], []>} : vector<256x128xf32>, vector<128x1xf32>, vector<256x1xf32> -> vector<256x1xf32>
    %84 = vector.shape_cast %83 : vector<256x1xf32> to vector<16x16x1xf32>
    %c0_33 = arith.constant 0 : index
    %c0_34 = arith.constant 0 : index
    %c0_35 = arith.constant 0 : index
    %85 = vector.load %arg3[%c0_33, %c0_34, %c0_35] : memref<1x16x1xf32, #tpu.memory_space<vmem>>, vector<1x16x1xf32>
    %86 = vector.broadcast %85 : vector<1x16x1xf32> to vector<16x16x1xf32>
    %87 = arith.addf %84, %86 : vector<16x16x1xf32>
    %cst_36 = arith.constant dense<0xFF800000> : vector<16x1xf32>
    %88 = vector.multi_reduction <maximumf>, %87, %cst_36 [1] : vector<16x16x1xf32> to vector<16x1xf32>
    %89 = vector.shape_cast %88 : vector<16x1xf32> to vector<16x1x1xf32>
    %90 = vector.broadcast %89 : vector<16x1x1xf32> to vector<16x16x1xf32>
    %91 = arith.subf %87, %90 : vector<16x16x1xf32>
    %92 = math.exp %91 : vector<16x16x1xf32>
    %cst_37 = arith.constant dense<0.000000e+00> : vector<16x1xf32>
    %93 = vector.multi_reduction <add>, %92, %cst_37 [1] : vector<16x16x1xf32> to vector<16x1xf32>
    %94 = vector.shape_cast %93 : vector<16x1xf32> to vector<16x1x1xf32>
    %95 = tpu.reciprocal %94 {approx = true} : vector<16x1x1xf32> -> vector<16x1x1xf32>
    %96 = vector.broadcast %95 : vector<16x1x1xf32> to vector<16x16x1xf32>
    %97 = arith.mulf %92, %96 : vector<16x16x1xf32>
    %98 = vector.shape_cast %75 : vector<256x128xf32> to vector<16x16x128xf32>
    %99 = vector.broadcast %97 : vector<16x16x1xf32> to vector<16x16x128xf32>
    %100 = arith.mulf %99, %98 : vector<16x16x128xf32>
    %cst_38 = arith.constant dense<0.000000e+00> : vector<16x128xf32>
    %101 = vector.multi_reduction <add>, %100, %cst_38 [1] : vector<16x16x128xf32> to vector<16x128xf32>
    %c0_39 = arith.constant 0 : index
    %c0_40 = arith.constant 0 : index
    %102 = vector.load %arg11[%c0_39, %c0_40] : memref<16x128xf32, #tpu.memory_space<vmem>>, vector<16x128xf32>
    tpu.vector_store %arg11[%c0_39, %c0_40], %101 {strides = array<i32>} : memref<16x128xf32, #tpu.memory_space<vmem>>, vector<16x128xf32>,
    return
  }
  func.func @transform_0(%arg0: i32) -> (i32, i32, i32) {
    %c0_i32 = arith.constant 0 : i32
    %c0_i32_0 = arith.constant 0 : i32
    %c0_i32_1 = arith.constant 0 : i32
    return %arg0, %c0_i32, %c0_i32_0 : i32, i32, i32
  }
  func.func @transform_1(%arg0: i32) -> (i32, i32) {
    %c0_i32 = arith.constant 0 : i32
    %c0_i32_0 = arith.constant 0 : i32
    return %arg0, %c0_i32 : i32, i32
  }
  func.func @transform_2(%arg0: i32) -> (i32, i32, i32) {
    %c0_i32 = arith.constant 0 : i32
    %c0_i32_0 = arith.constant 0 : i32
    %c0_i32_1 = arith.constant 0 : i32
    %c0_i32_2 = arith.constant 0 : i32
    return %c0_i32, %c0_i32_0, %c0_i32_1 : i32, i32, i32
  }
  func.func @transform_3(%arg0: i32) -> (i32, i32) {
    %c0_i32 = arith.constant 0 : i32
    %c0_i32_0 = arith.constant 0 : i32
    %c0_i32_1 = arith.constant 0 : i32
    return %c0_i32, %c0_i32_0 : i32, i32
  }
  func.func @transform_4(%arg0: i32) -> (i32, i32) {
    %c0_i32 = arith.constant 0 : i32
    %c0_i32_0 = arith.constant 0 : i32
    %c0_i32_1 = arith.constant 0 : i32
    return %c0_i32, %c0_i32_0 : i32, i32
  }
  func.func @transform_5(%arg0: i32) -> (i32, i32) {
    %c0_i32 = arith.constant 0 : i32
    %c0_i32_0 = arith.constant 0 : i32
    %c0_i32_1 = arith.constant 0 : i32
    return %c0_i32, %c0_i32_0 : i32, i32
  }
  func.func @transform_6(%arg0: i32) -> (i32, i32) {
    %c0_i32 = arith.constant 0 : i32
    %c0_i32_0 = arith.constant 0 : i32
    %c0_i32_1 = arith.constant 0 : i32
    return %c0_i32, %c0_i32_0 : i32, i32
  }
  func.func @transform_7(%arg0: i32) -> (i32, i32) {
    %c0_i32 = arith.constant 0 : i32
    %c0_i32_0 = arith.constant 0 : i32
    %c0_i32_1 = arith.constant 0 : i32
    return %c0_i32, %c0_i32_0 : i32, i32
  }
  func.func @transform_8(%arg0: i32) -> (i32, i32) {
    %c0_i32 = arith.constant 0 : i32
    %c0_i32_0 = arith.constant 0 : i32
    %c0_i32_1 = arith.constant 0 : i32
    return %c0_i32, %c0_i32_0 : i32, i32
  }
  func.func @transform_9(%arg0: i32) -> (i32, i32) {
    %c0_i32 = arith.constant 0 : i32
    %c0_i32_0 = arith.constant 0 : i32
    %c0_i32_1 = arith.constant 0 : i32
    return %c0_i32, %c0_i32_0 : i32, i32
  }
  func.func @transform_10(%arg0: i32) -> (i32, i32) {
    %c0_i32 = arith.constant 0 : i32
    %c0_i32_0 = arith.constant 0 : i32
    return %arg0, %c0_i32 : i32, i32
  }
}

module attributes {stable_mosaic.version = 11 : i64} {
  func.func @encoder_kernel(%arg0: i32, %arg1: memref<16x16x128xbf16, #tpu.memory_space<vmem>>, %arg2: memref<16x16xf32, #tpu.memory_space<vmem>>, %arg3: memref<1x16x1xf32, #tpu.memory_space<vmem>>, %arg4: memref<128x768xbf16, #tpu.memory_space<vmem>>, %arg5: memref<1x768xf32, #tpu.memory_space<vmem>>, %arg6: memref<256x128xbf16, #tpu.memory_space<vmem>>, %arg7: memref<1x128xf32, #tpu.memory_space<vmem>>, %arg8: memref<128x128xf32, #tpu.memory_space<vmem>>, %arg9: memref<1x128xf32, #tpu.memory_space<vmem>>, %arg10: memref<128x1xf32, #tpu.memory_space<vmem>>, %arg11: memref<16x128xf32, #tpu.memory_space<vmem>>) attributes {dimension_semantics = [#tpu.dimension_semantics<parallel>], iteration_bounds = array<i64: 1>, scalar_prefetch = 0 : i64, scratch_operands = 0 : i64, tpu.core_type = #tpu.core_type<tc>, window_params = [{transform_indices = @transform_0, window_bounds = array<i64: 16, 16, 128>}, {transform_indices = @transform_1, window_bounds = array<i64: 16, 16>}, {pipeline_mode = #tpu.pipeline_mode<synchronous>, transform_indices = @transform_2, window_bounds = array<i64: 1, 16, 1>}, {pipeline_mode = #tpu.pipeline_mode<synchronous>, transform_indices = @transform_3, window_bounds = array<i64: 128, 768>}, {pipeline_mode = #tpu.pipeline_mode<synchronous>, transform_indices = @transform_4, window_bounds = array<i64: 1, 768>}, {pipeline_mode = #tpu.pipeline_mode<synchronous>, transform_indices = @transform_5, window_bounds = array<i64: 256, 128>}, {pipeline_mode = #tpu.pipeline_mode<synchronous>, transform_indices = @transform_6, window_bounds = array<i64: 1, 128>}, {pipeline_mode = #tpu.pipeline_mode<synchronous>, transform_indices = @transform_7, window_bounds = array<i64: 128, 128>}, {pipeline_mode = #tpu.pipeline_mode<synchronous>, transform_indices = @transform_8, window_bounds = array<i64: 1, 128>}, {pipeline_mode = #tpu.pipeline_mode<synchronous>, transform_indices = @transform_9, window_bounds = array<i64: 128, 1>}, {transform_indices = @transform_10, window_bounds = array<i64: 16, 128>}]} {
    %c0 = arith.constant 0 : index
    %c0_0 = arith.constant 0 : index
    %c0_1 = arith.constant 0 : index
    %0 = vector.load %arg1[%c0, %c0_0, %c0_1] : memref<16x16x128xbf16, #tpu.memory_space<vmem>>, vector<16x16x128xbf16>
    %1 = vector.shape_cast %0 : vector<16x16x128xbf16> to vector<256x128xbf16>
    %c0_2 = arith.constant 0 : index
    %c0_3 = arith.constant 0 : index
    %2 = vector.load %arg4[%c0_2, %c0_3] : memref<128x768xbf16, #tpu.memory_space<vmem>>, vector<128x768xbf16>
    %cst = arith.constant dense<0.000000e+00> : vector<256x768xf32>
    %3 = tpu.matmul %1, %2, %cst {dimension_numbers = #tpu.dot_dimension_numbers<[1], [0], [0], [1], [0, 0, 1, 1], [], []>} : vector<256x128xbf16>, vector<128x768xbf16>, vector<256x768xf32> -> vector<256x768xf32>
    %c0_4 = arith.constant 0 : index
    %c0_5 = arith.constant 0 : index
    %4 = vector.load %arg5[%c0_4, %c0_5] : memref<1x768xf32, #tpu.memory_space<vmem>>, vector<1x768xf32>
    %5 = vector.broadcast %4 : vector<1x768xf32> to vector<256x768xf32>
    %6 = arith.addf %3, %5 : vector<256x768xf32>
    %7 = vector.extract_strided_slice %6 {offsets = [0, 0], sizes = [256, 256], strides = [1, 1]} : vector<256x768xf32> to vector<256x256xf32>
    %8 = vector.shape_cast %7 : vector<256x256xf32> to vector<16x16x256xf32>
    %9 = vector.extract_strided_slice %6 {offsets = [0, 256], sizes = [256, 256], strides = [1, 1]} : vector<256x768xf32> to vector<256x256xf32>
    %10 = vector.shape_cast %9 : vector<256x256xf32> to vector<16x16x256xf32>
    %11 = vector.extract_strided_slice %6 {offsets = [0, 512], sizes = [256, 256], strides = [1, 1]} : vector<256x768xf32> to vector<256x256xf32>
    %12 = vector.shape_cast %11 : vector<256x256xf32> to vector<16x16x256xf32>
    %c0_6 = arith.constant 0 : index
    %c0_7 = arith.constant 0 : index
    %13 = vector.load %arg2[%c0_6, %c0_7] : memref<16x16xf32, #tpu.memory_space<vmem>>, vector<16x16xf32>
    %14 = vector.shape_cast %13 : vector<16x16xf32> to vector<16x1x16xf32>
    %15 = vector.shape_cast %14 : vector<16x1x16xf32> to vector<16x1x16xf32>
    %16 = vector.broadcast %15 : vector<16x1x16xf32> to vector<16x16x16xf32>
    %c0_8 = arith.constant 0 : index
    %c0_9 = arith.constant 0 : index
    %17 = vector.load %arg6[%c0_8, %c0_9] : memref<256x128xbf16, #tpu.memory_space<vmem>>, vector<256x128xbf16>
    %cst_10 = arith.constant 0.000000e+00 : f32
    %18 = vector.broadcast %cst_10 : f32 to vector<256x128xf32>
    %19 = vector.extract_strided_slice %8 {offsets = [0, 0, 0], sizes = [16, 16, 128], strides = [1, 1, 1]} : vector<16x16x256xf32> to vector<16x16x128xf32>
    %20 = arith.truncf %19 : vector<16x16x128xf32> to vector<16x16x128xbf16>
    %21 = vector.extract_strided_slice %10 {offsets = [0, 0, 0], sizes = [16, 16, 128], strides = [1, 1, 1]} : vector<16x16x256xf32> to vector<16x16x128xf32>
    %22 = arith.truncf %21 : vector<16x16x128xf32> to vector<16x16x128xbf16>
    %23 = vector.extract_strided_slice %12 {offsets = [0, 0, 0], sizes = [16, 16, 128], strides = [1, 1, 1]} : vector<16x16x256xf32> to vector<16x16x128xf32>
    %24 = arith.truncf %23 : vector<16x16x128xf32> to vector<16x16x128xbf16>
    "tpu.trace_start"() <{level = 10 : i32, message = "bqd,bkd->bqk"}> : () -> ()
    %cst_11 = arith.constant dense<0.000000e+00> : vector<16x16x16xf32>
    %25 = tpu.matmul %20, %22, %cst_11 {dimension_numbers = #tpu.dot_dimension_numbers<[2], [2], [1], [1], [0, 0, 0, 1, 1, 1], [0], [0]>} : vector<16x16x128xbf16>, vector<16x16x128xbf16>, vector<16x16x16xf32> -> vector<16x16x16xf32>
    "tpu.trace_stop"() : () -> ()
    %cst_12 = arith.constant 2.500000e-01 : f32
    %26 = vector.broadcast %cst_12 : f32 to vector<16x16x16xf32>
    %27 = arith.mulf %25, %26 : vector<16x16x16xf32>
    %28 = arith.addf %27, %16 : vector<16x16x16xf32>
    %cst_13 = arith.constant dense<0xFF800000> : vector<16x16xf32>
    %29 = vector.multi_reduction <maximumf>, %28, %cst_13 [2] : vector<16x16x16xf32> to vector<16x16xf32>
    %30 = vector.shape_cast %29 : vector<16x16xf32> to vector<16x16x1xf32>
    %31 = vector.broadcast %30 : vector<16x16x1xf32> to vector<16x16x16xf32>
    %32 = arith.subf %28, %31 : vector<16x16x16xf32>
    %33 = math.exp %32 : vector<16x16x16xf32>
    %cst_14 = arith.constant dense<0.000000e+00> : vector<16x16xf32>
    %34 = vector.multi_reduction <add>, %33, %cst_14 [2] : vector<16x16x16xf32> to vector<16x16xf32>
    %35 = vector.shape_cast %34 : vector<16x16xf32> to vector<16x16x1xf32>
    %36 = tpu.reciprocal %35 {approx = true} : vector<16x16x1xf32> -> vector<16x16x1xf32>
    %37 = vector.broadcast %36 : vector<16x16x1xf32> to vector<16x16x16xf32>
    %38 = arith.mulf %33, %37 : vector<16x16x16xf32>
    %39 = arith.truncf %38 : vector<16x16x16xf32> to vector<16x16x16xbf16>
    "tpu.trace_start"() <{level = 10 : i32, message = "bqk,bkd->bqd"}> : () -> ()
    %cst_15 = arith.constant dense<0.000000e+00> : vector<16x16x128xf32>
    %40 = tpu.matmul %39, %24, %cst_15 {dimension_numbers = #tpu.dot_dimension_numbers<[2], [1], [1], [2], [0, 0, 0, 1, 1, 2], [0], [0]>} : vector<16x16x16xbf16>, vector<16x16x128xbf16>, vector<16x16x128xf32> -> vector<16x16x128xf32>
    "tpu.trace_stop"() : () -> ()
    %41 = vector.shape_cast %40 : vector<16x16x128xf32> to vector<256x128xf32>
    %42 = arith.truncf %41 : vector<256x128xf32> to vector<256x128xbf16>
    %43 = vector.extract_strided_slice %17 {offsets = [0, 0], sizes = [128, 128], strides = [1, 1]} : vector<256x128xbf16> to vector<128x128xbf16>
    %cst_16 = arith.constant dense<0.000000e+00> : vector<256x128xf32>
    %44 = tpu.matmul %42, %43, %cst_16 {dimension_numbers = #tpu.dot_dimension_numbers<[1], [0], [0], [1], [0, 0, 1, 1], [], []>} : vector<256x128xbf16>, vector<128x128xbf16>, vector<256x128xf32> -> vector<256x128xf32>
    %45 = arith.addf %18, %44 : vector<256x128xf32>
    %46 = vector.extract_strided_slice %8 {offsets = [0, 0, 128], sizes = [16, 16, 128], strides = [1, 1, 1]} : vector<16x16x256xf32> to vector<16x16x128xf32>
    %47 = arith.truncf %46 : vector<16x16x128xf32> to vector<16x16x128xbf16>
    %48 = vector.extract_strided_slice %10 {offsets = [0, 0, 128], sizes = [16, 16, 128], strides = [1, 1, 1]} : vector<16x16x256xf32> to vector<16x16x128xf32>
    %49 = arith.truncf %48 : vector<16x16x128xf32> to vector<16x16x128xbf16>
    %50 = vector.extract_strided_slice %12 {offsets = [0, 0, 128], sizes = [16, 16, 128], strides = [1, 1, 1]} : vector<16x16x256xf32> to vector<16x16x128xf32>
    %51 = arith.truncf %50 : vector<16x16x128xf32> to vector<16x16x128xbf16>
    "tpu.trace_start"() <{level = 10 : i32, message = "bqd,bkd->bqk"}> : () -> ()
    %cst_17 = arith.constant dense<0.000000e+00> : vector<16x16x16xf32>
    %52 = tpu.matmul %47, %49, %cst_17 {dimension_numbers = #tpu.dot_dimension_numbers<[2], [2], [1], [1], [0, 0, 0, 1, 1, 1], [0], [0]>} : vector<16x16x128xbf16>, vector<16x16x128xbf16>, vector<16x16x16xf32> -> vector<16x16x16xf32>
    "tpu.trace_stop"() : () -> ()
    %cst_18 = arith.constant 2.500000e-01 : f32
    %53 = vector.broadcast %cst_18 : f32 to vector<16x16x16xf32>
    %54 = arith.mulf %52, %53 : vector<16x16x16xf32>
    %55 = arith.addf %54, %16 : vector<16x16x16xf32>
    %cst_19 = arith.constant dense<0xFF800000> : vector<16x16xf32>
    %56 = vector.multi_reduction <maximumf>, %55, %cst_19 [2] : vector<16x16x16xf32> to vector<16x16xf32>
    %57 = vector.shape_cast %56 : vector<16x16xf32> to vector<16x16x1xf32>
    %58 = vector.broadcast %57 : vector<16x16x1xf32> to vector<16x16x16xf32>
    %59 = arith.subf %55, %58 : vector<16x16x16xf32>
    %60 = math.exp %59 : vector<16x16x16xf32>
    %cst_20 = arith.constant dense<0.000000e+00> : vector<16x16xf32>
    %61 = vector.multi_reduction <add>, %60, %cst_20 [2] : vector<16x16x16xf32> to vector<16x16xf32>
    %62 = vector.shape_cast %61 : vector<16x16xf32> to vector<16x16x1xf32>
    %63 = tpu.reciprocal %62 {approx = true} : vector<16x16x1xf32> -> vector<16x16x1xf32>
    %64 = vector.broadcast %63 : vector<16x16x1xf32> to vector<16x16x16xf32>
    %65 = arith.mulf %60, %64 : vector<16x16x16xf32>
    %66 = arith.truncf %65 : vector<16x16x16xf32> to vector<16x16x16xbf16>
    "tpu.trace_start"() <{level = 10 : i32, message = "bqk,bkd->bqd"}> : () -> ()
    %cst_21 = arith.constant dense<0.000000e+00> : vector<16x16x128xf32>
    %67 = tpu.matmul %66, %51, %cst_21 {dimension_numbers = #tpu.dot_dimension_numbers<[2], [1], [1], [2], [0, 0, 0, 1, 1, 2], [0], [0]>} : vector<16x16x16xbf16>, vector<16x16x128xbf16>, vector<16x16x128xf32> -> vector<16x16x128xf32>
    "tpu.trace_stop"() : () -> ()
    %68 = vector.shape_cast %67 : vector<16x16x128xf32> to vector<256x128xf32>
    %69 = arith.truncf %68 : vector<256x128xf32> to vector<256x128xbf16>
    %70 = vector.extract_strided_slice %17 {offsets = [128, 0], sizes = [128, 128], strides = [1, 1]} : vector<256x128xbf16> to vector<128x128xbf16>
    %cst_22 = arith.constant dense<0.000000e+00> : vector<256x128xf32>
    %71 = tpu.matmul %69, %70, %cst_22 {dimension_numbers = #tpu.dot_dimension_numbers<[1], [0], [0], [1], [0, 0, 1, 1], [], []>} : vector<256x128xbf16>, vector<128x128xbf16>, vector<256x128xf32> -> vector<256x128xf32>
    %72 = arith.addf %45, %71 : vector<256x128xf32>
    %c0_23 = arith.constant 0 : index
    %c0_24 = arith.constant 0 : index
    %73 = vector.load %arg7[%c0_23, %c0_24] : memref<1x128xf32, #tpu.memory_space<vmem>>, vector<1x128xf32>
    %74 = vector.broadcast %73 : vector<1x128xf32> to vector<256x128xf32>
    %75 = arith.addf %72, %74 : vector<256x128xf32>
    %c0_25 = arith.constant 0 : index
    %c0_26 = arith.constant 0 : index
    %76 = vector.load %arg8[%c0_25, %c0_26] : memref<128x128xf32, #tpu.memory_space<vmem>>, vector<128x128xf32>
    %cst_27 = arith.constant dense<0.000000e+00> : vector<256x128xf32>
    %77 = tpu.matmul %75, %76, %cst_27 {dimension_numbers = #tpu.dot_dimension_numbers<[1], [0], [0], [1], [0, 0, 1, 1], [], []>} : vector<256x128xf32>, vector<128x128xf32>, vector<256x128xf32> -> vector<256x128xf32>
    %c0_28 = arith.constant 0 : index
    %c0_29 = arith.constant 0 : index
    %78 = vector.load %arg9[%c0_28, %c0_29] : memref<1x128xf32, #tpu.memory_space<vmem>>, vector<1x128xf32>
    %79 = vector.broadcast %78 : vector<1x128xf32> to vector<256x128xf32>
    %80 = arith.addf %77, %79 : vector<256x128xf32>
    %81 = math.tanh %80 : vector<256x128xf32>
    %c0_30 = arith.constant 0 : index
    %c0_31 = arith.constant 0 : index
    %82 = vector.load %arg10[%c0_30, %c0_31] : memref<128x1xf32, #tpu.memory_space<vmem>>, vector<128x1xf32>
    %cst_32 = arith.constant dense<0.000000e+00> : vector<256x1xf32>
    %83 = tpu.matmul %81, %82, %cst_32 {dimension_numbers = #tpu.dot_dimension_numbers<[1], [0], [0], [1], [0, 0, 1, 1], [], []>} : vector<256x128xf32>, vector<128x1xf32>, vector<256x1xf32> -> vector<256x1xf32>
    %84 = vector.shape_cast %83 : vector<256x1xf32> to vector<16x16x1xf32>
    %c0_33 = arith.constant 0 : index
    %c0_34 = arith.constant 0 : index
    %c0_35 = arith.constant 0 : index
    %85 = vector.load %arg3[%c0_33, %c0_34, %c0_35] : memref<1x16x1xf32, #tpu.memory_space<vmem>>, vector<1x16x1xf32>
    %86 = vector.broadcast %85 : vector<1x16x1xf32> to vector<16x16x1xf32>
    %87 = arith.addf %84, %86 : vector<16x16x1xf32>
    %cst_36 = arith.constant dense<0xFF800000> : vector<16x1xf32>
    %88 = vector.multi_reduction <maximumf>, %87, %cst_36 [1] : vector<16x16x1xf32> to vector<16x1xf32>
    %89 = vector.shape_cast %88 : vector<16x1xf32> to vector<16x1x1xf32>
    %90 = vector.broadcast %89 : vector<16x1x1xf32> to vector<16x16x1xf32>
    %91 = arith.subf %87, %90 : vector<16x16x1xf32>
    %92 = math.exp %91 : vector<16x16x1xf32>
    %cst_37 = arith.constant dense<0.000000e+00> : vector<16x1xf32>
    %93 = vector.multi_reduction <add>, %92, %cst_37 [1] : vector<16x16x1xf32> to vector<16x1xf32>
    %94 = vector.shape_cast %93 : vector<16x1xf32> to vector<16x1x1xf32>
    %95 = tpu.reciprocal %94 {approx = true} : vector<16x1x1xf32> -> vector<16x1x1xf32>
    %96 = vector.broadcast %95 : vector<16x1x1xf32> to vector<16x16x1xf32>
    %97 = arith.mulf %92, %96 : vector<16x16x1xf32>
    %98 = vector.shape_cast %75 : vector<256x128xf32> to vector<16x16x128xf32>
    %99 = vector.broadcast %97 : vector<16x16x1xf32> to vector<16x16x128xf32>
    %100 = arith.mulf %99, %98 : vector<16x16x128xf32>
    %cst_38 = arith.constant dense<0.000000e+00> : vector<16x128xf32>
    %101 = vector.multi_reduction <add>, %100, %cst_38 [1] : vector<16x16x128xf32> to vector<16x128xf32>
    %c0_39 = arith.constant 0 : index
    %c0_40 = arith.constant 0 : index
    %102 = vector.load %arg11[%c0_39, %c0_40] : memref<16x128xf32, #tpu.memory_space<vmem>>, vector<16x128xf32>
    tpu.vector_store %arg11[%c0_39, %c0_40], %101 {strides = array<i32>} : memref<16x128xf32, #tpu.memory_space<vmem>>, vector<16x128xf32>,
    return
  }
  func.func @transform_0(%arg0: i32) -> (i32, i32, i32) {
    %c0_i32 = arith.constant 0 : i32
    %c0_i32_0 = arith.constant 0 : i32
    %c0_i32_1 = arith.constant 0 : i32
    return %arg0, %c0_i32, %c0_i32_0 : i32, i32, i32
  }
  func.func @transform_1(%arg0: i32) -> (i32, i32) {
    %c0_i32 = arith.constant 0 : i32
    %c0_i32_0 = arith.constant 0 : i32
    return %arg0, %c0_i32 : i32, i32
  }
  func.func @transform_2(%arg0: i32) -> (i32, i32, i32) {
    %c0_i32 = arith.constant 0 : i32
    %c0_i32_0 = arith.constant 0 : i32
    %c0_i32_1 = arith.constant 0 : i32
    %c0_i32_2 = arith.constant 0 : i32
    return %c0_i32, %c0_i32_0, %c0_i32_1 : i32, i32, i32
  }
  func.func @transform_3(%arg0: i32) -> (i32, i32) {
    %c0_i32 = arith.constant 0 : i32
    %c0_i32_0 = arith.constant 0 : i32
    %c0_i32_1 = arith.constant 0 : i32
    return %c0_i32, %c0_i32_0 : i32, i32
  }
  func.func @transform_4(%arg0: i32) -> (i32, i32) {
    %c0_i32 = arith.constant 0 : i32
    %c0_i32_0 = arith.constant 0 : i32
    %c0_i32_1 = arith.constant 0 : i32
    return %c0_i32, %c0_i32_0 : i32, i32
  }
  func.func @transform_5(%arg0: i32) -> (i32, i32) {
    %c0_i32 = arith.constant 0 : i32
    %c0_i32_0 = arith.constant 0 : i32
    %c0_i32_1 = arith.constant 0 : i32
    return %c0_i32, %c0_i32_0 : i32, i32
  }
  func.func @transform_6(%arg0: i32) -> (i32, i32) {
    %c0_i32 = arith.constant 0 : i32
    %c0_i32_0 = arith.constant 0 : i32
    %c0_i32_1 = arith.constant 0 : i32
    return %c0_i32, %c0_i32_0 : i32, i32
  }
  func.func @transform_7(%arg0: i32) -> (i32, i32) {
    %c0_i32 = arith.constant 0 : i32
    %c0_i32_0 = arith.constant 0 : i32
    %c0_i32_1 = arith.constant 0 : i32
    return %c0_i32, %c0_i32_0 : i32, i32
  }
  func.func @transform_8(%arg0: i32) -> (i32, i32) {
    %c0_i32 = arith.constant 0 : i32
    %c0_i32_0 = arith.constant 0 : i32
    %c0_i32_1 = arith.constant 0 : i32
    return %c0_i32, %c0_i32_0 : i32, i32
  }
  func.func @transform_9(%arg0: i32) -> (i32, i32) {
    %c0_i32 = arith.constant 0 : i32
    %c0_i32_0 = arith.constant 0 : i32
    %c0_i32_1 = arith.constant 0 : i32
    return %c0_i32, %c0_i32_0 : i32, i32
  }
  func.func @transform_10(%arg0: i32) -> (i32, i32) {
    %c0_i32 = arith.constant 0 : i32
    %c0_i32_0 = arith.constant 0 : i32
    return %arg0, %c0_i32 : i32, i32
  }
}

</mosaic_0001>

<llo_original>
// kernel: tpu_custom_call.1
$region0: #{tpu_custom_call.1}
  #allocation0 [shape = 'u32[]', space=smem, size = 0x4, offset = 0x4, fixed_abs, tag = 'smem constant byte address 0x4 - core index']
  #allocation1 [shape = 'u32[72,128]{1,0:T(1,128)}', space=vmem, size = 0x9000, scoped, tag = 'internal scratch']
  %s0 = inlined_call_operand.vmem [shape: bf16[16,16,128], index: 0, kind: input, shape index: {}]
  %s1 = inlined_call_operand.vmem [shape: f32[16,16], index: 1, kind: input, shape index: {}]
  %s2 = inlined_call_operand.vmem [shape: f32[1,16,1], index: 2, kind: input, shape index: {}]
  %s3 = inlined_call_operand.hbm [shape: bf16[128,768], index: 3, kind: input, shape index: {}]
  %s4 = inlined_call_operand.hbm [shape: f32[1,768], index: 4, kind: input, shape index: {}]
  %s5 = inlined_call_operand.hbm [shape: bf16[256,128], index: 5, kind: input, shape index: {}]
  %s6 = inlined_call_operand.vmem [shape: f32[1,128], index: 6, kind: input, shape index: {}]
  %s7 = inlined_call_operand.hbm [shape: f32[128,128], index: 7, kind: input, shape index: {}]
  %s8 = inlined_call_operand.vmem [shape: f32[1,128], index: 8, kind: input, shape index: {}]
  %s9 = inlined_call_operand.vmem [shape: f32[128,1], index: 9, kind: input, shape index: {}]
  %s10 = inlined_call_operand.hbm [shape: f32[16,128], index: 10, kind: output, shape index: {}]
  %s11 = sld [smem:[#allocation0]]
  $region66: #{tpu_custom_call.1} parent=0
    _
  %s13 = ssub.s32 1, %s11
  %s14 = scalar_select 0, %s13, %s11
  $region1: #{tpu_custom_call.1} parent=0
    #allocation2 [shape = 'u8[196608]{0}', space=vmem, size = 0x30000, scoped, tag = 'input window, operand 3, single buffered']
    #allocation3 [shape = 's32[1]{0}', space=sflag, size = 0x4, scoped, tag = 'scoped memory for tpu_custom_call.1']
    #allocation4 [shape = 's32[1]{0}', space=sflag, size = 0x4, scoped, tag = 'scoped memory for tpu_custom_call.1']
    #allocation5 [shape = 'u8[3072]{0}', space=vmem, size = 0xc00, scoped, tag = 'input window, operand 4, single buffered']
    #allocation6 [shape = 's32[1]{0}', space=sflag, size = 0x4, scoped, tag = 'scoped memory for tpu_custom_call.1']
    #allocation7 [shape = 'u8[65536]{0}', space=vmem, size = 0x10000, scoped, tag = 'input window, operand 5, single buffered']
    #allocation8 [shape = 'u8[65536]{0}', space=vmem, size = 0x10000, scoped, tag = 'input window, operand 7, single buffered']
    #allocation9 [shape = 's32[1]{0}', space=sflag, size = 0x4, scoped, tag = 'scoped memory for tpu_custom_call.1']
    #allocation10 [shape = 'u8[8192]{0}', space=vmem, size = 0x2000, scoped, tag = 'output window, operand 0, single buffered']
    %15 = vsyncpa [#allocation3], 0
    %16 = vsyncpa [#allocation6], 0
    %17 = vsyncpa [#allocation9], 0
    %18 = vsyncpa [#allocation4], 0
    // Predicated region
    $region2: #{tpu_custom_call.1} parent=1 // pred_check
      _
    $region3: #{tpu_custom_call.1} parent=1 // pred_check_branch
      %20 = sbr.rel (0) target = $region5
    $region4: #{tpu_custom_call.1} parent=1 // pred_region
      _
    $region5: #{tpu_custom_call.1} parent=1 // pred_fallthru
      _
    // Predicated region
    $region6: #{tpu_custom_call.1} parent=1 // pred_check
      _
    $region7: #{tpu_custom_call.1} parent=1 // pred_check_branch
      %22 = sbr.rel (0) target = $region9
    $region8: #{tpu_custom_call.1} parent=1 // pred_region
      _
    $region9: #{tpu_custom_call.1} parent=1 // pred_fallthru
      _
    // Predicated region
    $region10: #{tpu_custom_call.1} parent=1 // pred_check
      _
    $region11: #{tpu_custom_call.1} parent=1 // pred_check_branch
      %24 = sbr.rel (0) target = $region13
    $region12: #{tpu_custom_call.1} parent=1 // pred_region
      _
    $region13: #{tpu_custom_call.1} parent=1 // pred_fallthru
      _
    // Predicated region
    $region14: #{tpu_custom_call.1} parent=1 // pred_check
      _
    $region15: #{tpu_custom_call.1} parent=1 // pred_check_branch
      %26 = sbr.rel (0) target = $region17
    $region16: #{tpu_custom_call.1} parent=1 // pred_region
      %28 = vsyncadd [#allocation3], 0
      %s29 = sshll.u32 %s3, 4
      %s30 = int_to_ptr.hbm [resolvable:$true] %s29
      %s31 = sshll.u32 [#allocation2], 4
      %s32 = int_to_ptr.vmem [resolvable:$true] %s31
      %37 = dma.hbm_to_vmem [thread:$0]  %s30, 6144, %s32, [#allocation3], 384, 384, 24
    $region17: #{tpu_custom_call.1} parent=1 // pred_fallthru
      _
    // Predicated region
    $region18: #{tpu_custom_call.1} parent=1 // pred_check
      _
    $region19: #{tpu_custom_call.1} parent=1 // pred_check_branch
      %39 = sbr.rel (0) target = $region21
    $region20: #{tpu_custom_call.1} parent=1 // pred_region
      %41 = vsyncadd [#allocation6], 0
      %s43 = sshll.u32 %s4, 4
      %s44 = int_to_ptr.hbm [resolvable:$true] %s43
      %s45 = sshll.u32 [#allocation5], 4
      %s46 = int_to_ptr.vmem [resolvable:$true] %s45
      %48 = dma.hbm_to_vmem [thread:$0]  %s44, 96, %s46, [#allocation6]
    $region21: #{tpu_custom_call.1} parent=1 // pred_fallthru
      _
    // Predicated region
    $region22: #{tpu_custom_call.1} parent=1 // pred_check
      _
    $region23: #{tpu_custom_call.1} parent=1 // pred_check_branch
      %50 = sbr.rel (0) target = $region25
    $region24: #{tpu_custom_call.1} parent=1 // pred_region
      %52 = vsyncadd [#allocation6], 0
      %s53 = sshll.u32 %s5, 4
      %s54 = int_to_ptr.hbm [resolvable:$true] %s53
      %s55 = sshll.u32 [#allocation7], 4
      %s56 = int_to_ptr.vmem [resolvable:$true] %s55
      %61 = dma.hbm_to_vmem [thread:$0]  %s54, 2048, %s56, [#allocation6], 64, 64, 4
    $region25: #{tpu_custom_call.1} parent=1 // pred_fallthru
      _
    // Predicated region
    $region26: #{tpu_custom_call.1} parent=1 // pred_check
      _
    $region27: #{tpu_custom_call.1} parent=1 // pred_check_branch
      %63 = sbr.rel (0) target = $region29
    $region28: #{tpu_custom_call.1} parent=1 // pred_region
      _
    $region29: #{tpu_custom_call.1} parent=1 // pred_fallthru
      _
    // Predicated region
    $region30: #{tpu_custom_call.1} parent=1 // pred_check
      _
    $region31: #{tpu_custom_call.1} parent=1 // pred_check_branch
      %65 = sbr.rel (0) target = $region33
    $region32: #{tpu_custom_call.1} parent=1 // pred_region
      %67 = vsyncadd [#allocation9], 0
      %s68 = sshll.u32 %s7, 4
      %s69 = int_to_ptr.hbm [resolvable:$true] %s68
      %s70 = sshll.u32 [#allocation8], 4
      %s71 = int_to_ptr.vmem [resolvable:$true] %s70
      %76 = dma.hbm_to_vmem [thread:$0]  %s69, 2048, %s71, [#allocation9], 128, 128, 8
    $region33: #{tpu_custom_call.1} parent=1 // pred_fallthru
      _
    // Predicated region
    $region34: #{tpu_custom_call.1} parent=1 // pred_check
      _
    $region35: #{tpu_custom_call.1} parent=1 // pred_check_branch
      %78 = sbr.rel (0) target = $region37
    $region36: #{tpu_custom_call.1} parent=1 // pred_region
      _
    $region37: #{tpu_custom_call.1} parent=1 // pred_fallthru
      _
    // Predicated region
    $region38: #{tpu_custom_call.1} parent=1 // pred_check
      _
    $region39: #{tpu_custom_call.1} parent=1 // pred_check_branch
      %80 = sbr.rel (0) target = $region41
    $region40: #{tpu_custom_call.1} parent=1 // pred_region
      _
    $region41: #{tpu_custom_call.1} parent=1 // pred_fallthru
      _
    // Predicated region
    $region42: #{tpu_custom_call.1} parent=1 // pred_check
      _
    $region43: #{tpu_custom_call.1} parent=1 // pred_check_branch
      %82 = sbr.rel (0) target = $region45
    $region44: #{tpu_custom_call.1} parent=1 // pred_region
      %84 = dma.done [#allocation3], 6144
    $region45: #{tpu_custom_call.1} parent=1 // pred_fallthru
      _
    // Predicated region
    $region46: #{tpu_custom_call.1} parent=1 // pred_check
      _
    $region47: #{tpu_custom_call.1} parent=1 // pred_check_branch
      %86 = sbr.rel (0) target = $region49
    $region48: #{tpu_custom_call.1} parent=1 // pred_region
      %88 = dma.done [#allocation6], 96
    $region49: #{tpu_custom_call.1} parent=1 // pred_fallthru
      _
    // Predicated region
    $region50: #{tpu_custom_call.1} parent=1 // pred_check
      _
    $region51: #{tpu_custom_call.1} parent=1 // pred_check_branch
      %90 = sbr.rel (0) target = $region53
    $region52: #{tpu_custom_call.1} parent=1 // pred_region
      %92 = dma.done [#allocation6], 2048
    $region53: #{tpu_custom_call.1} parent=1 // pred_fallthru
      _
    // Predicated region
    $region54: #{tpu_custom_call.1} parent=1 // pred_check
      _
    $region55: #{tpu_custom_call.1} parent=1 // pred_check_branch
      %94 = sbr.rel (0) target = $region57
    $region56: #{tpu_custom_call.1} parent=1 // pred_region
      %96 = dma.done [#allocation9], 2048
    $region57: #{tpu_custom_call.1} parent=1 // pred_fallthru
      _
    %v98 = vld [vmem:[%s0] sm:$0xf]
    %v99 = vld [vmem:[%s0 + $0x4] sm:$0xf]
    %v100 = vld [vmem:[%s0 + $0x8] sm:$0xf]
    %v101 = vld [vmem:[%s0 + $0xc] sm:$0xf]
    %v102 = vld [vmem:[%s0 + $0x10] sm:$0xf]
    %v103 = vld [vmem:[%s0 + $0x14] sm:$0xf]
    %v104 = vld [vmem:[%s0 + $0x18] sm:$0xf]
    %v105 = vld [vmem:[%s0 + $0x1c] sm:$0xf]
    %v106 = vld [vmem:[%s0 + $0x20] sm:$0xf]
    %v107 = vld [vmem:[%s0 + $0x24] sm:$0xf]
    %v108 = vld [vmem:[%s0 + $0x28] sm:$0xf]
    %v109 = vld [vmem:[%s0 + $0x2c] sm:$0xf]
    %v110 = vld [vmem:[%s0 + $0x30] sm:$0xf]
    %v111 = vld [vmem:[%s0 + $0x34] sm:$0xf]
    %v112 = vld [vmem:[%s0 + $0x38] sm:$0xf]
    %v113 = vld [vmem:[%s0 + $0x3c] sm:$0xf]
    %v114 = vld [vmem:[%s0 + $0x40] sm:$0xf]
    %v115 = vld [vmem:[%s0 + $0x44] sm:$0xf]
    %v116 = vld [vmem:[%s0 + $0x48] sm:$0xf]
    %v117 = vld [vmem:[%s0 + $0x4c] sm:$0xf]
    %v118 = vld [vmem:[%s0 + $0x50] sm:$0xf]
    %v119 = vld [vmem:[%s0 + $0x54] sm:$0xf]
    %v120 = vld [vmem:[%s0 + $0x58] sm:$0xf]
    %v121 = vld [vmem:[%s0 + $0x5c] sm:$0xf]
    %v122 = vld [vmem:[%s0 + $0x60] sm:$0xf]
    %v123 = vld [vmem:[%s0 + $0x64] sm:$0xf]
    %v124 = vld [vmem:[%s0 + $0x68] sm:$0xf]
    %v125 = vld [vmem:[%s0 + $0x6c] sm:$0xf]
    %v126 = vld [vmem:[%s0 + $0x70] sm:$0xf]
    %v127 = vld [vmem:[%s0 + $0x74] sm:$0xf]
    %v128 = vld [vmem:[%s0 + $0x78] sm:$0xf]
    %v129 = vld [vmem:[%s0 + $0x7c] sm:$0xf]
    %v130 = vld [vmem:[#allocation2] sm:$0xff]
    %v131 = vld [vmem:[#allocation2 + $0x8] sm:$0xff]
    %v132 = vld [vmem:[#allocation2 + $0x10] sm:$0xff]
    %v133 = vld [vmem:[#allocation2 + $0x18] sm:$0xff]
    %v134 = vld [vmem:[#allocation2 + $0x20] sm:$0xff]
    %v135 = vld [vmem:[#allocation2 + $0x28] sm:$0xff]
    %v136 = vld [vmem:[#allocation2 + $0x30] sm:$0xff]
    %v137 = vld [vmem:[#allocation2 + $0x38] sm:$0xff]
    %v138 = vld [vmem:[#allocation2 + $0x40] sm:$0xff]
    %v139 = vld [vmem:[#allocation2 + $0x48] sm:$0xff]
    %v140 = vld [vmem:[#allocation2 + $0x50] sm:$0xff]
    %v141 = vld [vmem:[#allocation2 + $0x58] sm:$0xff]
    %v142 = vld [vmem:[#allocation2 + $0x60] sm:$0xff]
    %v143 = vld [vmem:[#allocation2 + $0x68] sm:$0xff]
    %v144 = vld [vmem:[#allocation2 + $0x70] sm:$0xff]
    %v145 = vld [vmem:[#allocation2 + $0x78] sm:$0xff]
    %v146 = vld [vmem:[#allocation2 + $0x80] sm:$0xff]
    %v147 = vld [vmem:[#allocation2 + $0x88] sm:$0xff]
    %v148 = vld [vmem:[#allocation2 + $0x90] sm:$0xff]
    %v149 = vld [vmem:[#allocation2 + $0x98] sm:$0xff]
    %v150 = vld [vmem:[#allocation2 + $0xa0] sm:$0xff]
    %v151 = vld [vmem:[#allocation2 + $0xa8] sm:$0xff]
    %v152 = vld [vmem:[#allocation2 + $0xb0] sm:$0xff]
    %v153 = vld [vmem:[#allocation2 + $0xb8] sm:$0xff]
    %v154 = vld [vmem:[#allocation2 + $0xc0] sm:$0xff]
    %v155 = vld [vmem:[#allocation2 + $0xc8] sm:$0xff]
    %v156 = vld [vmem:[#allocation2 + $0xd0] sm:$0xff]
    %v157 = vld [vmem:[#allocation2 + $0xd8] sm:$0xff]
    %v158 = vld [vmem:[#allocation2 + $0xe0] sm:$0xff]
    %v159 = vld [vmem:[#allocation2 + $0xe8] sm:$0xff]
    %v160 = vld [vmem:[#allocation2 + $0xf0] sm:$0xff]
    %v161 = vld [vmem:[#allocation2 + $0xf8] sm:$0xff]
    %v162 = vld [vmem:[#allocation2 + $0x100] sm:$0xff]
    %v163 = vld [vmem:[#allocation2 + $0x108] sm:$0xff]
    %v164 = vld [vmem:[#allocation2 + $0x110] sm:$0xff]
    %v165 = vld [vmem:[#allocation2 + $0x118] sm:$0xff]
    %v166 = vld [vmem:[#allocation2 + $0x120] sm:$0xff]
    %v167 = vld [vmem:[#allocation2 + $0x128] sm:$0xff]
    %v168 = vld [vmem:[#allocation2 + $0x130] sm:$0xff]
    %v169 = vld [vmem:[#allocation2 + $0x138] sm:$0xff]
    %v170 = vld [vmem:[#allocation2 + $0x140] sm:$0xff]
    %v171 = vld [vmem:[#allocation2 + $0x148] sm:$0xff]
    %v172 = vld [vmem:[#allocation2 + $0x150] sm:$0xff]
    %v173 = vld [vmem:[#allocation2 + $0x158] sm:$0xff]
    %v174 = vld [vmem:[#allocation2 + $0x160] sm:$0xff]
    %v175 = vld [vmem:[#allocation2 + $0x168] sm:$0xff]
    %v176 = vld [vmem:[#allocation2 + $0x170] sm:$0xff]
    %v177 = vld [vmem:[#allocation2 + $0x178] sm:$0xff]
    %v178 = vld [vmem:[#allocation5] sm:$0x3f]
    %v180 = vperm.slane %v178, 0
    %v181 = vperm.slane %v178, 1
    %v182 = vperm.slane %v178, 2
    %v183 = vperm.slane %v178, 3
    %v184 = vperm.slane %v178, 4
    %v185 = vperm.slane %v178, 5
    %v224 = vunpack.c.l.b16 %v98
    %v225 = vunpack.c.l.b16 %v99
    %v226 = vunpack.c.l.b16 %v100
    %v227 = vunpack.c.l.b16 %v101
    %v228 = vunpack.c.l.b16 %v102
    %v229 = vunpack.c.l.b16 %v103
    %v230 = vunpack.c.l.b16 %v104
    %v231 = vunpack.c.l.b16 %v105
    %v232 = vunpack.c.l.b16 %v106
    %v233 = vunpack.c.l.b16 %v107
    %v234 = vunpack.c.l.b16 %v108
    %v235 = vunpack.c.l.b16 %v109
    %v236 = vunpack.c.l.b16 %v110
    %v237 = vunpack.c.l.b16 %v111
    %v238 = vunpack.c.l.b16 %v112
    %v239 = vunpack.c.l.b16 %v113
    %v240 = vunpack.c.l.b16 %v114
    %v241 = vunpack.c.l.b16 %v115
    %v242 = vunpack.c.l.b16 %v116
    %v243 = vunpack.c.l.b16 %v117
    %v244 = vunpack.c.l.b16 %v118
    %v245 = vunpack.c.l.b16 %v119
    %v246 = vunpack.c.l.b16 %v120
    %v247 = vunpack.c.l.b16 %v121
    %v248 = vunpack.c.l.b16 %v122
    %v249 = vunpack.c.l.b16 %v123
    %v250 = vunpack.c.l.b16 %v124
    %v251 = vunpack.c.l.b16 %v125
    %v252 = vunpack.c.l.b16 %v126
    %v253 = vunpack.c.l.b16 %v127
    %v254 = vunpack.c.l.b16 %v128
    %v255 = vunpack.c.l.b16 %v129
    %v256 = vpack.c.b16 %v225, %v224
    %v257 = vpack.c.b16 %v227, %v226
    %v258 = vpack.c.b16 %v229, %v228
    %v259 = vpack.c.b16 %v231, %v230
    %v260 = vpack.c.b16 %v233, %v232
    %v261 = vpack.c.b16 %v235, %v234
    %v262 = vpack.c.b16 %v237, %v236
    %v263 = vpack.c.b16 %v239, %v238
    %v264 = vpack.c.b16 %v241, %v240
    %v265 = vpack.c.b16 %v243, %v242
    %v266 = vpack.c.b16 %v245, %v244
    %v267 = vpack.c.b16 %v247, %v246
    %v268 = vpack.c.b16 %v249, %v248
    %v269 = vpack.c.b16 %v251, %v250
    %v270 = vpack.c.b16 %v253, %v252
    %v271 = vpack.c.b16 %v255, %v254
    %v336 = vunpack.c.l.b16 %v130
    %v337 = vunpack.c.h.b16 %v130
    %v338 = vunpack.c.l.b16 %v131
    %v339 = vunpack.c.h.b16 %v131
    %v340 = vunpack.c.l.b16 %v132
    %v341 = vunpack.c.h.b16 %v132
    %v342 = vunpack.c.l.b16 %v133
    %v343 = vunpack.c.h.b16 %v133
    %v344 = vunpack.c.l.b16 %v134
    %v345 = vunpack.c.h.b16 %v134
    %v346 = vunpack.c.l.b16 %v135
    %v347 = vunpack.c.h.b16 %v135
    %v348 = vunpack.c.l.b16 %v136
    %v349 = vunpack.c.h.b16 %v136
    %v350 = vunpack.c.l.b16 %v137
    %v351 = vunpack.c.h.b16 %v137
    %v352 = vunpack.c.l.b16 %v138
    %v353 = vunpack.c.h.b16 %v138
    %v354 = vunpack.c.l.b16 %v139
    %v355 = vunpack.c.h.b16 %v139
    %v356 = vunpack.c.l.b16 %v140
    %v357 = vunpack.c.h.b16 %v140
    %v358 = vunpack.c.l.b16 %v141
    %v359 = vunpack.c.h.b16 %v141
    %v360 = vunpack.c.l.b16 %v142
    %v361 = vunpack.c.h.b16 %v142
    %v362 = vunpack.c.l.b16 %v143
    %v363 = vunpack.c.h.b16 %v143
    %v364 = vunpack.c.l.b16 %v144
    %v365 = vunpack.c.h.b16 %v144
    %v366 = vunpack.c.l.b16 %v145
    %v367 = vunpack.c.h.b16 %v145
    %v368 = vunpack.c.l.b16 %v146
    %v369 = vunpack.c.h.b16 %v146
    %v370 = vunpack.c.l.b16 %v147
    %v371 = vunpack.c.h.b16 %v147
    %v372 = vunpack.c.l.b16 %v148
    %v373 = vunpack.c.h.b16 %v148
    %v374 = vunpack.c.l.b16 %v149
    %v375 = vunpack.c.h.b16 %v149
    %v376 = vunpack.c.l.b16 %v150
    %v377 = vunpack.c.h.b16 %v150
    %v378 = vunpack.c.l.b16 %v151
    %v379 = vunpack.c.h.b16 %v151
    %v380 = vunpack.c.l.b16 %v152
    %v381 = vunpack.c.h.b16 %v152
    %v382 = vunpack.c.l.b16 %v153
    %v383 = vunpack.c.h.b16 %v153
    %v384 = vunpack.c.l.b16 %v154
    %v385 = vunpack.c.h.b16 %v154
    %v386 = vunpack.c.l.b16 %v155
    %v387 = vunpack.c.h.b16 %v155
    %v388 = vunpack.c.l.b16 %v156
    %v389 = vunpack.c.h.b16 %v156
    %v390 = vunpack.c.l.b16 %v157
    %v391 = vunpack.c.h.b16 %v157
    %v392 = vunpack.c.l.b16 %v158
    %v393 = vunpack.c.h.b16 %v158
    %v394 = vunpack.c.l.b16 %v159
    %v395 = vunpack.c.h.b16 %v159
    %v396 = vunpack.c.l.b16 %v160
    %v397 = vunpack.c.h.b16 %v160
    %v398 = vunpack.c.l.b16 %v161
    %v399 = vunpack.c.h.b16 %v161
    %v400 = vunpack.c.l.b16 %v162
    %v401 = vunpack.c.h.b16 %v162
    %v402 = vunpack.c.l.b16 %v163
    %v403 = vunpack.c.h.b16 %v163
    %v404 = vunpack.c.l.b16 %v164
    %v405 = vunpack.c.h.b16 %v164
    %v406 = vunpack.c.l.b16 %v165
    %v407 = vunpack.c.h.b16 %v165
    %v408 = vunpack.c.l.b16 %v166
    %v409 = vunpack.c.h.b16 %v166
    %v410 = vunpack.c.l.b16 %v167
    %v411 = vunpack.c.h.b16 %v167
    %v412 = vunpack.c.l.b16 %v168
    %v413 = vunpack.c.h.b16 %v168
    %v414 = vunpack.c.l.b16 %v169
    %v415 = vunpack.c.h.b16 %v169
    %v416 = vunpack.c.l.b16 %v170
    %v417 = vunpack.c.h.b16 %v170
    %v418 = vunpack.c.l.b16 %v171
    %v419 = vunpack.c.h.b16 %v171
    %v420 = vunpack.c.l.b16 %v172
    %v421 = vunpack.c.h.b16 %v172
    %v422 = vunpack.c.l.b16 %v173
    %v423 = vunpack.c.h.b16 %v173
    %v424 = vunpack.c.l.b16 %v174
    %v425 = vunpack.c.h.b16 %v174
    %v426 = vunpack.c.l.b16 %v175
    %v427 = vunpack.c.h.b16 %v175
    %v428 = vunpack.c.l.b16 %v176
    %v429 = vunpack.c.h.b16 %v176
    %v430 = vunpack.c.l.b16 %v177
    %v431 = vunpack.c.h.b16 %v177
    %v432 = vpack.c.b16 %v342, %v336
    %v433 = vpack.c.b16 %v343, %v337
    %v434 = vpack.c.b16 %v344, %v338
    %v435 = vpack.c.b16 %v345, %v339
    %v436 = vpack.c.b16 %v346, %v340
    %v437 = vpack.c.b16 %v347, %v341
    %v438 = vpack.c.b16 %v354, %v348
    %v439 = vpack.c.b16 %v355, %v349
    %v440 = vpack.c.b16 %v356, %v350
    %v441 = vpack.c.b16 %v357, %v351
    %v442 = vpack.c.b16 %v358, %v352
    %v443 = vpack.c.b16 %v359, %v353
    %v444 = vpack.c.b16 %v366, %v360
    %v445 = vpack.c.b16 %v367, %v361
    %v446 = vpack.c.b16 %v368, %v362
    %v447 = vpack.c.b16 %v369, %v363
    %v448 = vpack.c.b16 %v370, %v364
    %v449 = vpack.c.b16 %v371, %v365
    %v450 = vpack.c.b16 %v378, %v372
    %v451 = vpack.c.b16 %v379, %v373
    %v452 = vpack.c.b16 %v380, %v374
    %v453 = vpack.c.b16 %v381, %v375
    %v454 = vpack.c.b16 %v382, %v376
    %v455 = vpack.c.b16 %v383, %v377
    %v456 = vpack.c.b16 %v390, %v384
    %v457 = vpack.c.b16 %v391, %v385
    %v458 = vpack.c.b16 %v392, %v386
    %v459 = vpack.c.b16 %v393, %v387
    %v460 = vpack.c.b16 %v394, %v388
    %v461 = vpack.c.b16 %v395, %v389
    %v462 = vpack.c.b16 %v402, %v396
    %v463 = vpack.c.b16 %v403, %v397
    %v464 = vpack.c.b16 %v404, %v398
    %v465 = vpack.c.b16 %v405, %v399
    %v466 = vpack.c.b16 %v406, %v400
    %v467 = vpack.c.b16 %v407, %v401
    %v468 = vpack.c.b16 %v414, %v408
    %v469 = vpack.c.b16 %v415, %v409
    %v470 = vpack.c.b16 %v416, %v410
    %v471 = vpack.c.b16 %v417, %v411
    %v472 = vpack.c.b16 %v418, %v412
    %v473 = vpack.c.b16 %v419, %v413
    %v474 = vpack.c.b16 %v426, %v420
    %v475 = vpack.c.b16 %v427, %v421
    %v476 = vpack.c.b16 %v428, %v422
    %v477 = vpack.c.b16 %v429, %v423
    %v478 = vpack.c.b16 %v430, %v424
    %v479 = vpack.c.b16 %v431, %v425
    %528 = vmatpush.bf16.msra.mxu0 %v474
    %529 = vmatpush.bf16.msra.mxu0 %v468
    %530 = vmatpush.bf16.msra.mxu0 %v462
    %531 = vmatpush.bf16.msra.mxu0 %v456
    %532 = vmatpush.bf16.msra.mxu0 %v450
    %533 = vmatpush.bf16.msra.mxu0 %v444
    %534 = vmatpush.bf16.msra.mxu0 %v438
    %535 = vmatpush.bf16.msra.mxu0 %v432
    %536 = vmatmul.bf16.gmra.mxu0 %v256
    %v537 = vpop.f32.mrf.mxu0
    %v538 = vadd.f32 %v180, %v537
    %v539 = vpop.f32.mrf.mxu0
    %v540 = vadd.f32 %v180, %v539
    %541 = vmatmul.bf16.gmra.mxu0 %v257
    %v542 = vpop.f32.mrf.mxu0
    %v543 = vadd.f32 %v180, %v542
    %v544 = vpop.f32.mrf.mxu0
    %v545 = vadd.f32 %v180, %v544
    %546 = vmatmul.bf16.gmra.mxu0 %v258
    %v547 = vpop.f32.mrf.mxu0
    %v548 = vadd.f32 %v180, %v547
    %v549 = vpop.f32.mrf.mxu0
    %v550 = vadd.f32 %v180, %v549
    %551 = vmatmul.bf16.gmra.mxu0 %v259
    %v552 = vpop.f32.mrf.mxu0
    %v553 = vadd.f32 %v180, %v552
    %v554 = vpop.f32.mrf.mxu0
    %v555 = vadd.f32 %v180, %v554
    %556 = vmatmul.bf16.gmra.mxu0 %v260
    %v557 = vpop.f32.mrf.mxu0
    %v558 = vadd.f32 %v180, %v557
    %v559 = vpop.f32.mrf.mxu0
    %v560 = vadd.f32 %v180, %v559
    %561 = vmatmul.bf16.gmra.mxu0 %v261
    %v562 = vpop.f32.mrf.mxu0
    %v563 = vadd.f32 %v180, %v562
    %v564 = vpop.f32.mrf.mxu0
    %v565 = vadd.f32 %v180, %v564
    %566 = vmatmul.bf16.gmra.mxu0 %v262
    %v567 = vpop.f32.mrf.mxu0
    %v568 = vadd.f32 %v180, %v567
    %v569 = vpop.f32.mrf.mxu0
    %v570 = vadd.f32 %v180, %v569
    %571 = vmatmul.bf16.gmra.mxu0 %v263
    %v572 = vpop.f32.mrf.mxu0
    %v573 = vadd.f32 %v180, %v572
    %v574 = vpop.f32.mrf.mxu0
    %v575 = vadd.f32 %v180, %v574
    %576 = vmatmul.bf16.gmra.mxu0 %v264
    %v577 = vpop.f32.mrf.mxu0
    %v578 = vadd.f32 %v180, %v577
    %v579 = vpop.f32.mrf.mxu0
    %v580 = vadd.f32 %v180, %v579
    %581 = vmatmul.bf16.gmra.mxu0 %v265
    %v582 = vpop.f32.mrf.mxu0
    %v583 = vadd.f32 %v180, %v582
    %v584 = vpop.f32.mrf.mxu0
    %v585 = vadd.f32 %v180, %v584
    %586 = vmatmul.bf16.gmra.mxu0 %v266
    %v587 = vpop.f32.mrf.mxu0
    %v588 = vadd.f32 %v180, %v587
    %v589 = vpop.f32.mrf.mxu0
    %v590 = vadd.f32 %v180, %v589
    %591 = vmatmul.bf16.gmra.mxu0 %v267
    %v592 = vpop.f32.mrf.mxu0
    %v593 = vadd.f32 %v180, %v592
    %v594 = vpop.f32.mrf.mxu0
    %v595 = vadd.f32 %v180, %v594
    %596 = vmatmul.bf16.gmra.mxu0 %v268
    %v597 = vpop.f32.mrf.mxu0
    %v598 = vadd.f32 %v180, %v597
    %v599 = vpop.f32.mrf.mxu0
    %v600 = vadd.f32 %v180, %v599
    %601 = vmatmul.bf16.gmra.mxu0 %v269
    %v602 = vpop.f32.mrf.mxu0
    %v603 = vadd.f32 %v180, %v602
    %v604 = vpop.f32.mrf.mxu0
    %v605 = vadd.f32 %v180, %v604
    %606 = vmatmul.bf16.gmra.mxu0 %v270
    %v607 = vpop.f32.mrf.mxu0
    %v608 = vadd.f32 %v180, %v607
    %v609 = vpop.f32.mrf.mxu0
    %v610 = vadd.f32 %v180, %v609
    %611 = vmatmul.bf16.gmra.mxu0 %v271
    %v612 = vpop.f32.mrf.mxu0
    %v613 = vadd.f32 %v180, %v612
    %v614 = vpop.f32.mrf.mxu0
    %v615 = vadd.f32 %v180, %v614
    %616 = vdwg.mxu0
    %617 = vmatpush.bf16.msra.mxu0 %v475
    %618 = vmatpush.bf16.msra.mxu0 %v469
    %619 = vmatpush.bf16.msra.mxu0 %v463
    %620 = vmatpush.bf16.msra.mxu0 %v457
    %621 = vmatpush.bf16.msra.mxu0 %v451
    %622 = vmatpush.bf16.msra.mxu0 %v445
    %623 = vmatpush.bf16.msra.mxu0 %v439
    %624 = vmatpush.bf16.msra.mxu0 %v433
    %625 = vmatmul.bf16.gmra.mxu0 %v256
    %v626 = vpop.f32.mrf.mxu0
    %v627 = vadd.f32 %v181, %v626
    %v628 = vpop.f32.mrf.mxu0
    %v629 = vadd.f32 %v181, %v628
    %630 = vmatmul.bf16.gmra.mxu0 %v257
    %v631 = vpop.f32.mrf.mxu0
    %v632 = vadd.f32 %v181, %v631
    %v633 = vpop.f32.mrf.mxu0
    %v634 = vadd.f32 %v181, %v633
    %635 = vmatmul.bf16.gmra.mxu0 %v258
    %v636 = vpop.f32.mrf.mxu0
    %v637 = vadd.f32 %v181, %v636
    %v638 = vpop.f32.mrf.mxu0
    %v639 = vadd.f32 %v181, %v638
    %640 = vmatmul.bf16.gmra.mxu0 %v259
    %v641 = vpop.f32.mrf.mxu0
    %v642 = vadd.f32 %v181, %v641
    %v643 = vpop.f32.mrf.mxu0
    %v644 = vadd.f32 %v181, %v643
    %645 = vmatmul.bf16.gmra.mxu0 %v260
    %v646 = vpop.f32.mrf.mxu0
    %v647 = vadd.f32 %v181, %v646
    %v648 = vpop.f32.mrf.mxu0
    %v649 = vadd.f32 %v181, %v648
    %650 = vmatmul.bf16.gmra.mxu0 %v261
    %v651 = vpop.f32.mrf.mxu0
    %v652 = vadd.f32 %v181, %v651
    %v653 = vpop.f32.mrf.mxu0
    %v654 = vadd.f32 %v181, %v653
    %655 = vmatmul.bf16.gmra.mxu0 %v262
    %v656 = vpop.f32.mrf.mxu0
    %v657 = vadd.f32 %v181, %v656
    %v658 = vpop.f32.mrf.mxu0
    %v659 = vadd.f32 %v181, %v658
    %660 = vmatmul.bf16.gmra.mxu0 %v263
    %v661 = vpop.f32.mrf.mxu0
    %v662 = vadd.f32 %v181, %v661
    %v663 = vpop.f32.mrf.mxu0
    %v664 = vadd.f32 %v181, %v663
    %665 = vmatmul.bf16.gmra.mxu0 %v264
    %v666 = vpop.f32.mrf.mxu0
    %v667 = vadd.f32 %v181, %v666
    %v668 = vpop.f32.mrf.mxu0
    %v669 = vadd.f32 %v181, %v668
    %670 = vmatmul.bf16.gmra.mxu0 %v265
    %v671 = vpop.f32.mrf.mxu0
    %v672 = vadd.f32 %v181, %v671
    %v673 = vpop.f32.mrf.mxu0
    %v674 = vadd.f32 %v181, %v673
    %675 = vmatmul.bf16.gmra.mxu0 %v266
    %v676 = vpop.f32.mrf.mxu0
    %v677 = vadd.f32 %v181, %v676
    %v678 = vpop.f32.mrf.mxu0
    %v679 = vadd.f32 %v181, %v678
    %680 = vmatmul.bf16.gmra.mxu0 %v267
    %v681 = vpop.f32.mrf.mxu0
    %v682 = vadd.f32 %v181, %v681
    %v683 = vpop.f32.mrf.mxu0
    %v684 = vadd.f32 %v181, %v683
    %685 = vmatmul.bf16.gmra.mxu0 %v268
    %v686 = vpop.f32.mrf.mxu0
    %v687 = vadd.f32 %v181, %v686
    %v688 = vpop.f32.mrf.mxu0
    %v689 = vadd.f32 %v181, %v688
    %690 = vmatmul.bf16.gmra.mxu0 %v269
    %v691 = vpop.f32.mrf.mxu0
    %v692 = vadd.f32 %v181, %v691
    %v693 = vpop.f32.mrf.mxu0
    %v694 = vadd.f32 %v181, %v693
    %695 = vmatmul.bf16.gmra.mxu0 %v270
    %v696 = vpop.f32.mrf.mxu0
    %v697 = vadd.f32 %v181, %v696
    %v698 = vpop.f32.mrf.mxu0
    %v699 = vadd.f32 %v181, %v698
    %700 = vmatmul.bf16.gmra.mxu0 %v271
    %v701 = vpop.f32.mrf.mxu0
    %v702 = vadd.f32 %v181, %v701
    %v703 = vpop.f32.mrf.mxu0
    %v704 = vadd.f32 %v181, %v703
    %705 = vdwg.mxu0
    %706 = vmatpush.bf16.msra.mxu0 %v476
    %707 = vmatpush.bf16.msra.mxu0 %v470
    %708 = vmatpush.bf16.msra.mxu0 %v464
    %709 = vmatpush.bf16.msra.mxu0 %v458
    %710 = vmatpush.bf16.msra.mxu0 %v452
    %711 = vmatpush.bf16.msra.mxu0 %v446
    %712 = vmatpush.bf16.msra.mxu0 %v440
    %713 = vmatpush.bf16.msra.mxu0 %v434
    %714 = vmatmul.bf16.gmra.mxu0 %v256
    %v715 = vpop.f32.mrf.mxu0
    %v716 = vadd.f32 %v182, %v715
    %v717 = vpop.f32.mrf.mxu0
    %v718 = vadd.f32 %v182, %v717
    %719 = vmatmul.bf16.gmra.mxu0 %v257
    %v720 = vpop.f32.mrf.mxu0
    %v721 = vadd.f32 %v182, %v720
    %v722 = vpop.f32.mrf.mxu0
    %v723 = vadd.f32 %v182, %v722
    %724 = vmatmul.bf16.gmra.mxu0 %v258
    %v725 = vpop.f32.mrf.mxu0
    %v726 = vadd.f32 %v182, %v725
    %v727 = vpop.f32.mrf.mxu0
    %v728 = vadd.f32 %v182, %v727
    %729 = vmatmul.bf16.gmra.mxu0 %v259
    %v730 = vpop.f32.mrf.mxu0
    %v731 = vadd.f32 %v182, %v730
    %v732 = vpop.f32.mrf.mxu0
    %v733 = vadd.f32 %v182, %v732
    %734 = vmatmul.bf16.gmra.mxu0 %v260
    %v735 = vpop.f32.mrf.mxu0
    %v736 = vadd.f32 %v182, %v735
    %v737 = vpop.f32.mrf.mxu0
    %v738 = vadd.f32 %v182, %v737
    %739 = vmatmul.bf16.gmra.mxu0 %v261
    %v740 = vpop.f32.mrf.mxu0
    %v741 = vadd.f32 %v182, %v740
    %v742 = vpop.f32.mrf.mxu0
    %v743 = vadd.f32 %v182, %v742
    %744 = vmatmul.bf16.gmra.mxu0 %v262
    %v745 = vpop.f32.mrf.mxu0
    %v746 = vadd.f32 %v182, %v745
    %v747 = vpop.f32.mrf.mxu0
    %v748 = vadd.f32 %v182, %v747
    %749 = vmatmul.bf16.gmra.mxu0 %v263
    %v750 = vpop.f32.mrf.mxu0
    %v751 = vadd.f32 %v182, %v750
    %v752 = vpop.f32.mrf.mxu0
    %v753 = vadd.f32 %v182, %v752
    %754 = vmatmul.bf16.gmra.mxu0 %v264
    %v755 = vpop.f32.mrf.mxu0
    %v756 = vadd.f32 %v182, %v755
    %v757 = vpop.f32.mrf.mxu0
    %v758 = vadd.f32 %v182, %v757
    %759 = vmatmul.bf16.gmra.mxu0 %v265
    %v760 = vpop.f32.mrf.mxu0
    %v761 = vadd.f32 %v182, %v760
    %v762 = vpop.f32.mrf.mxu0
    %v763 = vadd.f32 %v182, %v762
    %764 = vmatmul.bf16.gmra.mxu0 %v266
    %v765 = vpop.f32.mrf.mxu0
    %v766 = vadd.f32 %v182, %v765
    %v767 = vpop.f32.mrf.mxu0
    %v768 = vadd.f32 %v182, %v767
    %769 = vmatmul.bf16.gmra.mxu0 %v267
    %v770 = vpop.f32.mrf.mxu0
    %v771 = vadd.f32 %v182, %v770
    %v772 = vpop.f32.mrf.mxu0
    %v773 = vadd.f32 %v182, %v772
    %774 = vmatmul.bf16.gmra.mxu0 %v268
    %v775 = vpop.f32.mrf.mxu0
    %v776 = vadd.f32 %v182, %v775
    %v777 = vpop.f32.mrf.mxu0
    %v778 = vadd.f32 %v182, %v777
    %779 = vmatmul.bf16.gmra.mxu0 %v269
    %v780 = vpop.f32.mrf.mxu0
    %v781 = vadd.f32 %v182, %v780
    %v782 = vpop.f32.mrf.mxu0
    %v783 = vadd.f32 %v182, %v782
    %784 = vmatmul.bf16.gmra.mxu0 %v270
    %v785 = vpop.f32.mrf.mxu0
    %v786 = vadd.f32 %v182, %v785
    %v787 = vpop.f32.mrf.mxu0
    %v788 = vadd.f32 %v182, %v787
    %789 = vmatmul.bf16.gmra.mxu0 %v271
    %v790 = vpop.f32.mrf.mxu0
    %v791 = vadd.f32 %v182, %v790
    %v792 = vpop.f32.mrf.mxu0
    %v793 = vadd.f32 %v182, %v792
    %794 = vdwg.mxu0
    %795 = vmatpush.bf16.msra.mxu0 %v477
    %796 = vmatpush.bf16.msra.mxu0 %v471
    %797 = vmatpush.bf16.msra.mxu0 %v465
    %798 = vmatpush.bf16.msra.mxu0 %v459
    %799 = vmatpush.bf16.msra.mxu0 %v453
    %800 = vmatpush.bf16.msra.mxu0 %v447
    %801 = vmatpush.bf16.msra.mxu0 %v441
    %802 = vmatpush.bf16.msra.mxu0 %v435
    %803 = vmatmul.bf16.gmra.mxu0 %v256
    %v804 = vpop.f32.mrf.mxu0
    %v805 = vadd.f32 %v183, %v804
    %v806 = vpop.f32.mrf.mxu0
    %v807 = vadd.f32 %v183, %v806
    %808 = vmatmul.bf16.gmra.mxu0 %v257
    %v809 = vpop.f32.mrf.mxu0
    %v810 = vadd.f32 %v183, %v809
    %v811 = vpop.f32.mrf.mxu0
    %v812 = vadd.f32 %v183, %v811
    %813 = vmatmul.bf16.gmra.mxu0 %v258
    %v814 = vpop.f32.mrf.mxu0
    %v815 = vadd.f32 %v183, %v814
    %v816 = vpop.f32.mrf.mxu0
    %v817 = vadd.f32 %v183, %v816
    %818 = vmatmul.bf16.gmra.mxu0 %v259
    %v819 = vpop.f32.mrf.mxu0
    %v820 = vadd.f32 %v183, %v819
    %v821 = vpop.f32.mrf.mxu0
    %v822 = vadd.f32 %v183, %v821
    %823 = vmatmul.bf16.gmra.mxu0 %v260
    %v824 = vpop.f32.mrf.mxu0
    %v825 = vadd.f32 %v183, %v824
    %v826 = vpop.f32.mrf.mxu0
    %v827 = vadd.f32 %v183, %v826
    %828 = vmatmul.bf16.gmra.mxu0 %v261
    %v829 = vpop.f32.mrf.mxu0
    %v830 = vadd.f32 %v183, %v829
    %v831 = vpop.f32.mrf.mxu0
    %v832 = vadd.f32 %v183, %v831
    %833 = vmatmul.bf16.gmra.mxu0 %v262
    %v834 = vpop.f32.mrf.mxu0
    %v835 = vadd.f32 %v183, %v834
    %v836 = vpop.f32.mrf.mxu0
    %v837 = vadd.f32 %v183, %v836
    %838 = vmatmul.bf16.gmra.mxu0 %v263
    %v839 = vpop.f32.mrf.mxu0
    %v840 = vadd.f32 %v183, %v839
    %v841 = vpop.f32.mrf.mxu0
    %v842 = vadd.f32 %v183, %v841
    %843 = vmatmul.bf16.gmra.mxu0 %v264
    %v844 = vpop.f32.mrf.mxu0
    %v845 = vadd.f32 %v183, %v844
    %v846 = vpop.f32.mrf.mxu0
    %v847 = vadd.f32 %v183, %v846
    %848 = vmatmul.bf16.gmra.mxu0 %v265
    %v849 = vpop.f32.mrf.mxu0
    %v850 = vadd.f32 %v183, %v849
    %v851 = vpop.f32.mrf.mxu0
    %v852 = vadd.f32 %v183, %v851
    %853 = vmatmul.bf16.gmra.mxu0 %v266
    %v854 = vpop.f32.mrf.mxu0
    %v855 = vadd.f32 %v183, %v854
    %v856 = vpop.f32.mrf.mxu0
    %v857 = vadd.f32 %v183, %v856
    %858 = vmatmul.bf16.gmra.mxu0 %v267
    %v859 = vpop.f32.mrf.mxu0
    %v860 = vadd.f32 %v183, %v859
    %v861 = vpop.f32.mrf.mxu0
    %v862 = vadd.f32 %v183, %v861
    %863 = vmatmul.bf16.gmra.mxu0 %v268
    %v864 = vpop.f32.mrf.mxu0
    %v865 = vadd.f32 %v183, %v864
    %v866 = vpop.f32.mrf.mxu0
    %v867 = vadd.f32 %v183, %v866
    %868 = vmatmul.bf16.gmra.mxu0 %v269
    %v869 = vpop.f32.mrf.mxu0
    %v870 = vadd.f32 %v183, %v869
    %v871 = vpop.f32.mrf.mxu0
    %v872 = vadd.f32 %v183, %v871
    %873 = vmatmul.bf16.gmra.mxu0 %v270
    %v874 = vpop.f32.mrf.mxu0
    %v875 = vadd.f32 %v183, %v874
    %v876 = vpop.f32.mrf.mxu0
    %v877 = vadd.f32 %v183, %v876
    %878 = vmatmul.bf16.gmra.mxu0 %v271
    %v879 = vpop.f32.mrf.mxu0
    %v880 = vadd.f32 %v183, %v879
    %v881 = vpop.f32.mrf.mxu0
    %v882 = vadd.f32 %v183, %v881
    %883 = vdwg.mxu0
    %884 = vmatpush.bf16.msra.mxu0 %v478
    %885 = vmatpush.bf16.msra.mxu0 %v472
    %886 = vmatpush.bf16.msra.mxu0 %v466
    %887 = vmatpush.bf16.msra.mxu0 %v460
    %888 = vmatpush.bf16.msra.mxu0 %v454
    %889 = vmatpush.bf16.msra.mxu0 %v448
    %890 = vmatpush.bf16.msra.mxu0 %v442
    %891 = vmatpush.bf16.msra.mxu0 %v436
    %892 = vmatmul.bf16.gmra.mxu0 %v256
    %v893 = vpop.f32.mrf.mxu0
    %v894 = vadd.f32 %v184, %v893
    %v895 = vpop.f32.mrf.mxu0
    %v896 = vadd.f32 %v184, %v895
    %897 = vmatmul.bf16.gmra.mxu0 %v257
    %v898 = vpop.f32.mrf.mxu0
    %v899 = vadd.f32 %v184, %v898
    %v900 = vpop.f32.mrf.mxu0
    %v901 = vadd.f32 %v184, %v900
    %902 = vmatmul.bf16.gmra.mxu0 %v258
    %v903 = vpop.f32.mrf.mxu0
    %v904 = vadd.f32 %v184, %v903
    %v905 = vpop.f32.mrf.mxu0
    %v906 = vadd.f32 %v184, %v905
    %907 = vmatmul.bf16.gmra.mxu0 %v259
    %v908 = vpop.f32.mrf.mxu0
    %v909 = vadd.f32 %v184, %v908
    %v910 = vpop.f32.mrf.mxu0
    %v911 = vadd.f32 %v184, %v910
    %912 = vmatmul.bf16.gmra.mxu0 %v260
    %v913 = vpop.f32.mrf.mxu0
    %v914 = vadd.f32 %v184, %v913
    %v915 = vpop.f32.mrf.mxu0
    %v916 = vadd.f32 %v184, %v915
    %917 = vmatmul.bf16.gmra.mxu0 %v261
    %v918 = vpop.f32.mrf.mxu0
    %v919 = vadd.f32 %v184, %v918
    %v920 = vpop.f32.mrf.mxu0
    %v921 = vadd.f32 %v184, %v920
    %922 = vmatmul.bf16.gmra.mxu0 %v262
    %v923 = vpop.f32.mrf.mxu0
    %v924 = vadd.f32 %v184, %v923
    %v925 = vpop.f32.mrf.mxu0
    %v926 = vadd.f32 %v184, %v925
    %927 = vmatmul.bf16.gmra.mxu0 %v263
    %v928 = vpop.f32.mrf.mxu0
    %v929 = vadd.f32 %v184, %v928
    %v930 = vpop.f32.mrf.mxu0
    %v931 = vadd.f32 %v184, %v930
    %932 = vmatmul.bf16.gmra.mxu0 %v264
    %v933 = vpop.f32.mrf.mxu0
    %v934 = vadd.f32 %v184, %v933
    %v935 = vpop.f32.mrf.mxu0
    %v936 = vadd.f32 %v184, %v935
    %937 = vmatmul.bf16.gmra.mxu0 %v265
    %v938 = vpop.f32.mrf.mxu0
    %v939 = vadd.f32 %v184, %v938
    %v940 = vpop.f32.mrf.mxu0
    %v941 = vadd.f32 %v184, %v940
    %942 = vmatmul.bf16.gmra.mxu0 %v266
    %v943 = vpop.f32.mrf.mxu0
    %v944 = vadd.f32 %v184, %v943
    %v945 = vpop.f32.mrf.mxu0
    %v946 = vadd.f32 %v184, %v945
    %947 = vmatmul.bf16.gmra.mxu0 %v267
    %v948 = vpop.f32.mrf.mxu0
    %v949 = vadd.f32 %v184, %v948
    %v950 = vpop.f32.mrf.mxu0
    %v951 = vadd.f32 %v184, %v950
    %952 = vmatmul.bf16.gmra.mxu0 %v268
    %v953 = vpop.f32.mrf.mxu0
    %v954 = vadd.f32 %v184, %v953
    %v955 = vpop.f32.mrf.mxu0
    %v956 = vadd.f32 %v184, %v955
    %957 = vmatmul.bf16.gmra.mxu0 %v269
    %v958 = vpop.f32.mrf.mxu0
    %v959 = vadd.f32 %v184, %v958
    %v960 = vpop.f32.mrf.mxu0
    %v961 = vadd.f32 %v184, %v960
    %962 = vmatmul.bf16.gmra.mxu0 %v270
    %v963 = vpop.f32.mrf.mxu0
    %v964 = vadd.f32 %v184, %v963
    %v965 = vpop.f32.mrf.mxu0
    %v966 = vadd.f32 %v184, %v965
    %967 = vmatmul.bf16.gmra.mxu0 %v271
    %v968 = vpop.f32.mrf.mxu0
    %v969 = vadd.f32 %v184, %v968
    %v970 = vpop.f32.mrf.mxu0
    %v971 = vadd.f32 %v184, %v970
    %972 = vdwg.mxu0
    %973 = vmatpush.bf16.msra.mxu0 %v479
    %974 = vmatpush.bf16.msra.mxu0 %v473
    %975 = vmatpush.bf16.msra.mxu0 %v467
    %976 = vmatpush.bf16.msra.mxu0 %v461
    %977 = vmatpush.bf16.msra.mxu0 %v455
    %978 = vmatpush.bf16.msra.mxu0 %v449
    %979 = vmatpush.bf16.msra.mxu0 %v443
    %980 = vmatpush.bf16.msra.mxu0 %v437
    %981 = vmatmul.bf16.gmra.mxu0 %v256
    %v982 = vpop.f32.mrf.mxu0
    %v983 = vadd.f32 %v185, %v982
    %v984 = vpop.f32.mrf.mxu0
    %v985 = vadd.f32 %v185, %v984
    %986 = vmatmul.bf16.gmra.mxu0 %v257
    %v987 = vpop.f32.mrf.mxu0
    %v988 = vadd.f32 %v185, %v987
    %v989 = vpop.f32.mrf.mxu0
    %v990 = vadd.f32 %v185, %v989
    %991 = vmatmul.bf16.gmra.mxu0 %v258
    %v992 = vpop.f32.mrf.mxu0
    %v993 = vadd.f32 %v185, %v992
    %v994 = vpop.f32.mrf.mxu0
    %v995 = vadd.f32 %v185, %v994
    %996 = vmatmul.bf16.gmra.mxu0 %v259
    %v997 = vpop.f32.mrf.mxu0
    %v998 = vadd.f32 %v185, %v997
    %v999 = vpop.f32.mrf.mxu0
    %v1000 = vadd.f32 %v185, %v999
    %1001 = vmatmul.bf16.gmra.mxu0 %v260
    %v1002 = vpop.f32.mrf.mxu0
    %v1003 = vadd.f32 %v185, %v1002
    %v1004 = vpop.f32.mrf.mxu0
    %v1005 = vadd.f32 %v185, %v1004
    %1006 = vmatmul.bf16.gmra.mxu0 %v261
    %v1007 = vpop.f32.mrf.mxu0
    %v1008 = vadd.f32 %v185, %v1007
    %v1009 = vpop.f32.mrf.mxu0
    %v1010 = vadd.f32 %v185, %v1009
    %1011 = vmatmul.bf16.gmra.mxu0 %v262
    %v1012 = vpop.f32.mrf.mxu0
    %v1013 = vadd.f32 %v185, %v1012
    %v1014 = vpop.f32.mrf.mxu0
    %v1015 = vadd.f32 %v185, %v1014
    %1016 = vmatmul.bf16.gmra.mxu0 %v263
    %v1017 = vpop.f32.mrf.mxu0
    %v1018 = vadd.f32 %v185, %v1017
    %v1019 = vpop.f32.mrf.mxu0
    %v1020 = vadd.f32 %v185, %v1019
    %1021 = vmatmul.bf16.gmra.mxu0 %v264
    %v1022 = vpop.f32.mrf.mxu0
    %v1023 = vadd.f32 %v185, %v1022
    %v1024 = vpop.f32.mrf.mxu0
    %v1025 = vadd.f32 %v185, %v1024
    %1026 = vmatmul.bf16.gmra.mxu0 %v265
    %v1027 = vpop.f32.mrf.mxu0
    %v1028 = vadd.f32 %v185, %v1027
    %v1029 = vpop.f32.mrf.mxu0
    %v1030 = vadd.f32 %v185, %v1029
    %1031 = vmatmul.bf16.gmra.mxu0 %v266
    %v1032 = vpop.f32.mrf.mxu0
    %v1033 = vadd.f32 %v185, %v1032
    %v1034 = vpop.f32.mrf.mxu0
    %v1035 = vadd.f32 %v185, %v1034
    %1036 = vmatmul.bf16.gmra.mxu0 %v267
    %v1037 = vpop.f32.mrf.mxu0
    %v1038 = vadd.f32 %v185, %v1037
    %v1039 = vpop.f32.mrf.mxu0
    %v1040 = vadd.f32 %v185, %v1039
    %1041 = vmatmul.bf16.gmra.mxu0 %v268
    %v1042 = vpop.f32.mrf.mxu0
    %v1043 = vadd.f32 %v185, %v1042
    %v1044 = vpop.f32.mrf.mxu0
    %v1045 = vadd.f32 %v185, %v1044
    %1046 = vmatmul.bf16.gmra.mxu0 %v269
    %v1047 = vpop.f32.mrf.mxu0
    %v1048 = vadd.f32 %v185, %v1047
    %v1049 = vpop.f32.mrf.mxu0
    %v1050 = vadd.f32 %v185, %v1049
    %1051 = vmatmul.bf16.gmra.mxu0 %v270
    %v1052 = vpop.f32.mrf.mxu0
    %v1053 = vadd.f32 %v185, %v1052
    %v1054 = vpop.f32.mrf.mxu0
    %v1055 = vadd.f32 %v185, %v1054
    %1056 = vmatmul.bf16.gmra.mxu0 %v271
    %v1057 = vpop.f32.mrf.mxu0
    %v1058 = vadd.f32 %v185, %v1057
    %v1059 = vpop.f32.mrf.mxu0
    %v1060 = vadd.f32 %v185, %v1059
    %1061 = vdwg.mxu0
    %v1062 = vld [vmem:[%s1] sm:$0xff]
    %v1063 = vld [vmem:[%s1 + $0x8] sm:$0xff]
    %v1066 = vrot.slane %v1062, 1
    %v1067 = vrot.slane %v1062, 2
    %v1068 = vrot.slane %v1062, 3
    %v1069 = vrot.slane %v1062, 4
    %v1070 = vrot.slane %v1062, 5
    %v1071 = vrot.slane %v1062, 6
    %v1072 = vrot.slane %v1062, 7
    %v1073 = vrot.slane %v1063, 1
    %v1074 = vrot.slane %v1063, 2
    %v1075 = vrot.slane %v1063, 3
    %v1076 = vrot.slane %v1063, 4
    %v1077 = vrot.slane %v1063, 5
    %v1078 = vrot.slane %v1063, 6
    %v1079 = vrot.slane %v1063, 7
    %v1080 = vperm.slane %v1062, 0
    %v1081 = vperm.slane %v1066, 0
    %v1082 = vperm.slane %v1067, 0
    %v1083 = vperm.slane %v1068, 0
    %v1084 = vperm.slane %v1069, 0
    %v1085 = vperm.slane %v1070, 0
    %v1086 = vperm.slane %v1071, 0
    %v1087 = vperm.slane %v1072, 0
    %v1088 = vperm.slane %v1063, 0
    %v1089 = vperm.slane %v1073, 0
    %v1090 = vperm.slane %v1074, 0
    %v1091 = vperm.slane %v1075, 0
    %v1092 = vperm.slane %v1076, 0
    %v1093 = vperm.slane %v1077, 0
    %v1094 = vperm.slane %v1078, 0
    %v1095 = vperm.slane %v1079, 0
    %v1112 = vld [vmem:[#allocation7] sm:$0xf]
    %v1113 = vld [vmem:[#allocation7 + $0x4] sm:$0xf]
    %v1114 = vld [vmem:[#allocation7 + $0x8] sm:$0xf]
    %v1115 = vld [vmem:[#allocation7 + $0xc] sm:$0xf]
    %v1116 = vld [vmem:[#allocation7 + $0x10] sm:$0xf]
    %v1117 = vld [vmem:[#allocation7 + $0x14] sm:$0xf]
    %v1118 = vld [vmem:[#allocation7 + $0x18] sm:$0xf]
    %v1119 = vld [vmem:[#allocation7 + $0x1c] sm:$0xf]
    %v1120 = vld [vmem:[#allocation7 + $0x20] sm:$0xf]
    %v1121 = vld [vmem:[#allocation7 + $0x24] sm:$0xf]
    %v1122 = vld [vmem:[#allocation7 + $0x28] sm:$0xf]
    %v1123 = vld [vmem:[#allocation7 + $0x2c] sm:$0xf]
    %v1124 = vld [vmem:[#allocation7 + $0x30] sm:$0xf]
    %v1125 = vld [vmem:[#allocation7 + $0x34] sm:$0xf]
    %v1126 = vld [vmem:[#allocation7 + $0x38] sm:$0xf]
    %v1127 = vld [vmem:[#allocation7 + $0x3c] sm:$0xf]
    %v1128 = vld [vmem:[#allocation7 + $0x40] sm:$0xf]
    %v1129 = vld [vmem:[#allocation7 + $0x44] sm:$0xf]
    %v1130 = vld [vmem:[#allocation7 + $0x48] sm:$0xf]
    %v1131 = vld [vmem:[#allocation7 + $0x4c] sm:$0xf]
    %v1132 = vld [vmem:[#allocation7 + $0x50] sm:$0xf]
    %v1133 = vld [vmem:[#allocation7 + $0x54] sm:$0xf]
    %v1134 = vld [vmem:[#allocation7 + $0x58] sm:$0xf]
    %v1135 = vld [vmem:[#allocation7 + $0x5c] sm:$0xf]
    %v1136 = vld [vmem:[#allocation7 + $0x60] sm:$0xf]
    %v1137 = vld [vmem:[#allocation7 + $0x64] sm:$0xf]
    %v1138 = vld [vmem:[#allocation7 + $0x68] sm:$0xf]
    %v1139 = vld [vmem:[#allocation7 + $0x6c] sm:$0xf]
    %v1140 = vld [vmem:[#allocation7 + $0x70] sm:$0xf]
    %v1141 = vld [vmem:[#allocation7 + $0x74] sm:$0xf]
    %v1142 = vld [vmem:[#allocation7 + $0x78] sm:$0xf]
    %v1143 = vld [vmem:[#allocation7 + $0x7c] sm:$0xf]
    %v1144 = vpack.c.bf16 %v538, %v538
    %v1145 = vpack.c.bf16 %v540, %v540
    %v1146 = vpack.c.bf16 %v543, %v543
    %v1147 = vpack.c.bf16 %v545, %v545
    %v1148 = vpack.c.bf16 %v548, %v548
    %v1149 = vpack.c.bf16 %v550, %v550
    %v1150 = vpack.c.bf16 %v553, %v553
    %v1151 = vpack.c.bf16 %v555, %v555
    %v1152 = vpack.c.bf16 %v558, %v558
    %v1153 = vpack.c.bf16 %v560, %v560
    %v1154 = vpack.c.bf16 %v563, %v563
    %v1155 = vpack.c.bf16 %v565, %v565
    %v1156 = vpack.c.bf16 %v568, %v568
    %v1157 = vpack.c.bf16 %v570, %v570
    %v1158 = vpack.c.bf16 %v573, %v573
    %v1159 = vpack.c.bf16 %v575, %v575
    %v1160 = vpack.c.bf16 %v578, %v578
    %v1161 = vpack.c.bf16 %v580, %v580
    %v1162 = vpack.c.bf16 %v583, %v583
    %v1163 = vpack.c.bf16 %v585, %v585
    %v1164 = vpack.c.bf16 %v588, %v588
    %v1165 = vpack.c.bf16 %v590, %v590
    %v1166 = vpack.c.bf16 %v593, %v593
    %v1167 = vpack.c.bf16 %v595, %v595
    %v1168 = vpack.c.bf16 %v598, %v598
    %v1169 = vpack.c.bf16 %v600, %v600
    %v1170 = vpack.c.bf16 %v603, %v603
    %v1171 = vpack.c.bf16 %v605, %v605
    %v1172 = vpack.c.bf16 %v608, %v608
    %v1173 = vpack.c.bf16 %v610, %v610
    %v1174 = vpack.c.bf16 %v613, %v613
    %v1175 = vpack.c.bf16 %v615, %v615
    %v1176 = vpack.c.bf16 %v716, %v716
    %v1177 = vpack.c.bf16 %v718, %v718
    %v1178 = vpack.c.bf16 %v721, %v721
    %v1179 = vpack.c.bf16 %v723, %v723
    %v1180 = vpack.c.bf16 %v726, %v726
    %v1181 = vpack.c.bf16 %v728, %v728
    %v1182 = vpack.c.bf16 %v731, %v731
    %v1183 = vpack.c.bf16 %v733, %v733
    %v1184 = vpack.c.bf16 %v736, %v736
    %v1185 = vpack.c.bf16 %v738, %v738
    %v1186 = vpack.c.bf16 %v741, %v741
    %v1187 = vpack.c.bf16 %v743, %v743
    %v1188 = vpack.c.bf16 %v746, %v746
    %v1189 = vpack.c.bf16 %v748, %v748
    %v1190 = vpack.c.bf16 %v751, %v751
    %v1191 = vpack.c.bf16 %v753, %v753
    %v1192 = vpack.c.bf16 %v756, %v756
    %v1193 = vpack.c.bf16 %v758, %v758
    %v1194 = vpack.c.bf16 %v761, %v761
    %v1195 = vpack.c.bf16 %v763, %v763
    %v1196 = vpack.c.bf16 %v766, %v766
    %v1197 = vpack.c.bf16 %v768, %v768
    %v1198 = vpack.c.bf16 %v771, %v771
    %v1199 = vpack.c.bf16 %v773, %v773
    %v1200 = vpack.c.bf16 %v776, %v776
    %v1201 = vpack.c.bf16 %v778, %v778
    %v1202 = vpack.c.bf16 %v781, %v781
    %v1203 = vpack.c.bf16 %v783, %v783
    %v1204 = vpack.c.bf16 %v786, %v786
    %v1205 = vpack.c.bf16 %v788, %v788
    %v1206 = vpack.c.bf16 %v791, %v791
    %v1207 = vpack.c.bf16 %v793, %v793
    %v1208 = vpack.c.bf16 %v894, %v894
    %v1209 = vpack.c.bf16 %v896, %v896
    %v1210 = vpack.c.bf16 %v899, %v899
    %v1211 = vpack.c.bf16 %v901, %v901
    %v1212 = vpack.c.bf16 %v904, %v904
    %v1213 = vpack.c.bf16 %v906, %v906
    %v1214 = vpack.c.bf16 %v909, %v909
    %v1215 = vpack.c.bf16 %v911, %v911
    %v1216 = vpack.c.bf16 %v914, %v914
    %v1217 = vpack.c.bf16 %v916, %v916
    %v1218 = vpack.c.bf16 %v919, %v919
    %v1219 = vpack.c.bf16 %v921, %v921
    %v1220 = vpack.c.bf16 %v924, %v924
    %v1221 = vpack.c.bf16 %v926, %v926
    %v1222 = vpack.c.bf16 %v929, %v929
    %v1223 = vpack.c.bf16 %v931, %v931
    %v1224 = vpack.c.bf16 %v934, %v934
    %v1225 = vpack.c.bf16 %v936, %v936
    %v1226 = vpack.c.bf16 %v939, %v939
    %v1227 = vpack.c.bf16 %v941, %v941
    %v1228 = vpack.c.bf16 %v944, %v944
    %v1229 = vpack.c.bf16 %v946, %v946
    %v1230 = vpack.c.bf16 %v949, %v949
    %v1231 = vpack.c.bf16 %v951, %v951
    %v1232 = vpack.c.bf16 %v954, %v954
    %v1233 = vpack.c.bf16 %v956, %v956
    %v1234 = vpack.c.bf16 %v959, %v959
    %v1235 = vpack.c.bf16 %v961, %v961
    %v1236 = vpack.c.bf16 %v964, %v964
    %v1237 = vpack.c.bf16 %v966, %v966
    %v1238 = vpack.c.bf16 %v969, %v969
    %v1239 = vpack.c.bf16 %v971, %v971
    %v1242 = vunpack.c.l.b16 %v1144
    %v1243 = vunpack.c.l.b16 %v1145
    %v1244 = vpack.c.b16 %v1243, %v1242
    %v1248 = vunpack.c.l.b16 %v1176
    %v1249 = vunpack.c.l.b16 %v1177
    %v1250 = vpack.c.b16 %v1249, %v1248
    %1252 = vmatpush.bf16.xpose.msra.mxu0 0
    %1253 = vmatpush.bf16.xpose.msra.mxu0 0
    %1254 = vmatpush.bf16.xpose.msra.mxu0 0
    %1255 = vmatpush.bf16.xpose.msra.mxu0 0
    %1256 = vmatpush.bf16.xpose.msra.mxu0 0
    %1257 = vmatpush.bf16.xpose.msra.mxu0 0
    %1258 = vmatpush.bf16.xpose.msra.mxu0 0
    %1259 = vmatpush.bf16.xpose.msra.mxu0 %v1250
    %1260 = vmatmul.bf16.gmra.mxu0 %v1244
    %v1261 = vpop.f32.mrf.mxu0
    %v1262 = vadd.f32 0.0, %v1261
    %v1263 = vpop.f32.mrf.mxu0
    %v1264 = vadd.f32 0.0, %v1263
    %1265 = vdwg.mxu0
    %v1268 = vunpack.c.l.b16 %v1146
    %v1269 = vunpack.c.l.b16 %v1147
    %v1270 = vpack.c.b16 %v1269, %v1268
    %v1274 = vunpack.c.l.b16 %v1178
    %v1275 = vunpack.c.l.b16 %v1179
    %v1276 = vpack.c.b16 %v1275, %v1274
    %1278 = vmatpush.bf16.xpose.msra.mxu0 0
    %1279 = vmatpush.bf16.xpose.msra.mxu0 0
    %1280 = vmatpush.bf16.xpose.msra.mxu0 0
    %1281 = vmatpush.bf16.xpose.msra.mxu0 0
    %1282 = vmatpush.bf16.xpose.msra.mxu0 0
    %1283 = vmatpush.bf16.xpose.msra.mxu0 0
    %1284 = vmatpush.bf16.xpose.msra.mxu0 0
    %1285 = vmatpush.bf16.xpose.msra.mxu0 %v1276
    %1286 = vmatmul.bf16.gmra.mxu0 %v1270
    %v1287 = vpop.f32.mrf.mxu0
    %v1288 = vadd.f32 0.0, %v1287
    %v1289 = vpop.f32.mrf.mxu0
    %v1290 = vadd.f32 0.0, %v1289
    %1291 = vdwg.mxu0
    %v1294 = vunpack.c.l.b16 %v1148
    %v1295 = vunpack.c.l.b16 %v1149
    %v1296 = vpack.c.b16 %v1295, %v1294
    %v1300 = vunpack.c.l.b16 %v1180
    %v1301 = vunpack.c.l.b16 %v1181
    %v1302 = vpack.c.b16 %v1301, %v1300
    %1304 = vmatpush.bf16.xpose.msra.mxu0 0
    %1305 = vmatpush.bf16.xpose.msra.mxu0 0
    %1306 = vmatpush.bf16.xpose.msra.mxu0 0
    %1307 = vmatpush.bf16.xpose.msra.mxu0 0
    %1308 = vmatpush.bf16.xpose.msra.mxu0 0
    %1309 = vmatpush.bf16.xpose.msra.mxu0 0
    %1310 = vmatpush.bf16.xpose.msra.mxu0 0
    %1311 = vmatpush.bf16.xpose.msra.mxu0 %v1302
    %1312 = vmatmul.bf16.gmra.mxu0 %v1296
    %v1313 = vpop.f32.mrf.mxu0
    %v1314 = vadd.f32 0.0, %v1313
    %v1315 = vpop.f32.mrf.mxu0
    %v1316 = vadd.f32 0.0, %v1315
    %1317 = vdwg.mxu0
    %v1320 = vunpack.c.l.b16 %v1150
    %v1321 = vunpack.c.l.b16 %v1151
    %v1322 = vpack.c.b16 %v1321, %v1320
    %v1326 = vunpack.c.l.b16 %v1182
    %v1327 = vunpack.c.l.b16 %v1183
    %v1328 = vpack.c.b16 %v1327, %v1326
    %1330 = vmatpush.bf16.xpose.msra.mxu0 0
    %1331 = vmatpush.bf16.xpose.msra.mxu0 0
    %1332 = vmatpush.bf16.xpose.msra.mxu0 0
    %1333 = vmatpush.bf16.xpose.msra.mxu0 0
    %1334 = vmatpush.bf16.xpose.msra.mxu0 0
    %1335 = vmatpush.bf16.xpose.msra.mxu0 0
    %1336 = vmatpush.bf16.xpose.msra.mxu0 0
    %1337 = vmatpush.bf16.xpose.msra.mxu0 %v1328
    %1338 = vmatmul.bf16.gmra.mxu0 %v1322
    %v1339 = vpop.f32.mrf.mxu0
    %v1340 = vadd.f32 0.0, %v1339
    %v1341 = vpop.f32.mrf.mxu0
    %v1342 = vadd.f32 0.0, %v1341
    %1343 = vdwg.mxu0
    %v1346 = vunpack.c.l.b16 %v1152
    %v1347 = vunpack.c.l.b16 %v1153
    %v1348 = vpack.c.b16 %v1347, %v1346
    %v1352 = vunpack.c.l.b16 %v1184
    %v1353 = vunpack.c.l.b16 %v1185
    %v1354 = vpack.c.b16 %v1353, %v1352
    %1356 = vmatpush.bf16.xpose.msra.mxu0 0
    %1357 = vmatpush.bf16.xpose.msra.mxu0 0
    %1358 = vmatpush.bf16.xpose.msra.mxu0 0
    %1359 = vmatpush.bf16.xpose.msra.mxu0 0
    %1360 = vmatpush.bf16.xpose.msra.mxu0 0
    %1361 = vmatpush.bf16.xpose.msra.mxu0 0
    %1362 = vmatpush.bf16.xpose.msra.mxu0 0
    %1363 = vmatpush.bf16.xpose.msra.mxu0 %v1354
    %1364 = vmatmul.bf16.gmra.mxu0 %v1348
    %v1365 = vpop.f32.mrf.mxu0
    %v1366 = vadd.f32 0.0, %v1365
    %v1367 = vpop.f32.mrf.mxu0
    %v1368 = vadd.f32 0.0, %v1367
    %1369 = vdwg.mxu0
    %v1372 = vunpack.c.l.b16 %v1154
    %v1373 = vunpack.c.l.b16 %v1155
    %v1374 = vpack.c.b16 %v1373, %v1372
    %v1378 = vunpack.c.l.b16 %v1186
    %v1379 = vunpack.c.l.b16 %v1187
    %v1380 = vpack.c.b16 %v1379, %v1378
    %1382 = vmatpush.bf16.xpose.msra.mxu0 0
    %1383 = vmatpush.bf16.xpose.msra.mxu0 0
    %1384 = vmatpush.bf16.xpose.msra.mxu0 0
    %1385 = vmatpush.bf16.xpose.msra.mxu0 0
    %1386 = vmatpush.bf16.xpose.msra.mxu0 0
    %1387 = vmatpush.bf16.xpose.msra.mxu0 0
    %1388 = vmatpush.bf16.xpose.msra.mxu0 0
    %1389 = vmatpush.bf16.xpose.msra.mxu0 %v1380
    %1390 = vmatmul.bf16.gmra.mxu0 %v1374
    %v1391 = vpop.f32.mrf.mxu0
    %v1392 = vadd.f32 0.0, %v1391
    %v1393 = vpop.f32.mrf.mxu0
    %v1394 = vadd.f32 0.0, %v1393
    %1395 = vdwg.mxu0
    %v1398 = vunpack.c.l.b16 %v1156
    %v1399 = vunpack.c.l.b16 %v1157
    %v1400 = vpack.c.b16 %v1399, %v1398
    %v1404 = vunpack.c.l.b16 %v1188
    %v1405 = vunpack.c.l.b16 %v1189
    %v1406 = vpack.c.b16 %v1405, %v1404
    %1408 = vmatpush.bf16.xpose.msra.mxu0 0
    %1409 = vmatpush.bf16.xpose.msra.mxu0 0
    %1410 = vmatpush.bf16.xpose.msra.mxu0 0
    %1411 = vmatpush.bf16.xpose.msra.mxu0 0
    %1412 = vmatpush.bf16.xpose.msra.mxu0 0
    %1413 = vmatpush.bf16.xpose.msra.mxu0 0
    %1414 = vmatpush.bf16.xpose.msra.mxu0 0
    %1415 = vmatpush.bf16.xpose.msra.mxu0 %v1406
    %1416 = vmatmul.bf16.gmra.mxu0 %v1400
    %v1417 = vpop.f32.mrf.mxu0
    %v1418 = vadd.f32 0.0, %v1417
    %v1419 = vpop.f32.mrf.mxu0
    %v1420 = vadd.f32 0.0, %v1419
    %1421 = vdwg.mxu0
    %v1424 = vunpack.c.l.b16 %v1158
    %v1425 = vunpack.c.l.b16 %v1159
    %v1426 = vpack.c.b16 %v1425, %v1424
    %v1430 = vunpack.c.l.b16 %v1190
    %v1431 = vunpack.c.l.b16 %v1191
    %v1432 = vpack.c.b16 %v1431, %v1430
    %1434 = vmatpush.bf16.xpose.msra.mxu0 0
    %1435 = vmatpush.bf16.xpose.msra.mxu0 0
    %1436 = vmatpush.bf16.xpose.msra.mxu0 0
    %1437 = vmatpush.bf16.xpose.msra.mxu0 0
    %1438 = vmatpush.bf16.xpose.msra.mxu0 0
    %1439 = vmatpush.bf16.xpose.msra.mxu0 0
    %1440 = vmatpush.bf16.xpose.msra.mxu0 0
    %1441 = vmatpush.bf16.xpose.msra.mxu0 %v1432
    %1442 = vmatmul.bf16.gmra.mxu0 %v1426
    %v1443 = vpop.f32.mrf.mxu0
    %v1444 = vadd.f32 0.0, %v1443
    %v1445 = vpop.f32.mrf.mxu0
    %v1446 = vadd.f32 0.0, %v1445
    %1447 = vdwg.mxu0
    %v1450 = vunpack.c.l.b16 %v1160
    %v1451 = vunpack.c.l.b16 %v1161
    %v1452 = vpack.c.b16 %v1451, %v1450
    %v1456 = vunpack.c.l.b16 %v1192
    %v1457 = vunpack.c.l.b16 %v1193
    %v1458 = vpack.c.b16 %v1457, %v1456
    %1460 = vmatpush.bf16.xpose.msra.mxu0 0
    %1461 = vmatpush.bf16.xpose.msra.mxu0 0
    %1462 = vmatpush.bf16.xpose.msra.mxu0 0
    %1463 = vmatpush.bf16.xpose.msra.mxu0 0
    %1464 = vmatpush.bf16.xpose.msra.mxu0 0
    %1465 = vmatpush.bf16.xpose.msra.mxu0 0
    %1466 = vmatpush.bf16.xpose.msra.mxu0 0
    %1467 = vmatpush.bf16.xpose.msra.mxu0 %v1458
    %1468 = vmatmul.bf16.gmra.mxu0 %v1452
    %v1469 = vpop.f32.mrf.mxu0
    %v1470 = vadd.f32 0.0, %v1469
    %v1471 = vpop.f32.mrf.mxu0
    %v1472 = vadd.f32 0.0, %v1471
    %1473 = vdwg.mxu0
    %v1476 = vunpack.c.l.b16 %v1162
    %v1477 = vunpack.c.l.b16 %v1163
    %v1478 = vpack.c.b16 %v1477, %v1476
    %v1482 = vunpack.c.l.b16 %v1194
    %v1483 = vunpack.c.l.b16 %v1195
    %v1484 = vpack.c.b16 %v1483, %v1482
    %1486 = vmatpush.bf16.xpose.msra.mxu0 0
    %1487 = vmatpush.bf16.xpose.msra.mxu0 0
    %1488 = vmatpush.bf16.xpose.msra.mxu0 0
    %1489 = vmatpush.bf16.xpose.msra.mxu0 0
    %1490 = vmatpush.bf16.xpose.msra.mxu0 0
    %1491 = vmatpush.bf16.xpose.msra.mxu0 0
    %1492 = vmatpush.bf16.xpose.msra.mxu0 0
    %1493 = vmatpush.bf16.xpose.msra.mxu0 %v1484
    %1494 = vmatmul.bf16.gmra.mxu0 %v1478
    %v1495 = vpop.f32.mrf.mxu0
    %v1496 = vadd.f32 0.0, %v1495
    %v1497 = vpop.f32.mrf.mxu0
    %v1498 = vadd.f32 0.0, %v1497
    %1499 = vdwg.mxu0
    %v1502 = vunpack.c.l.b16 %v1164
    %v1503 = vunpack.c.l.b16 %v1165
    %v1504 = vpack.c.b16 %v1503, %v1502
    %v1508 = vunpack.c.l.b16 %v1196
    %v1509 = vunpack.c.l.b16 %v1197
    %v1510 = vpack.c.b16 %v1509, %v1508
    %1512 = vmatpush.bf16.xpose.msra.mxu0 0
    %1513 = vmatpush.bf16.xpose.msra.mxu0 0
    %1514 = vmatpush.bf16.xpose.msra.mxu0 0
    %1515 = vmatpush.bf16.xpose.msra.mxu0 0
    %1516 = vmatpush.bf16.xpose.msra.mxu0 0
    %1517 = vmatpush.bf16.xpose.msra.mxu0 0
    %1518 = vmatpush.bf16.xpose.msra.mxu0 0
    %1519 = vmatpush.bf16.xpose.msra.mxu0 %v1510
    %1520 = vmatmul.bf16.gmra.mxu0 %v1504
    %v1521 = vpop.f32.mrf.mxu0
    %v1522 = vadd.f32 0.0, %v1521
    %v1523 = vpop.f32.mrf.mxu0
    %v1524 = vadd.f32 0.0, %v1523
    %1525 = vdwg.mxu0
    %v1528 = vunpack.c.l.b16 %v1166
    %v1529 = vunpack.c.l.b16 %v1167
    %v1530 = vpack.c.b16 %v1529, %v1528
    %v1534 = vunpack.c.l.b16 %v1198
    %v1535 = vunpack.c.l.b16 %v1199
    %v1536 = vpack.c.b16 %v1535, %v1534
    %1538 = vmatpush.bf16.xpose.msra.mxu0 0
    %1539 = vmatpush.bf16.xpose.msra.mxu0 0
    %1540 = vmatpush.bf16.xpose.msra.mxu0 0
    %1541 = vmatpush.bf16.xpose.msra.mxu0 0
    %1542 = vmatpush.bf16.xpose.msra.mxu0 0
    %1543 = vmatpush.bf16.xpose.msra.mxu0 0
    %1544 = vmatpush.bf16.xpose.msra.mxu0 0
    %1545 = vmatpush.bf16.xpose.msra.mxu0 %v1536
    %1546 = vmatmul.bf16.gmra.mxu0 %v1530
    %v1547 = vpop.f32.mrf.mxu0
    %v1548 = vadd.f32 0.0, %v1547
    %v1549 = vpop.f32.mrf.mxu0
    %v1550 = vadd.f32 0.0, %v1549
    %1551 = vdwg.mxu0
    %v1554 = vunpack.c.l.b16 %v1168
    %v1555 = vunpack.c.l.b16 %v1169
    %v1556 = vpack.c.b16 %v1555, %v1554
    %v1560 = vunpack.c.l.b16 %v1200
    %v1561 = vunpack.c.l.b16 %v1201
    %v1562 = vpack.c.b16 %v1561, %v1560
    %1564 = vmatpush.bf16.xpose.msra.mxu0 0
    %1565 = vmatpush.bf16.xpose.msra.mxu0 0
    %1566 = vmatpush.bf16.xpose.msra.mxu0 0
    %1567 = vmatpush.bf16.xpose.msra.mxu0 0
    %1568 = vmatpush.bf16.xpose.msra.mxu0 0
    %1569 = vmatpush.bf16.xpose.msra.mxu0 0
    %1570 = vmatpush.bf16.xpose.msra.mxu0 0
    %1571 = vmatpush.bf16.xpose.msra.mxu0 %v1562
    %1572 = vmatmul.bf16.gmra.mxu0 %v1556
    %v1573 = vpop.f32.mrf.mxu0
    %v1574 = vadd.f32 0.0, %v1573
    %v1575 = vpop.f32.mrf.mxu0
    %v1576 = vadd.f32 0.0, %v1575
    %1577 = vdwg.mxu0
    %v1580 = vunpack.c.l.b16 %v1170
    %v1581 = vunpack.c.l.b16 %v1171
    %v1582 = vpack.c.b16 %v1581, %v1580
    %v1586 = vunpack.c.l.b16 %v1202
    %v1587 = vunpack.c.l.b16 %v1203
    %v1588 = vpack.c.b16 %v1587, %v1586
    %1590 = vmatpush.bf16.xpose.msra.mxu0 0
    %1591 = vmatpush.bf16.xpose.msra.mxu0 0
    %1592 = vmatpush.bf16.xpose.msra.mxu0 0
    %1593 = vmatpush.bf16.xpose.msra.mxu0 0
    %1594 = vmatpush.bf16.xpose.msra.mxu0 0
    %1595 = vmatpush.bf16.xpose.msra.mxu0 0
    %1596 = vmatpush.bf16.xpose.msra.mxu0 0
    %1597 = vmatpush.bf16.xpose.msra.mxu0 %v1588
    %1598 = vmatmul.bf16.gmra.mxu0 %v1582
    %v1599 = vpop.f32.mrf.mxu0
    %v1600 = vadd.f32 0.0, %v1599
    %v1601 = vpop.f32.mrf.mxu0
    %v1602 = vadd.f32 0.0, %v1601
    %1603 = vdwg.mxu0
    %v1606 = vunpack.c.l.b16 %v1172
    %v1607 = vunpack.c.l.b16 %v1173
    %v1608 = vpack.c.b16 %v1607, %v1606
    %v1612 = vunpack.c.l.b16 %v1204
    %v1613 = vunpack.c.l.b16 %v1205
    %v1614 = vpack.c.b16 %v1613, %v1612
    %1616 = vmatpush.bf16.xpose.msra.mxu0 0
    %1617 = vmatpush.bf16.xpose.msra.mxu0 0
    %1618 = vmatpush.bf16.xpose.msra.mxu0 0
    %1619 = vmatpush.bf16.xpose.msra.mxu0 0
    %1620 = vmatpush.bf16.xpose.msra.mxu0 0
    %1621 = vmatpush.bf16.xpose.msra.mxu0 0
    %1622 = vmatpush.bf16.xpose.msra.mxu0 0
    %1623 = vmatpush.bf16.xpose.msra.mxu0 %v1614
    %1624 = vmatmul.bf16.gmra.mxu0 %v1608
    %v1625 = vpop.f32.mrf.mxu0
    %v1626 = vadd.f32 0.0, %v1625
    %v1627 = vpop.f32.mrf.mxu0
    %v1628 = vadd.f32 0.0, %v1627
    %1629 = vdwg.mxu0
    %v1632 = vunpack.c.l.b16 %v1174
    %v1633 = vunpack.c.l.b16 %v1175
    %v1634 = vpack.c.b16 %v1633, %v1632
    %v1638 = vunpack.c.l.b16 %v1206
    %v1639 = vunpack.c.l.b16 %v1207
    %v1640 = vpack.c.b16 %v1639, %v1638
    %1642 = vmatpush.bf16.xpose.msra.mxu0 0
    %1643 = vmatpush.bf16.xpose.msra.mxu0 0
    %1644 = vmatpush.bf16.xpose.msra.mxu0 0
    %1645 = vmatpush.bf16.xpose.msra.mxu0 0
    %1646 = vmatpush.bf16.xpose.msra.mxu0 0
    %1647 = vmatpush.bf16.xpose.msra.mxu0 0
    %1648 = vmatpush.bf16.xpose.msra.mxu0 0
    %1649 = vmatpush.bf16.xpose.msra.mxu0 %v1640
    %1650 = vmatmul.bf16.gmra.mxu0 %v1634
    %v1651 = vpop.f32.mrf.mxu0
    %v1652 = vadd.f32 0.0, %v1651
    %v1653 = vpop.f32.mrf.mxu0
    %v1654 = vadd.f32 0.0, %v1653
    %1655 = vdwg.mxu0
    %v1656 = vmul.f32 %v1262, 0.25
    %v1657 = vmul.f32 %v1264, 0.25
    %v1658 = vmul.f32 %v1288, 0.25
    %v1659 = vmul.f32 %v1290, 0.25
    %v1660 = vmul.f32 %v1314, 0.25
    %v1661 = vmul.f32 %v1316, 0.25
    %v1662 = vmul.f32 %v1340, 0.25
    %v1663 = vmul.f32 %v1342, 0.25
    %v1664 = vmul.f32 %v1366, 0.25
    %v1665 = vmul.f32 %v1368, 0.25
    %v1666 = vmul.f32 %v1392, 0.25
    %v1667 = vmul.f32 %v1394, 0.25
    %v1668 = vmul.f32 %v1418, 0.25
    %v1669 = vmul.f32 %v1420, 0.25
    %v1670 = vmul.f32 %v1444, 0.25
    %v1671 = vmul.f32 %v1446, 0.25
    %v1672 = vmul.f32 %v1470, 0.25
    %v1673 = vmul.f32 %v1472, 0.25
    %v1674 = vmul.f32 %v1496, 0.25
    %v1675 = vmul.f32 %v1498, 0.25
    %v1676 = vmul.f32 %v1522, 0.25
    %v1677 = vmul.f32 %v1524, 0.25
    %v1678 = vmul.f32 %v1548, 0.25
    %v1679 = vmul.f32 %v1550, 0.25
    %v1680 = vmul.f32 %v1574, 0.25
    %v1681 = vmul.f32 %v1576, 0.25
    %v1682 = vmul.f32 %v1600, 0.25
    %v1683 = vmul.f32 %v1602, 0.25
    %v1684 = vmul.f32 %v1626, 0.25
    %v1685 = vmul.f32 %v1628, 0.25
    %v1686 = vmul.f32 %v1652, 0.25
    %v1687 = vmul.f32 %v1654, 0.25
    %v1688 = vadd.f32 %v1656, %v1080
    %v1689 = vadd.f32 %v1657, %v1080
    %v1690 = vadd.f32 %v1658, %v1081
    %v1691 = vadd.f32 %v1659, %v1081
    %v1692 = vadd.f32 %v1660, %v1082
    %v1693 = vadd.f32 %v1661, %v1082
    %v1694 = vadd.f32 %v1662, %v1083
    %v1695 = vadd.f32 %v1663, %v1083
    %v1696 = vadd.f32 %v1664, %v1084
    %v1697 = vadd.f32 %v1665, %v1084
    %v1698 = vadd.f32 %v1666, %v1085
    %v1699 = vadd.f32 %v1667, %v1085
    %v1700 = vadd.f32 %v1668, %v1086
    %v1701 = vadd.f32 %v1669, %v1086
    %v1702 = vadd.f32 %v1670, %v1087
    %v1703 = vadd.f32 %v1671, %v1087
    %v1704 = vadd.f32 %v1672, %v1088
    %v1705 = vadd.f32 %v1673, %v1088
    %v1706 = vadd.f32 %v1674, %v1089
    %v1707 = vadd.f32 %v1675, %v1089
    %v1708 = vadd.f32 %v1676, %v1090
    %v1709 = vadd.f32 %v1677, %v1090
    %v1710 = vadd.f32 %v1678, %v1091
    %v1711 = vadd.f32 %v1679, %v1091
    %v1712 = vadd.f32 %v1680, %v1092
    %v1713 = vadd.f32 %v1681, %v1092
    %v1714 = vadd.f32 %v1682, %v1093
    %v1715 = vadd.f32 %v1683, %v1093
    %v1716 = vadd.f32 %v1684, %v1094
    %v1717 = vadd.f32 %v1685, %v1094
    %v1718 = vadd.f32 %v1686, %v1095
    %v1719 = vadd.f32 %v1687, %v1095
    %vm1720 = vcmask 130048
    %v1721 = vsel %vm1720, %v1688, -inf
    %1722 = vmax.xlane.f32.xlu0 %v1721
    %v1723 = vpop.xlane.xlu0 %1722
    %v1724 = vsel %vm1720, %v1689, -inf
    %1725 = vmax.xlane.f32.xlu0 %v1724
    %v1726 = vpop.xlane.xlu0 %1725
    %v1727 = vsel %vm1720, %v1690, -inf
    %1728 = vmax.xlane.f32.xlu0 %v1727
    %v1729 = vpop.xlane.xlu0 %1728
    %v1730 = vsel %vm1720, %v1691, -inf
    %1731 = vmax.xlane.f32.xlu0 %v1730
    %v1732 = vpop.xlane.xlu0 %1731
    %v1733 = vsel %vm1720, %v1692, -inf
    %1734 = vmax.xlane.f32.xlu0 %v1733
    %v1735 = vpop.xlane.xlu0 %1734
    %v1736 = vsel %vm1720, %v1693, -inf
    %1737 = vmax.xlane.f32.xlu0 %v1736
    %v1738 = vpop.xlane.xlu0 %1737
    %v1739 = vsel %vm1720, %v1694, -inf
    %1740 = vmax.xlane.f32.xlu0 %v1739
    %v1741 = vpop.xlane.xlu0 %1740
    %v1742 = vsel %vm1720, %v1695, -inf
    %1743 = vmax.xlane.f32.xlu0 %v1742
    %v1744 = vpop.xlane.xlu0 %1743
    %v1745 = vsel %vm1720, %v1696, -inf
    %1746 = vmax.xlane.f32.xlu0 %v1745
    %v1747 = vpop.xlane.xlu0 %1746
    %v1748 = vsel %vm1720, %v1697, -inf
    %1749 = vmax.xlane.f32.xlu0 %v1748
    %v1750 = vpop.xlane.xlu0 %1749
    %v1751 = vsel %vm1720, %v1698, -inf
    %1752 = vmax.xlane.f32.xlu0 %v1751
    %v1753 = vpop.xlane.xlu0 %1752
    %v1754 = vsel %vm1720, %v1699, -inf
    %1755 = vmax.xlane.f32.xlu0 %v1754
    %v1756 = vpop.xlane.xlu0 %1755
    %v1757 = vsel %vm1720, %v1700, -inf
    %1758 = vmax.xlane.f32.xlu0 %v1757
    %v1759 = vpop.xlane.xlu0 %1758
    %v1760 = vsel %vm1720, %v1701, -inf
    %1761 = vmax.xlane.f32.xlu0 %v1760
    %v1762 = vpop.xlane.xlu0 %1761
    %v1763 = vsel %vm1720, %v1702, -inf
    %1764 = vmax.xlane.f32.xlu0 %v1763
    %v1765 = vpop.xlane.xlu0 %1764
    %v1766 = vsel %vm1720, %v1703, -inf
    %1767 = vmax.xlane.f32.xlu0 %v1766
    %v1768 = vpop.xlane.xlu0 %1767
    %v1769 = vsel %vm1720, %v1704, -inf
    %1770 = vmax.xlane.f32.xlu0 %v1769
    %v1771 = vpop.xlane.xlu0 %1770
    %v1772 = vsel %vm1720, %v1705, -inf
    %1773 = vmax.xlane.f32.xlu0 %v1772
    %v1774 = vpop.xlane.xlu0 %1773
    %v1775 = vsel %vm1720, %v1706, -inf
    %1776 = vmax.xlane.f32.xlu0 %v1775
    %v1777 = vpop.xlane.xlu0 %1776
    %v1778 = vsel %vm1720, %v1707, -inf
    %1779 = vmax.xlane.f32.xlu0 %v1778
    %v1780 = vpop.xlane.xlu0 %1779
    %v1781 = vsel %vm1720, %v1708, -inf
    %1782 = vmax.xlane.f32.xlu0 %v1781
    %v1783 = vpop.xlane.xlu0 %1782
    %v1784 = vsel %vm1720, %v1709, -inf
    %1785 = vmax.xlane.f32.xlu0 %v1784
    %v1786 = vpop.xlane.xlu0 %1785
    %v1787 = vsel %vm1720, %v1710, -inf
    %1788 = vmax.xlane.f32.xlu0 %v1787
    %v1789 = vpop.xlane.xlu0 %1788
    %v1790 = vsel %vm1720, %v1711, -inf
    %1791 = vmax.xlane.f32.xlu0 %v1790
    %v1792 = vpop.xlane.xlu0 %1791
    %v1793 = vsel %vm1720, %v1712, -inf
    %1794 = vmax.xlane.f32.xlu0 %v1793
    %v1795 = vpop.xlane.xlu0 %1794
    %v1796 = vsel %vm1720, %v1713, -inf
    %1797 = vmax.xlane.f32.xlu0 %v1796
    %v1798 = vpop.xlane.xlu0 %1797
    %v1799 = vsel %vm1720, %v1714, -inf
    %1800 = vmax.xlane.f32.xlu0 %v1799
    %v1801 = vpop.xlane.xlu0 %1800
    %v1802 = vsel %vm1720, %v1715, -inf
    %1803 = vmax.xlane.f32.xlu0 %v1802
    %v1804 = vpop.xlane.xlu0 %1803
    %v1805 = vsel %vm1720, %v1716, -inf
    %1806 = vmax.xlane.f32.xlu0 %v1805
    %v1807 = vpop.xlane.xlu0 %1806
    %v1808 = vsel %vm1720, %v1717, -inf
    %1809 = vmax.xlane.f32.xlu0 %v1808
    %v1810 = vpop.xlane.xlu0 %1809
    %v1811 = vsel %vm1720, %v1718, -inf
    %1812 = vmax.xlane.f32.xlu0 %v1811
    %v1813 = vpop.xlane.xlu0 %1812
    %v1814 = vsel %vm1720, %v1719, -inf
    %1815 = vmax.xlane.f32.xlu0 %v1814
    %v1816 = vpop.xlane.xlu0 %1815
    %v1817 = vsub.f32 %v1688, %v1723
    %v1818 = vsub.f32 %v1689, %v1726
    %v1819 = vsub.f32 %v1690, %v1729
    %v1820 = vsub.f32 %v1691, %v1732
    %v1821 = vsub.f32 %v1692, %v1735
    %v1822 = vsub.f32 %v1693, %v1738
    %v1823 = vsub.f32 %v1694, %v1741
    %v1824 = vsub.f32 %v1695, %v1744
    %v1825 = vsub.f32 %v1696, %v1747
    %v1826 = vsub.f32 %v1697, %v1750
    %v1827 = vsub.f32 %v1698, %v1753
    %v1828 = vsub.f32 %v1699, %v1756
    %v1829 = vsub.f32 %v1700, %v1759
    %v1830 = vsub.f32 %v1701, %v1762
    %v1831 = vsub.f32 %v1702, %v1765
    %v1832 = vsub.f32 %v1703, %v1768
    %v1833 = vsub.f32 %v1704, %v1771
    %v1834 = vsub.f32 %v1705, %v1774
    %v1835 = vsub.f32 %v1706, %v1777
    %v1836 = vsub.f32 %v1707, %v1780
    %v1837 = vsub.f32 %v1708, %v1783
    %v1838 = vsub.f32 %v1709, %v1786
    %v1839 = vsub.f32 %v1710, %v1789
    %v1840 = vsub.f32 %v1711, %v1792
    %v1841 = vsub.f32 %v1712, %v1795
    %v1842 = vsub.f32 %v1713, %v1798
    %v1843 = vsub.f32 %v1714, %v1801
    %v1844 = vsub.f32 %v1715, %v1804
    %v1845 = vsub.f32 %v1716, %v1807
    %v1846 = vsub.f32 %v1717, %v1810
    %v1847 = vsub.f32 %v1718, %v1813
    %v1848 = vsub.f32 %v1719, %v1816
    %v1849 = vmul.f32 %v1817, 1.442695
    %v1850 = vpow.pop %v1849
    %v1851 = vmul.f32 %v1818, 1.442695
    %v1852 = vpow.pop %v1851
    %v1853 = vmul.f32 %v1819, 1.442695
    %v1854 = vpow.pop %v1853
    %v1855 = vmul.f32 %v1820, 1.442695
    %v1856 = vpow.pop %v1855
    %v1857 = vmul.f32 %v1821, 1.442695
    %v1858 = vpow.pop %v1857
    %v1859 = vmul.f32 %v1822, 1.442695
    %v1860 = vpow.pop %v1859
    %v1861 = vmul.f32 %v1823, 1.442695
    %v1862 = vpow.pop %v1861
    %v1863 = vmul.f32 %v1824, 1.442695
    %v1864 = vpow.pop %v1863
    %v1865 = vmul.f32 %v1825, 1.442695
    %v1866 = vpow.pop %v1865
    %v1867 = vmul.f32 %v1826, 1.442695
    %v1868 = vpow.pop %v1867
    %v1869 = vmul.f32 %v1827, 1.442695
    %v1870 = vpow.pop %v1869
    %v1871 = vmul.f32 %v1828, 1.442695
    %v1872 = vpow.pop %v1871
    %v1873 = vmul.f32 %v1829, 1.442695
    %v1874 = vpow.pop %v1873
    %v1875 = vmul.f32 %v1830, 1.442695
    %v1876 = vpow.pop %v1875
    %v1877 = vmul.f32 %v1831, 1.442695
    %v1878 = vpow.pop %v1877
    %v1879 = vmul.f32 %v1832, 1.442695
    %v1880 = vpow.pop %v1879
    %v1881 = vmul.f32 %v1833, 1.442695
    %v1882 = vpow.pop %v1881
    %v1883 = vmul.f32 %v1834, 1.442695
    %v1884 = vpow.pop %v1883
    %v1885 = vmul.f32 %v1835, 1.442695
    %v1886 = vpow.pop %v1885
    %v1887 = vmul.f32 %v1836, 1.442695
    %v1888 = vpow.pop %v1887
    %v1889 = vmul.f32 %v1837, 1.442695
    %v1890 = vpow.pop %v1889
    %v1891 = vmul.f32 %v1838, 1.442695
    %v1892 = vpow.pop %v1891
    %v1893 = vmul.f32 %v1839, 1.442695
    %v1894 = vpow.pop %v1893
    %v1895 = vmul.f32 %v1840, 1.442695
    %v1896 = vpow.pop %v1895
    %v1897 = vmul.f32 %v1841, 1.442695
    %v1898 = vpow.pop %v1897
    %v1899 = vmul.f32 %v1842, 1.442695
    %v1900 = vpow.pop %v1899
    %v1901 = vmul.f32 %v1843, 1.442695
    %v1902 = vpow.pop %v1901
    %v1903 = vmul.f32 %v1844, 1.442695
    %v1904 = vpow.pop %v1903
    %v1905 = vmul.f32 %v1845, 1.442695
    %v1906 = vpow.pop %v1905
    %v1907 = vmul.f32 %v1846, 1.442695
    %v1908 = vpow.pop %v1907
    %v1909 = vmul.f32 %v1847, 1.442695
    %v1910 = vpow.pop %v1909
    %v1911 = vmul.f32 %v1848, 1.442695
    %v1912 = vpow.pop %v1911
    %v1913 = vsel %vm1720, %v1850, 0.0
    %1914 = vadd.xlane.f32.xlu0 %v1913
    %v1915 = vpop.xlane.xlu0 %1914
    %v1916 = vsel %vm1720, %v1852, 0.0
    %1917 = vadd.xlane.f32.xlu0 %v1916
    %v1918 = vpop.xlane.xlu0 %1917
    %v1919 = vsel %vm1720, %v1854, 0.0
    %1920 = vadd.xlane.f32.xlu0 %v1919
    %v1921 = vpop.xlane.xlu0 %1920
    %v1922 = vsel %vm1720, %v1856, 0.0
    %1923 = vadd.xlane.f32.xlu0 %v1922
    %v1924 = vpop.xlane.xlu0 %1923
    %v1925 = vsel %vm1720, %v1858, 0.0
    %1926 = vadd.xlane.f32.xlu0 %v1925
    %v1927 = vpop.xlane.xlu0 %1926
    %v1928 = vsel %vm1720, %v1860, 0.0
    %1929 = vadd.xlane.f32.xlu0 %v1928
    %v1930 = vpop.xlane.xlu0 %1929
    %v1931 = vsel %vm1720, %v1862, 0.0
    %1932 = vadd.xlane.f32.xlu0 %v1931
    %v1933 = vpop.xlane.xlu0 %1932
    %v1934 = vsel %vm1720, %v1864, 0.0
    %1935 = vadd.xlane.f32.xlu0 %v1934
    %v1936 = vpop.xlane.xlu0 %1935
    %v1937 = vsel %vm1720, %v1866, 0.0
    %1938 = vadd.xlane.f32.xlu0 %v1937
    %v1939 = vpop.xlane.xlu0 %1938
    %v1940 = vsel %vm1720, %v1868, 0.0
    %1941 = vadd.xlane.f32.xlu0 %v1940
    %v1942 = vpop.xlane.xlu0 %1941
    %v1943 = vsel %vm1720, %v1870, 0.0
    %1944 = vadd.xlane.f32.xlu0 %v1943
    %v1945 = vpop.xlane.xlu0 %1944
    %v1946 = vsel %vm1720, %v1872, 0.0
    %1947 = vadd.xlane.f32.xlu0 %v1946
    %v1948 = vpop.xlane.xlu0 %1947
    %v1949 = vsel %vm1720, %v1874, 0.0
    %1950 = vadd.xlane.f32.xlu0 %v1949
    %v1951 = vpop.xlane.xlu0 %1950
    %v1952 = vsel %vm1720, %v1876, 0.0
    %1953 = vadd.xlane.f32.xlu0 %v1952
    %v1954 = vpop.xlane.xlu0 %1953
    %v1955 = vsel %vm1720, %v1878, 0.0
    %1956 = vadd.xlane.f32.xlu0 %v1955
    %v1957 = vpop.xlane.xlu0 %1956
    %v1958 = vsel %vm1720, %v1880, 0.0
    %1959 = vadd.xlane.f32.xlu0 %v1958
    %v1960 = vpop.xlane.xlu0 %1959
    %v1961 = vsel %vm1720, %v1882, 0.0
    %1962 = vadd.xlane.f32.xlu0 %v1961
    %v1963 = vpop.xlane.xlu0 %1962
    %v1964 = vsel %vm1720, %v1884, 0.0
    %1965 = vadd.xlane.f32.xlu0 %v1964
    %v1966 = vpop.xlane.xlu0 %1965
    %v1967 = vsel %vm1720, %v1886, 0.0
    %1968 = vadd.xlane.f32.xlu0 %v1967
    %v1969 = vpop.xlane.xlu0 %1968
    %v1970 = vsel %vm1720, %v1888, 0.0
    %1971 = vadd.xlane.f32.xlu0 %v1970
    %v1972 = vpop.xlane.xlu0 %1971
    %v1973 = vsel %vm1720, %v1890, 0.0
    %1974 = vadd.xlane.f32.xlu0 %v1973
    %v1975 = vpop.xlane.xlu0 %1974
    %v1976 = vsel %vm1720, %v1892, 0.0
    %1977 = vadd.xlane.f32.xlu0 %v1976
    %v1978 = vpop.xlane.xlu0 %1977
    %v1979 = vsel %vm1720, %v1894, 0.0
    %1980 = vadd.xlane.f32.xlu0 %v1979
    %v1981 = vpop.xlane.xlu0 %1980
    %v1982 = vsel %vm1720, %v1896, 0.0
    %1983 = vadd.xlane.f32.xlu0 %v1982
    %v1984 = vpop.xlane.xlu0 %1983
    %v1985 = vsel %vm1720, %v1898, 0.0
    %1986 = vadd.xlane.f32.xlu0 %v1985
    %v1987 = vpop.xlane.xlu0 %1986
    %v1988 = vsel %vm1720, %v1900, 0.0
    %1989 = vadd.xlane.f32.xlu0 %v1988
    %v1990 = vpop.xlane.xlu0 %1989
    %v1991 = vsel %vm1720, %v1902, 0.0
    %1992 = vadd.xlane.f32.xlu0 %v1991
    %v1993 = vpop.xlane.xlu0 %1992
    %v1994 = vsel %vm1720, %v1904, 0.0
    %1995 = vadd.xlane.f32.xlu0 %v1994
    %v1996 = vpop.xlane.xlu0 %1995
    %v1997 = vsel %vm1720, %v1906, 0.0
    %1998 = vadd.xlane.f32.xlu0 %v1997
    %v1999 = vpop.xlane.xlu0 %1998
    %v2000 = vsel %vm1720, %v1908, 0.0
    %2001 = vadd.xlane.f32.xlu0 %v2000
    %v2002 = vpop.xlane.xlu0 %2001
    %v2003 = vsel %vm1720, %v1910, 0.0
    %2004 = vadd.xlane.f32.xlu0 %v2003
    %v2005 = vpop.xlane.xlu0 %2004
    %v2006 = vsel %vm1720, %v1912, 0.0
    %2007 = vadd.xlane.f32.xlu0 %v2006
    %v2008 = vpop.xlane.xlu0 %2007
    %v2009 = vrcp.pop %v1915
    %v2010 = vrcp.pop %v1918
    %v2011 = vrcp.pop %v1921
    %v2012 = vrcp.pop %v1924
    %v2013 = vrcp.pop %v1927
    %v2014 = vrcp.pop %v1930
    %v2015 = vrcp.pop %v1933
    %v2016 = vrcp.pop %v1936
    %v2017 = vrcp.pop %v1939
    %v2018 = vrcp.pop %v1942
    %v2019 = vrcp.pop %v1945
    %v2020 = vrcp.pop %v1948
    %v2021 = vrcp.pop %v1951
    %v2022 = vrcp.pop %v1954
    %v2023 = vrcp.pop %v1957
    %v2024 = vrcp.pop %v1960
    %v2025 = vrcp.pop %v1963
    %v2026 = vrcp.pop %v1966
    %v2027 = vrcp.pop %v1969
    %v2028 = vrcp.pop %v1972
    %v2029 = vrcp.pop %v1975
    %v2030 = vrcp.pop %v1978
    %v2031 = vrcp.pop %v1981
    %v2032 = vrcp.pop %v1984
    %v2033 = vrcp.pop %v1987
    %v2034 = vrcp.pop %v1990
    %v2035 = vrcp.pop %v1993
    %v2036 = vrcp.pop %v1996
    %v2037 = vrcp.pop %v1999
    %v2038 = vrcp.pop %v2002
    %v2039 = vrcp.pop %v2005
    %v2040 = vrcp.pop %v2008
    %v2041 = vmul.f32 %v1850, %v2009
    %v2042 = vmul.f32 %v1852, %v2010
    %v2043 = vmul.f32 %v1854, %v2011
    %v2044 = vmul.f32 %v1856, %v2012
    %v2045 = vmul.f32 %v1858, %v2013
    %v2046 = vmul.f32 %v1860, %v2014
    %v2047 = vmul.f32 %v1862, %v2015
    %v2048 = vmul.f32 %v1864, %v2016
    %v2049 = vmul.f32 %v1866, %v2017
    %v2050 = vmul.f32 %v1868, %v2018
    %v2051 = vmul.f32 %v1870, %v2019
    %v2052 = vmul.f32 %v1872, %v2020
    %v2053 = vmul.f32 %v1874, %v2021
    %v2054 = vmul.f32 %v1876, %v2022
    %v2055 = vmul.f32 %v1878, %v2023
    %v2056 = vmul.f32 %v1880, %v2024
    %v2057 = vmul.f32 %v1882, %v2025
    %v2058 = vmul.f32 %v1884, %v2026
    %v2059 = vmul.f32 %v1886, %v2027
    %v2060 = vmul.f32 %v1888, %v2028
    %v2061 = vmul.f32 %v1890, %v2029
    %v2062 = vmul.f32 %v1892, %v2030
    %v2063 = vmul.f32 %v1894, %v2031
    %v2064 = vmul.f32 %v1896, %v2032
    %v2065 = vmul.f32 %v1898, %v2033
    %v2066 = vmul.f32 %v1900, %v2034
    %v2067 = vmul.f32 %v1902, %v2035
    %v2068 = vmul.f32 %v1904, %v2036
    %v2069 = vmul.f32 %v1906, %v2037
    %v2070 = vmul.f32 %v1908, %v2038
    %v2071 = vmul.f32 %v1910, %v2039
    %v2072 = vmul.f32 %v1912, %v2040
    %v2073 = vpack.c.bf16 %v2041, %v2041
    %v2074 = vpack.c.bf16 %v2042, %v2042
    %v2075 = vpack.c.bf16 %v2043, %v2043
    %v2076 = vpack.c.bf16 %v2044, %v2044
    %v2077 = vpack.c.bf16 %v2045, %v2045
    %v2078 = vpack.c.bf16 %v2046, %v2046
    %v2079 = vpack.c.bf16 %v2047, %v2047
    %v2080 = vpack.c.bf16 %v2048, %v2048
    %v2081 = vpack.c.bf16 %v2049, %v2049
    %v2082 = vpack.c.bf16 %v2050, %v2050
    %v2083 = vpack.c.bf16 %v2051, %v2051
    %v2084 = vpack.c.bf16 %v2052, %v2052
    %v2085 = vpack.c.bf16 %v2053, %v2053
    %v2086 = vpack.c.bf16 %v2054, %v2054
    %v2087 = vpack.c.bf16 %v2055, %v2055
    %v2088 = vpack.c.bf16 %v2056, %v2056
    %v2089 = vpack.c.bf16 %v2057, %v2057
    %v2090 = vpack.c.bf16 %v2058, %v2058
    %v2091 = vpack.c.bf16 %v2059, %v2059
    %v2092 = vpack.c.bf16 %v2060, %v2060
    %v2093 = vpack.c.bf16 %v2061, %v2061
    %v2094 = vpack.c.bf16 %v2062, %v2062
    %v2095 = vpack.c.bf16 %v2063, %v2063
    %v2096 = vpack.c.bf16 %v2064, %v2064
    %v2097 = vpack.c.bf16 %v2065, %v2065
    %v2098 = vpack.c.bf16 %v2066, %v2066
    %v2099 = vpack.c.bf16 %v2067, %v2067
    %v2100 = vpack.c.bf16 %v2068, %v2068
    %v2101 = vpack.c.bf16 %v2069, %v2069
    %v2102 = vpack.c.bf16 %v2070, %v2070
    %v2103 = vpack.c.bf16 %v2071, %v2071
    %v2104 = vpack.c.bf16 %v2072, %v2072
    %v2107 = vunpack.c.l.b16 %v2073
    %v2108 = vunpack.c.l.b16 %v2074
    %v2109 = vpack.c.b16 %v2108, %v2107
    %v2112 = vunpack.c.l.b16 %v1208
    %v2113 = vunpack.c.l.b16 %v1209
    %v2114 = vpack.c.b16 %v2113, %v2112
    %v2117 = vsel %vm1720, %v2109, 0
    %2119 = vmatpush.bf16.msra.mxu0 0
    %2120 = vmatpush.bf16.msra.mxu0 0
    %2121 = vmatpush.bf16.msra.mxu0 0
    %2122 = vmatpush.bf16.msra.mxu0 0
    %2123 = vmatpush.bf16.msra.mxu0 0
    %2124 = vmatpush.bf16.msra.mxu0 0
    %2125 = vmatpush.bf16.msra.mxu0 0
    %2126 = vmatpush.bf16.msra.mxu0 %v2114
    %2127 = vmatmul.bf16.gmra.mxu0 %v2117
    %v2128 = vpop.f32.mrf.mxu0
    %v2129 = vadd.f32 0.0, %v2128
    %v2130 = vpop.f32.mrf.mxu0
    %v2131 = vadd.f32 0.0, %v2130
    %2132 = vdwg.mxu0
    %v2135 = vunpack.c.l.b16 %v2075
    %v2136 = vunpack.c.l.b16 %v2076
    %v2137 = vpack.c.b16 %v2136, %v2135
    %v2140 = vunpack.c.l.b16 %v1210
    %v2141 = vunpack.c.l.b16 %v1211
    %v2142 = vpack.c.b16 %v2141, %v2140
    %v2145 = vsel %vm1720, %v2137, 0
    %2147 = vmatpush.bf16.msra.mxu0 0
    %2148 = vmatpush.bf16.msra.mxu0 0
    %2149 = vmatpush.bf16.msra.mxu0 0
    %2150 = vmatpush.bf16.msra.mxu0 0
    %2151 = vmatpush.bf16.msra.mxu0 0
    %2152 = vmatpush.bf16.msra.mxu0 0
    %2153 = vmatpush.bf16.msra.mxu0 0
    %2154 = vmatpush.bf16.msra.mxu0 %v2142
    %2155 = vmatmul.bf16.gmra.mxu0 %v2145
    %v2156 = vpop.f32.mrf.mxu0
    %v2157 = vadd.f32 0.0, %v2156
    %v2158 = vpop.f32.mrf.mxu0
    %v2159 = vadd.f32 0.0, %v2158
    %2160 = vdwg.mxu0
    %v2163 = vunpack.c.l.b16 %v2077
    %v2164 = vunpack.c.l.b16 %v2078
    %v2165 = vpack.c.b16 %v2164, %v2163
    %v2168 = vunpack.c.l.b16 %v1212
    %v2169 = vunpack.c.l.b16 %v1213
    %v2170 = vpack.c.b16 %v2169, %v2168
    %v2173 = vsel %vm1720, %v2165, 0
    %2175 = vmatpush.bf16.msra.mxu0 0
    %2176 = vmatpush.bf16.msra.mxu0 0
    %2177 = vmatpush.bf16.msra.mxu0 0
    %2178 = vmatpush.bf16.msra.mxu0 0
    %2179 = vmatpush.bf16.msra.mxu0 0
    %2180 = vmatpush.bf16.msra.mxu0 0
    %2181 = vmatpush.bf16.msra.mxu0 0
    %2182 = vmatpush.bf16.msra.mxu0 %v2170
    %2183 = vmatmul.bf16.gmra.mxu0 %v2173
    %v2184 = vpop.f32.mrf.mxu0
    %v2185 = vadd.f32 0.0, %v2184
    %v2186 = vpop.f32.mrf.mxu0
    %v2187 = vadd.f32 0.0, %v2186
    %2188 = vdwg.mxu0
    %v2191 = vunpack.c.l.b16 %v2079
    %v2192 = vunpack.c.l.b16 %v2080
    %v2193 = vpack.c.b16 %v2192, %v2191
    %v2196 = vunpack.c.l.b16 %v1214
    %v2197 = vunpack.c.l.b16 %v1215
    %v2198 = vpack.c.b16 %v2197, %v2196
    %v2201 = vsel %vm1720, %v2193, 0
    %2203 = vmatpush.bf16.msra.mxu0 0
    %2204 = vmatpush.bf16.msra.mxu0 0
    %2205 = vmatpush.bf16.msra.mxu0 0
    %2206 = vmatpush.bf16.msra.mxu0 0
    %2207 = vmatpush.bf16.msra.mxu0 0
    %2208 = vmatpush.bf16.msra.mxu0 0
    %2209 = vmatpush.bf16.msra.mxu0 0
    %2210 = vmatpush.bf16.msra.mxu0 %v2198
    %2211 = vmatmul.bf16.gmra.mxu0 %v2201
    %v2212 = vpop.f32.mrf.mxu0
    %v2213 = vadd.f32 0.0, %v2212
    %v2214 = vpop.f32.mrf.mxu0
    %v2215 = vadd.f32 0.0, %v2214
    %2216 = vdwg.mxu0
    %v2219 = vunpack.c.l.b16 %v2081
    %v2220 = vunpack.c.l.b16 %v2082
    %v2221 = vpack.c.b16 %v2220, %v2219
    %v2224 = vunpack.c.l.b16 %v1216
    %v2225 = vunpack.c.l.b16 %v1217
    %v2226 = vpack.c.b16 %v2225, %v2224
    %v2229 = vsel %vm1720, %v2221, 0
    %2231 = vmatpush.bf16.msra.mxu0 0
    %2232 = vmatpush.bf16.msra.mxu0 0
    %2233 = vmatpush.bf16.msra.mxu0 0
    %2234 = vmatpush.bf16.msra.mxu0 0
    %2235 = vmatpush.bf16.msra.mxu0 0
    %2236 = vmatpush.bf16.msra.mxu0 0
    %2237 = vmatpush.bf16.msra.mxu0 0
    %2238 = vmatpush.bf16.msra.mxu0 %v2226
    %2239 = vmatmul.bf16.gmra.mxu0 %v2229
    %v2240 = vpop.f32.mrf.mxu0
    %v2241 = vadd.f32 0.0, %v2240
    %v2242 = vpop.f32.mrf.mxu0
    %v2243 = vadd.f32 0.0, %v2242
    %2244 = vdwg.mxu0
    %v2247 = vunpack.c.l.b16 %v2083
    %v2248 = vunpack.c.l.b16 %v2084
    %v2249 = vpack.c.b16 %v2248, %v2247
    %v2252 = vunpack.c.l.b16 %v1218
    %v2253 = vunpack.c.l.b16 %v1219
    %v2254 = vpack.c.b16 %v2253, %v2252
    %v2257 = vsel %vm1720, %v2249, 0
    %2259 = vmatpush.bf16.msra.mxu0 0
    %2260 = vmatpush.bf16.msra.mxu0 0
    %2261 = vmatpush.bf16.msra.mxu0 0
    %2262 = vmatpush.bf16.msra.mxu0 0
    %2263 = vmatpush.bf16.msra.mxu0 0
    %2264 = vmatpush.bf16.msra.mxu0 0
    %2265 = vmatpush.bf16.msra.mxu0 0
    %2266 = vmatpush.bf16.msra.mxu0 %v2254
    %2267 = vmatmul.bf16.gmra.mxu0 %v2257
    %v2268 = vpop.f32.mrf.mxu0
    %v2269 = vadd.f32 0.0, %v2268
    %v2270 = vpop.f32.mrf.mxu0
    %v2271 = vadd.f32 0.0, %v2270
    %2272 = vdwg.mxu0
    %v2275 = vunpack.c.l.b16 %v2085
    %v2276 = vunpack.c.l.b16 %v2086
    %v2277 = vpack.c.b16 %v2276, %v2275
    %v2280 = vunpack.c.l.b16 %v1220
    %v2281 = vunpack.c.l.b16 %v1221
    %v2282 = vpack.c.b16 %v2281, %v2280
    %v2285 = vsel %vm1720, %v2277, 0
    %2287 = vmatpush.bf16.msra.mxu0 0
    %2288 = vmatpush.bf16.msra.mxu0 0
    %2289 = vmatpush.bf16.msra.mxu0 0
    %2290 = vmatpush.bf16.msra.mxu0 0
    %2291 = vmatpush.bf16.msra.mxu0 0
    %2292 = vmatpush.bf16.msra.mxu0 0
    %2293 = vmatpush.bf16.msra.mxu0 0
    %2294 = vmatpush.bf16.msra.mxu0 %v2282
    %2295 = vmatmul.bf16.gmra.mxu0 %v2285
    %v2296 = vpop.f32.mrf.mxu0
    %v2297 = vadd.f32 0.0, %v2296
    %v2298 = vpop.f32.mrf.mxu0
    %v2299 = vadd.f32 0.0, %v2298
    %2300 = vdwg.mxu0
    %v2303 = vunpack.c.l.b16 %v2087
    %v2304 = vunpack.c.l.b16 %v2088
    %v2305 = vpack.c.b16 %v2304, %v2303
    %v2308 = vunpack.c.l.b16 %v1222
    %v2309 = vunpack.c.l.b16 %v1223
    %v2310 = vpack.c.b16 %v2309, %v2308
    %v2313 = vsel %vm1720, %v2305, 0
    %2315 = vmatpush.bf16.msra.mxu0 0
    %2316 = vmatpush.bf16.msra.mxu0 0
    %2317 = vmatpush.bf16.msra.mxu0 0
    %2318 = vmatpush.bf16.msra.mxu0 0
    %2319 = vmatpush.bf16.msra.mxu0 0
    %2320 = vmatpush.bf16.msra.mxu0 0
    %2321 = vmatpush.bf16.msra.mxu0 0
    %2322 = vmatpush.bf16.msra.mxu0 %v2310
    %2323 = vmatmul.bf16.gmra.mxu0 %v2313
    %v2324 = vpop.f32.mrf.mxu0
    %v2325 = vadd.f32 0.0, %v2324
    %v2326 = vpop.f32.mrf.mxu0
    %v2327 = vadd.f32 0.0, %v2326
    %2328 = vdwg.mxu0
    %v2331 = vunpack.c.l.b16 %v2089
    %v2332 = vunpack.c.l.b16 %v2090
    %v2333 = vpack.c.b16 %v2332, %v2331
    %v2336 = vunpack.c.l.b16 %v1224
    %v2337 = vunpack.c.l.b16 %v1225
    %v2338 = vpack.c.b16 %v2337, %v2336
    %v2341 = vsel %vm1720, %v2333, 0
    %2343 = vmatpush.bf16.msra.mxu0 0
    %2344 = vmatpush.bf16.msra.mxu0 0
    %2345 = vmatpush.bf16.msra.mxu0 0
    %2346 = vmatpush.bf16.msra.mxu0 0
    %2347 = vmatpush.bf16.msra.mxu0 0
    %2348 = vmatpush.bf16.msra.mxu0 0
    %2349 = vmatpush.bf16.msra.mxu0 0
    %2350 = vmatpush.bf16.msra.mxu0 %v2338
    %2351 = vmatmul.bf16.gmra.mxu0 %v2341
    %v2352 = vpop.f32.mrf.mxu0
    %v2353 = vadd.f32 0.0, %v2352
    %v2354 = vpop.f32.mrf.mxu0
    %v2355 = vadd.f32 0.0, %v2354
    %2356 = vdwg.mxu0
    %v2359 = vunpack.c.l.b16 %v2091
    %v2360 = vunpack.c.l.b16 %v2092
    %v2361 = vpack.c.b16 %v2360, %v2359
    %v2364 = vunpack.c.l.b16 %v1226
    %v2365 = vunpack.c.l.b16 %v1227
    %v2366 = vpack.c.b16 %v2365, %v2364
    %v2369 = vsel %vm1720, %v2361, 0
    %2371 = vmatpush.bf16.msra.mxu0 0
    %2372 = vmatpush.bf16.msra.mxu0 0
    %2373 = vmatpush.bf16.msra.mxu0 0
    %2374 = vmatpush.bf16.msra.mxu0 0
    %2375 = vmatpush.bf16.msra.mxu0 0
    %2376 = vmatpush.bf16.msra.mxu0 0
    %2377 = vmatpush.bf16.msra.mxu0 0
    %2378 = vmatpush.bf16.msra.mxu0 %v2366
    %2379 = vmatmul.bf16.gmra.mxu0 %v2369
    %v2380 = vpop.f32.mrf.mxu0
    %v2381 = vadd.f32 0.0, %v2380
    %v2382 = vpop.f32.mrf.mxu0
    %v2383 = vadd.f32 0.0, %v2382
    %2384 = vdwg.mxu0
    %v2387 = vunpack.c.l.b16 %v2093
    %v2388 = vunpack.c.l.b16 %v2094
    %v2389 = vpack.c.b16 %v2388, %v2387
    %v2392 = vunpack.c.l.b16 %v1228
    %v2393 = vunpack.c.l.b16 %v1229
    %v2394 = vpack.c.b16 %v2393, %v2392
    %v2397 = vsel %vm1720, %v2389, 0
    %2399 = vmatpush.bf16.msra.mxu0 0
    %2400 = vmatpush.bf16.msra.mxu0 0
    %2401 = vmatpush.bf16.msra.mxu0 0
    %2402 = vmatpush.bf16.msra.mxu0 0
    %2403 = vmatpush.bf16.msra.mxu0 0
    %2404 = vmatpush.bf16.msra.mxu0 0
    %2405 = vmatpush.bf16.msra.mxu0 0
    %2406 = vmatpush.bf16.msra.mxu0 %v2394
    %2407 = vmatmul.bf16.gmra.mxu0 %v2397
    %v2408 = vpop.f32.mrf.mxu0
    %v2409 = vadd.f32 0.0, %v2408
    %v2410 = vpop.f32.mrf.mxu0
    %v2411 = vadd.f32 0.0, %v2410
    %2412 = vdwg.mxu0
    %v2415 = vunpack.c.l.b16 %v2095
    %v2416 = vunpack.c.l.b16 %v2096
    %v2417 = vpack.c.b16 %v2416, %v2415
    %v2420 = vunpack.c.l.b16 %v1230
    %v2421 = vunpack.c.l.b16 %v1231
    %v2422 = vpack.c.b16 %v2421, %v2420
    %v2425 = vsel %vm1720, %v2417, 0
    %2427 = vmatpush.bf16.msra.mxu0 0
    %2428 = vmatpush.bf16.msra.mxu0 0
    %2429 = vmatpush.bf16.msra.mxu0 0
    %2430 = vmatpush.bf16.msra.mxu0 0
    %2431 = vmatpush.bf16.msra.mxu0 0
    %2432 = vmatpush.bf16.msra.mxu0 0
    %2433 = vmatpush.bf16.msra.mxu0 0
    %2434 = vmatpush.bf16.msra.mxu0 %v2422
    %2435 = vmatmul.bf16.gmra.mxu0 %v2425
    %v2436 = vpop.f32.mrf.mxu0
    %v2437 = vadd.f32 0.0, %v2436
    %v2438 = vpop.f32.mrf.mxu0
    %v2439 = vadd.f32 0.0, %v2438
    %2440 = vdwg.mxu0
    %v2443 = vunpack.c.l.b16 %v2097
    %v2444 = vunpack.c.l.b16 %v2098
    %v2445 = vpack.c.b16 %v2444, %v2443
    %v2448 = vunpack.c.l.b16 %v1232
    %v2449 = vunpack.c.l.b16 %v1233
    %v2450 = vpack.c.b16 %v2449, %v2448
    %v2453 = vsel %vm1720, %v2445, 0
    %2455 = vmatpush.bf16.msra.mxu0 0
    %2456 = vmatpush.bf16.msra.mxu0 0
    %2457 = vmatpush.bf16.msra.mxu0 0
    %2458 = vmatpush.bf16.msra.mxu0 0
    %2459 = vmatpush.bf16.msra.mxu0 0
    %2460 = vmatpush.bf16.msra.mxu0 0
    %2461 = vmatpush.bf16.msra.mxu0 0
    %2462 = vmatpush.bf16.msra.mxu0 %v2450
    %2463 = vmatmul.bf16.gmra.mxu0 %v2453
    %v2464 = vpop.f32.mrf.mxu0
    %v2465 = vadd.f32 0.0, %v2464
    %v2466 = vpop.f32.mrf.mxu0
    %v2467 = vadd.f32 0.0, %v2466
    %2468 = vdwg.mxu0
    %v2471 = vunpack.c.l.b16 %v2099
    %v2472 = vunpack.c.l.b16 %v2100
    %v2473 = vpack.c.b16 %v2472, %v2471
    %v2476 = vunpack.c.l.b16 %v1234
    %v2477 = vunpack.c.l.b16 %v1235
    %v2478 = vpack.c.b16 %v2477, %v2476
    %v2481 = vsel %vm1720, %v2473, 0
    %2483 = vmatpush.bf16.msra.mxu0 0
    %2484 = vmatpush.bf16.msra.mxu0 0
    %2485 = vmatpush.bf16.msra.mxu0 0
    %2486 = vmatpush.bf16.msra.mxu0 0
    %2487 = vmatpush.bf16.msra.mxu0 0
    %2488 = vmatpush.bf16.msra.mxu0 0
    %2489 = vmatpush.bf16.msra.mxu0 0
    %2490 = vmatpush.bf16.msra.mxu0 %v2478
    %2491 = vmatmul.bf16.gmra.mxu0 %v2481
    %v2492 = vpop.f32.mrf.mxu0
    %v2493 = vadd.f32 0.0, %v2492
    %v2494 = vpop.f32.mrf.mxu0
    %v2495 = vadd.f32 0.0, %v2494
    %2496 = vdwg.mxu0
    %v2499 = vunpack.c.l.b16 %v2101
    %v2500 = vunpack.c.l.b16 %v2102
    %v2501 = vpack.c.b16 %v2500, %v2499
    %v2504 = vunpack.c.l.b16 %v1236
    %v2505 = vunpack.c.l.b16 %v1237
    %v2506 = vpack.c.b16 %v2505, %v2504
    %v2509 = vsel %vm1720, %v2501, 0
    %2511 = vmatpush.bf16.msra.mxu0 0
    %2512 = vmatpush.bf16.msra.mxu0 0
    %2513 = vmatpush.bf16.msra.mxu0 0
    %2514 = vmatpush.bf16.msra.mxu0 0
    %2515 = vmatpush.bf16.msra.mxu0 0
    %2516 = vmatpush.bf16.msra.mxu0 0
    %2517 = vmatpush.bf16.msra.mxu0 0
    %2518 = vmatpush.bf16.msra.mxu0 %v2506
    %2519 = vmatmul.bf16.gmra.mxu0 %v2509
    %v2520 = vpop.f32.mrf.mxu0
    %v2521 = vadd.f32 0.0, %v2520
    %v2522 = vpop.f32.mrf.mxu0
    %v2523 = vadd.f32 0.0, %v2522
    %2524 = vdwg.mxu0
    %v2527 = vunpack.c.l.b16 %v2103
    %v2528 = vunpack.c.l.b16 %v2104
    %v2529 = vpack.c.b16 %v2528, %v2527
    %v2532 = vunpack.c.l.b16 %v1238
    %v2533 = vunpack.c.l.b16 %v1239
    %v2534 = vpack.c.b16 %v2533, %v2532
    %v2537 = vsel %vm1720, %v2529, 0
    %2539 = vmatpush.bf16.msra.mxu0 0
    %2540 = vmatpush.bf16.msra.mxu0 0
    %2541 = vmatpush.bf16.msra.mxu0 0
    %2542 = vmatpush.bf16.msra.mxu0 0
    %2543 = vmatpush.bf16.msra.mxu0 0
    %2544 = vmatpush.bf16.msra.mxu0 0
    %2545 = vmatpush.bf16.msra.mxu0 0
    %2546 = vmatpush.bf16.msra.mxu0 %v2534
    %2547 = vmatmul.bf16.gmra.mxu0 %v2537
    %v2548 = vpop.f32.mrf.mxu0
    %v2549 = vadd.f32 0.0, %v2548
    %v2550 = vpop.f32.mrf.mxu0
    %v2551 = vadd.f32 0.0, %v2550
    %2552 = vdwg.mxu0
    %v2553 = vpack.c.bf16 %v2131, %v2129
    %v2554 = vpack.c.bf16 %v2159, %v2157
    %v2555 = vpack.c.bf16 %v2187, %v2185
    %v2556 = vpack.c.bf16 %v2215, %v2213
    %v2557 = vpack.c.bf16 %v2243, %v2241
    %v2558 = vpack.c.bf16 %v2271, %v2269
    %v2559 = vpack.c.bf16 %v2299, %v2297
    %v2560 = vpack.c.bf16 %v2327, %v2325
    %v2561 = vpack.c.bf16 %v2355, %v2353
    %v2562 = vpack.c.bf16 %v2383, %v2381
    %v2563 = vpack.c.bf16 %v2411, %v2409
    %v2564 = vpack.c.bf16 %v2439, %v2437
    %v2565 = vpack.c.bf16 %v2467, %v2465
    %v2566 = vpack.c.bf16 %v2495, %v2493
    %v2567 = vpack.c.bf16 %v2523, %v2521
    %v2568 = vpack.c.bf16 %v2551, %v2549
    %v2569 = vpack.c.bf16 %v627, %v627
    %v2570 = vpack.c.bf16 %v629, %v629
    %v2571 = vpack.c.bf16 %v632, %v632
    %v2572 = vpack.c.bf16 %v634, %v634
    %v2573 = vpack.c.bf16 %v637, %v637
    %v2574 = vpack.c.bf16 %v639, %v639
    %v2575 = vpack.c.bf16 %v642, %v642
    %v2576 = vpack.c.bf16 %v644, %v644
    %v2577 = vpack.c.bf16 %v647, %v647
    %v2578 = vpack.c.bf16 %v649, %v649
    %v2579 = vpack.c.bf16 %v652, %v652
    %v2580 = vpack.c.bf16 %v654, %v654
    %v2581 = vpack.c.bf16 %v657, %v657
    %v2582 = vpack.c.bf16 %v659, %v659
    %v2583 = vpack.c.bf16 %v662, %v662
    %v2584 = vpack.c.bf16 %v664, %v664
    %v2585 = vpack.c.bf16 %v667, %v667
    %v2586 = vpack.c.bf16 %v669, %v669
    %v2587 = vpack.c.bf16 %v672, %v672
    %v2588 = vpack.c.bf16 %v674, %v674
    %v2589 = vpack.c.bf16 %v677, %v677
    %v2590 = vpack.c.bf16 %v679, %v679
    %v2591 = vpack.c.bf16 %v682, %v682
    %v2592 = vpack.c.bf16 %v684, %v684
    %v2593 = vpack.c.bf16 %v687, %v687
    %v2594 = vpack.c.bf16 %v689, %v689
    %v2595 = vpack.c.bf16 %v692, %v692
    %v2596 = vpack.c.bf16 %v694, %v694
    %v2597 = vpack.c.bf16 %v697, %v697
    %v2598 = vpack.c.bf16 %v699, %v699
    %v2599 = vpack.c.bf16 %v702, %v702
    %v2600 = vpack.c.bf16 %v704, %v704
    %v2601 = vpack.c.bf16 %v805, %v805
    %v2602 = vpack.c.bf16 %v807, %v807
    %v2603 = vpack.c.bf16 %v810, %v810
    %v2604 = vpack.c.bf16 %v812, %v812
    %v2605 = vpack.c.bf16 %v815, %v815
    %v2606 = vpack.c.bf16 %v817, %v817
    %v2607 = vpack.c.bf16 %v820, %v820
    %v2608 = vpack.c.bf16 %v822, %v822
    %v2609 = vpack.c.bf16 %v825, %v825
    %v2610 = vpack.c.bf16 %v827, %v827
    %v2611 = vpack.c.bf16 %v830, %v830
    %v2612 = vpack.c.bf16 %v832, %v832
    %v2613 = vpack.c.bf16 %v835, %v835
    %v2614 = vpack.c.bf16 %v837, %v837
    %v2615 = vpack.c.bf16 %v840, %v840
    %v2616 = vpack.c.bf16 %v842, %v842
    %v2617 = vpack.c.bf16 %v845, %v845
    %v2618 = vpack.c.bf16 %v847, %v847
    %v2619 = vpack.c.bf16 %v850, %v850
    %v2620 = vpack.c.bf16 %v852, %v852
    %v2621 = vpack.c.bf16 %v855, %v855
    %v2622 = vpack.c.bf16 %v857, %v857
    %v2623 = vpack.c.bf16 %v860, %v860
    %v2624 = vpack.c.bf16 %v862, %v862
    %v2625 = vpack.c.bf16 %v865, %v865
    %v2626 = vpack.c.bf16 %v867, %v867
    %v2627 = vpack.c.bf16 %v870, %v870
    %v2628 = vpack.c.bf16 %v872, %v872
    %v2629 = vpack.c.bf16 %v875, %v875
    %v2630 = vpack.c.bf16 %v877, %v877
    %v2631 = vpack.c.bf16 %v880, %v880
    %v2632 = vpack.c.bf16 %v882, %v882
    %v2633 = vpack.c.bf16 %v983, %v983
    %v2634 = vpack.c.bf16 %v985, %v985
    %v2635 = vpack.c.bf16 %v988, %v988
    %v2636 = vpack.c.bf16 %v990, %v990
    %v2637 = vpack.c.bf16 %v993, %v993
    %v2638 = vpack.c.bf16 %v995, %v995
    %v2639 = vpack.c.bf16 %v998, %v998
    %v2640 = vpack.c.bf16 %v1000, %v1000
    %v2641 = vpack.c.bf16 %v1003, %v1003
    %v2642 = vpack.c.bf16 %v1005, %v1005
    %v2643 = vpack.c.bf16 %v1008, %v1008
    %v2644 = vpack.c.bf16 %v1010, %v1010
    %v2645 = vpack.c.bf16 %v1013, %v1013
    %v2646 = vpack.c.bf16 %v1015, %v1015
    %v2647 = vpack.c.bf16 %v1018, %v1018
    %v2648 = vpack.c.bf16 %v1020, %v1020
    %v2649 = vpack.c.bf16 %v1023, %v1023
    %v2650 = vpack.c.bf16 %v1025, %v1025
    %v2651 = vpack.c.bf16 %v1028, %v1028
    %v2652 = vpack.c.bf16 %v1030, %v1030
    %v2653 = vpack.c.bf16 %v1033, %v1033
    %v2654 = vpack.c.bf16 %v1035, %v1035
    %v2655 = vpack.c.bf16 %v1038, %v1038
    %v2656 = vpack.c.bf16 %v1040, %v1040
    %v2657 = vpack.c.bf16 %v1043, %v1043
    %v2658 = vpack.c.bf16 %v1045, %v1045
    %v2659 = vpack.c.bf16 %v1048, %v1048
    %v2660 = vpack.c.bf16 %v1050, %v1050
    %v2661 = vpack.c.bf16 %v1053, %v1053
    %v2662 = vpack.c.bf16 %v1055, %v1055
    %v2663 = vpack.c.bf16 %v1058, %v1058
    %v2664 = vpack.c.bf16 %v1060, %v1060
    %v2667 = vunpack.c.l.b16 %v2569
    %v2668 = vunpack.c.l.b16 %v2570
    %v2669 = vpack.c.b16 %v2668, %v2667
    %v2673 = vunpack.c.l.b16 %v2601
    %v2674 = vunpack.c.l.b16 %v2602
    %v2675 = vpack.c.b16 %v2674, %v2673
    %2677 = vmatpush.bf16.xpose.msra.mxu0 0
    %2678 = vmatpush.bf16.xpose.msra.mxu0 0
    %2679 = vmatpush.bf16.xpose.msra.mxu0 0
    %2680 = vmatpush.bf16.xpose.msra.mxu0 0
    %2681 = vmatpush.bf16.xpose.msra.mxu0 0
    %2682 = vmatpush.bf16.xpose.msra.mxu0 0
    %2683 = vmatpush.bf16.xpose.msra.mxu0 0
    %2684 = vmatpush.bf16.xpose.msra.mxu0 %v2675
    %2685 = vmatmul.bf16.gmra.mxu0 %v2669
    %v2686 = vpop.f32.mrf.mxu0
    %v2687 = vadd.f32 0.0, %v2686
    %v2688 = vpop.f32.mrf.mxu0
    %v2689 = vadd.f32 0.0, %v2688
    %2690 = vdwg.mxu0
    %v2693 = vunpack.c.l.b16 %v2571
    %v2694 = vunpack.c.l.b16 %v2572
    %v2695 = vpack.c.b16 %v2694, %v2693
    %v2699 = vunpack.c.l.b16 %v2603
    %v2700 = vunpack.c.l.b16 %v2604
    %v2701 = vpack.c.b16 %v2700, %v2699
    %2703 = vmatpush.bf16.xpose.msra.mxu0 0
    %2704 = vmatpush.bf16.xpose.msra.mxu0 0
    %2705 = vmatpush.bf16.xpose.msra.mxu0 0
    %2706 = vmatpush.bf16.xpose.msra.mxu0 0
    %2707 = vmatpush.bf16.xpose.msra.mxu0 0
    %2708 = vmatpush.bf16.xpose.msra.mxu0 0
    %2709 = vmatpush.bf16.xpose.msra.mxu0 0
    %2710 = vmatpush.bf16.xpose.msra.mxu0 %v2701
    %2711 = vmatmul.bf16.gmra.mxu0 %v2695
    %v2712 = vpop.f32.mrf.mxu0
    %v2713 = vadd.f32 0.0, %v2712
    %v2714 = vpop.f32.mrf.mxu0
    %v2715 = vadd.f32 0.0, %v2714
    %2716 = vdwg.mxu0
    %v2719 = vunpack.c.l.b16 %v2573
    %v2720 = vunpack.c.l.b16 %v2574
    %v2721 = vpack.c.b16 %v2720, %v2719
    %v2725 = vunpack.c.l.b16 %v2605
    %v2726 = vunpack.c.l.b16 %v2606
    %v2727 = vpack.c.b16 %v2726, %v2725
    %2729 = vmatpush.bf16.xpose.msra.mxu0 0
    %2730 = vmatpush.bf16.xpose.msra.mxu0 0
    %2731 = vmatpush.bf16.xpose.msra.mxu0 0
    %2732 = vmatpush.bf16.xpose.msra.mxu0 0
    %2733 = vmatpush.bf16.xpose.msra.mxu0 0
    %2734 = vmatpush.bf16.xpose.msra.mxu0 0
    %2735 = vmatpush.bf16.xpose.msra.mxu0 0
    %2736 = vmatpush.bf16.xpose.msra.mxu0 %v2727
    %2737 = vmatmul.bf16.gmra.mxu0 %v2721
    %v2738 = vpop.f32.mrf.mxu0
    %v2739 = vadd.f32 0.0, %v2738
    %v2740 = vpop.f32.mrf.mxu0
    %v2741 = vadd.f32 0.0, %v2740
    %2742 = vdwg.mxu0
    %v2745 = vunpack.c.l.b16 %v2575
    %v2746 = vunpack.c.l.b16 %v2576
    %v2747 = vpack.c.b16 %v2746, %v2745
    %v2751 = vunpack.c.l.b16 %v2607
    %v2752 = vunpack.c.l.b16 %v2608
    %v2753 = vpack.c.b16 %v2752, %v2751
    %2755 = vmatpush.bf16.xpose.msra.mxu0 0
    %2756 = vmatpush.bf16.xpose.msra.mxu0 0
    %2757 = vmatpush.bf16.xpose.msra.mxu0 0
    %2758 = vmatpush.bf16.xpose.msra.mxu0 0
    %2759 = vmatpush.bf16.xpose.msra.mxu0 0
    %2760 = vmatpush.bf16.xpose.msra.mxu0 0
    %2761 = vmatpush.bf16.xpose.msra.mxu0 0
    %2762 = vmatpush.bf16.xpose.msra.mxu0 %v2753
    %2763 = vmatmul.bf16.gmra.mxu0 %v2747
    %v2764 = vpop.f32.mrf.mxu0
    %v2765 = vadd.f32 0.0, %v2764
    %v2766 = vpop.f32.mrf.mxu0
    %v2767 = vadd.f32 0.0, %v2766
    %2768 = vdwg.mxu0
    %v2771 = vunpack.c.l.b16 %v2577
    %v2772 = vunpack.c.l.b16 %v2578
    %v2773 = vpack.c.b16 %v2772, %v2771
    %v2777 = vunpack.c.l.b16 %v2609
    %v2778 = vunpack.c.l.b16 %v2610
    %v2779 = vpack.c.b16 %v2778, %v2777
    %2781 = vmatpush.bf16.xpose.msra.mxu0 0
    %2782 = vmatpush.bf16.xpose.msra.mxu0 0
    %2783 = vmatpush.bf16.xpose.msra.mxu0 0
    %2784 = vmatpush.bf16.xpose.msra.mxu0 0
    %2785 = vmatpush.bf16.xpose.msra.mxu0 0
    %2786 = vmatpush.bf16.xpose.msra.mxu0 0
    %2787 = vmatpush.bf16.xpose.msra.mxu0 0
    %2788 = vmatpush.bf16.xpose.msra.mxu0 %v2779
    %2789 = vmatmul.bf16.gmra.mxu0 %v2773
    %v2790 = vpop.f32.mrf.mxu0
    %v2791 = vadd.f32 0.0, %v2790
    %v2792 = vpop.f32.mrf.mxu0
    %v2793 = vadd.f32 0.0, %v2792
    %2794 = vdwg.mxu0
    %v2797 = vunpack.c.l.b16 %v2579
    %v2798 = vunpack.c.l.b16 %v2580
    %v2799 = vpack.c.b16 %v2798, %v2797
    %v2803 = vunpack.c.l.b16 %v2611
    %v2804 = vunpack.c.l.b16 %v2612
    %v2805 = vpack.c.b16 %v2804, %v2803
    %2807 = vmatpush.bf16.xpose.msra.mxu0 0
    %2808 = vmatpush.bf16.xpose.msra.mxu0 0
    %2809 = vmatpush.bf16.xpose.msra.mxu0 0
    %2810 = vmatpush.bf16.xpose.msra.mxu0 0
    %2811 = vmatpush.bf16.xpose.msra.mxu0 0
    %2812 = vmatpush.bf16.xpose.msra.mxu0 0
    %2813 = vmatpush.bf16.xpose.msra.mxu0 0
    %2814 = vmatpush.bf16.xpose.msra.mxu0 %v2805
    %2815 = vmatmul.bf16.gmra.mxu0 %v2799
    %v2816 = vpop.f32.mrf.mxu0
    %v2817 = vadd.f32 0.0, %v2816
    %v2818 = vpop.f32.mrf.mxu0
    %v2819 = vadd.f32 0.0, %v2818
    %2820 = vdwg.mxu0
    %v2823 = vunpack.c.l.b16 %v2581
    %v2824 = vunpack.c.l.b16 %v2582
    %v2825 = vpack.c.b16 %v2824, %v2823
    %v2829 = vunpack.c.l.b16 %v2613
    %v2830 = vunpack.c.l.b16 %v2614
    %v2831 = vpack.c.b16 %v2830, %v2829
    %2833 = vmatpush.bf16.xpose.msra.mxu0 0
    %2834 = vmatpush.bf16.xpose.msra.mxu0 0
    %2835 = vmatpush.bf16.xpose.msra.mxu0 0
    %2836 = vmatpush.bf16.xpose.msra.mxu0 0
    %2837 = vmatpush.bf16.xpose.msra.mxu0 0
    %2838 = vmatpush.bf16.xpose.msra.mxu0 0
    %2839 = vmatpush.bf16.xpose.msra.mxu0 0
    %2840 = vmatpush.bf16.xpose.msra.mxu0 %v2831
    %2841 = vmatmul.bf16.gmra.mxu0 %v2825
    %v2842 = vpop.f32.mrf.mxu0
    %v2843 = vadd.f32 0.0, %v2842
    %v2844 = vpop.f32.mrf.mxu0
    %v2845 = vadd.f32 0.0, %v2844
    %2846 = vdwg.mxu0
    %v2849 = vunpack.c.l.b16 %v2583
    %v2850 = vunpack.c.l.b16 %v2584
    %v2851 = vpack.c.b16 %v2850, %v2849
    %v2855 = vunpack.c.l.b16 %v2615
    %v2856 = vunpack.c.l.b16 %v2616
    %v2857 = vpack.c.b16 %v2856, %v2855
    %2859 = vmatpush.bf16.xpose.msra.mxu0 0
    %2860 = vmatpush.bf16.xpose.msra.mxu0 0
    %2861 = vmatpush.bf16.xpose.msra.mxu0 0
    %2862 = vmatpush.bf16.xpose.msra.mxu0 0
    %2863 = vmatpush.bf16.xpose.msra.mxu0 0
    %2864 = vmatpush.bf16.xpose.msra.mxu0 0
    %2865 = vmatpush.bf16.xpose.msra.mxu0 0
    %2866 = vmatpush.bf16.xpose.msra.mxu0 %v2857
    %2867 = vmatmul.bf16.gmra.mxu0 %v2851
    %v2868 = vpop.f32.mrf.mxu0
    %v2869 = vadd.f32 0.0, %v2868
    %v2870 = vpop.f32.mrf.mxu0
    %v2871 = vadd.f32 0.0, %v2870
    %2872 = vdwg.mxu0
    %v2875 = vunpack.c.l.b16 %v2585
    %v2876 = vunpack.c.l.b16 %v2586
    %v2877 = vpack.c.b16 %v2876, %v2875
    %v2881 = vunpack.c.l.b16 %v2617
    %v2882 = vunpack.c.l.b16 %v2618
    %v2883 = vpack.c.b16 %v2882, %v2881
    %2885 = vmatpush.bf16.xpose.msra.mxu0 0
    %2886 = vmatpush.bf16.xpose.msra.mxu0 0
    %2887 = vmatpush.bf16.xpose.msra.mxu0 0
    %2888 = vmatpush.bf16.xpose.msra.mxu0 0
    %2889 = vmatpush.bf16.xpose.msra.mxu0 0
    %2890 = vmatpush.bf16.xpose.msra.mxu0 0
    %2891 = vmatpush.bf16.xpose.msra.mxu0 0
    %2892 = vmatpush.bf16.xpose.msra.mxu0 %v2883
    %2893 = vmatmul.bf16.gmra.mxu0 %v2877
    %v2894 = vpop.f32.mrf.mxu0
    %v2895 = vadd.f32 0.0, %v2894
    %v2896 = vpop.f32.mrf.mxu0
    %v2897 = vadd.f32 0.0, %v2896
    %2898 = vdwg.mxu0
    %v2901 = vunpack.c.l.b16 %v2587
    %v2902 = vunpack.c.l.b16 %v2588
    %v2903 = vpack.c.b16 %v2902, %v2901
    %v2907 = vunpack.c.l.b16 %v2619
    %v2908 = vunpack.c.l.b16 %v2620
    %v2909 = vpack.c.b16 %v2908, %v2907
    %2911 = vmatpush.bf16.xpose.msra.mxu0 0
    %2912 = vmatpush.bf16.xpose.msra.mxu0 0
    %2913 = vmatpush.bf16.xpose.msra.mxu0 0
    %2914 = vmatpush.bf16.xpose.msra.mxu0 0
    %2915 = vmatpush.bf16.xpose.msra.mxu0 0
    %2916 = vmatpush.bf16.xpose.msra.mxu0 0
    %2917 = vmatpush.bf16.xpose.msra.mxu0 0
    %2918 = vmatpush.bf16.xpose.msra.mxu0 %v2909
    %2919 = vmatmul.bf16.gmra.mxu0 %v2903
    %v2920 = vpop.f32.mrf.mxu0
    %v2921 = vadd.f32 0.0, %v2920
    %v2922 = vpop.f32.mrf.mxu0
    %v2923 = vadd.f32 0.0, %v2922
    %2924 = vdwg.mxu0
    %v2927 = vunpack.c.l.b16 %v2589
    %v2928 = vunpack.c.l.b16 %v2590
    %v2929 = vpack.c.b16 %v2928, %v2927
    %v2933 = vunpack.c.l.b16 %v2621
    %v2934 = vunpack.c.l.b16 %v2622
    %v2935 = vpack.c.b16 %v2934, %v2933
    %2937 = vmatpush.bf16.xpose.msra.mxu0 0
    %2938 = vmatpush.bf16.xpose.msra.mxu0 0
    %2939 = vmatpush.bf16.xpose.msra.mxu0 0
    %2940 = vmatpush.bf16.xpose.msra.mxu0 0
    %2941 = vmatpush.bf16.xpose.msra.mxu0 0
    %2942 = vmatpush.bf16.xpose.msra.mxu0 0
    %2943 = vmatpush.bf16.xpose.msra.mxu0 0
    %2944 = vmatpush.bf16.xpose.msra.mxu0 %v2935
    %2945 = vmatmul.bf16.gmra.mxu0 %v2929
    %v2946 = vpop.f32.mrf.mxu0
    %v2947 = vadd.f32 0.0, %v2946
    %v2948 = vpop.f32.mrf.mxu0
    %v2949 = vadd.f32 0.0, %v2948
    %2950 = vdwg.mxu0
    %v2953 = vunpack.c.l.b16 %v2591
    %v2954 = vunpack.c.l.b16 %v2592
    %v2955 = vpack.c.b16 %v2954, %v2953
    %v2959 = vunpack.c.l.b16 %v2623
    %v2960 = vunpack.c.l.b16 %v2624
    %v2961 = vpack.c.b16 %v2960, %v2959
    %2963 = vmatpush.bf16.xpose.msra.mxu0 0
    %2964 = vmatpush.bf16.xpose.msra.mxu0 0
    %2965 = vmatpush.bf16.xpose.msra.mxu0 0
    %2966 = vmatpush.bf16.xpose.msra.mxu0 0
    %2967 = vmatpush.bf16.xpose.msra.mxu0 0
    %2968 = vmatpush.bf16.xpose.msra.mxu0 0
    %2969 = vmatpush.bf16.xpose.msra.mxu0 0
    %2970 = vmatpush.bf16.xpose.msra.mxu0 %v2961
    %2971 = vmatmul.bf16.gmra.mxu0 %v2955
    %v2972 = vpop.f32.mrf.mxu0
    %v2973 = vadd.f32 0.0, %v2972
    %v2974 = vpop.f32.mrf.mxu0
    %v2975 = vadd.f32 0.0, %v2974
    %2976 = vdwg.mxu0
    %v2979 = vunpack.c.l.b16 %v2593
    %v2980 = vunpack.c.l.b16 %v2594
    %v2981 = vpack.c.b16 %v2980, %v2979
    %v2985 = vunpack.c.l.b16 %v2625
    %v2986 = vunpack.c.l.b16 %v2626
    %v2987 = vpack.c.b16 %v2986, %v2985
    %2989 = vmatpush.bf16.xpose.msra.mxu0 0
    %2990 = vmatpush.bf16.xpose.msra.mxu0 0
    %2991 = vmatpush.bf16.xpose.msra.mxu0 0
    %2992 = vmatpush.bf16.xpose.msra.mxu0 0
    %2993 = vmatpush.bf16.xpose.msra.mxu0 0
    %2994 = vmatpush.bf16.xpose.msra.mxu0 0
    %2995 = vmatpush.bf16.xpose.msra.mxu0 0
    %2996 = vmatpush.bf16.xpose.msra.mxu0 %v2987
    %2997 = vmatmul.bf16.gmra.mxu0 %v2981
    %v2998 = vpop.f32.mrf.mxu0
    %v2999 = vadd.f32 0.0, %v2998
    %v3000 = vpop.f32.mrf.mxu0
    %v3001 = vadd.f32 0.0, %v3000
    %3002 = vdwg.mxu0
    %v3005 = vunpack.c.l.b16 %v2595
    %v3006 = vunpack.c.l.b16 %v2596
    %v3007 = vpack.c.b16 %v3006, %v3005
    %v3011 = vunpack.c.l.b16 %v2627
    %v3012 = vunpack.c.l.b16 %v2628
    %v3013 = vpack.c.b16 %v3012, %v3011
    %3015 = vmatpush.bf16.xpose.msra.mxu0 0
    %3016 = vmatpush.bf16.xpose.msra.mxu0 0
    %3017 = vmatpush.bf16.xpose.msra.mxu0 0
    %3018 = vmatpush.bf16.xpose.msra.mxu0 0
    %3019 = vmatpush.bf16.xpose.msra.mxu0 0
    %3020 = vmatpush.bf16.xpose.msra.mxu0 0
    %3021 = vmatpush.bf16.xpose.msra.mxu0 0
    %3022 = vmatpush.bf16.xpose.msra.mxu0 %v3013
    %3023 = vmatmul.bf16.gmra.mxu0 %v3007
    %v3024 = vpop.f32.mrf.mxu0
    %v3025 = vadd.f32 0.0, %v3024
    %v3026 = vpop.f32.mrf.mxu0
    %v3027 = vadd.f32 0.0, %v3026
    %3028 = vdwg.mxu0
    %v3031 = vunpack.c.l.b16 %v2597
    %v3032 = vunpack.c.l.b16 %v2598
    %v3033 = vpack.c.b16 %v3032, %v3031
    %v3037 = vunpack.c.l.b16 %v2629
    %v3038 = vunpack.c.l.b16 %v2630
    %v3039 = vpack.c.b16 %v3038, %v3037
    %3041 = vmatpush.bf16.xpose.msra.mxu0 0
    %3042 = vmatpush.bf16.xpose.msra.mxu0 0
    %3043 = vmatpush.bf16.xpose.msra.mxu0 0
    %3044 = vmatpush.bf16.xpose.msra.mxu0 0
    %3045 = vmatpush.bf16.xpose.msra.mxu0 0
    %3046 = vmatpush.bf16.xpose.msra.mxu0 0
    %3047 = vmatpush.bf16.xpose.msra.mxu0 0
    %3048 = vmatpush.bf16.xpose.msra.mxu0 %v3039
    %3049 = vmatmul.bf16.gmra.mxu0 %v3033
    %v3050 = vpop.f32.mrf.mxu0
    %v3051 = vadd.f32 0.0, %v3050
    %v3052 = vpop.f32.mrf.mxu0
    %v3053 = vadd.f32 0.0, %v3052
    %3054 = vdwg.mxu0
    %v3057 = vunpack.c.l.b16 %v2599
    %v3058 = vunpack.c.l.b16 %v2600
    %v3059 = vpack.c.b16 %v3058, %v3057
    %v3063 = vunpack.c.l.b16 %v2631
    %v3064 = vunpack.c.l.b16 %v2632
    %v3065 = vpack.c.b16 %v3064, %v3063
    %3067 = vmatpush.bf16.xpose.msra.mxu0 0
    %3068 = vmatpush.bf16.xpose.msra.mxu0 0
    %3069 = vmatpush.bf16.xpose.msra.mxu0 0
    %3070 = vmatpush.bf16.xpose.msra.mxu0 0
    %3071 = vmatpush.bf16.xpose.msra.mxu0 0
    %3072 = vmatpush.bf16.xpose.msra.mxu0 0
    %3073 = vmatpush.bf16.xpose.msra.mxu0 0
    %3074 = vmatpush.bf16.xpose.msra.mxu0 %v3065
    %3075 = vmatmul.bf16.gmra.mxu0 %v3059
    %v3076 = vpop.f32.mrf.mxu0
    %v3077 = vadd.f32 0.0, %v3076
    %v3078 = vpop.f32.mrf.mxu0
    %v3079 = vadd.f32 0.0, %v3078
    %3080 = vdwg.mxu0
    %v3081 = vmul.f32 %v2687, 0.25
    %v3082 = vmul.f32 %v2689, 0.25
    %v3083 = vmul.f32 %v2713, 0.25
    %v3084 = vmul.f32 %v2715, 0.25
    %v3085 = vmul.f32 %v2739, 0.25
    %v3086 = vmul.f32 %v2741, 0.25
    %v3087 = vmul.f32 %v2765, 0.25
    %v3088 = vmul.f32 %v2767, 0.25
    %v3089 = vmul.f32 %v2791, 0.25
    %v3090 = vmul.f32 %v2793, 0.25
    %v3091 = vmul.f32 %v2817, 0.25
    %v3092 = vmul.f32 %v2819, 0.25
    %v3093 = vmul.f32 %v2843, 0.25
    %v3094 = vmul.f32 %v2845, 0.25
    %v3095 = vmul.f32 %v2869, 0.25
    %v3096 = vmul.f32 %v2871, 0.25
    %v3097 = vmul.f32 %v2895, 0.25
    %v3098 = vmul.f32 %v2897, 0.25
    %v3099 = vmul.f32 %v2921, 0.25
    %v3100 = vmul.f32 %v2923, 0.25
    %v3101 = vmul.f32 %v2947, 0.25
    %v3102 = vmul.f32 %v2949, 0.25
    %v3103 = vmul.f32 %v2973, 0.25
    %v3104 = vmul.f32 %v2975, 0.25
    %v3105 = vmul.f32 %v2999, 0.25
    %v3106 = vmul.f32 %v3001, 0.25
    %v3107 = vmul.f32 %v3025, 0.25
    %v3108 = vmul.f32 %v3027, 0.25
    %v3109 = vmul.f32 %v3051, 0.25
    %v3110 = vmul.f32 %v3053, 0.25
    %v3111 = vmul.f32 %v3077, 0.25
    %v3112 = vmul.f32 %v3079, 0.25
    %v3113 = vadd.f32 %v3081, %v1080
    %v3114 = vadd.f32 %v3082, %v1080
    %v3115 = vadd.f32 %v3083, %v1081
    %v3116 = vadd.f32 %v3084, %v1081
    %v3117 = vadd.f32 %v3085, %v1082
    %v3118 = vadd.f32 %v3086, %v1082
    %v3119 = vadd.f32 %v3087, %v1083
    %v3120 = vadd.f32 %v3088, %v1083
    %v3121 = vadd.f32 %v3089, %v1084
    %v3122 = vadd.f32 %v3090, %v1084
    %v3123 = vadd.f32 %v3091, %v1085
    %v3124 = vadd.f32 %v3092, %v1085
    %v3125 = vadd.f32 %v3093, %v1086
    %v3126 = vadd.f32 %v3094, %v1086
    %v3127 = vadd.f32 %v3095, %v1087
    %v3128 = vadd.f32 %v3096, %v1087
    %v3129 = vadd.f32 %v3097, %v1088
    %v3130 = vadd.f32 %v3098, %v1088
    %v3131 = vadd.f32 %v3099, %v1089
    %v3132 = vadd.f32 %v3100, %v1089
    %v3133 = vadd.f32 %v3101, %v1090
    %v3134 = vadd.f32 %v3102, %v1090
    %v3135 = vadd.f32 %v3103, %v1091
    %v3136 = vadd.f32 %v3104, %v1091
    %v3137 = vadd.f32 %v3105, %v1092
    %v3138 = vadd.f32 %v3106, %v1092
    %v3139 = vadd.f32 %v3107, %v1093
    %v3140 = vadd.f32 %v3108, %v1093
    %v3141 = vadd.f32 %v3109, %v1094
    %v3142 = vadd.f32 %v3110, %v1094
    %v3143 = vadd.f32 %v3111, %v1095
    %v3144 = vadd.f32 %v3112, %v1095
    %v3145 = vsel %vm1720, %v3113, -inf
    %3146 = vmax.xlane.f32.xlu0 %v3145
    %v3147 = vpop.xlane.xlu0 %3146
    %v3148 = vsel %vm1720, %v3114, -inf
    %3149 = vmax.xlane.f32.xlu0 %v3148
    %v3150 = vpop.xlane.xlu0 %3149
    %v3151 = vsel %vm1720, %v3115, -inf
    %3152 = vmax.xlane.f32.xlu0 %v3151
    %v3153 = vpop.xlane.xlu0 %3152
    %v3154 = vsel %vm1720, %v3116, -inf
    %3155 = vmax.xlane.f32.xlu0 %v3154
    %v3156 = vpop.xlane.xlu0 %3155
    %v3157 = vsel %vm1720, %v3117, -inf
    %3158 = vmax.xlane.f32.xlu0 %v3157
    %v3159 = vpop.xlane.xlu0 %3158
    %v3160 = vsel %vm1720, %v3118, -inf
    %3161 = vmax.xlane.f32.xlu0 %v3160
    %v3162 = vpop.xlane.xlu0 %3161
    %v3163 = vsel %vm1720, %v3119, -inf
    %3164 = vmax.xlane.f32.xlu0 %v3163
    %v3165 = vpop.xlane.xlu0 %3164
    %v3166 = vsel %vm1720, %v3120, -inf
    %3167 = vmax.xlane.f32.xlu0 %v3166
    %v3168 = vpop.xlane.xlu0 %3167
    %v3169 = vsel %vm1720, %v3121, -inf
    %3170 = vmax.xlane.f32.xlu0 %v3169
    %v3171 = vpop.xlane.xlu0 %3170
    %v3172 = vsel %vm1720, %v3122, -inf
    %3173 = vmax.xlane.f32.xlu0 %v3172
    %v3174 = vpop.xlane.xlu0 %3173
    %v3175 = vsel %vm1720, %v3123, -inf
    %3176 = vmax.xlane.f32.xlu0 %v3175
    %v3177 = vpop.xlane.xlu0 %3176
    %v3178 = vsel %vm1720, %v3124, -inf
    %3179 = vmax.xlane.f32.xlu0 %v3178
    %v3180 = vpop.xlane.xlu0 %3179
    %v3181 = vsel %vm1720, %v3125, -inf
    %3182 = vmax.xlane.f32.xlu0 %v3181
    %v3183 = vpop.xlane.xlu0 %3182
    %v3184 = vsel %vm1720, %v3126, -inf
    %3185 = vmax.xlane.f32.xlu0 %v3184
    %v3186 = vpop.xlane.xlu0 %3185
    %v3187 = vsel %vm1720, %v3127, -inf
    %3188 = vmax.xlane.f32.xlu0 %v3187
    %v3189 = vpop.xlane.xlu0 %3188
    %v3190 = vsel %vm1720, %v3128, -inf
    %3191 = vmax.xlane.f32.xlu0 %v3190
    %v3192 = vpop.xlane.xlu0 %3191
    %v3193 = vsel %vm1720, %v3129, -inf
    %3194 = vmax.xlane.f32.xlu0 %v3193
    %v3195 = vpop.xlane.xlu0 %3194
    %v3196 = vsel %vm1720, %v3130, -inf
    %3197 = vmax.xlane.f32.xlu0 %v3196
    %v3198 = vpop.xlane.xlu0 %3197
    %v3199 = vsel %vm1720, %v3131, -inf
    %3200 = vmax.xlane.f32.xlu0 %v3199
    %v3201 = vpop.xlane.xlu0 %3200
    %v3202 = vsel %vm1720, %v3132, -inf
    %3203 = vmax.xlane.f32.xlu0 %v3202
    %v3204 = vpop.xlane.xlu0 %3203
    %v3205 = vsel %vm1720, %v3133, -inf
    %3206 = vmax.xlane.f32.xlu0 %v3205
    %v3207 = vpop.xlane.xlu0 %3206
    %v3208 = vsel %vm1720, %v3134, -inf
    %3209 = vmax.xlane.f32.xlu0 %v3208
    %v3210 = vpop.xlane.xlu0 %3209
    %v3211 = vsel %vm1720, %v3135, -inf
    %3212 = vmax.xlane.f32.xlu0 %v3211
    %v3213 = vpop.xlane.xlu0 %3212
    %v3214 = vsel %vm1720, %v3136, -inf
    %3215 = vmax.xlane.f32.xlu0 %v3214
    %v3216 = vpop.xlane.xlu0 %3215
    %v3217 = vsel %vm1720, %v3137, -inf
    %3218 = vmax.xlane.f32.xlu0 %v3217
    %v3219 = vpop.xlane.xlu0 %3218
    %v3220 = vsel %vm1720, %v3138, -inf
    %3221 = vmax.xlane.f32.xlu0 %v3220
    %v3222 = vpop.xlane.xlu0 %3221
    %v3223 = vsel %vm1720, %v3139, -inf
    %3224 = vmax.xlane.f32.xlu0 %v3223
    %v3225 = vpop.xlane.xlu0 %3224
    %v3226 = vsel %vm1720, %v3140, -inf
    %3227 = vmax.xlane.f32.xlu0 %v3226
    %v3228 = vpop.xlane.xlu0 %3227
    %v3229 = vsel %vm1720, %v3141, -inf
    %3230 = vmax.xlane.f32.xlu0 %v3229
    %v3231 = vpop.xlane.xlu0 %3230
    %v3232 = vsel %vm1720, %v3142, -inf
    %3233 = vmax.xlane.f32.xlu0 %v3232
    %v3234 = vpop.xlane.xlu0 %3233
    %v3235 = vsel %vm1720, %v3143, -inf
    %3236 = vmax.xlane.f32.xlu0 %v3235
    %v3237 = vpop.xlane.xlu0 %3236
    %v3238 = vsel %vm1720, %v3144, -inf
    %3239 = vmax.xlane.f32.xlu0 %v3238
    %v3240 = vpop.xlane.xlu0 %3239
    %v3241 = vsub.f32 %v3113, %v3147
    %v3242 = vsub.f32 %v3114, %v3150
    %v3243 = vsub.f32 %v3115, %v3153
    %v3244 = vsub.f32 %v3116, %v3156
    %v3245 = vsub.f32 %v3117, %v3159
    %v3246 = vsub.f32 %v3118, %v3162
    %v3247 = vsub.f32 %v3119, %v3165
    %v3248 = vsub.f32 %v3120, %v3168
    %v3249 = vsub.f32 %v3121, %v3171
    %v3250 = vsub.f32 %v3122, %v3174
    %v3251 = vsub.f32 %v3123, %v3177
    %v3252 = vsub.f32 %v3124, %v3180
    %v3253 = vsub.f32 %v3125, %v3183
    %v3254 = vsub.f32 %v3126, %v3186
    %v3255 = vsub.f32 %v3127, %v3189
    %v3256 = vsub.f32 %v3128, %v3192
    %v3257 = vsub.f32 %v3129, %v3195
    %v3258 = vsub.f32 %v3130, %v3198
    %v3259 = vsub.f32 %v3131, %v3201
    %v3260 = vsub.f32 %v3132, %v3204
    %v3261 = vsub.f32 %v3133, %v3207
    %v3262 = vsub.f32 %v3134, %v3210
    %v3263 = vsub.f32 %v3135, %v3213
    %v3264 = vsub.f32 %v3136, %v3216
    %v3265 = vsub.f32 %v3137, %v3219
    %v3266 = vsub.f32 %v3138, %v3222
    %v3267 = vsub.f32 %v3139, %v3225
    %v3268 = vsub.f32 %v3140, %v3228
    %v3269 = vsub.f32 %v3141, %v3231
    %v3270 = vsub.f32 %v3142, %v3234
    %v3271 = vsub.f32 %v3143, %v3237
    %v3272 = vsub.f32 %v3144, %v3240
    %v3273 = vmul.f32 %v3241, 1.442695
    %v3274 = vpow.pop %v3273
    %v3275 = vmul.f32 %v3242, 1.442695
    %v3276 = vpow.pop %v3275
    %v3277 = vmul.f32 %v3243, 1.442695
    %v3278 = vpow.pop %v3277
    %v3279 = vmul.f32 %v3244, 1.442695
    %v3280 = vpow.pop %v3279
    %v3281 = vmul.f32 %v3245, 1.442695
    %v3282 = vpow.pop %v3281
    %v3283 = vmul.f32 %v3246, 1.442695
    %v3284 = vpow.pop %v3283
    %v3285 = vmul.f32 %v3247, 1.442695
    %v3286 = vpow.pop %v3285
    %v3287 = vmul.f32 %v3248, 1.442695
    %v3288 = vpow.pop %v3287
    %v3289 = vmul.f32 %v3249, 1.442695
    %v3290 = vpow.pop %v3289
    %v3291 = vmul.f32 %v3250, 1.442695
    %v3292 = vpow.pop %v3291
    %v3293 = vmul.f32 %v3251, 1.442695
    %v3294 = vpow.pop %v3293
    %v3295 = vmul.f32 %v3252, 1.442695
    %v3296 = vpow.pop %v3295
    %v3297 = vmul.f32 %v3253, 1.442695
    %v3298 = vpow.pop %v3297
    %v3299 = vmul.f32 %v3254, 1.442695
    %v3300 = vpow.pop %v3299
    %v3301 = vmul.f32 %v3255, 1.442695
    %v3302 = vpow.pop %v3301
    %v3303 = vmul.f32 %v3256, 1.442695
    %v3304 = vpow.pop %v3303
    %v3305 = vmul.f32 %v3257, 1.442695
    %v3306 = vpow.pop %v3305
    %v3307 = vmul.f32 %v3258, 1.442695
    %v3308 = vpow.pop %v3307
    %v3309 = vmul.f32 %v3259, 1.442695
    %v3310 = vpow.pop %v3309
    %v3311 = vmul.f32 %v3260, 1.442695
    %v3312 = vpow.pop %v3311
    %v3313 = vmul.f32 %v3261, 1.442695
    %v3314 = vpow.pop %v3313
    %v3315 = vmul.f32 %v3262, 1.442695
    %v3316 = vpow.pop %v3315
    %v3317 = vmul.f32 %v3263, 1.442695
    %v3318 = vpow.pop %v3317
    %v3319 = vmul.f32 %v3264, 1.442695
    %v3320 = vpow.pop %v3319
    %v3321 = vmul.f32 %v3265, 1.442695
    %v3322 = vpow.pop %v3321
    %v3323 = vmul.f32 %v3266, 1.442695
    %v3324 = vpow.pop %v3323
    %v3325 = vmul.f32 %v3267, 1.442695
    %v3326 = vpow.pop %v3325
    %v3327 = vmul.f32 %v3268, 1.442695
    %v3328 = vpow.pop %v3327
    %v3329 = vmul.f32 %v3269, 1.442695
    %v3330 = vpow.pop %v3329
    %v3331 = vmul.f32 %v3270, 1.442695
    %v3332 = vpow.pop %v3331
    %v3333 = vmul.f32 %v3271, 1.442695
    %v3334 = vpow.pop %v3333
    %v3335 = vmul.f32 %v3272, 1.442695
    %v3336 = vpow.pop %v3335
    %v3337 = vsel %vm1720, %v3274, 0.0
    %3338 = vadd.xlane.f32.xlu0 %v3337
    %v3339 = vpop.xlane.xlu0 %3338
    %v3340 = vsel %vm1720, %v3276, 0.0
    %3341 = vadd.xlane.f32.xlu0 %v3340
    %v3342 = vpop.xlane.xlu0 %3341
    %v3343 = vsel %vm1720, %v3278, 0.0
    %3344 = vadd.xlane.f32.xlu0 %v3343
    %v3345 = vpop.xlane.xlu0 %3344
    %v3346 = vsel %vm1720, %v3280, 0.0
    %3347 = vadd.xlane.f32.xlu0 %v3346
    %v3348 = vpop.xlane.xlu0 %3347
    %v3349 = vsel %vm1720, %v3282, 0.0
    %3350 = vadd.xlane.f32.xlu0 %v3349
    %v3351 = vpop.xlane.xlu0 %3350
    %v3352 = vsel %vm1720, %v3284, 0.0
    %3353 = vadd.xlane.f32.xlu0 %v3352
    %v3354 = vpop.xlane.xlu0 %3353
    %v3355 = vsel %vm1720, %v3286, 0.0
    %3356 = vadd.xlane.f32.xlu0 %v3355
    %v3357 = vpop.xlane.xlu0 %3356
    %v3358 = vsel %vm1720, %v3288, 0.0
    %3359 = vadd.xlane.f32.xlu0 %v3358
    %v3360 = vpop.xlane.xlu0 %3359
    %v3361 = vsel %vm1720, %v3290, 0.0
    %3362 = vadd.xlane.f32.xlu0 %v3361
    %v3363 = vpop.xlane.xlu0 %3362
    %v3364 = vsel %vm1720, %v3292, 0.0
    %3365 = vadd.xlane.f32.xlu0 %v3364
    %v3366 = vpop.xlane.xlu0 %3365
    %v3367 = vsel %vm1720, %v3294, 0.0
    %3368 = vadd.xlane.f32.xlu0 %v3367
    %v3369 = vpop.xlane.xlu0 %3368
    %v3370 = vsel %vm1720, %v3296, 0.0
    %3371 = vadd.xlane.f32.xlu0 %v3370
    %v3372 = vpop.xlane.xlu0 %3371
    %v3373 = vsel %vm1720, %v3298, 0.0
    %3374 = vadd.xlane.f32.xlu0 %v3373
    %v3375 = vpop.xlane.xlu0 %3374
    %v3376 = vsel %vm1720, %v3300, 0.0
    %3377 = vadd.xlane.f32.xlu0 %v3376
    %v3378 = vpop.xlane.xlu0 %3377
    %v3379 = vsel %vm1720, %v3302, 0.0
    %3380 = vadd.xlane.f32.xlu0 %v3379
    %v3381 = vpop.xlane.xlu0 %3380
    %v3382 = vsel %vm1720, %v3304, 0.0
    %3383 = vadd.xlane.f32.xlu0 %v3382
    %v3384 = vpop.xlane.xlu0 %3383
    %v3385 = vsel %vm1720, %v3306, 0.0
    %3386 = vadd.xlane.f32.xlu0 %v3385
    %v3387 = vpop.xlane.xlu0 %3386
    %v3388 = vsel %vm1720, %v3308, 0.0
    %3389 = vadd.xlane.f32.xlu0 %v3388
    %v3390 = vpop.xlane.xlu0 %3389
    %v3391 = vsel %vm1720, %v3310, 0.0
    %3392 = vadd.xlane.f32.xlu0 %v3391
    %v3393 = vpop.xlane.xlu0 %3392
    %v3394 = vsel %vm1720, %v3312, 0.0
    %3395 = vadd.xlane.f32.xlu0 %v3394
    %v3396 = vpop.xlane.xlu0 %3395
    %v3397 = vsel %vm1720, %v3314, 0.0
    %3398 = vadd.xlane.f32.xlu0 %v3397
    %v3399 = vpop.xlane.xlu0 %3398
    %v3400 = vsel %vm1720, %v3316, 0.0
    %3401 = vadd.xlane.f32.xlu0 %v3400
    %v3402 = vpop.xlane.xlu0 %3401
    %v3403 = vsel %vm1720, %v3318, 0.0
    %3404 = vadd.xlane.f32.xlu0 %v3403
    %v3405 = vpop.xlane.xlu0 %3404
    %v3406 = vsel %vm1720, %v3320, 0.0
    %3407 = vadd.xlane.f32.xlu0 %v3406
    %v3408 = vpop.xlane.xlu0 %3407
    %v3409 = vsel %vm1720, %v3322, 0.0
    %3410 = vadd.xlane.f32.xlu0 %v3409
    %v3411 = vpop.xlane.xlu0 %3410
    %v3412 = vsel %vm1720, %v3324, 0.0
    %3413 = vadd.xlane.f32.xlu0 %v3412
    %v3414 = vpop.xlane.xlu0 %3413
    %v3415 = vsel %vm1720, %v3326, 0.0
    %3416 = vadd.xlane.f32.xlu0 %v3415
    %v3417 = vpop.xlane.xlu0 %3416
    %v3418 = vsel %vm1720, %v3328, 0.0
    %3419 = vadd.xlane.f32.xlu0 %v3418
    %v3420 = vpop.xlane.xlu0 %3419
    %v3421 = vsel %vm1720, %v3330, 0.0
    %3422 = vadd.xlane.f32.xlu0 %v3421
    %v3423 = vpop.xlane.xlu0 %3422
    %v3424 = vsel %vm1720, %v3332, 0.0
    %3425 = vadd.xlane.f32.xlu0 %v3424
    %v3426 = vpop.xlane.xlu0 %3425
    %v3427 = vsel %vm1720, %v3334, 0.0
    %3428 = vadd.xlane.f32.xlu0 %v3427
    %v3429 = vpop.xlane.xlu0 %3428
    %v3430 = vsel %vm1720, %v3336, 0.0
    %3431 = vadd.xlane.f32.xlu0 %v3430
    %v3432 = vpop.xlane.xlu0 %3431
    %v3433 = vrcp.pop %v3339
    %v3434 = vrcp.pop %v3342
    %v3435 = vrcp.pop %v3345
    %v3436 = vrcp.pop %v3348
    %v3437 = vrcp.pop %v3351
    %v3438 = vrcp.pop %v3354
    %v3439 = vrcp.pop %v3357
    %v3440 = vrcp.pop %v3360
    %v3441 = vrcp.pop %v3363
    %v3442 = vrcp.pop %v3366
    %v3443 = vrcp.pop %v3369
    %v3444 = vrcp.pop %v3372
    %v3445 = vrcp.pop %v3375
    %v3446 = vrcp.pop %v3378
    %v3447 = vrcp.pop %v3381
    %v3448 = vrcp.pop %v3384
    %v3449 = vrcp.pop %v3387
    %v3450 = vrcp.pop %v3390
    %v3451 = vrcp.pop %v3393
    %v3452 = vrcp.pop %v3396
    %v3453 = vrcp.pop %v3399
    %v3454 = vrcp.pop %v3402
    %v3455 = vrcp.pop %v3405
    %v3456 = vrcp.pop %v3408
    %v3457 = vrcp.pop %v3411
    %v3458 = vrcp.pop %v3414
    %v3459 = vrcp.pop %v3417
    %v3460 = vrcp.pop %v3420
    %v3461 = vrcp.pop %v3423
    %v3462 = vrcp.pop %v3426
    %v3463 = vrcp.pop %v3429
    %v3464 = vrcp.pop %v3432
    %v3465 = vmul.f32 %v3274, %v3433
    %v3466 = vmul.f32 %v3276, %v3434
    %v3467 = vmul.f32 %v3278, %v3435
    %v3468 = vmul.f32 %v3280, %v3436
    %v3469 = vmul.f32 %v3282, %v3437
    %v3470 = vmul.f32 %v3284, %v3438
    %v3471 = vmul.f32 %v3286, %v3439
    %v3472 = vmul.f32 %v3288, %v3440
    %v3473 = vmul.f32 %v3290, %v3441
    %v3474 = vmul.f32 %v3292, %v3442
    %v3475 = vmul.f32 %v3294, %v3443
    %v3476 = vmul.f32 %v3296, %v3444
    %v3477 = vmul.f32 %v3298, %v3445
    %v3478 = vmul.f32 %v3300, %v3446
    %v3479 = vmul.f32 %v3302, %v3447
    %v3480 = vmul.f32 %v3304, %v3448
    %v3481 = vmul.f32 %v3306, %v3449
    %v3482 = vmul.f32 %v3308, %v3450
    %v3483 = vmul.f32 %v3310, %v3451
    %v3484 = vmul.f32 %v3312, %v3452
    %v3485 = vmul.f32 %v3314, %v3453
    %v3486 = vmul.f32 %v3316, %v3454
    %v3487 = vmul.f32 %v3318, %v3455
    %v3488 = vmul.f32 %v3320, %v3456
    %v3489 = vmul.f32 %v3322, %v3457
    %v3490 = vmul.f32 %v3324, %v3458
    %v3491 = vmul.f32 %v3326, %v3459
    %v3492 = vmul.f32 %v3328, %v3460
    %v3493 = vmul.f32 %v3330, %v3461
    %v3494 = vmul.f32 %v3332, %v3462
    %v3495 = vmul.f32 %v3334, %v3463
    %v3496 = vmul.f32 %v3336, %v3464
    %v3497 = vpack.c.bf16 %v3465, %v3465
    %v3498 = vpack.c.bf16 %v3466, %v3466
    %v3499 = vpack.c.bf16 %v3467, %v3467
    %v3500 = vpack.c.bf16 %v3468, %v3468
    %v3501 = vpack.c.bf16 %v3469, %v3469
    %v3502 = vpack.c.bf16 %v3470, %v3470
    %v3503 = vpack.c.bf16 %v3471, %v3471
    %v3504 = vpack.c.bf16 %v3472, %v3472
    %v3505 = vpack.c.bf16 %v3473, %v3473
    %v3506 = vpack.c.bf16 %v3474, %v3474
    %v3507 = vpack.c.bf16 %v3475, %v3475
    %v3508 = vpack.c.bf16 %v3476, %v3476
    %v3509 = vpack.c.bf16 %v3477, %v3477
    %v3510 = vpack.c.bf16 %v3478, %v3478
    %v3511 = vpack.c.bf16 %v3479, %v3479
    %v3512 = vpack.c.bf16 %v3480, %v3480
    %v3513 = vpack.c.bf16 %v3481, %v3481
    %v3514 = vpack.c.bf16 %v3482, %v3482
    %v3515 = vpack.c.bf16 %v3483, %v3483
    %v3516 = vpack.c.bf16 %v3484, %v3484
    %v3517 = vpack.c.bf16 %v3485, %v3485
    %v3518 = vpack.c.bf16 %v3486, %v3486
    %v3519 = vpack.c.bf16 %v3487, %v3487
    %v3520 = vpack.c.bf16 %v3488, %v3488
    %v3521 = vpack.c.bf16 %v3489, %v3489
    %v3522 = vpack.c.bf16 %v3490, %v3490
    %v3523 = vpack.c.bf16 %v3491, %v3491
    %v3524 = vpack.c.bf16 %v3492, %v3492
    %v3525 = vpack.c.bf16 %v3493, %v3493
    %v3526 = vpack.c.bf16 %v3494, %v3494
    %v3527 = vpack.c.bf16 %v3495, %v3495
    %v3528 = vpack.c.bf16 %v3496, %v3496
    %v3531 = vunpack.c.l.b16 %v3497
    %v3532 = vunpack.c.l.b16 %v3498
    %v3533 = vpack.c.b16 %v3532, %v3531
    %v3536 = vunpack.c.l.b16 %v2633
    %v3537 = vunpack.c.l.b16 %v2634
    %v3538 = vpack.c.b16 %v3537, %v3536
    %v3541 = vsel %vm1720, %v3533, 0
    %3543 = vmatpush.bf16.msra.mxu0 0
    %3544 = vmatpush.bf16.msra.mxu0 0
    %3545 = vmatpush.bf16.msra.mxu0 0
    %3546 = vmatpush.bf16.msra.mxu0 0
    %3547 = vmatpush.bf16.msra.mxu0 0
    %3548 = vmatpush.bf16.msra.mxu0 0
    %3549 = vmatpush.bf16.msra.mxu0 0
    %3550 = vmatpush.bf16.msra.mxu0 %v3538
    %3551 = vmatmul.bf16.gmra.mxu0 %v3541
    %v3552 = vpop.f32.mrf.mxu0
    %v3553 = vadd.f32 0.0, %v3552
    %v3554 = vpop.f32.mrf.mxu0
    %v3555 = vadd.f32 0.0, %v3554
    %3556 = vdwg.mxu0
    %v3559 = vunpack.c.l.b16 %v3499
    %v3560 = vunpack.c.l.b16 %v3500
    %v3561 = vpack.c.b16 %v3560, %v3559
    %v3564 = vunpack.c.l.b16 %v2635
    %v3565 = vunpack.c.l.b16 %v2636
    %v3566 = vpack.c.b16 %v3565, %v3564
    %v3569 = vsel %vm1720, %v3561, 0
    %3571 = vmatpush.bf16.msra.mxu0 0
    %3572 = vmatpush.bf16.msra.mxu0 0
    %3573 = vmatpush.bf16.msra.mxu0 0
    %3574 = vmatpush.bf16.msra.mxu0 0
    %3575 = vmatpush.bf16.msra.mxu0 0
    %3576 = vmatpush.bf16.msra.mxu0 0
    %3577 = vmatpush.bf16.msra.mxu0 0
    %3578 = vmatpush.bf16.msra.mxu0 %v3566
    %3579 = vmatmul.bf16.gmra.mxu0 %v3569
    %v3580 = vpop.f32.mrf.mxu0
    %v3581 = vadd.f32 0.0, %v3580
    %v3582 = vpop.f32.mrf.mxu0
    %v3583 = vadd.f32 0.0, %v3582
    %3584 = vdwg.mxu0
    %v3587 = vunpack.c.l.b16 %v3501
    %v3588 = vunpack.c.l.b16 %v3502
    %v3589 = vpack.c.b16 %v3588, %v3587
    %v3592 = vunpack.c.l.b16 %v2637
    %v3593 = vunpack.c.l.b16 %v2638
    %v3594 = vpack.c.b16 %v3593, %v3592
    %v3597 = vsel %vm1720, %v3589, 0
    %3599 = vmatpush.bf16.msra.mxu0 0
    %3600 = vmatpush.bf16.msra.mxu0 0
    %3601 = vmatpush.bf16.msra.mxu0 0
    %3602 = vmatpush.bf16.msra.mxu0 0
    %3603 = vmatpush.bf16.msra.mxu0 0
    %3604 = vmatpush.bf16.msra.mxu0 0
    %3605 = vmatpush.bf16.msra.mxu0 0
    %3606 = vmatpush.bf16.msra.mxu0 %v3594
    %3607 = vmatmul.bf16.gmra.mxu0 %v3597
    %v3608 = vpop.f32.mrf.mxu0
    %v3609 = vadd.f32 0.0, %v3608
    %v3610 = vpop.f32.mrf.mxu0
    %v3611 = vadd.f32 0.0, %v3610
    %3612 = vdwg.mxu0
    %v3615 = vunpack.c.l.b16 %v3503
    %v3616 = vunpack.c.l.b16 %v3504
    %v3617 = vpack.c.b16 %v3616, %v3615
    %v3620 = vunpack.c.l.b16 %v2639
    %v3621 = vunpack.c.l.b16 %v2640
    %v3622 = vpack.c.b16 %v3621, %v3620
    %v3625 = vsel %vm1720, %v3617, 0
    %3627 = vmatpush.bf16.msra.mxu0 0
    %3628 = vmatpush.bf16.msra.mxu0 0
    %3629 = vmatpush.bf16.msra.mxu0 0
    %3630 = vmatpush.bf16.msra.mxu0 0
    %3631 = vmatpush.bf16.msra.mxu0 0
    %3632 = vmatpush.bf16.msra.mxu0 0
    %3633 = vmatpush.bf16.msra.mxu0 0
    %3634 = vmatpush.bf16.msra.mxu0 %v3622
    %3635 = vmatmul.bf16.gmra.mxu0 %v3625
    %v3636 = vpop.f32.mrf.mxu0
    %v3637 = vadd.f32 0.0, %v3636
    %v3638 = vpop.f32.mrf.mxu0
    %v3639 = vadd.f32 0.0, %v3638
    %3640 = vdwg.mxu0
    %v3643 = vunpack.c.l.b16 %v3505
    %v3644 = vunpack.c.l.b16 %v3506
    %v3645 = vpack.c.b16 %v3644, %v3643
    %v3648 = vunpack.c.l.b16 %v2641
    %v3649 = vunpack.c.l.b16 %v2642
    %v3650 = vpack.c.b16 %v3649, %v3648
    %v3653 = vsel %vm1720, %v3645, 0
    %3655 = vmatpush.bf16.msra.mxu0 0
    %3656 = vmatpush.bf16.msra.mxu0 0
    %3657 = vmatpush.bf16.msra.mxu0 0
    %3658 = vmatpush.bf16.msra.mxu0 0
    %3659 = vmatpush.bf16.msra.mxu0 0
    %3660 = vmatpush.bf16.msra.mxu0 0
    %3661 = vmatpush.bf16.msra.mxu0 0
    %3662 = vmatpush.bf16.msra.mxu0 %v3650
    %3663 = vmatmul.bf16.gmra.mxu0 %v3653
    %v3664 = vpop.f32.mrf.mxu0
    %v3665 = vadd.f32 0.0, %v3664
    %v3666 = vpop.f32.mrf.mxu0
    %v3667 = vadd.f32 0.0, %v3666
    %3668 = vdwg.mxu0
    %v3671 = vunpack.c.l.b16 %v3507
    %v3672 = vunpack.c.l.b16 %v3508
    %v3673 = vpack.c.b16 %v3672, %v3671
    %v3676 = vunpack.c.l.b16 %v2643
    %v3677 = vunpack.c.l.b16 %v2644
    %v3678 = vpack.c.b16 %v3677, %v3676
    %v3681 = vsel %vm1720, %v3673, 0
    %3683 = vmatpush.bf16.msra.mxu0 0
    %3684 = vmatpush.bf16.msra.mxu0 0
    %3685 = vmatpush.bf16.msra.mxu0 0
    %3686 = vmatpush.bf16.msra.mxu0 0
    %3687 = vmatpush.bf16.msra.mxu0 0
    %3688 = vmatpush.bf16.msra.mxu0 0
    %3689 = vmatpush.bf16.msra.mxu0 0
    %3690 = vmatpush.bf16.msra.mxu0 %v3678
    %3691 = vmatmul.bf16.gmra.mxu0 %v3681
    %v3692 = vpop.f32.mrf.mxu0
    %v3693 = vadd.f32 0.0, %v3692
    %v3694 = vpop.f32.mrf.mxu0
    %v3695 = vadd.f32 0.0, %v3694
    %3696 = vdwg.mxu0
    %v3699 = vunpack.c.l.b16 %v3509
    %v3700 = vunpack.c.l.b16 %v3510
    %v3701 = vpack.c.b16 %v3700, %v3699
    %v3704 = vunpack.c.l.b16 %v2645
    %v3705 = vunpack.c.l.b16 %v2646
    %v3706 = vpack.c.b16 %v3705, %v3704
    %v3709 = vsel %vm1720, %v3701, 0
    %3711 = vmatpush.bf16.msra.mxu0 0
    %3712 = vmatpush.bf16.msra.mxu0 0
    %3713 = vmatpush.bf16.msra.mxu0 0
    %3714 = vmatpush.bf16.msra.mxu0 0
    %3715 = vmatpush.bf16.msra.mxu0 0
    %3716 = vmatpush.bf16.msra.mxu0 0
    %3717 = vmatpush.bf16.msra.mxu0 0
    %3718 = vmatpush.bf16.msra.mxu0 %v3706
    %3719 = vmatmul.bf16.gmra.mxu0 %v3709
    %v3720 = vpop.f32.mrf.mxu0
    %v3721 = vadd.f32 0.0, %v3720
    %v3722 = vpop.f32.mrf.mxu0
    %v3723 = vadd.f32 0.0, %v3722
    %3724 = vdwg.mxu0
    %v3727 = vunpack.c.l.b16 %v3511
    %v3728 = vunpack.c.l.b16 %v3512
    %v3729 = vpack.c.b16 %v3728, %v3727
    %v3732 = vunpack.c.l.b16 %v2647
    %v3733 = vunpack.c.l.b16 %v2648
    %v3734 = vpack.c.b16 %v3733, %v3732
    %v3737 = vsel %vm1720, %v3729, 0
    %3739 = vmatpush.bf16.msra.mxu0 0
    %3740 = vmatpush.bf16.msra.mxu0 0
    %3741 = vmatpush.bf16.msra.mxu0 0
    %3742 = vmatpush.bf16.msra.mxu0 0
    %3743 = vmatpush.bf16.msra.mxu0 0
    %3744 = vmatpush.bf16.msra.mxu0 0
    %3745 = vmatpush.bf16.msra.mxu0 0
    %3746 = vmatpush.bf16.msra.mxu0 %v3734
    %3747 = vmatmul.bf16.gmra.mxu0 %v3737
    %v3748 = vpop.f32.mrf.mxu0
    %v3749 = vadd.f32 0.0, %v3748
    %v3750 = vpop.f32.mrf.mxu0
    %v3751 = vadd.f32 0.0, %v3750
    %3752 = vdwg.mxu0
    %v3755 = vunpack.c.l.b16 %v3513
    %v3756 = vunpack.c.l.b16 %v3514
    %v3757 = vpack.c.b16 %v3756, %v3755
    %v3760 = vunpack.c.l.b16 %v2649
    %v3761 = vunpack.c.l.b16 %v2650
    %v3762 = vpack.c.b16 %v3761, %v3760
    %v3765 = vsel %vm1720, %v3757, 0
    %3767 = vmatpush.bf16.msra.mxu0 0
    %3768 = vmatpush.bf16.msra.mxu0 0
    %3769 = vmatpush.bf16.msra.mxu0 0
    %3770 = vmatpush.bf16.msra.mxu0 0
    %3771 = vmatpush.bf16.msra.mxu0 0
    %3772 = vmatpush.bf16.msra.mxu0 0
    %3773 = vmatpush.bf16.msra.mxu0 0
    %3774 = vmatpush.bf16.msra.mxu0 %v3762
    %3775 = vmatmul.bf16.gmra.mxu0 %v3765
    %v3776 = vpop.f32.mrf.mxu0
    %v3777 = vadd.f32 0.0, %v3776
    %v3778 = vpop.f32.mrf.mxu0
    %v3779 = vadd.f32 0.0, %v3778
    %3780 = vdwg.mxu0
    %v3783 = vunpack.c.l.b16 %v3515
    %v3784 = vunpack.c.l.b16 %v3516
    %v3785 = vpack.c.b16 %v3784, %v3783
    %v3788 = vunpack.c.l.b16 %v2651
    %v3789 = vunpack.c.l.b16 %v2652
    %v3790 = vpack.c.b16 %v3789, %v3788
    %v3793 = vsel %vm1720, %v3785, 0
    %3795 = vmatpush.bf16.msra.mxu0 0
    %3796 = vmatpush.bf16.msra.mxu0 0
    %3797 = vmatpush.bf16.msra.mxu0 0
    %3798 = vmatpush.bf16.msra.mxu0 0
    %3799 = vmatpush.bf16.msra.mxu0 0
    %3800 = vmatpush.bf16.msra.mxu0 0
    %3801 = vmatpush.bf16.msra.mxu0 0
    %3802 = vmatpush.bf16.msra.mxu0 %v3790
    %3803 = vmatmul.bf16.gmra.mxu0 %v3793
    %v3804 = vpop.f32.mrf.mxu0
    %v3805 = vadd.f32 0.0, %v3804
    %v3806 = vpop.f32.mrf.mxu0
    %v3807 = vadd.f32 0.0, %v3806
    %3808 = vdwg.mxu0
    %v3811 = vunpack.c.l.b16 %v3517
    %v3812 = vunpack.c.l.b16 %v3518
    %v3813 = vpack.c.b16 %v3812, %v3811
    %v3816 = vunpack.c.l.b16 %v2653
    %v3817 = vunpack.c.l.b16 %v2654
    %v3818 = vpack.c.b16 %v3817, %v3816
    %v3821 = vsel %vm1720, %v3813, 0
    %3823 = vmatpush.bf16.msra.mxu0 0
    %3824 = vmatpush.bf16.msra.mxu0 0
    %3825 = vmatpush.bf16.msra.mxu0 0
    %3826 = vmatpush.bf16.msra.mxu0 0
    %3827 = vmatpush.bf16.msra.mxu0 0
    %3828 = vmatpush.bf16.msra.mxu0 0
    %3829 = vmatpush.bf16.msra.mxu0 0
    %3830 = vmatpush.bf16.msra.mxu0 %v3818
    %3831 = vmatmul.bf16.gmra.mxu0 %v3821
    %v3832 = vpop.f32.mrf.mxu0
    %v3833 = vadd.f32 0.0, %v3832
    %v3834 = vpop.f32.mrf.mxu0
    %v3835 = vadd.f32 0.0, %v3834
    %3836 = vdwg.mxu0
    %v3839 = vunpack.c.l.b16 %v3519
    %v3840 = vunpack.c.l.b16 %v3520
    %v3841 = vpack.c.b16 %v3840, %v3839
    %v3844 = vunpack.c.l.b16 %v2655
    %v3845 = vunpack.c.l.b16 %v2656
    %v3846 = vpack.c.b16 %v3845, %v3844
    %v3849 = vsel %vm1720, %v3841, 0
    %3851 = vmatpush.bf16.msra.mxu0 0
    %3852 = vmatpush.bf16.msra.mxu0 0
    %3853 = vmatpush.bf16.msra.mxu0 0
    %3854 = vmatpush.bf16.msra.mxu0 0
    %3855 = vmatpush.bf16.msra.mxu0 0
    %3856 = vmatpush.bf16.msra.mxu0 0
    %3857 = vmatpush.bf16.msra.mxu0 0
    %3858 = vmatpush.bf16.msra.mxu0 %v3846
    %3859 = vmatmul.bf16.gmra.mxu0 %v3849
    %v3860 = vpop.f32.mrf.mxu0
    %v3861 = vadd.f32 0.0, %v3860
    %v3862 = vpop.f32.mrf.mxu0
    %v3863 = vadd.f32 0.0, %v3862
    %3864 = vdwg.mxu0
    %v3867 = vunpack.c.l.b16 %v3521
    %v3868 = vunpack.c.l.b16 %v3522
    %v3869 = vpack.c.b16 %v3868, %v3867
    %v3872 = vunpack.c.l.b16 %v2657
    %v3873 = vunpack.c.l.b16 %v2658
    %v3874 = vpack.c.b16 %v3873, %v3872
    %v3877 = vsel %vm1720, %v3869, 0
    %3879 = vmatpush.bf16.msra.mxu0 0
    %3880 = vmatpush.bf16.msra.mxu0 0
    %3881 = vmatpush.bf16.msra.mxu0 0
    %3882 = vmatpush.bf16.msra.mxu0 0
    %3883 = vmatpush.bf16.msra.mxu0 0
    %3884 = vmatpush.bf16.msra.mxu0 0
    %3885 = vmatpush.bf16.msra.mxu0 0
    %3886 = vmatpush.bf16.msra.mxu0 %v3874
    %3887 = vmatmul.bf16.gmra.mxu0 %v3877
    %v3888 = vpop.f32.mrf.mxu0
    %v3889 = vadd.f32 0.0, %v3888
    %v3890 = vpop.f32.mrf.mxu0
    %v3891 = vadd.f32 0.0, %v3890
    %3892 = vdwg.mxu0
    %v3895 = vunpack.c.l.b16 %v3523
    %v3896 = vunpack.c.l.b16 %v3524
    %v3897 = vpack.c.b16 %v3896, %v3895
    %v3900 = vunpack.c.l.b16 %v2659
    %v3901 = vunpack.c.l.b16 %v2660
    %v3902 = vpack.c.b16 %v3901, %v3900
    %v3905 = vsel %vm1720, %v3897, 0
    %3907 = vmatpush.bf16.msra.mxu0 0
    %3908 = vmatpush.bf16.msra.mxu0 0
    %3909 = vmatpush.bf16.msra.mxu0 0
    %3910 = vmatpush.bf16.msra.mxu0 0
    %3911 = vmatpush.bf16.msra.mxu0 0
    %3912 = vmatpush.bf16.msra.mxu0 0
    %3913 = vmatpush.bf16.msra.mxu0 0
    %3914 = vmatpush.bf16.msra.mxu0 %v3902
    %3915 = vmatmul.bf16.gmra.mxu0 %v3905
    %v3916 = vpop.f32.mrf.mxu0
    %v3917 = vadd.f32 0.0, %v3916
    %v3918 = vpop.f32.mrf.mxu0
    %v3919 = vadd.f32 0.0, %v3918
    %3920 = vdwg.mxu0
    %v3923 = vunpack.c.l.b16 %v3525
    %v3924 = vunpack.c.l.b16 %v3526
    %v3925 = vpack.c.b16 %v3924, %v3923
    %v3928 = vunpack.c.l.b16 %v2661
    %v3929 = vunpack.c.l.b16 %v2662
    %v3930 = vpack.c.b16 %v3929, %v3928
    %v3933 = vsel %vm1720, %v3925, 0
    %3935 = vmatpush.bf16.msra.mxu0 0
    %3936 = vmatpush.bf16.msra.mxu0 0
    %3937 = vmatpush.bf16.msra.mxu0 0
    %3938 = vmatpush.bf16.msra.mxu0 0
    %3939 = vmatpush.bf16.msra.mxu0 0
    %3940 = vmatpush.bf16.msra.mxu0 0
    %3941 = vmatpush.bf16.msra.mxu0 0
    %3942 = vmatpush.bf16.msra.mxu0 %v3930
    %3943 = vmatmul.bf16.gmra.mxu0 %v3933
    %v3944 = vpop.f32.mrf.mxu0
    %v3945 = vadd.f32 0.0, %v3944
    %v3946 = vpop.f32.mrf.mxu0
    %v3947 = vadd.f32 0.0, %v3946
    %3948 = vdwg.mxu0
    %v3951 = vunpack.c.l.b16 %v3527
    %v3952 = vunpack.c.l.b16 %v3528
    %v3953 = vpack.c.b16 %v3952, %v3951
    %v3956 = vunpack.c.l.b16 %v2663
    %v3957 = vunpack.c.l.b16 %v2664
    %v3958 = vpack.c.b16 %v3957, %v3956
    %v3961 = vsel %vm1720, %v3953, 0
    %3963 = vmatpush.bf16.msra.mxu0 0
    %3964 = vmatpush.bf16.msra.mxu0 0
    %3965 = vmatpush.bf16.msra.mxu0 0
    %3966 = vmatpush.bf16.msra.mxu0 0
    %3967 = vmatpush.bf16.msra.mxu0 0
    %3968 = vmatpush.bf16.msra.mxu0 0
    %3969 = vmatpush.bf16.msra.mxu0 0
    %3970 = vmatpush.bf16.msra.mxu0 %v3958
    %3971 = vmatmul.bf16.gmra.mxu0 %v3961
    %v3972 = vpop.f32.mrf.mxu0
    %v3973 = vadd.f32 0.0, %v3972
    %v3974 = vpop.f32.mrf.mxu0
    %v3975 = vadd.f32 0.0, %v3974
    %3976 = vdwg.mxu0
    %v3977 = vpack.c.bf16 %v3555, %v3553
    %v3978 = vpack.c.bf16 %v3583, %v3581
    %v3979 = vpack.c.bf16 %v3611, %v3609
    %v3980 = vpack.c.bf16 %v3639, %v3637
    %v3981 = vpack.c.bf16 %v3667, %v3665
    %v3982 = vpack.c.bf16 %v3695, %v3693
    %v3983 = vpack.c.bf16 %v3723, %v3721
    %v3984 = vpack.c.bf16 %v3751, %v3749
    %v3985 = vpack.c.bf16 %v3779, %v3777
    %v3986 = vpack.c.bf16 %v3807, %v3805
    %v3987 = vpack.c.bf16 %v3835, %v3833
    %v3988 = vpack.c.bf16 %v3863, %v3861
    %v3989 = vpack.c.bf16 %v3891, %v3889
    %v3990 = vpack.c.bf16 %v3919, %v3917
    %v3991 = vpack.c.bf16 %v3947, %v3945
    %v3992 = vpack.c.bf16 %v3975, %v3973
    %v4009 = vunpack.c.l.b16 %v1128
    %v4010 = vunpack.c.l.b16 %v1129
    %v4011 = vunpack.c.l.b16 %v1130
    %v4012 = vunpack.c.l.b16 %v1131
    %v4013 = vunpack.c.l.b16 %v1132
    %v4014 = vunpack.c.l.b16 %v1133
    %v4015 = vunpack.c.l.b16 %v1134
    %v4016 = vunpack.c.l.b16 %v1135
    %v4017 = vunpack.c.l.b16 %v1136
    %v4018 = vunpack.c.l.b16 %v1137
    %v4019 = vunpack.c.l.b16 %v1138
    %v4020 = vunpack.c.l.b16 %v1139
    %v4021 = vunpack.c.l.b16 %v1140
    %v4022 = vunpack.c.l.b16 %v1141
    %v4023 = vunpack.c.l.b16 %v1142
    %v4024 = vunpack.c.l.b16 %v1143
    %v4025 = vpack.c.b16 %v4010, %v4009
    %v4026 = vpack.c.b16 %v4012, %v4011
    %v4027 = vpack.c.b16 %v4014, %v4013
    %v4028 = vpack.c.b16 %v4016, %v4015
    %v4029 = vpack.c.b16 %v4018, %v4017
    %v4030 = vpack.c.b16 %v4020, %v4019
    %v4031 = vpack.c.b16 %v4022, %v4021
    %v4032 = vpack.c.b16 %v4024, %v4023
    %4041 = vmatpush.bf16.msra.mxu0 %v4032
    %4042 = vmatpush.bf16.msra.mxu0 %v4031
    %4043 = vmatpush.bf16.msra.mxu0 %v4030
    %4044 = vmatpush.bf16.msra.mxu0 %v4029
    %4045 = vmatpush.bf16.msra.mxu0 %v4028
    %4046 = vmatpush.bf16.msra.mxu0 %v4027
    %4047 = vmatpush.bf16.msra.mxu0 %v4026
    %4048 = vmatpush.bf16.msra.mxu0 %v4025
    %4049 = vmatmul.bf16.gmra.mxu0 %v3977
    %v4050 = vpop.f32.mrf.mxu0
    %v4051 = vadd.f32 0.0, %v4050
    %v4052 = vpop.f32.mrf.mxu0
    %v4053 = vadd.f32 0.0, %v4052
    %4054 = vmatmul.bf16.gmra.mxu0 %v3978
    %v4055 = vpop.f32.mrf.mxu0
    %v4056 = vadd.f32 0.0, %v4055
    %v4057 = vpop.f32.mrf.mxu0
    %v4058 = vadd.f32 0.0, %v4057
    %4059 = vmatmul.bf16.gmra.mxu0 %v3979
    %v4060 = vpop.f32.mrf.mxu0
    %v4061 = vadd.f32 0.0, %v4060
    %v4062 = vpop.f32.mrf.mxu0
    %v4063 = vadd.f32 0.0, %v4062
    %4064 = vmatmul.bf16.gmra.mxu0 %v3980
    %v4065 = vpop.f32.mrf.mxu0
    %v4066 = vadd.f32 0.0, %v4065
    %v4067 = vpop.f32.mrf.mxu0
    %v4068 = vadd.f32 0.0, %v4067
    %4069 = vmatmul.bf16.gmra.mxu0 %v3981
    %v4070 = vpop.f32.mrf.mxu0
    %v4071 = vadd.f32 0.0, %v4070
    %v4072 = vpop.f32.mrf.mxu0
    %v4073 = vadd.f32 0.0, %v4072
    %4074 = vmatmul.bf16.gmra.mxu0 %v3982
    %v4075 = vpop.f32.mrf.mxu0
    %v4076 = vadd.f32 0.0, %v4075
    %v4077 = vpop.f32.mrf.mxu0
    %v4078 = vadd.f32 0.0, %v4077
    %4079 = vmatmul.bf16.gmra.mxu0 %v3983
    %v4080 = vpop.f32.mrf.mxu0
    %v4081 = vadd.f32 0.0, %v4080
    %v4082 = vpop.f32.mrf.mxu0
    %v4083 = vadd.f32 0.0, %v4082
    %4084 = vmatmul.bf16.gmra.mxu0 %v3984
    %v4085 = vpop.f32.mrf.mxu0
    %v4086 = vadd.f32 0.0, %v4085
    %v4087 = vpop.f32.mrf.mxu0
    %v4088 = vadd.f32 0.0, %v4087
    %4089 = vmatmul.bf16.gmra.mxu0 %v3985
    %v4090 = vpop.f32.mrf.mxu0
    %v4091 = vadd.f32 0.0, %v4090
    %v4092 = vpop.f32.mrf.mxu0
    %v4093 = vadd.f32 0.0, %v4092
    %4094 = vmatmul.bf16.gmra.mxu0 %v3986
    %v4095 = vpop.f32.mrf.mxu0
    %v4096 = vadd.f32 0.0, %v4095
    %v4097 = vpop.f32.mrf.mxu0
    %v4098 = vadd.f32 0.0, %v4097
    %4099 = vmatmul.bf16.gmra.mxu0 %v3987
    %v4100 = vpop.f32.mrf.mxu0
    %v4101 = vadd.f32 0.0, %v4100
    %v4102 = vpop.f32.mrf.mxu0
    %v4103 = vadd.f32 0.0, %v4102
    %4104 = vmatmul.bf16.gmra.mxu0 %v3988
    %v4105 = vpop.f32.mrf.mxu0
    %v4106 = vadd.f32 0.0, %v4105
    %v4107 = vpop.f32.mrf.mxu0
    %v4108 = vadd.f32 0.0, %v4107
    %4109 = vmatmul.bf16.gmra.mxu0 %v3989
    %v4110 = vpop.f32.mrf.mxu0
    %v4111 = vadd.f32 0.0, %v4110
    %v4112 = vpop.f32.mrf.mxu0
    %v4113 = vadd.f32 0.0, %v4112
    %4114 = vmatmul.bf16.gmra.mxu0 %v3990
    %v4115 = vpop.f32.mrf.mxu0
    %v4116 = vadd.f32 0.0, %v4115
    %v4117 = vpop.f32.mrf.mxu0
    %v4118 = vadd.f32 0.0, %v4117
    %4119 = vmatmul.bf16.gmra.mxu0 %v3991
    %v4120 = vpop.f32.mrf.mxu0
    %v4121 = vadd.f32 0.0, %v4120
    %v4122 = vpop.f32.mrf.mxu0
    %v4123 = vadd.f32 0.0, %v4122
    %4124 = vmatmul.bf16.gmra.mxu0 %v3992
    %v4125 = vpop.f32.mrf.mxu0
    %v4126 = vadd.f32 0.0, %v4125
    %v4127 = vpop.f32.mrf.mxu0
    %v4128 = vadd.f32 0.0, %v4127
    %4129 = vdwg.mxu0
    %v4146 = vunpack.c.l.b16 %v1112
    %v4147 = vunpack.c.l.b16 %v1113
    %v4148 = vunpack.c.l.b16 %v1114
    %v4149 = vunpack.c.l.b16 %v1115
    %v4150 = vunpack.c.l.b16 %v1116
    %v4151 = vunpack.c.l.b16 %v1117
    %v4152 = vunpack.c.l.b16 %v1118
    %v4153 = vunpack.c.l.b16 %v1119
    %v4154 = vunpack.c.l.b16 %v1120
    %v4155 = vunpack.c.l.b16 %v1121
    %v4156 = vunpack.c.l.b16 %v1122
    %v4157 = vunpack.c.l.b16 %v1123
    %v4158 = vunpack.c.l.b16 %v1124
    %v4159 = vunpack.c.l.b16 %v1125
    %v4160 = vunpack.c.l.b16 %v1126
    %v4161 = vunpack.c.l.b16 %v1127
    %v4162 = vpack.c.b16 %v4147, %v4146
    %v4163 = vpack.c.b16 %v4149, %v4148
    %v4164 = vpack.c.b16 %v4151, %v4150
    %v4165 = vpack.c.b16 %v4153, %v4152
    %v4166 = vpack.c.b16 %v4155, %v4154
    %v4167 = vpack.c.b16 %v4157, %v4156
    %v4168 = vpack.c.b16 %v4159, %v4158
    %v4169 = vpack.c.b16 %v4161, %v4160
    %4178 = vmatpush.bf16.msra.mxu0 %v4169
    %4179 = vmatpush.bf16.msra.mxu0 %v4168
    %4180 = vmatpush.bf16.msra.mxu0 %v4167
    %4181 = vmatpush.bf16.msra.mxu0 %v4166
    %4182 = vmatpush.bf16.msra.mxu0 %v4165
    %4183 = vmatpush.bf16.msra.mxu0 %v4164
    %4184 = vmatpush.bf16.msra.mxu0 %v4163
    %4185 = vmatpush.bf16.msra.mxu0 %v4162
    %4186 = vmatmul.bf16.gmra.mxu0 %v2553
    %v4187 = vpop.f32.mrf.mxu0
    %v4188 = vadd.f32 %v4051, %v4187
    %v4189 = vpop.f32.mrf.mxu0
    %v4190 = vadd.f32 %v4053, %v4189
    %4191 = vmatmul.bf16.gmra.mxu0 %v2554
    %v4192 = vpop.f32.mrf.mxu0
    %v4193 = vadd.f32 %v4056, %v4192
    %v4194 = vpop.f32.mrf.mxu0
    %v4195 = vadd.f32 %v4058, %v4194
    %4196 = vmatmul.bf16.gmra.mxu0 %v2555
    %v4197 = vpop.f32.mrf.mxu0
    %v4198 = vadd.f32 %v4061, %v4197
    %v4199 = vpop.f32.mrf.mxu0
    %v4200 = vadd.f32 %v4063, %v4199
    %4201 = vmatmul.bf16.gmra.mxu0 %v2556
    %v4202 = vpop.f32.mrf.mxu0
    %v4203 = vadd.f32 %v4066, %v4202
    %v4204 = vpop.f32.mrf.mxu0
    %v4205 = vadd.f32 %v4068, %v4204
    %4206 = vmatmul.bf16.gmra.mxu0 %v2557
    %v4207 = vpop.f32.mrf.mxu0
    %v4208 = vadd.f32 %v4071, %v4207
    %v4209 = vpop.f32.mrf.mxu0
    %v4210 = vadd.f32 %v4073, %v4209
    %4211 = vmatmul.bf16.gmra.mxu0 %v2558
    %v4212 = vpop.f32.mrf.mxu0
    %v4213 = vadd.f32 %v4076, %v4212
    %v4214 = vpop.f32.mrf.mxu0
    %v4215 = vadd.f32 %v4078, %v4214
    %4216 = vmatmul.bf16.gmra.mxu0 %v2559
    %v4217 = vpop.f32.mrf.mxu0
    %v4218 = vadd.f32 %v4081, %v4217
    %v4219 = vpop.f32.mrf.mxu0
    %v4220 = vadd.f32 %v4083, %v4219
    %4221 = vmatmul.bf16.gmra.mxu0 %v2560
    %v4222 = vpop.f32.mrf.mxu0
    %v4223 = vadd.f32 %v4086, %v4222
    %v4224 = vpop.f32.mrf.mxu0
    %v4225 = vadd.f32 %v4088, %v4224
    %4226 = vmatmul.bf16.gmra.mxu0 %v2561
    %v4227 = vpop.f32.mrf.mxu0
    %v4228 = vadd.f32 %v4091, %v4227
    %v4229 = vpop.f32.mrf.mxu0
    %v4230 = vadd.f32 %v4093, %v4229
    %4231 = vmatmul.bf16.gmra.mxu0 %v2562
    %v4232 = vpop.f32.mrf.mxu0
    %v4233 = vadd.f32 %v4096, %v4232
    %v4234 = vpop.f32.mrf.mxu0
    %v4235 = vadd.f32 %v4098, %v4234
    %4236 = vmatmul.bf16.gmra.mxu0 %v2563
    %v4237 = vpop.f32.mrf.mxu0
    %v4238 = vadd.f32 %v4101, %v4237
    %v4239 = vpop.f32.mrf.mxu0
    %v4240 = vadd.f32 %v4103, %v4239
    %4241 = vmatmul.bf16.gmra.mxu0 %v2564
    %v4242 = vpop.f32.mrf.mxu0
    %v4243 = vadd.f32 %v4106, %v4242
    %v4244 = vpop.f32.mrf.mxu0
    %v4245 = vadd.f32 %v4108, %v4244
    %4246 = vmatmul.bf16.gmra.mxu0 %v2565
    %v4247 = vpop.f32.mrf.mxu0
    %v4248 = vadd.f32 %v4111, %v4247
    %v4249 = vpop.f32.mrf.mxu0
    %v4250 = vadd.f32 %v4113, %v4249
    %4251 = vmatmul.bf16.gmra.mxu0 %v2566
    %v4252 = vpop.f32.mrf.mxu0
    %v4253 = vadd.f32 %v4116, %v4252
    %v4254 = vpop.f32.mrf.mxu0
    %v4255 = vadd.f32 %v4118, %v4254
    %4256 = vmatmul.bf16.gmra.mxu0 %v2567
    %v4257 = vpop.f32.mrf.mxu0
    %v4258 = vadd.f32 %v4121, %v4257
    %v4259 = vpop.f32.mrf.mxu0
    %v4260 = vadd.f32 %v4123, %v4259
    %4261 = vmatmul.bf16.gmra.mxu0 %v2568
    %v4262 = vpop.f32.mrf.mxu0
    %v4263 = vadd.f32 %v4126, %v4262
    %v4264 = vpop.f32.mrf.mxu0
    %v4265 = vadd.f32 %v4128, %v4264
    %4266 = vdwg.mxu0
    %v4267 = vld [vmem:[%s6] sm:$0x1]
    %v4269 = vperm.slane %v4267, 0
    %v4271 = vadd.f32 %v4188, %v4269
    %v4272 = vadd.f32 %v4190, %v4269
    %v4273 = vadd.f32 %v4193, %v4269
    %v4274 = vadd.f32 %v4195, %v4269
    %v4275 = vadd.f32 %v4198, %v4269
    %v4276 = vadd.f32 %v4200, %v4269
    %v4277 = vadd.f32 %v4203, %v4269
    %v4278 = vadd.f32 %v4205, %v4269
    %v4279 = vadd.f32 %v4208, %v4269
    %v4280 = vadd.f32 %v4210, %v4269
    %v4281 = vadd.f32 %v4213, %v4269
    %v4282 = vadd.f32 %v4215, %v4269
    %v4283 = vadd.f32 %v4218, %v4269
    %v4284 = vadd.f32 %v4220, %v4269
    %v4285 = vadd.f32 %v4223, %v4269
    %v4286 = vadd.f32 %v4225, %v4269
    %v4287 = vadd.f32 %v4228, %v4269
    %v4288 = vadd.f32 %v4230, %v4269
    %v4289 = vadd.f32 %v4233, %v4269
    %v4290 = vadd.f32 %v4235, %v4269
    %v4291 = vadd.f32 %v4238, %v4269
    %v4292 = vadd.f32 %v4240, %v4269
    %v4293 = vadd.f32 %v4243, %v4269
    %v4294 = vadd.f32 %v4245, %v4269
    %v4295 = vadd.f32 %v4248, %v4269
    %v4296 = vadd.f32 %v4250, %v4269
    %v4297 = vadd.f32 %v4253, %v4269
    %v4298 = vadd.f32 %v4255, %v4269
    %v4299 = vadd.f32 %v4258, %v4269
    %v4300 = vadd.f32 %v4260, %v4269
    %v4301 = vadd.f32 %v4263, %v4269
    %v4302 = vadd.f32 %v4265, %v4269
    %v4303 = vld [vmem:[#allocation8] sm:$0xff]
    %v4304 = vld [vmem:[#allocation8 + $0x8] sm:$0xff]
    %v4305 = vld [vmem:[#allocation8 + $0x10] sm:$0xff]
    %v4306 = vld [vmem:[#allocation8 + $0x18] sm:$0xff]
    %v4307 = vld [vmem:[#allocation8 + $0x20] sm:$0xff]
    %v4308 = vld [vmem:[#allocation8 + $0x28] sm:$0xff]
    %v4309 = vld [vmem:[#allocation8 + $0x30] sm:$0xff]
    %v4310 = vld [vmem:[#allocation8 + $0x38] sm:$0xff]
    %v4311 = vld [vmem:[#allocation8 + $0x40] sm:$0xff]
    %v4312 = vld [vmem:[#allocation8 + $0x48] sm:$0xff]
    %v4313 = vld [vmem:[#allocation8 + $0x50] sm:$0xff]
    %v4314 = vld [vmem:[#allocation8 + $0x58] sm:$0xff]
    %v4315 = vld [vmem:[#allocation8 + $0x60] sm:$0xff]
    %v4316 = vld [vmem:[#allocation8 + $0x68] sm:$0xff]
    %v4317 = vld [vmem:[#allocation8 + $0x70] sm:$0xff]
    %v4318 = vld [vmem:[#allocation8 + $0x78] sm:$0xff]
    %v4319 = vld [vmem:[%s8] sm:$0x1]
    %v4321 = vperm.slane %v4319, 0
    %4323 = vmatpush.msra.mxu0 %v4318
    %4324 = vmatpush.msra.mxu0 %v4317
    %4325 = vmatpush.msra.mxu0 %v4316
    %4326 = vmatpush.msra.mxu0 %v4315
    %4327 = vmatpush.msra.mxu0 %v4314
    %4328 = vmatpush.msra.mxu0 %v4313
    %4329 = vmatpush.msra.mxu0 %v4312
    %4330 = vmatpush.msra.mxu0 %v4311
    %4331 = vmatpush.msra.mxu0 %v4310
    %4332 = vmatpush.msra.mxu0 %v4309
    %4333 = vmatpush.msra.mxu0 %v4308
    %4334 = vmatpush.msra.mxu0 %v4307
    %4335 = vmatpush.msra.mxu0 %v4306
    %4336 = vmatpush.msra.mxu0 %v4305
    %4337 = vmatpush.msra.mxu0 %v4304
    %4338 = vmatpush.msra.mxu0 %v4303
    %4339 = vmatmul.f32.gmra.mxu0 %v4271
    %v4340 = vpop.f32.mrf.mxu0
    %v4341 = vadd.f32 %v4321, %v4340
    %4342 = vmatmul.f32.gmra.mxu0 %v4272
    %v4343 = vpop.f32.mrf.mxu0
    %v4344 = vadd.f32 %v4321, %v4343
    %4345 = vmatmul.f32.gmra.mxu0 %v4273
    %v4346 = vpop.f32.mrf.mxu0
    %v4347 = vadd.f32 %v4321, %v4346
    %4348 = vmatmul.f32.gmra.mxu0 %v4274
    %v4349 = vpop.f32.mrf.mxu0
    %v4350 = vadd.f32 %v4321, %v4349
    %4351 = vmatmul.f32.gmra.mxu0 %v4275
    %v4352 = vpop.f32.mrf.mxu0
    %v4353 = vadd.f32 %v4321, %v4352
    %4354 = vmatmul.f32.gmra.mxu0 %v4276
    %v4355 = vpop.f32.mrf.mxu0
    %v4356 = vadd.f32 %v4321, %v4355
    %4357 = vmatmul.f32.gmra.mxu0 %v4277
    %v4358 = vpop.f32.mrf.mxu0
    %v4359 = vadd.f32 %v4321, %v4358
    %4360 = vmatmul.f32.gmra.mxu0 %v4278
    %v4361 = vpop.f32.mrf.mxu0
    %v4362 = vadd.f32 %v4321, %v4361
    %4363 = vmatmul.f32.gmra.mxu0 %v4279
    %v4364 = vpop.f32.mrf.mxu0
    %v4365 = vadd.f32 %v4321, %v4364
    %4366 = vmatmul.f32.gmra.mxu0 %v4280
    %v4367 = vpop.f32.mrf.mxu0
    %v4368 = vadd.f32 %v4321, %v4367
    %4369 = vmatmul.f32.gmra.mxu0 %v4281
    %v4370 = vpop.f32.mrf.mxu0
    %v4371 = vadd.f32 %v4321, %v4370
    %4372 = vmatmul.f32.gmra.mxu0 %v4282
    %v4373 = vpop.f32.mrf.mxu0
    %v4374 = vadd.f32 %v4321, %v4373
    %4375 = vmatmul.f32.gmra.mxu0 %v4283
    %v4376 = vpop.f32.mrf.mxu0
    %v4377 = vadd.f32 %v4321, %v4376
    %4378 = vmatmul.f32.gmra.mxu0 %v4284
    %v4379 = vpop.f32.mrf.mxu0
    %v4380 = vadd.f32 %v4321, %v4379
    %4381 = vmatmul.f32.gmra.mxu0 %v4285
    %v4382 = vpop.f32.mrf.mxu0
    %v4383 = vadd.f32 %v4321, %v4382
    %4384 = vmatmul.f32.gmra.mxu0 %v4286
    %v4385 = vpop.f32.mrf.mxu0
    %v4386 = vadd.f32 %v4321, %v4385
    %4387 = vmatmul.f32.gmra.mxu0 %v4287
    %v4388 = vpop.f32.mrf.mxu0
    %v4389 = vadd.f32 %v4321, %v4388
    %4390 = vmatmul.f32.gmra.mxu0 %v4288
    %v4391 = vpop.f32.mrf.mxu0
    %v4392 = vadd.f32 %v4321, %v4391
    %4393 = vmatmul.f32.gmra.mxu0 %v4289
    %v4394 = vpop.f32.mrf.mxu0
    %v4395 = vadd.f32 %v4321, %v4394
    %4396 = vmatmul.f32.gmra.mxu0 %v4290
    %v4397 = vpop.f32.mrf.mxu0
    %v4398 = vadd.f32 %v4321, %v4397
    %4399 = vmatmul.f32.gmra.mxu0 %v4291
    %v4400 = vpop.f32.mrf.mxu0
    %v4401 = vadd.f32 %v4321, %v4400
    %4402 = vmatmul.f32.gmra.mxu0 %v4292
    %v4403 = vpop.f32.mrf.mxu0
    %v4404 = vadd.f32 %v4321, %v4403
    %4405 = vmatmul.f32.gmra.mxu0 %v4293
    %v4406 = vpop.f32.mrf.mxu0
    %v4407 = vadd.f32 %v4321, %v4406
    %4408 = vmatmul.f32.gmra.mxu0 %v4294
    %v4409 = vpop.f32.mrf.mxu0
    %v4410 = vadd.f32 %v4321, %v4409
    %4411 = vmatmul.f32.gmra.mxu0 %v4295
    %v4412 = vpop.f32.mrf.mxu0
    %v4413 = vadd.f32 %v4321, %v4412
    %4414 = vmatmul.f32.gmra.mxu0 %v4296
    %v4415 = vpop.f32.mrf.mxu0
    %v4416 = vadd.f32 %v4321, %v4415
    %4417 = vmatmul.f32.gmra.mxu0 %v4297
    %v4418 = vpop.f32.mrf.mxu0
    %v4419 = vadd.f32 %v4321, %v4418
    %4420 = vmatmul.f32.gmra.mxu0 %v4298
    %v4421 = vpop.f32.mrf.mxu0
    %v4422 = vadd.f32 %v4321, %v4421
    %4423 = vmatmul.f32.gmra.mxu0 %v4299
    %v4424 = vpop.f32.mrf.mxu0
    %v4425 = vadd.f32 %v4321, %v4424
    %4426 = vmatmul.f32.gmra.mxu0 %v4300
    %v4427 = vpop.f32.mrf.mxu0
    %v4428 = vadd.f32 %v4321, %v4427
    %4429 = vmatmul.f32.gmra.mxu0 %v4301
    %v4430 = vpop.f32.mrf.mxu0
    %v4431 = vadd.f32 %v4321, %v4430
    %4432 = vmatmul.f32.gmra.mxu0 %v4302
    %v4433 = vpop.f32.mrf.mxu0
    %v4434 = vadd.f32 %v4321, %v4433
    %4435 = vdwg.mxu0
    %v4436 = vtanh.pop %v4341
    %v4437 = vtanh.pop %v4344
    %v4438 = vtanh.pop %v4347
    %v4439 = vtanh.pop %v4350
    %v4440 = vtanh.pop %v4353
    %v4441 = vtanh.pop %v4356
    %v4442 = vtanh.pop %v4359
    %v4443 = vtanh.pop %v4362
    %v4444 = vtanh.pop %v4365
    %v4445 = vtanh.pop %v4368
    %v4446 = vtanh.pop %v4371
    %v4447 = vtanh.pop %v4374
    %v4448 = vtanh.pop %v4377
    %v4449 = vtanh.pop %v4380
    %v4450 = vtanh.pop %v4383
    %v4451 = vtanh.pop %v4386
    %v4452 = vtanh.pop %v4389
    %v4453 = vtanh.pop %v4392
    %v4454 = vtanh.pop %v4395
    %v4455 = vtanh.pop %v4398
    %v4456 = vtanh.pop %v4401
    %v4457 = vtanh.pop %v4404
    %v4458 = vtanh.pop %v4407
    %v4459 = vtanh.pop %v4410
    %v4460 = vtanh.pop %v4413
    %v4461 = vtanh.pop %v4416
    %v4462 = vtanh.pop %v4419
    %v4463 = vtanh.pop %v4422
    %v4464 = vtanh.pop %v4425
    %v4465 = vtanh.pop %v4428
    %v4466 = vtanh.pop %v4431
    %v4467 = vtanh.pop %v4434
    %v4468 = vld [vmem:[%s9] sm:$0xff]
    %v4469 = vld [vmem:[%s9 + $0x8] sm:$0xff]
    %v4470 = vld [vmem:[%s9 + $0x10] sm:$0xff]
    %v4471 = vld [vmem:[%s9 + $0x18] sm:$0xff]
    %v4472 = vld [vmem:[%s9 + $0x20] sm:$0xff]
    %v4473 = vld [vmem:[%s9 + $0x28] sm:$0xff]
    %v4474 = vld [vmem:[%s9 + $0x30] sm:$0xff]
    %v4475 = vld [vmem:[%s9 + $0x38] sm:$0xff]
    %v4476 = vld [vmem:[%s9 + $0x40] sm:$0xff]
    %v4477 = vld [vmem:[%s9 + $0x48] sm:$0xff]
    %v4478 = vld [vmem:[%s9 + $0x50] sm:$0xff]
    %v4479 = vld [vmem:[%s9 + $0x58] sm:$0xff]
    %v4480 = vld [vmem:[%s9 + $0x60] sm:$0xff]
    %v4481 = vld [vmem:[%s9 + $0x68] sm:$0xff]
    %v4482 = vld [vmem:[%s9 + $0x70] sm:$0xff]
    %v4483 = vld [vmem:[%s9 + $0x78] sm:$0xff]
    %4484 = vmatpush.msra.mxu0 %v4483
    %4485 = vmatpush.msra.mxu0 %v4482
    %4486 = vmatpush.msra.mxu0 %v4481
    %4487 = vmatpush.msra.mxu0 %v4480
    %4488 = vmatpush.msra.mxu0 %v4479
    %4489 = vmatpush.msra.mxu0 %v4478
    %4490 = vmatpush.msra.mxu0 %v4477
    %4491 = vmatpush.msra.mxu0 %v4476
    %4492 = vmatpush.msra.mxu0 %v4475
    %4493 = vmatpush.msra.mxu0 %v4474
    %4494 = vmatpush.msra.mxu0 %v4473
    %4495 = vmatpush.msra.mxu0 %v4472
    %4496 = vmatpush.msra.mxu0 %v4471
    %4497 = vmatpush.msra.mxu0 %v4470
    %4498 = vmatpush.msra.mxu0 %v4469
    %4499 = vmatpush.msra.mxu0 %v4468
    %4500 = vmatmul.f32.gmra.mxu0 %v4436
    %v4501 = vpop.f32.mrf.mxu0
    %v4502 = vadd.f32 0.0, %v4501
    %4503 = vmatmul.f32.gmra.mxu0 %v4437
    %v4504 = vpop.f32.mrf.mxu0
    %v4505 = vadd.f32 0.0, %v4504
    %4506 = vmatmul.f32.gmra.mxu0 %v4438
    %v4507 = vpop.f32.mrf.mxu0
    %v4508 = vadd.f32 0.0, %v4507
    %4509 = vmatmul.f32.gmra.mxu0 %v4439
    %v4510 = vpop.f32.mrf.mxu0
    %v4511 = vadd.f32 0.0, %v4510
    %4512 = vmatmul.f32.gmra.mxu0 %v4440
    %v4513 = vpop.f32.mrf.mxu0
    %v4514 = vadd.f32 0.0, %v4513
    %4515 = vmatmul.f32.gmra.mxu0 %v4441
    %v4516 = vpop.f32.mrf.mxu0
    %v4517 = vadd.f32 0.0, %v4516
    %4518 = vmatmul.f32.gmra.mxu0 %v4442
    %v4519 = vpop.f32.mrf.mxu0
    %v4520 = vadd.f32 0.0, %v4519
    %4521 = vmatmul.f32.gmra.mxu0 %v4443
    %v4522 = vpop.f32.mrf.mxu0
    %v4523 = vadd.f32 0.0, %v4522
    %4524 = vmatmul.f32.gmra.mxu0 %v4444
    %v4525 = vpop.f32.mrf.mxu0
    %v4526 = vadd.f32 0.0, %v4525
    %4527 = vmatmul.f32.gmra.mxu0 %v4445
    %v4528 = vpop.f32.mrf.mxu0
    %v4529 = vadd.f32 0.0, %v4528
    %4530 = vmatmul.f32.gmra.mxu0 %v4446
    %v4531 = vpop.f32.mrf.mxu0
    %v4532 = vadd.f32 0.0, %v4531
    %4533 = vmatmul.f32.gmra.mxu0 %v4447
    %v4534 = vpop.f32.mrf.mxu0
    %v4535 = vadd.f32 0.0, %v4534
    %4536 = vmatmul.f32.gmra.mxu0 %v4448
    %v4537 = vpop.f32.mrf.mxu0
    %v4538 = vadd.f32 0.0, %v4537
    %4539 = vmatmul.f32.gmra.mxu0 %v4449
    %v4540 = vpop.f32.mrf.mxu0
    %v4541 = vadd.f32 0.0, %v4540
    %4542 = vmatmul.f32.gmra.mxu0 %v4450
    %v4543 = vpop.f32.mrf.mxu0
    %v4544 = vadd.f32 0.0, %v4543
    %4545 = vmatmul.f32.gmra.mxu0 %v4451
    %v4546 = vpop.f32.mrf.mxu0
    %v4547 = vadd.f32 0.0, %v4546
    %4548 = vmatmul.f32.gmra.mxu0 %v4452
    %v4549 = vpop.f32.mrf.mxu0
    %v4550 = vadd.f32 0.0, %v4549
    %4551 = vmatmul.f32.gmra.mxu0 %v4453
    %v4552 = vpop.f32.mrf.mxu0
    %v4553 = vadd.f32 0.0, %v4552
    %4554 = vmatmul.f32.gmra.mxu0 %v4454
    %v4555 = vpop.f32.mrf.mxu0
    %v4556 = vadd.f32 0.0, %v4555
    %4557 = vmatmul.f32.gmra.mxu0 %v4455
    %v4558 = vpop.f32.mrf.mxu0
    %v4559 = vadd.f32 0.0, %v4558
    %4560 = vmatmul.f32.gmra.mxu0 %v4456
    %v4561 = vpop.f32.mrf.mxu0
    %v4562 = vadd.f32 0.0, %v4561
    %4563 = vmatmul.f32.gmra.mxu0 %v4457
    %v4564 = vpop.f32.mrf.mxu0
    %v4565 = vadd.f32 0.0, %v4564
    %4566 = vmatmul.f32.gmra.mxu0 %v4458
    %v4567 = vpop.f32.mrf.mxu0
    %v4568 = vadd.f32 0.0, %v4567
    %4569 = vmatmul.f32.gmra.mxu0 %v4459
    %v4570 = vpop.f32.mrf.mxu0
    %v4571 = vadd.f32 0.0, %v4570
    %4572 = vmatmul.f32.gmra.mxu0 %v4460
    %v4573 = vpop.f32.mrf.mxu0
    %v4574 = vadd.f32 0.0, %v4573
    %4575 = vmatmul.f32.gmra.mxu0 %v4461
    %v4576 = vpop.f32.mrf.mxu0
    %v4577 = vadd.f32 0.0, %v4576
    %4578 = vmatmul.f32.gmra.mxu0 %v4462
    %v4579 = vpop.f32.mrf.mxu0
    %v4580 = vadd.f32 0.0, %v4579
    %4581 = vmatmul.f32.gmra.mxu0 %v4463
    %v4582 = vpop.f32.mrf.mxu0
    %v4583 = vadd.f32 0.0, %v4582
    %4584 = vmatmul.f32.gmra.mxu0 %v4464
    %v4585 = vpop.f32.mrf.mxu0
    %v4586 = vadd.f32 0.0, %v4585
    %4587 = vmatmul.f32.gmra.mxu0 %v4465
    %v4588 = vpop.f32.mrf.mxu0
    %v4589 = vadd.f32 0.0, %v4588
    %4590 = vmatmul.f32.gmra.mxu0 %v4466
    %v4591 = vpop.f32.mrf.mxu0
    %v4592 = vadd.f32 0.0, %v4591
    %4593 = vmatmul.f32.gmra.mxu0 %v4467
    %v4594 = vpop.f32.mrf.mxu0
    %v4595 = vadd.f32 0.0, %v4594
    %4596 = vdwg.mxu0
    %v4597 = vld [vmem:[%s2] sm:$0xff]
    %v4598 = vld [vmem:[%s2 + $0x8] sm:$0xff]
    %v4599 = vadd.f32 %v4502, %v4597
    %v4600 = vadd.f32 %v4505, %v4598
    %v4601 = vadd.f32 %v4508, %v4597
    %v4602 = vadd.f32 %v4511, %v4598
    %v4603 = vadd.f32 %v4514, %v4597
    %v4604 = vadd.f32 %v4517, %v4598
    %v4605 = vadd.f32 %v4520, %v4597
    %v4606 = vadd.f32 %v4523, %v4598
    %v4607 = vadd.f32 %v4526, %v4597
    %v4608 = vadd.f32 %v4529, %v4598
    %v4609 = vadd.f32 %v4532, %v4597
    %v4610 = vadd.f32 %v4535, %v4598
    %v4611 = vadd.f32 %v4538, %v4597
    %v4612 = vadd.f32 %v4541, %v4598
    %v4613 = vadd.f32 %v4544, %v4597
    %v4614 = vadd.f32 %v4547, %v4598
    %v4615 = vadd.f32 %v4550, %v4597
    %v4616 = vadd.f32 %v4553, %v4598
    %v4617 = vadd.f32 %v4556, %v4597
    %v4618 = vadd.f32 %v4559, %v4598
    %v4619 = vadd.f32 %v4562, %v4597
    %v4620 = vadd.f32 %v4565, %v4598
    %v4621 = vadd.f32 %v4568, %v4597
    %v4622 = vadd.f32 %v4571, %v4598
    %v4623 = vadd.f32 %v4574, %v4597
    %v4624 = vadd.f32 %v4577, %v4598
    %v4625 = vadd.f32 %v4580, %v4597
    %v4626 = vadd.f32 %v4583, %v4598
    %v4627 = vadd.f32 %v4586, %v4597
    %v4628 = vadd.f32 %v4589, %v4598
    %v4629 = vadd.f32 %v4592, %v4597
    %v4630 = vadd.f32 %v4595, %v4598
    %vm4631 = vcmask 7168
    %v4632 = vsel %vm4631, %v4599, -inf
    %v4633 = vsel %vm4631, %v4600, -inf
    %v4634 = vmax.f32 %v4632, %v4633
    %v4635 = vrot.slane %v4634, 4
    %v4636 = vmax.f32 %v4634, %v4635
    %v4637 = vrot.slane %v4636, 2
    %v4638 = vmax.f32 %v4636, %v4637
    %v4639 = vrot.slane %v4638, 1
    %v4640 = vmax.f32 %v4638, %v4639
    %v4641 = vsel %vm4631, %v4601, -inf
    %v4642 = vsel %vm4631, %v4602, -inf
    %v4643 = vmax.f32 %v4641, %v4642
    %v4644 = vrot.slane %v4643, 4
    %v4645 = vmax.f32 %v4643, %v4644
    %v4646 = vrot.slane %v4645, 2
    %v4647 = vmax.f32 %v4645, %v4646
    %v4648 = vrot.slane %v4647, 1
    %v4649 = vmax.f32 %v4647, %v4648
    %v4650 = vsel %vm4631, %v4603, -inf
    %v4651 = vsel %vm4631, %v4604, -inf
    %v4652 = vmax.f32 %v4650, %v4651
    %v4653 = vrot.slane %v4652, 4
    %v4654 = vmax.f32 %v4652, %v4653
    %v4655 = vrot.slane %v4654, 2
    %v4656 = vmax.f32 %v4654, %v4655
    %v4657 = vrot.slane %v4656, 1
    %v4658 = vmax.f32 %v4656, %v4657
    %v4659 = vsel %vm4631, %v4605, -inf
    %v4660 = vsel %vm4631, %v4606, -inf
    %v4661 = vmax.f32 %v4659, %v4660
    %v4662 = vrot.slane %v4661, 4
    %v4663 = vmax.f32 %v4661, %v4662
    %v4664 = vrot.slane %v4663, 2
    %v4665 = vmax.f32 %v4663, %v4664
    %v4666 = vrot.slane %v4665, 1
    %v4667 = vmax.f32 %v4665, %v4666
    %v4668 = vsel %vm4631, %v4607, -inf
    %v4669 = vsel %vm4631, %v4608, -inf
    %v4670 = vmax.f32 %v4668, %v4669
    %v4671 = vrot.slane %v4670, 4
    %v4672 = vmax.f32 %v4670, %v4671
    %v4673 = vrot.slane %v4672, 2
    %v4674 = vmax.f32 %v4672, %v4673
    %v4675 = vrot.slane %v4674, 1
    %v4676 = vmax.f32 %v4674, %v4675
    %v4677 = vsel %vm4631, %v4609, -inf
    %v4678 = vsel %vm4631, %v4610, -inf
    %v4679 = vmax.f32 %v4677, %v4678
    %v4680 = vrot.slane %v4679, 4
    %v4681 = vmax.f32 %v4679, %v4680
    %v4682 = vrot.slane %v4681, 2
    %v4683 = vmax.f32 %v4681, %v4682
    %v4684 = vrot.slane %v4683, 1
    %v4685 = vmax.f32 %v4683, %v4684
    %v4686 = vsel %vm4631, %v4611, -inf
    %v4687 = vsel %vm4631, %v4612, -inf
    %v4688 = vmax.f32 %v4686, %v4687
    %v4689 = vrot.slane %v4688, 4
    %v4690 = vmax.f32 %v4688, %v4689
    %v4691 = vrot.slane %v4690, 2
    %v4692 = vmax.f32 %v4690, %v4691
    %v4693 = vrot.slane %v4692, 1
    %v4694 = vmax.f32 %v4692, %v4693
    %v4695 = vsel %vm4631, %v4613, -inf
    %v4696 = vsel %vm4631, %v4614, -inf
    %v4697 = vmax.f32 %v4695, %v4696
    %v4698 = vrot.slane %v4697, 4
    %v4699 = vmax.f32 %v4697, %v4698
    %v4700 = vrot.slane %v4699, 2
    %v4701 = vmax.f32 %v4699, %v4700
    %v4702 = vrot.slane %v4701, 1
    %v4703 = vmax.f32 %v4701, %v4702
    %v4704 = vsel %vm4631, %v4615, -inf
    %v4705 = vsel %vm4631, %v4616, -inf
    %v4706 = vmax.f32 %v4704, %v4705
    %v4707 = vrot.slane %v4706, 4
    %v4708 = vmax.f32 %v4706, %v4707
    %v4709 = vrot.slane %v4708, 2
    %v4710 = vmax.f32 %v4708, %v4709
    %v4711 = vrot.slane %v4710, 1
    %v4712 = vmax.f32 %v4710, %v4711
    %v4713 = vsel %vm4631, %v4617, -inf
    %v4714 = vsel %vm4631, %v4618, -inf
    %v4715 = vmax.f32 %v4713, %v4714
    %v4716 = vrot.slane %v4715, 4
    %v4717 = vmax.f32 %v4715, %v4716
    %v4718 = vrot.slane %v4717, 2
    %v4719 = vmax.f32 %v4717, %v4718
    %v4720 = vrot.slane %v4719, 1
    %v4721 = vmax.f32 %v4719, %v4720
    %v4722 = vsel %vm4631, %v4619, -inf
    %v4723 = vsel %vm4631, %v4620, -inf
    %v4724 = vmax.f32 %v4722, %v4723
    %v4725 = vrot.slane %v4724, 4
    %v4726 = vmax.f32 %v4724, %v4725
    %v4727 = vrot.slane %v4726, 2
    %v4728 = vmax.f32 %v4726, %v4727
    %v4729 = vrot.slane %v4728, 1
    %v4730 = vmax.f32 %v4728, %v4729
    %v4731 = vsel %vm4631, %v4621, -inf
    %v4732 = vsel %vm4631, %v4622, -inf
    %v4733 = vmax.f32 %v4731, %v4732
    %v4734 = vrot.slane %v4733, 4
    %v4735 = vmax.f32 %v4733, %v4734
    %v4736 = vrot.slane %v4735, 2
    %v4737 = vmax.f32 %v4735, %v4736
    %v4738 = vrot.slane %v4737, 1
    %v4739 = vmax.f32 %v4737, %v4738
    %v4740 = vsel %vm4631, %v4623, -inf
    %v4741 = vsel %vm4631, %v4624, -inf
    %v4742 = vmax.f32 %v4740, %v4741
    %v4743 = vrot.slane %v4742, 4
    %v4744 = vmax.f32 %v4742, %v4743
    %v4745 = vrot.slane %v4744, 2
    %v4746 = vmax.f32 %v4744, %v4745
    %v4747 = vrot.slane %v4746, 1
    %v4748 = vmax.f32 %v4746, %v4747
    %v4749 = vsel %vm4631, %v4625, -inf
    %v4750 = vsel %vm4631, %v4626, -inf
    %v4751 = vmax.f32 %v4749, %v4750
    %v4752 = vrot.slane %v4751, 4
    %v4753 = vmax.f32 %v4751, %v4752
    %v4754 = vrot.slane %v4753, 2
    %v4755 = vmax.f32 %v4753, %v4754
    %v4756 = vrot.slane %v4755, 1
    %v4757 = vmax.f32 %v4755, %v4756
    %v4758 = vsel %vm4631, %v4627, -inf
    %v4759 = vsel %vm4631, %v4628, -inf
    %v4760 = vmax.f32 %v4758, %v4759
    %v4761 = vrot.slane %v4760, 4
    %v4762 = vmax.f32 %v4760, %v4761
    %v4763 = vrot.slane %v4762, 2
    %v4764 = vmax.f32 %v4762, %v4763
    %v4765 = vrot.slane %v4764, 1
    %v4766 = vmax.f32 %v4764, %v4765
    %v4767 = vsel %vm4631, %v4629, -inf
    %v4768 = vsel %vm4631, %v4630, -inf
    %v4769 = vmax.f32 %v4767, %v4768
    %v4770 = vrot.slane %v4769, 4
    %v4771 = vmax.f32 %v4769, %v4770
    %v4772 = vrot.slane %v4771, 2
    %v4773 = vmax.f32 %v4771, %v4772
    %v4774 = vrot.slane %v4773, 1
    %v4775 = vmax.f32 %v4773, %v4774
    %v4776 = vsub.f32 %v4599, %v4640
    %v4777 = vsub.f32 %v4600, %v4640
    %v4778 = vsub.f32 %v4601, %v4649
    %v4779 = vsub.f32 %v4602, %v4649
    %v4780 = vsub.f32 %v4603, %v4658
    %v4781 = vsub.f32 %v4604, %v4658
    %v4782 = vsub.f32 %v4605, %v4667
    %v4783 = vsub.f32 %v4606, %v4667
    %v4784 = vsub.f32 %v4607, %v4676
    %v4785 = vsub.f32 %v4608, %v4676
    %v4786 = vsub.f32 %v4609, %v4685
    %v4787 = vsub.f32 %v4610, %v4685
    %v4788 = vsub.f32 %v4611, %v4694
    %v4789 = vsub.f32 %v4612, %v4694
    %v4790 = vsub.f32 %v4613, %v4703
    %v4791 = vsub.f32 %v4614, %v4703
    %v4792 = vsub.f32 %v4615, %v4712
    %v4793 = vsub.f32 %v4616, %v4712
    %v4794 = vsub.f32 %v4617, %v4721
    %v4795 = vsub.f32 %v4618, %v4721
    %v4796 = vsub.f32 %v4619, %v4730
    %v4797 = vsub.f32 %v4620, %v4730
    %v4798 = vsub.f32 %v4621, %v4739
    %v4799 = vsub.f32 %v4622, %v4739
    %v4800 = vsub.f32 %v4623, %v4748
    %v4801 = vsub.f32 %v4624, %v4748
    %v4802 = vsub.f32 %v4625, %v4757
    %v4803 = vsub.f32 %v4626, %v4757
    %v4804 = vsub.f32 %v4627, %v4766
    %v4805 = vsub.f32 %v4628, %v4766
    %v4806 = vsub.f32 %v4629, %v4775
    %v4807 = vsub.f32 %v4630, %v4775
    %v4808 = vmul.f32 %v4776, 1.442695
    %v4809 = vpow.pop %v4808
    %v4810 = vmul.f32 %v4777, 1.442695
    %v4811 = vpow.pop %v4810
    %v4812 = vmul.f32 %v4778, 1.442695
    %v4813 = vpow.pop %v4812
    %v4814 = vmul.f32 %v4779, 1.442695
    %v4815 = vpow.pop %v4814
    %v4816 = vmul.f32 %v4780, 1.442695
    %v4817 = vpow.pop %v4816
    %v4818 = vmul.f32 %v4781, 1.442695
    %v4819 = vpow.pop %v4818
    %v4820 = vmul.f32 %v4782, 1.442695
    %v4821 = vpow.pop %v4820
    %v4822 = vmul.f32 %v4783, 1.442695
    %v4823 = vpow.pop %v4822
    %v4824 = vmul.f32 %v4784, 1.442695
    %v4825 = vpow.pop %v4824
    %v4826 = vmul.f32 %v4785, 1.442695
    %v4827 = vpow.pop %v4826
    %v4828 = vmul.f32 %v4786, 1.442695
    %v4829 = vpow.pop %v4828
    %v4830 = vmul.f32 %v4787, 1.442695
    %v4831 = vpow.pop %v4830
    %v4832 = vmul.f32 %v4788, 1.442695
    %v4833 = vpow.pop %v4832
    %v4834 = vmul.f32 %v4789, 1.442695
    %v4835 = vpow.pop %v4834
    %v4836 = vmul.f32 %v4790, 1.442695
    %v4837 = vpow.pop %v4836
    %v4838 = vmul.f32 %v4791, 1.442695
    %v4839 = vpow.pop %v4838
    %v4840 = vmul.f32 %v4792, 1.442695
    %v4841 = vpow.pop %v4840
    %v4842 = vmul.f32 %v4793, 1.442695
    %v4843 = vpow.pop %v4842
    %v4844 = vmul.f32 %v4794, 1.442695
    %v4845 = vpow.pop %v4844
    %v4846 = vmul.f32 %v4795, 1.442695
    %v4847 = vpow.pop %v4846
    %v4848 = vmul.f32 %v4796, 1.442695
    %v4849 = vpow.pop %v4848
    %v4850 = vmul.f32 %v4797, 1.442695
    %v4851 = vpow.pop %v4850
    %v4852 = vmul.f32 %v4798, 1.442695
    %v4853 = vpow.pop %v4852
    %v4854 = vmul.f32 %v4799, 1.442695
    %v4855 = vpow.pop %v4854
    %v4856 = vmul.f32 %v4800, 1.442695
    %v4857 = vpow.pop %v4856
    %v4858 = vmul.f32 %v4801, 1.442695
    %v4859 = vpow.pop %v4858
    %v4860 = vmul.f32 %v4802, 1.442695
    %v4861 = vpow.pop %v4860
    %v4862 = vmul.f32 %v4803, 1.442695
    %v4863 = vpow.pop %v4862
    %v4864 = vmul.f32 %v4804, 1.442695
    %v4865 = vpow.pop %v4864
    %v4866 = vmul.f32 %v4805, 1.442695
    %v4867 = vpow.pop %v4866
    %v4868 = vmul.f32 %v4806, 1.442695
    %v4869 = vpow.pop %v4868
    %v4870 = vmul.f32 %v4807, 1.442695
    %v4871 = vpow.pop %v4870
    %v4872 = vsel %vm4631, %v4809, 0.0
    %v4873 = vsel %vm4631, %v4811, 0.0
    %v4874 = vadd.f32 %v4872, %v4873
    %v4875 = vrot.slane %v4874, 4
    %v4876 = vadd.f32 %v4874, %v4875
    %v4877 = vrot.slane %v4876, 2
    %v4878 = vadd.f32 %v4876, %v4877
    %v4879 = vrot.slane %v4878, 1
    %v4880 = vadd.f32 %v4878, %v4879
    %v4881 = vsel %vm4631, %v4813, 0.0
    %v4882 = vsel %vm4631, %v4815, 0.0
    %v4883 = vadd.f32 %v4881, %v4882
    %v4884 = vrot.slane %v4883, 4
    %v4885 = vadd.f32 %v4883, %v4884
    %v4886 = vrot.slane %v4885, 2
    %v4887 = vadd.f32 %v4885, %v4886
    %v4888 = vrot.slane %v4887, 1
    %v4889 = vadd.f32 %v4887, %v4888
    %v4890 = vsel %vm4631, %v4817, 0.0
    %v4891 = vsel %vm4631, %v4819, 0.0
    %v4892 = vadd.f32 %v4890, %v4891
    %v4893 = vrot.slane %v4892, 4
    %v4894 = vadd.f32 %v4892, %v4893
    %v4895 = vrot.slane %v4894, 2
    %v4896 = vadd.f32 %v4894, %v4895
    %v4897 = vrot.slane %v4896, 1
    %v4898 = vadd.f32 %v4896, %v4897
    %v4899 = vsel %vm4631, %v4821, 0.0
    %v4900 = vsel %vm4631, %v4823, 0.0
    %v4901 = vadd.f32 %v4899, %v4900
    %v4902 = vrot.slane %v4901, 4
    %v4903 = vadd.f32 %v4901, %v4902
    %v4904 = vrot.slane %v4903, 2
    %v4905 = vadd.f32 %v4903, %v4904
    %v4906 = vrot.slane %v4905, 1
    %v4907 = vadd.f32 %v4905, %v4906
    %v4908 = vsel %vm4631, %v4825, 0.0
    %v4909 = vsel %vm4631, %v4827, 0.0
    %v4910 = vadd.f32 %v4908, %v4909
    %v4911 = vrot.slane %v4910, 4
    %v4912 = vadd.f32 %v4910, %v4911
    %v4913 = vrot.slane %v4912, 2
    %v4914 = vadd.f32 %v4912, %v4913
    %v4915 = vrot.slane %v4914, 1
    %v4916 = vadd.f32 %v4914, %v4915
    %v4917 = vsel %vm4631, %v4829, 0.0
    %v4918 = vsel %vm4631, %v4831, 0.0
    %v4919 = vadd.f32 %v4917, %v4918
    %v4920 = vrot.slane %v4919, 4
    %v4921 = vadd.f32 %v4919, %v4920
    %v4922 = vrot.slane %v4921, 2
    %v4923 = vadd.f32 %v4921, %v4922
    %v4924 = vrot.slane %v4923, 1
    %v4925 = vadd.f32 %v4923, %v4924
    %v4926 = vsel %vm4631, %v4833, 0.0
    %v4927 = vsel %vm4631, %v4835, 0.0
    %v4928 = vadd.f32 %v4926, %v4927
    %v4929 = vrot.slane %v4928, 4
    %v4930 = vadd.f32 %v4928, %v4929
    %v4931 = vrot.slane %v4930, 2
    %v4932 = vadd.f32 %v4930, %v4931
    %v4933 = vrot.slane %v4932, 1
    %v4934 = vadd.f32 %v4932, %v4933
    %v4935 = vsel %vm4631, %v4837, 0.0
    %v4936 = vsel %vm4631, %v4839, 0.0
    %v4937 = vadd.f32 %v4935, %v4936
    %v4938 = vrot.slane %v4937, 4
    %v4939 = vadd.f32 %v4937, %v4938
    %v4940 = vrot.slane %v4939, 2
    %v4941 = vadd.f32 %v4939, %v4940
    %v4942 = vrot.slane %v4941, 1
    %v4943 = vadd.f32 %v4941, %v4942
    %v4944 = vsel %vm4631, %v4841, 0.0
    %v4945 = vsel %vm4631, %v4843, 0.0
    %v4946 = vadd.f32 %v4944, %v4945
    %v4947 = vrot.slane %v4946, 4
    %v4948 = vadd.f32 %v4946, %v4947
    %v4949 = vrot.slane %v4948, 2
    %v4950 = vadd.f32 %v4948, %v4949
    %v4951 = vrot.slane %v4950, 1
    %v4952 = vadd.f32 %v4950, %v4951
    %v4953 = vsel %vm4631, %v4845, 0.0
    %v4954 = vsel %vm4631, %v4847, 0.0
    %v4955 = vadd.f32 %v4953, %v4954
    %v4956 = vrot.slane %v4955, 4
    %v4957 = vadd.f32 %v4955, %v4956
    %v4958 = vrot.slane %v4957, 2
    %v4959 = vadd.f32 %v4957, %v4958
    %v4960 = vrot.slane %v4959, 1
    %v4961 = vadd.f32 %v4959, %v4960
    %v4962 = vsel %vm4631, %v4849, 0.0
    %v4963 = vsel %vm4631, %v4851, 0.0
    %v4964 = vadd.f32 %v4962, %v4963
    %v4965 = vrot.slane %v4964, 4
    %v4966 = vadd.f32 %v4964, %v4965
    %v4967 = vrot.slane %v4966, 2
    %v4968 = vadd.f32 %v4966, %v4967
    %v4969 = vrot.slane %v4968, 1
    %v4970 = vadd.f32 %v4968, %v4969
    %v4971 = vsel %vm4631, %v4853, 0.0
    %v4972 = vsel %vm4631, %v4855, 0.0
    %v4973 = vadd.f32 %v4971, %v4972
    %v4974 = vrot.slane %v4973, 4
    %v4975 = vadd.f32 %v4973, %v4974
    %v4976 = vrot.slane %v4975, 2
    %v4977 = vadd.f32 %v4975, %v4976
    %v4978 = vrot.slane %v4977, 1
    %v4979 = vadd.f32 %v4977, %v4978
    %v4980 = vsel %vm4631, %v4857, 0.0
    %v4981 = vsel %vm4631, %v4859, 0.0
    %v4982 = vadd.f32 %v4980, %v4981
    %v4983 = vrot.slane %v4982, 4
    %v4984 = vadd.f32 %v4982, %v4983
    %v4985 = vrot.slane %v4984, 2
    %v4986 = vadd.f32 %v4984, %v4985
    %v4987 = vrot.slane %v4986, 1
    %v4988 = vadd.f32 %v4986, %v4987
    %v4989 = vsel %vm4631, %v4861, 0.0
    %v4990 = vsel %vm4631, %v4863, 0.0
    %v4991 = vadd.f32 %v4989, %v4990
    %v4992 = vrot.slane %v4991, 4
    %v4993 = vadd.f32 %v4991, %v4992
    %v4994 = vrot.slane %v4993, 2
    %v4995 = vadd.f32 %v4993, %v4994
    %v4996 = vrot.slane %v4995, 1
    %v4997 = vadd.f32 %v4995, %v4996
    %v4998 = vsel %vm4631, %v4865, 0.0
    %v4999 = vsel %vm4631, %v4867, 0.0
    %v5000 = vadd.f32 %v4998, %v4999
    %v5001 = vrot.slane %v5000, 4
    %v5002 = vadd.f32 %v5000, %v5001
    %v5003 = vrot.slane %v5002, 2
    %v5004 = vadd.f32 %v5002, %v5003
    %v5005 = vrot.slane %v5004, 1
    %v5006 = vadd.f32 %v5004, %v5005
    %v5007 = vsel %vm4631, %v4869, 0.0
    %v5008 = vsel %vm4631, %v4871, 0.0
    %v5009 = vadd.f32 %v5007, %v5008
    %v5010 = vrot.slane %v5009, 4
    %v5011 = vadd.f32 %v5009, %v5010
    %v5012 = vrot.slane %v5011, 2
    %v5013 = vadd.f32 %v5011, %v5012
    %v5014 = vrot.slane %v5013, 1
    %v5015 = vadd.f32 %v5013, %v5014
    %v5016 = vrcp.pop %v4880
    %v5017 = vrcp.pop %v4889
    %v5018 = vrcp.pop %v4898
    %v5019 = vrcp.pop %v4907
    %v5020 = vrcp.pop %v4916
    %v5021 = vrcp.pop %v4925
    %v5022 = vrcp.pop %v4934
    %v5023 = vrcp.pop %v4943
    %v5024 = vrcp.pop %v4952
    %v5025 = vrcp.pop %v4961
    %v5026 = vrcp.pop %v4970
    %v5027 = vrcp.pop %v4979
    %v5028 = vrcp.pop %v4988
    %v5029 = vrcp.pop %v4997
    %v5030 = vrcp.pop %v5006
    %v5031 = vrcp.pop %v5015
    %v5032 = vmul.f32 %v4809, %v5016
    %v5033 = vmul.f32 %v4811, %v5016
    %v5034 = vmul.f32 %v4813, %v5017
    %v5035 = vmul.f32 %v4815, %v5017
    %v5036 = vmul.f32 %v4817, %v5018
    %v5037 = vmul.f32 %v4819, %v5018
    %v5038 = vmul.f32 %v4821, %v5019
    %v5039 = vmul.f32 %v4823, %v5019
    %v5040 = vmul.f32 %v4825, %v5020
    %v5041 = vmul.f32 %v4827, %v5020
    %v5042 = vmul.f32 %v4829, %v5021
    %v5043 = vmul.f32 %v4831, %v5021
    %v5044 = vmul.f32 %v4833, %v5022
    %v5045 = vmul.f32 %v4835, %v5022
    %v5046 = vmul.f32 %v4837, %v5023
    %v5047 = vmul.f32 %v4839, %v5023
    %v5048 = vmul.f32 %v4841, %v5024
    %v5049 = vmul.f32 %v4843, %v5024
    %v5050 = vmul.f32 %v4845, %v5025
    %v5051 = vmul.f32 %v4847, %v5025
    %v5052 = vmul.f32 %v4849, %v5026
    %v5053 = vmul.f32 %v4851, %v5026
    %v5054 = vmul.f32 %v4853, %v5027
    %v5055 = vmul.f32 %v4855, %v5027
    %v5056 = vmul.f32 %v4857, %v5028
    %v5057 = vmul.f32 %v4859, %v5028
    %v5058 = vmul.f32 %v4861, %v5029
    %v5059 = vmul.f32 %v4863, %v5029
    %v5060 = vmul.f32 %v4865, %v5030
    %v5061 = vmul.f32 %v4867, %v5030
    %v5062 = vmul.f32 %v4869, %v5031
    %v5063 = vmul.f32 %v4871, %v5031
    %5065 = vset.pattern.permute.xlu0 0
    %5066 = vperm.xlu0 %5065, %v5032
    %v5067 = vpop.permute.xlu0 %5066
    %5070 = vset.pattern.permute.xlu0 0
    %5071 = vperm.xlu0 %5070, %v5033
    %v5072 = vpop.permute.xlu0 %5071
    %5075 = vset.pattern.permute.xlu0 0
    %5076 = vperm.xlu0 %5075, %v5034
    %v5077 = vpop.permute.xlu0 %5076
    %5080 = vset.pattern.permute.xlu0 0
    %5081 = vperm.xlu0 %5080, %v5035
    %v5082 = vpop.permute.xlu0 %5081
    %5085 = vset.pattern.permute.xlu0 0
    %5086 = vperm.xlu0 %5085, %v5036
    %v5087 = vpop.permute.xlu0 %5086
    %5090 = vset.pattern.permute.xlu0 0
    %5091 = vperm.xlu0 %5090, %v5037
    %v5092 = vpop.permute.xlu0 %5091
    %5095 = vset.pattern.permute.xlu0 0
    %5096 = vperm.xlu0 %5095, %v5038
    %v5097 = vpop.permute.xlu0 %5096
    %5100 = vset.pattern.permute.xlu0 0
    %5101 = vperm.xlu0 %5100, %v5039
    %v5102 = vpop.permute.xlu0 %5101
    %5105 = vset.pattern.permute.xlu0 0
    %5106 = vperm.xlu0 %5105, %v5040
    %v5107 = vpop.permute.xlu0 %5106
    %5110 = vset.pattern.permute.xlu0 0
    %5111 = vperm.xlu0 %5110, %v5041
    %v5112 = vpop.permute.xlu0 %5111
    %5115 = vset.pattern.permute.xlu0 0
    %5116 = vperm.xlu0 %5115, %v5042
    %v5117 = vpop.permute.xlu0 %5116
    %5120 = vset.pattern.permute.xlu0 0
    %5121 = vperm.xlu0 %5120, %v5043
    %v5122 = vpop.permute.xlu0 %5121
    %5125 = vset.pattern.permute.xlu0 0
    %5126 = vperm.xlu0 %5125, %v5044
    %v5127 = vpop.permute.xlu0 %5126
    %5130 = vset.pattern.permute.xlu0 0
    %5131 = vperm.xlu0 %5130, %v5045
    %v5132 = vpop.permute.xlu0 %5131
    %5135 = vset.pattern.permute.xlu0 0
    %5136 = vperm.xlu0 %5135, %v5046
    %v5137 = vpop.permute.xlu0 %5136
    %5140 = vset.pattern.permute.xlu0 0
    %5141 = vperm.xlu0 %5140, %v5047
    %v5142 = vpop.permute.xlu0 %5141
    %5145 = vset.pattern.permute.xlu0 0
    %5146 = vperm.xlu0 %5145, %v5048
    %v5147 = vpop.permute.xlu0 %5146
    %5150 = vset.pattern.permute.xlu0 0
    %5151 = vperm.xlu0 %5150, %v5049
    %v5152 = vpop.permute.xlu0 %5151
    %5155 = vset.pattern.permute.xlu0 0
    %5156 = vperm.xlu0 %5155, %v5050
    %v5157 = vpop.permute.xlu0 %5156
    %5160 = vset.pattern.permute.xlu0 0
    %5161 = vperm.xlu0 %5160, %v5051
    %v5162 = vpop.permute.xlu0 %5161
    %5165 = vset.pattern.permute.xlu0 0
    %5166 = vperm.xlu0 %5165, %v5052
    %v5167 = vpop.permute.xlu0 %5166
    %5170 = vset.pattern.permute.xlu0 0
    %5171 = vperm.xlu0 %5170, %v5053
    %v5172 = vpop.permute.xlu0 %5171
    %5175 = vset.pattern.permute.xlu0 0
    %5176 = vperm.xlu0 %5175, %v5054
    %v5177 = vpop.permute.xlu0 %5176
    %5180 = vset.pattern.permute.xlu0 0
    %5181 = vperm.xlu0 %5180, %v5055
    %v5182 = vpop.permute.xlu0 %5181
    %5185 = vset.pattern.permute.xlu0 0
    %5186 = vperm.xlu0 %5185, %v5056
    %v5187 = vpop.permute.xlu0 %5186
    %5190 = vset.pattern.permute.xlu0 0
    %5191 = vperm.xlu0 %5190, %v5057
    %v5192 = vpop.permute.xlu0 %5191
    %5195 = vset.pattern.permute.xlu0 0
    %5196 = vperm.xlu0 %5195, %v5058
    %v5197 = vpop.permute.xlu0 %5196
    %5200 = vset.pattern.permute.xlu0 0
    %5201 = vperm.xlu0 %5200, %v5059
    %v5202 = vpop.permute.xlu0 %5201
    %5205 = vset.pattern.permute.xlu0 0
    %5206 = vperm.xlu0 %5205, %v5060
    %v5207 = vpop.permute.xlu0 %5206
    %5210 = vset.pattern.permute.xlu0 0
    %5211 = vperm.xlu0 %5210, %v5061
    %v5212 = vpop.permute.xlu0 %5211
    %5215 = vset.pattern.permute.xlu0 0
    %5216 = vperm.xlu0 %5215, %v5062
    %v5217 = vpop.permute.xlu0 %5216
    %5220 = vset.pattern.permute.xlu0 0
    %5221 = vperm.xlu0 %5220, %v5063
    %v5222 = vpop.permute.xlu0 %5221
    %v5224 = vmul.f32 %v5067, %v4271
    %v5225 = vmul.f32 %v5072, %v4272
    %v5226 = vmul.f32 %v5077, %v4273
    %v5227 = vmul.f32 %v5082, %v4274
    %v5228 = vmul.f32 %v5087, %v4275
    %v5229 = vmul.f32 %v5092, %v4276
    %v5230 = vmul.f32 %v5097, %v4277
    %v5231 = vmul.f32 %v5102, %v4278
    %v5232 = vmul.f32 %v5107, %v4279
    %v5233 = vmul.f32 %v5112, %v4280
    %v5234 = vmul.f32 %v5117, %v4281
    %v5235 = vmul.f32 %v5122, %v4282
    %v5236 = vmul.f32 %v5127, %v4283
    %v5237 = vmul.f32 %v5132, %v4284
    %v5238 = vmul.f32 %v5137, %v4285
    %v5239 = vmul.f32 %v5142, %v4286
    %v5240 = vmul.f32 %v5147, %v4287
    %v5241 = vmul.f32 %v5152, %v4288
    %v5242 = vmul.f32 %v5157, %v4289
    %v5243 = vmul.f32 %v5162, %v4290
    %v5244 = vmul.f32 %v5167, %v4291
    %v5245 = vmul.f32 %v5172, %v4292
    %v5246 = vmul.f32 %v5177, %v4293
    %v5247 = vmul.f32 %v5182, %v4294
    %v5248 = vmul.f32 %v5187, %v4295
    %v5249 = vmul.f32 %v5192, %v4296
    %v5250 = vmul.f32 %v5197, %v4297
    %v5251 = vmul.f32 %v5202, %v4298
    %v5252 = vmul.f32 %v5207, %v4299
    %v5253 = vmul.f32 %v5212, %v4300
    %v5254 = vmul.f32 %v5217, %v4301
    %v5255 = vmul.f32 %v5222, %v4302
    %v5256 = vadd.f32 %v5224, %v5225
    %v5257 = vrot.slane %v5256, 4
    %v5258 = vadd.f32 %v5256, %v5257
    %v5259 = vrot.slane %v5258, 2
    %v5260 = vadd.f32 %v5258, %v5259
    %v5261 = vrot.slane %v5260, 1
    %v5262 = vadd.f32 %v5260, %v5261
    %v5263 = vadd.f32 %v5226, %v5227
    %v5264 = vrot.slane %v5263, 4
    %v5265 = vadd.f32 %v5263, %v5264
    %v5266 = vrot.slane %v5265, 2
    %v5267 = vadd.f32 %v5265, %v5266
    %v5268 = vrot.slane %v5267, 1
    %v5269 = vadd.f32 %v5267, %v5268
    %v5270 = vadd.f32 %v5228, %v5229
    %v5271 = vrot.slane %v5270, 4
    %v5272 = vadd.f32 %v5270, %v5271
    %v5273 = vrot.slane %v5272, 2
    %v5274 = vadd.f32 %v5272, %v5273
    %v5275 = vrot.slane %v5274, 1
    %v5276 = vadd.f32 %v5274, %v5275
    %v5277 = vadd.f32 %v5230, %v5231
    %v5278 = vrot.slane %v5277, 4
    %v5279 = vadd.f32 %v5277, %v5278
    %v5280 = vrot.slane %v5279, 2
    %v5281 = vadd.f32 %v5279, %v5280
    %v5282 = vrot.slane %v5281, 1
    %v5283 = vadd.f32 %v5281, %v5282
    %v5284 = vadd.f32 %v5232, %v5233
    %v5285 = vrot.slane %v5284, 4
    %v5286 = vadd.f32 %v5284, %v5285
    %v5287 = vrot.slane %v5286, 2
    %v5288 = vadd.f32 %v5286, %v5287
    %v5289 = vrot.slane %v5288, 1
    %v5290 = vadd.f32 %v5288, %v5289
    %v5291 = vadd.f32 %v5234, %v5235
    %v5292 = vrot.slane %v5291, 4
    %v5293 = vadd.f32 %v5291, %v5292
    %v5294 = vrot.slane %v5293, 2
    %v5295 = vadd.f32 %v5293, %v5294
    %v5296 = vrot.slane %v5295, 1
    %v5297 = vadd.f32 %v5295, %v5296
    %v5298 = vadd.f32 %v5236, %v5237
    %v5299 = vrot.slane %v5298, 4
    %v5300 = vadd.f32 %v5298, %v5299
    %v5301 = vrot.slane %v5300, 2
    %v5302 = vadd.f32 %v5300, %v5301
    %v5303 = vrot.slane %v5302, 1
    %v5304 = vadd.f32 %v5302, %v5303
    %v5305 = vadd.f32 %v5238, %v5239
    %v5306 = vrot.slane %v5305, 4
    %v5307 = vadd.f32 %v5305, %v5306
    %v5308 = vrot.slane %v5307, 2
    %v5309 = vadd.f32 %v5307, %v5308
    %v5310 = vrot.slane %v5309, 1
    %v5311 = vadd.f32 %v5309, %v5310
    %v5312 = vadd.f32 %v5240, %v5241
    %v5313 = vrot.slane %v5312, 4
    %v5314 = vadd.f32 %v5312, %v5313
    %v5315 = vrot.slane %v5314, 2
    %v5316 = vadd.f32 %v5314, %v5315
    %v5317 = vrot.slane %v5316, 1
    %v5318 = vadd.f32 %v5316, %v5317
    %v5319 = vadd.f32 %v5242, %v5243
    %v5320 = vrot.slane %v5319, 4
    %v5321 = vadd.f32 %v5319, %v5320
    %v5322 = vrot.slane %v5321, 2
    %v5323 = vadd.f32 %v5321, %v5322
    %v5324 = vrot.slane %v5323, 1
    %v5325 = vadd.f32 %v5323, %v5324
    %v5326 = vadd.f32 %v5244, %v5245
    %v5327 = vrot.slane %v5326, 4
    %v5328 = vadd.f32 %v5326, %v5327
    %v5329 = vrot.slane %v5328, 2
    %v5330 = vadd.f32 %v5328, %v5329
    %v5331 = vrot.slane %v5330, 1
    %v5332 = vadd.f32 %v5330, %v5331
    %v5333 = vadd.f32 %v5246, %v5247
    %v5334 = vrot.slane %v5333, 4
    %v5335 = vadd.f32 %v5333, %v5334
    %v5336 = vrot.slane %v5335, 2
    %v5337 = vadd.f32 %v5335, %v5336
    %v5338 = vrot.slane %v5337, 1
    %v5339 = vadd.f32 %v5337, %v5338
    %v5340 = vadd.f32 %v5248, %v5249
    %v5341 = vrot.slane %v5340, 4
    %v5342 = vadd.f32 %v5340, %v5341
    %v5343 = vrot.slane %v5342, 2
    %v5344 = vadd.f32 %v5342, %v5343
    %v5345 = vrot.slane %v5344, 1
    %v5346 = vadd.f32 %v5344, %v5345
    %v5347 = vadd.f32 %v5250, %v5251
    %v5348 = vrot.slane %v5347, 4
    %v5349 = vadd.f32 %v5347, %v5348
    %v5350 = vrot.slane %v5349, 2
    %v5351 = vadd.f32 %v5349, %v5350
    %v5352 = vrot.slane %v5351, 1
    %v5353 = vadd.f32 %v5351, %v5352
    %v5354 = vadd.f32 %v5252, %v5253
    %v5355 = vrot.slane %v5354, 4
    %v5356 = vadd.f32 %v5354, %v5355
    %v5357 = vrot.slane %v5356, 2
    %v5358 = vadd.f32 %v5356, %v5357
    %v5359 = vrot.slane %v5358, 1
    %v5360 = vadd.f32 %v5358, %v5359
    %v5361 = vadd.f32 %v5254, %v5255
    %v5362 = vrot.slane %v5361, 4
    %v5363 = vadd.f32 %v5361, %v5362
    %v5364 = vrot.slane %v5363, 2
    %v5365 = vadd.f32 %v5363, %v5364
    %v5366 = vrot.slane %v5365, 1
    %v5367 = vadd.f32 %v5365, %v5366
    %vm5384 = vcmask 1041409
    %v5385 = vsel %vm5384, %v5269, %v5262
    %vm5386 = vcmask 1042434
    %v5387 = vsel %vm5386, %v5276, %v5385
    %vm5388 = vcmask 1043459
    %v5389 = vsel %vm5388, %v5283, %v5387
    %vm5390 = vcmask 1044484
    %v5391 = vsel %vm5390, %v5290, %v5389
    %vm5392 = vcmask 1045509
    %v5393 = vsel %vm5392, %v5297, %v5391
    %vm5394 = vcmask 1046534
    %v5395 = vsel %vm5394, %v5304, %v5393
    %vm5396 = vcmask 1047559
    %v5397 = vsel %vm5396, %v5311, %v5395
    %v5398 = vsel %vm5384, %v5325, %v5318
    %v5399 = vsel %vm5386, %v5332, %v5398
    %v5400 = vsel %vm5388, %v5339, %v5399
    %v5401 = vsel %vm5390, %v5346, %v5400
    %v5402 = vsel %vm5392, %v5353, %v5401
    %v5403 = vsel %vm5394, %v5360, %v5402
    %v5404 = vsel %vm5396, %v5367, %v5403
    %5407 = vst [vmem:[#allocation10] sm:$0xff] %v5397
    %5408 = vst [vmem:[#allocation10 + $0x8] sm:$0xff] %v5404
    // Predicated region
    $region58: #{tpu_custom_call.1} parent=1 // pred_check
      _
    $region59: #{tpu_custom_call.1} parent=1 // pred_check_branch
      %5410 = sbr.rel (0) target = $region61
    $region60: #{tpu_custom_call.1} parent=1 // pred_region
      %5412 = vsyncadd [#allocation4], 0
      %s5413 = sshll.u32 [#allocation10], 4
      %s5414 = int_to_ptr.vmem [resolvable:$true] %s5413
      %s5415 = sshll.u32 %s10, 4
      %s5416 = int_to_ptr.hbm [resolvable:$true] %s5415
      %5421 = dma.vmem_to_hbm [thread:$0]  %s5414, 256, %s5416, [#allocation4], 128, 128, 8
    $region61: #{tpu_custom_call.1} parent=1 // pred_fallthru
      _
    // Predicated region
    $region62: #{tpu_custom_call.1} parent=1 // pred_check
      _
    $region63: #{tpu_custom_call.1} parent=1 // pred_check_branch
      %5423 = sbr.rel (0) target = $region65
    $region64: #{tpu_custom_call.1} parent=1 // pred_region
      %5425 = dma.done [#allocation4], 256
    $region65: #{tpu_custom_call.1} parent=1 // pred_fallthru
      _
    %5426 = vsyncpa [#allocation3], 1
    %5427 = vsyncpa [#allocation6], 1
    %5428 = vsyncpa [#allocation9], 1
    %5429 = vsyncpa [#allocation4], 1

// kernel: tpu_custom_call.1
$region0: #{tpu_custom_call.1}
  #allocation0 [shape = 'u32[]', space=smem, size = 0x4, offset = 0x4, fixed_abs, tag = 'smem constant byte address 0x4 - core index']
  #allocation1 [shape = 'u32[72,128]{1,0:T(1,128)}', space=vmem, size = 0x9000, scoped, tag = 'internal scratch']
  %s0 = inlined_call_operand.vmem [shape: bf16[16,16,128], index: 0, kind: input, shape index: {}]
  %s1 = inlined_call_operand.vmem [shape: f32[16,16], index: 1, kind: input, shape index: {}]
  %s2 = inlined_call_operand.vmem [shape: f32[1,16,1], index: 2, kind: input, shape index: {}]
  %s3 = inlined_call_operand.hbm [shape: bf16[128,768], index: 3, kind: input, shape index: {}]
  %s4 = inlined_call_operand.hbm [shape: f32[1,768], index: 4, kind: input, shape index: {}]
  %s5 = inlined_call_operand.hbm [shape: bf16[256,128], index: 5, kind: input, shape index: {}]
  %s6 = inlined_call_operand.vmem [shape: f32[1,128], index: 6, kind: input, shape index: {}]
  %s7 = inlined_call_operand.hbm [shape: f32[128,128], index: 7, kind: input, shape index: {}]
  %s8 = inlined_call_operand.vmem [shape: f32[1,128], index: 8, kind: input, shape index: {}]
  %s9 = inlined_call_operand.vmem [shape: f32[128,1], index: 9, kind: input, shape index: {}]
  %s10 = inlined_call_operand.hbm [shape: f32[16,128], index: 10, kind: output, shape index: {}]
  %s11 = sld [smem:[#allocation0]]
  $region66: #{tpu_custom_call.1} parent=0
    _
  %s13 = ssub.s32 1, %s11
  %s14 = scalar_select 0, %s13, %s11
  $region1: #{tpu_custom_call.1} parent=0
    #allocation2 [shape = 'u8[196608]{0}', space=vmem, size = 0x30000, scoped, tag = 'input window, operand 3, single buffered']
    #allocation3 [shape = 's32[1]{0}', space=sflag, size = 0x4, scoped, tag = 'scoped memory for tpu_custom_call.1']
    #allocation4 [shape = 's32[1]{0}', space=sflag, size = 0x4, scoped, tag = 'scoped memory for tpu_custom_call.1']
    #allocation5 [shape = 'u8[3072]{0}', space=vmem, size = 0xc00, scoped, tag = 'input window, operand 4, single buffered']
    #allocation6 [shape = 's32[1]{0}', space=sflag, size = 0x4, scoped, tag = 'scoped memory for tpu_custom_call.1']
    #allocation7 [shape = 'u8[65536]{0}', space=vmem, size = 0x10000, scoped, tag = 'input window, operand 5, single buffered']
    #allocation8 [shape = 'u8[65536]{0}', space=vmem, size = 0x10000, scoped, tag = 'input window, operand 7, single buffered']
    #allocation9 [shape = 's32[1]{0}', space=sflag, size = 0x4, scoped, tag = 'scoped memory for tpu_custom_call.1']
    #allocation10 [shape = 'u8[8192]{0}', space=vmem, size = 0x2000, scoped, tag = 'output window, operand 0, single buffered']
    %15 = vsyncpa [#allocation3], 0
    %16 = vsyncpa [#allocation6], 0
    %17 = vsyncpa [#allocation9], 0
    %18 = vsyncpa [#allocation4], 0
    // Predicated region
    $region2: #{tpu_custom_call.1} parent=1 // pred_check
      _
    $region3: #{tpu_custom_call.1} parent=1 // pred_check_branch
      %20 = sbr.rel (0) target = $region5
    $region4: #{tpu_custom_call.1} parent=1 // pred_region
      _
    $region5: #{tpu_custom_call.1} parent=1 // pred_fallthru
      _
    // Predicated region
    $region6: #{tpu_custom_call.1} parent=1 // pred_check
      _
    $region7: #{tpu_custom_call.1} parent=1 // pred_check_branch
      %22 = sbr.rel (0) target = $region9
    $region8: #{tpu_custom_call.1} parent=1 // pred_region
      _
    $region9: #{tpu_custom_call.1} parent=1 // pred_fallthru
      _
    // Predicated region
    $region10: #{tpu_custom_call.1} parent=1 // pred_check
      _
    $region11: #{tpu_custom_call.1} parent=1 // pred_check_branch
      %24 = sbr.rel (0) target = $region13
    $region12: #{tpu_custom_call.1} parent=1 // pred_region
      _
    $region13: #{tpu_custom_call.1} parent=1 // pred_fallthru
      _
    // Predicated region
    $region14: #{tpu_custom_call.1} parent=1 // pred_check
      _
    $region15: #{tpu_custom_call.1} parent=1 // pred_check_branch
      %26 = sbr.rel (0) target = $region17
    $region16: #{tpu_custom_call.1} parent=1 // pred_region
      %28 = vsyncadd [#allocation3], 0
      %s29 = sshll.u32 %s3, 4
      %s30 = int_to_ptr.hbm [resolvable:$true] %s29
      %s31 = sshll.u32 [#allocation2], 4
      %s32 = int_to_ptr.vmem [resolvable:$true] %s31
      %37 = dma.hbm_to_vmem [thread:$0]  %s30, 6144, %s32, [#allocation3], 384, 384, 24
    $region17: #{tpu_custom_call.1} parent=1 // pred_fallthru
      _
    // Predicated region
    $region18: #{tpu_custom_call.1} parent=1 // pred_check
      _
    $region19: #{tpu_custom_call.1} parent=1 // pred_check_branch
      %39 = sbr.rel (0) target = $region21
    $region20: #{tpu_custom_call.1} parent=1 // pred_region
      %41 = vsyncadd [#allocation6], 0
      %s43 = sshll.u32 %s4, 4
      %s44 = int_to_ptr.hbm [resolvable:$true] %s43
      %s45 = sshll.u32 [#allocation5], 4
      %s46 = int_to_ptr.vmem [resolvable:$true] %s45
      %48 = dma.hbm_to_vmem [thread:$0]  %s44, 96, %s46, [#allocation6]
    $region21: #{tpu_custom_call.1} parent=1 // pred_fallthru
      _
    // Predicated region
    $region22: #{tpu_custom_call.1} parent=1 // pred_check
      _
    $region23: #{tpu_custom_call.1} parent=1 // pred_check_branch
      %50 = sbr.rel (0) target = $region25
    $region24: #{tpu_custom_call.1} parent=1 // pred_region
      %52 = vsyncadd [#allocation6], 0
      %s53 = sshll.u32 %s5, 4
      %s54 = int_to_ptr.hbm [resolvable:$true] %s53
      %s55 = sshll.u32 [#allocation7], 4
      %s56 = int_to_ptr.vmem [resolvable:$true] %s55
      %61 = dma.hbm_to_vmem [thread:$0]  %s54, 2048, %s56, [#allocation6], 64, 64, 4
    $region25: #{tpu_custom_call.1} parent=1 // pred_fallthru
      _
    // Predicated region
    $region26: #{tpu_custom_call.1} parent=1 // pred_check
      _
    $region27: #{tpu_custom_call.1} parent=1 // pred_check_branch
      %63 = sbr.rel (0) target = $region29
    $region28: #{tpu_custom_call.1} parent=1 // pred_region
      _
    $region29: #{tpu_custom_call.1} parent=1 // pred_fallthru
      _
    // Predicated region
    $region30: #{tpu_custom_call.1} parent=1 // pred_check
      _
    $region31: #{tpu_custom_call.1} parent=1 // pred_check_branch
      %65 = sbr.rel (0) target = $region33
    $region32: #{tpu_custom_call.1} parent=1 // pred_region
      %67 = vsyncadd [#allocation9], 0
      %s68 = sshll.u32 %s7, 4
      %s69 = int_to_ptr.hbm [resolvable:$true] %s68
      %s70 = sshll.u32 [#allocation8], 4
      %s71 = int_to_ptr.vmem [resolvable:$true] %s70
      %76 = dma.hbm_to_vmem [thread:$0]  %s69, 2048, %s71, [#allocation9], 128, 128, 8
    $region33: #{tpu_custom_call.1} parent=1 // pred_fallthru
      _
    // Predicated region
    $region34: #{tpu_custom_call.1} parent=1 // pred_check
      _
    $region35: #{tpu_custom_call.1} parent=1 // pred_check_branch
      %78 = sbr.rel (0) target = $region37
    $region36: #{tpu_custom_call.1} parent=1 // pred_region
      _
    $region37: #{tpu_custom_call.1} parent=1 // pred_fallthru
      _
    // Predicated region
    $region38: #{tpu_custom_call.1} parent=1 // pred_check
      _
    $region39: #{tpu_custom_call.1} parent=1 // pred_check_branch
      %80 = sbr.rel (0) target = $region41
    $region40: #{tpu_custom_call.1} parent=1 // pred_region
      _
    $region41: #{tpu_custom_call.1} parent=1 // pred_fallthru
      _
    // Predicated region
    $region42: #{tpu_custom_call.1} parent=1 // pred_check
      _
    $region43: #{tpu_custom_call.1} parent=1 // pred_check_branch
      %82 = sbr.rel (0) target = $region45
    $region44: #{tpu_custom_call.1} parent=1 // pred_region
      %84 = dma.done [#allocation3], 6144
    $region45: #{tpu_custom_call.1} parent=1 // pred_fallthru
      _
    // Predicated region
    $region46: #{tpu_custom_call.1} parent=1 // pred_check
      _
    $region47: #{tpu_custom_call.1} parent=1 // pred_check_branch
      %86 = sbr.rel (0) target = $region49
    $region48: #{tpu_custom_call.1} parent=1 // pred_region
      %88 = dma.done [#allocation6], 96
    $region49: #{tpu_custom_call.1} parent=1 // pred_fallthru
      _
    // Predicated region
    $region50: #{tpu_custom_call.1} parent=1 // pred_check
      _
    $region51: #{tpu_custom_call.1} parent=1 // pred_check_branch
      %90 = sbr.rel (0) target = $region53
    $region52: #{tpu_custom_call.1} parent=1 // pred_region
      %92 = dma.done [#allocation6], 2048
    $region53: #{tpu_custom_call.1} parent=1 // pred_fallthru
      _
    // Predicated region
    $region54: #{tpu_custom_call.1} parent=1 // pred_check
      _
    $region55: #{tpu_custom_call.1} parent=1 // pred_check_branch
      %94 = sbr.rel (0) target = $region57
    $region56: #{tpu_custom_call.1} parent=1 // pred_region
      %96 = dma.done [#allocation9], 2048
    $region57: #{tpu_custom_call.1} parent=1 // pred_fallthru
      _
    %v98 = vld [vmem:[%s0] sm:$0xf]
    %v99 = vld [vmem:[%s0 + $0x4] sm:$0xf]
    %v100 = vld [vmem:[%s0 + $0x8] sm:$0xf]
    %v101 = vld [vmem:[%s0 + $0xc] sm:$0xf]
    %v102 = vld [vmem:[%s0 + $0x10] sm:$0xf]
    %v103 = vld [vmem:[%s0 + $0x14] sm:$0xf]
    %v104 = vld [vmem:[%s0 + $0x18] sm:$0xf]
    %v105 = vld [vmem:[%s0 + $0x1c] sm:$0xf]
    %v106 = vld [vmem:[%s0 + $0x20] sm:$0xf]
    %v107 = vld [vmem:[%s0 + $0x24] sm:$0xf]
    %v108 = vld [vmem:[%s0 + $0x28] sm:$0xf]
    %v109 = vld [vmem:[%s0 + $0x2c] sm:$0xf]
    %v110 = vld [vmem:[%s0 + $0x30] sm:$0xf]
    %v111 = vld [vmem:[%s0 + $0x34] sm:$0xf]
    %v112 = vld [vmem:[%s0 + $0x38] sm:$0xf]
    %v113 = vld [vmem:[%s0 + $0x3c] sm:$0xf]
    %v114 = vld [vmem:[%s0 + $0x40] sm:$0xf]
    %v115 = vld [vmem:[%s0 + $0x44] sm:$0xf]
    %v116 = vld [vmem:[%s0 + $0x48] sm:$0xf]
    %v117 = vld [vmem:[%s0 + $0x4c] sm:$0xf]
    %v118 = vld [vmem:[%s0 + $0x50] sm:$0xf]
    %v119 = vld [vmem:[%s0 + $0x54] sm:$0xf]
    %v120 = vld [vmem:[%s0 + $0x58] sm:$0xf]
    %v121 = vld [vmem:[%s0 + $0x5c] sm:$0xf]
    %v122 = vld [vmem:[%s0 + $0x60] sm:$0xf]
    %v123 = vld [vmem:[%s0 + $0x64] sm:$0xf]
    %v124 = vld [vmem:[%s0 + $0x68] sm:$0xf]
    %v125 = vld [vmem:[%s0 + $0x6c] sm:$0xf]
    %v126 = vld [vmem:[%s0 + $0x70] sm:$0xf]
    %v127 = vld [vmem:[%s0 + $0x74] sm:$0xf]
    %v128 = vld [vmem:[%s0 + $0x78] sm:$0xf]
    %v129 = vld [vmem:[%s0 + $0x7c] sm:$0xf]
    %v130 = vld [vmem:[#allocation2] sm:$0xff]
    %v131 = vld [vmem:[#allocation2 + $0x8] sm:$0xff]
    %v132 = vld [vmem:[#allocation2 + $0x10] sm:$0xff]
    %v133 = vld [vmem:[#allocation2 + $0x18] sm:$0xff]
    %v134 = vld [vmem:[#allocation2 + $0x20] sm:$0xff]
    %v135 = vld [vmem:[#allocation2 + $0x28] sm:$0xff]
    %v136 = vld [vmem:[#allocation2 + $0x30] sm:$0xff]
    %v137 = vld [vmem:[#allocation2 + $0x38] sm:$0xff]
    %v138 = vld [vmem:[#allocation2 + $0x40] sm:$0xff]
    %v139 = vld [vmem:[#allocation2 + $0x48] sm:$0xff]
    %v140 = vld [vmem:[#allocation2 + $0x50] sm:$0xff]
    %v141 = vld [vmem:[#allocation2 + $0x58] sm:$0xff]
    %v142 = vld [vmem:[#allocation2 + $0x60] sm:$0xff]
    %v143 = vld [vmem:[#allocation2 + $0x68] sm:$0xff]
    %v144 = vld [vmem:[#allocation2 + $0x70] sm:$0xff]
    %v145 = vld [vmem:[#allocation2 + $0x78] sm:$0xff]
    %v146 = vld [vmem:[#allocation2 + $0x80] sm:$0xff]
    %v147 = vld [vmem:[#allocation2 + $0x88] sm:$0xff]
    %v148 = vld [vmem:[#allocation2 + $0x90] sm:$0xff]
    %v149 = vld [vmem:[#allocation2 + $0x98] sm:$0xff]
    %v150 = vld [vmem:[#allocation2 + $0xa0] sm:$0xff]
    %v151 = vld [vmem:[#allocation2 + $0xa8] sm:$0xff]
    %v152 = vld [vmem:[#allocation2 + $0xb0] sm:$0xff]
    %v153 = vld [vmem:[#allocation2 + $0xb8] sm:$0xff]
    %v154 = vld [vmem:[#allocation2 + $0xc0] sm:$0xff]
    %v155 = vld [vmem:[#allocation2 + $0xc8] sm:$0xff]
    %v156 = vld [vmem:[#allocation2 + $0xd0] sm:$0xff]
    %v157 = vld [vmem:[#allocation2 + $0xd8] sm:$0xff]
    %v158 = vld [vmem:[#allocation2 + $0xe0] sm:$0xff]
    %v159 = vld [vmem:[#allocation2 + $0xe8] sm:$0xff]
    %v160 = vld [vmem:[#allocation2 + $0xf0] sm:$0xff]
    %v161 = vld [vmem:[#allocation2 + $0xf8] sm:$0xff]
    %v162 = vld [vmem:[#allocation2 + $0x100] sm:$0xff]
    %v163 = vld [vmem:[#allocation2 + $0x108] sm:$0xff]
    %v164 = vld [vmem:[#allocation2 + $0x110] sm:$0xff]
    %v165 = vld [vmem:[#allocation2 + $0x118] sm:$0xff]
    %v166 = vld [vmem:[#allocation2 + $0x120] sm:$0xff]
    %v167 = vld [vmem:[#allocation2 + $0x128] sm:$0xff]
    %v168 = vld [vmem:[#allocation2 + $0x130] sm:$0xff]
    %v169 = vld [vmem:[#allocation2 + $0x138] sm:$0xff]
    %v170 = vld [vmem:[#allocation2 + $0x140] sm:$0xff]
    %v171 = vld [vmem:[#allocation2 + $0x148] sm:$0xff]
    %v172 = vld [vmem:[#allocation2 + $0x150] sm:$0xff]
    %v173 = vld [vmem:[#allocation2 + $0x158] sm:$0xff]
    %v174 = vld [vmem:[#allocation2 + $0x160] sm:$0xff]
    %v175 = vld [vmem:[#allocation2 + $0x168] sm:$0xff]
    %v176 = vld [vmem:[#allocation2 + $0x170] sm:$0xff]
    %v177 = vld [vmem:[#allocation2 + $0x178] sm:$0xff]
    %v178 = vld [vmem:[#allocation5] sm:$0x3f]
    %v180 = vperm.slane %v178, 0
    %v181 = vperm.slane %v178, 1
    %v182 = vperm.slane %v178, 2
    %v183 = vperm.slane %v178, 3
    %v184 = vperm.slane %v178, 4
    %v185 = vperm.slane %v178, 5
    %v224 = vunpack.c.l.b16 %v98
    %v225 = vunpack.c.l.b16 %v99
    %v226 = vunpack.c.l.b16 %v100
    %v227 = vunpack.c.l.b16 %v101
    %v228 = vunpack.c.l.b16 %v102
    %v229 = vunpack.c.l.b16 %v103
    %v230 = vunpack.c.l.b16 %v104
    %v231 = vunpack.c.l.b16 %v105
    %v232 = vunpack.c.l.b16 %v106
    %v233 = vunpack.c.l.b16 %v107
    %v234 = vunpack.c.l.b16 %v108
    %v235 = vunpack.c.l.b16 %v109
    %v236 = vunpack.c.l.b16 %v110
    %v237 = vunpack.c.l.b16 %v111
    %v238 = vunpack.c.l.b16 %v112
    %v239 = vunpack.c.l.b16 %v113
    %v240 = vunpack.c.l.b16 %v114
    %v241 = vunpack.c.l.b16 %v115
    %v242 = vunpack.c.l.b16 %v116
    %v243 = vunpack.c.l.b16 %v117
    %v244 = vunpack.c.l.b16 %v118
    %v245 = vunpack.c.l.b16 %v119
    %v246 = vunpack.c.l.b16 %v120
    %v247 = vunpack.c.l.b16 %v121
    %v248 = vunpack.c.l.b16 %v122
    %v249 = vunpack.c.l.b16 %v123
    %v250 = vunpack.c.l.b16 %v124
    %v251 = vunpack.c.l.b16 %v125
    %v252 = vunpack.c.l.b16 %v126
    %v253 = vunpack.c.l.b16 %v127
    %v254 = vunpack.c.l.b16 %v128
    %v255 = vunpack.c.l.b16 %v129
    %v256 = vpack.c.b16 %v225, %v224
    %v257 = vpack.c.b16 %v227, %v226
    %v258 = vpack.c.b16 %v229, %v228
    %v259 = vpack.c.b16 %v231, %v230
    %v260 = vpack.c.b16 %v233, %v232
    %v261 = vpack.c.b16 %v235, %v234
    %v262 = vpack.c.b16 %v237, %v236
    %v263 = vpack.c.b16 %v239, %v238
    %v264 = vpack.c.b16 %v241, %v240
    %v265 = vpack.c.b16 %v243, %v242
    %v266 = vpack.c.b16 %v245, %v244
    %v267 = vpack.c.b16 %v247, %v246
    %v268 = vpack.c.b16 %v249, %v248
    %v269 = vpack.c.b16 %v251, %v250
    %v270 = vpack.c.b16 %v253, %v252
    %v271 = vpack.c.b16 %v255, %v254
    %v336 = vunpack.c.l.b16 %v130
    %v337 = vunpack.c.h.b16 %v130
    %v338 = vunpack.c.l.b16 %v131
    %v339 = vunpack.c.h.b16 %v131
    %v340 = vunpack.c.l.b16 %v132
    %v341 = vunpack.c.h.b16 %v132
    %v342 = vunpack.c.l.b16 %v133
    %v343 = vunpack.c.h.b16 %v133
    %v344 = vunpack.c.l.b16 %v134
    %v345 = vunpack.c.h.b16 %v134
    %v346 = vunpack.c.l.b16 %v135
    %v347 = vunpack.c.h.b16 %v135
    %v348 = vunpack.c.l.b16 %v136
    %v349 = vunpack.c.h.b16 %v136
    %v350 = vunpack.c.l.b16 %v137
    %v351 = vunpack.c.h.b16 %v137
    %v352 = vunpack.c.l.b16 %v138
    %v353 = vunpack.c.h.b16 %v138
    %v354 = vunpack.c.l.b16 %v139
    %v355 = vunpack.c.h.b16 %v139
    %v356 = vunpack.c.l.b16 %v140
    %v357 = vunpack.c.h.b16 %v140
    %v358 = vunpack.c.l.b16 %v141
    %v359 = vunpack.c.h.b16 %v141
    %v360 = vunpack.c.l.b16 %v142
    %v361 = vunpack.c.h.b16 %v142
    %v362 = vunpack.c.l.b16 %v143
    %v363 = vunpack.c.h.b16 %v143
    %v364 = vunpack.c.l.b16 %v144
    %v365 = vunpack.c.h.b16 %v144
    %v366 = vunpack.c.l.b16 %v145
    %v367 = vunpack.c.h.b16 %v145
    %v368 = vunpack.c.l.b16 %v146
    %v369 = vunpack.c.h.b16 %v146
    %v370 = vunpack.c.l.b16 %v147
    %v371 = vunpack.c.h.b16 %v147
    %v372 = vunpack.c.l.b16 %v148
    %v373 = vunpack.c.h.b16 %v148
    %v374 = vunpack.c.l.b16 %v149
    %v375 = vunpack.c.h.b16 %v149
    %v376 = vunpack.c.l.b16 %v150
    %v377 = vunpack.c.h.b16 %v150
    %v378 = vunpack.c.l.b16 %v151
    %v379 = vunpack.c.h.b16 %v151
    %v380 = vunpack.c.l.b16 %v152
    %v381 = vunpack.c.h.b16 %v152
    %v382 = vunpack.c.l.b16 %v153
    %v383 = vunpack.c.h.b16 %v153
    %v384 = vunpack.c.l.b16 %v154
    %v385 = vunpack.c.h.b16 %v154
    %v386 = vunpack.c.l.b16 %v155
    %v387 = vunpack.c.h.b16 %v155
    %v388 = vunpack.c.l.b16 %v156
    %v389 = vunpack.c.h.b16 %v156
    %v390 = vunpack.c.l.b16 %v157
    %v391 = vunpack.c.h.b16 %v157
    %v392 = vunpack.c.l.b16 %v158
    %v393 = vunpack.c.h.b16 %v158
    %v394 = vunpack.c.l.b16 %v159
    %v395 = vunpack.c.h.b16 %v159
    %v396 = vunpack.c.l.b16 %v160
    %v397 = vunpack.c.h.b16 %v160
    %v398 = vunpack.c.l.b16 %v161
    %v399 = vunpack.c.h.b16 %v161
    %v400 = vunpack.c.l.b16 %v162
    %v401 = vunpack.c.h.b16 %v162
    %v402 = vunpack.c.l.b16 %v163
    %v403 = vunpack.c.h.b16 %v163
    %v404 = vunpack.c.l.b16 %v164
    %v405 = vunpack.c.h.b16 %v164
    %v406 = vunpack.c.l.b16 %v165
    %v407 = vunpack.c.h.b16 %v165
    %v408 = vunpack.c.l.b16 %v166
    %v409 = vunpack.c.h.b16 %v166
    %v410 = vunpack.c.l.b16 %v167
    %v411 = vunpack.c.h.b16 %v167
    %v412 = vunpack.c.l.b16 %v168
    %v413 = vunpack.c.h.b16 %v168
    %v414 = vunpack.c.l.b16 %v169
    %v415 = vunpack.c.h.b16 %v169
    %v416 = vunpack.c.l.b16 %v170
    %v417 = vunpack.c.h.b16 %v170
    %v418 = vunpack.c.l.b16 %v171
    %v419 = vunpack.c.h.b16 %v171
    %v420 = vunpack.c.l.b16 %v172
    %v421 = vunpack.c.h.b16 %v172
    %v422 = vunpack.c.l.b16 %v173
    %v423 = vunpack.c.h.b16 %v173
    %v424 = vunpack.c.l.b16 %v174
    %v425 = vunpack.c.h.b16 %v174
    %v426 = vunpack.c.l.b16 %v175
    %v427 = vunpack.c.h.b16 %v175
    %v428 = vunpack.c.l.b16 %v176
    %v429 = vunpack.c.h.b16 %v176
    %v430 = vunpack.c.l.b16 %v177
    %v431 = vunpack.c.h.b16 %v177
    %v432 = vpack.c.b16 %v342, %v336
    %v433 = vpack.c.b16 %v343, %v337
    %v434 = vpack.c.b16 %v344, %v338
    %v435 = vpack.c.b16 %v345, %v339
    %v436 = vpack.c.b16 %v346, %v340
    %v437 = vpack.c.b16 %v347, %v341
    %v438 = vpack.c.b16 %v354, %v348
    %v439 = vpack.c.b16 %v355, %v349
    %v440 = vpack.c.b16 %v356, %v350
    %v441 = vpack.c.b16 %v357, %v351
    %v442 = vpack.c.b16 %v358, %v352
    %v443 = vpack.c.b16 %v359, %v353
    %v444 = vpack.c.b16 %v366, %v360
    %v445 = vpack.c.b16 %v367, %v361
    %v446 = vpack.c.b16 %v368, %v362
    %v447 = vpack.c.b16 %v369, %v363
    %v448 = vpack.c.b16 %v370, %v364
    %v449 = vpack.c.b16 %v371, %v365
    %v450 = vpack.c.b16 %v378, %v372
    %v451 = vpack.c.b16 %v379, %v373
    %v452 = vpack.c.b16 %v380, %v374
    %v453 = vpack.c.b16 %v381, %v375
    %v454 = vpack.c.b16 %v382, %v376
    %v455 = vpack.c.b16 %v383, %v377
    %v456 = vpack.c.b16 %v390, %v384
    %v457 = vpack.c.b16 %v391, %v385
    %v458 = vpack.c.b16 %v392, %v386
    %v459 = vpack.c.b16 %v393, %v387
    %v460 = vpack.c.b16 %v394, %v388
    %v461 = vpack.c.b16 %v395, %v389
    %v462 = vpack.c.b16 %v402, %v396
    %v463 = vpack.c.b16 %v403, %v397
    %v464 = vpack.c.b16 %v404, %v398
    %v465 = vpack.c.b16 %v405, %v399
    %v466 = vpack.c.b16 %v406, %v400
    %v467 = vpack.c.b16 %v407, %v401
    %v468 = vpack.c.b16 %v414, %v408
    %v469 = vpack.c.b16 %v415, %v409
    %v470 = vpack.c.b16 %v416, %v410
    %v471 = vpack.c.b16 %v417, %v411
    %v472 = vpack.c.b16 %v418, %v412
    %v473 = vpack.c.b16 %v419, %v413
    %v474 = vpack.c.b16 %v426, %v420
    %v475 = vpack.c.b16 %v427, %v421
    %v476 = vpack.c.b16 %v428, %v422
    %v477 = vpack.c.b16 %v429, %v423
    %v478 = vpack.c.b16 %v430, %v424
    %v479 = vpack.c.b16 %v431, %v425
    %528 = vmatpush.bf16.msra.mxu0 %v474
    %529 = vmatpush.bf16.msra.mxu0 %v468
    %530 = vmatpush.bf16.msra.mxu0 %v462
    %531 = vmatpush.bf16.msra.mxu0 %v456
    %532 = vmatpush.bf16.msra.mxu0 %v450
    %533 = vmatpush.bf16.msra.mxu0 %v444
    %534 = vmatpush.bf16.msra.mxu0 %v438
    %535 = vmatpush.bf16.msra.mxu0 %v432
    %536 = vmatmul.bf16.gmra.mxu0 %v256
    %v537 = vpop.f32.mrf.mxu0
    %v538 = vadd.f32 %v180, %v537
    %v539 = vpop.f32.mrf.mxu0
    %v540 = vadd.f32 %v180, %v539
    %541 = vmatmul.bf16.gmra.mxu0 %v257
    %v542 = vpop.f32.mrf.mxu0
    %v543 = vadd.f32 %v180, %v542
    %v544 = vpop.f32.mrf.mxu0
    %v545 = vadd.f32 %v180, %v544
    %546 = vmatmul.bf16.gmra.mxu0 %v258
    %v547 = vpop.f32.mrf.mxu0
    %v548 = vadd.f32 %v180, %v547
    %v549 = vpop.f32.mrf.mxu0
    %v550 = vadd.f32 %v180, %v549
    %551 = vmatmul.bf16.gmra.mxu0 %v259
    %v552 = vpop.f32.mrf.mxu0
    %v553 = vadd.f32 %v180, %v552
    %v554 = vpop.f32.mrf.mxu0
    %v555 = vadd.f32 %v180, %v554
    %556 = vmatmul.bf16.gmra.mxu0 %v260
    %v557 = vpop.f32.mrf.mxu0
    %v558 = vadd.f32 %v180, %v557
    %v559 = vpop.f32.mrf.mxu0
    %v560 = vadd.f32 %v180, %v559
    %561 = vmatmul.bf16.gmra.mxu0 %v261
    %v562 = vpop.f32.mrf.mxu0
    %v563 = vadd.f32 %v180, %v562
    %v564 = vpop.f32.mrf.mxu0
    %v565 = vadd.f32 %v180, %v564
    %566 = vmatmul.bf16.gmra.mxu0 %v262
    %v567 = vpop.f32.mrf.mxu0
    %v568 = vadd.f32 %v180, %v567
    %v569 = vpop.f32.mrf.mxu0
    %v570 = vadd.f32 %v180, %v569
    %571 = vmatmul.bf16.gmra.mxu0 %v263
    %v572 = vpop.f32.mrf.mxu0
    %v573 = vadd.f32 %v180, %v572
    %v574 = vpop.f32.mrf.mxu0
    %v575 = vadd.f32 %v180, %v574
    %576 = vmatmul.bf16.gmra.mxu0 %v264
    %v577 = vpop.f32.mrf.mxu0
    %v578 = vadd.f32 %v180, %v577
    %v579 = vpop.f32.mrf.mxu0
    %v580 = vadd.f32 %v180, %v579
    %581 = vmatmul.bf16.gmra.mxu0 %v265
    %v582 = vpop.f32.mrf.mxu0
    %v583 = vadd.f32 %v180, %v582
    %v584 = vpop.f32.mrf.mxu0
    %v585 = vadd.f32 %v180, %v584
    %586 = vmatmul.bf16.gmra.mxu0 %v266
    %v587 = vpop.f32.mrf.mxu0
    %v588 = vadd.f32 %v180, %v587
    %v589 = vpop.f32.mrf.mxu0
    %v590 = vadd.f32 %v180, %v589
    %591 = vmatmul.bf16.gmra.mxu0 %v267
    %v592 = vpop.f32.mrf.mxu0
    %v593 = vadd.f32 %v180, %v592
    %v594 = vpop.f32.mrf.mxu0
    %v595 = vadd.f32 %v180, %v594
    %596 = vmatmul.bf16.gmra.mxu0 %v268
    %v597 = vpop.f32.mrf.mxu0
    %v598 = vadd.f32 %v180, %v597
    %v599 = vpop.f32.mrf.mxu0
    %v600 = vadd.f32 %v180, %v599
    %601 = vmatmul.bf16.gmra.mxu0 %v269
    %v602 = vpop.f32.mrf.mxu0
    %v603 = vadd.f32 %v180, %v602
    %v604 = vpop.f32.mrf.mxu0
    %v605 = vadd.f32 %v180, %v604
    %606 = vmatmul.bf16.gmra.mxu0 %v270
    %v607 = vpop.f32.mrf.mxu0
    %v608 = vadd.f32 %v180, %v607
    %v609 = vpop.f32.mrf.mxu0
    %v610 = vadd.f32 %v180, %v609
    %611 = vmatmul.bf16.gmra.mxu0 %v271
    %v612 = vpop.f32.mrf.mxu0
    %v613 = vadd.f32 %v180, %v612
    %v614 = vpop.f32.mrf.mxu0
    %v615 = vadd.f32 %v180, %v614
    %616 = vdwg.mxu0
    %617 = vmatpush.bf16.msra.mxu0 %v475
    %618 = vmatpush.bf16.msra.mxu0 %v469
    %619 = vmatpush.bf16.msra.mxu0 %v463
    %620 = vmatpush.bf16.msra.mxu0 %v457
    %621 = vmatpush.bf16.msra.mxu0 %v451
    %622 = vmatpush.bf16.msra.mxu0 %v445
    %623 = vmatpush.bf16.msra.mxu0 %v439
    %624 = vmatpush.bf16.msra.mxu0 %v433
    %625 = vmatmul.bf16.gmra.mxu0 %v256
    %v626 = vpop.f32.mrf.mxu0
    %v627 = vadd.f32 %v181, %v626
    %v628 = vpop.f32.mrf.mxu0
    %v629 = vadd.f32 %v181, %v628
    %630 = vmatmul.bf16.gmra.mxu0 %v257
    %v631 = vpop.f32.mrf.mxu0
    %v632 = vadd.f32 %v181, %v631
    %v633 = vpop.f32.mrf.mxu0
    %v634 = vadd.f32 %v181, %v633
    %635 = vmatmul.bf16.gmra.mxu0 %v258
    %v636 = vpop.f32.mrf.mxu0
    %v637 = vadd.f32 %v181, %v636
    %v638 = vpop.f32.mrf.mxu0
    %v639 = vadd.f32 %v181, %v638
    %640 = vmatmul.bf16.gmra.mxu0 %v259
    %v641 = vpop.f32.mrf.mxu0
    %v642 = vadd.f32 %v181, %v641
    %v643 = vpop.f32.mrf.mxu0
    %v644 = vadd.f32 %v181, %v643
    %645 = vmatmul.bf16.gmra.mxu0 %v260
    %v646 = vpop.f32.mrf.mxu0
    %v647 = vadd.f32 %v181, %v646
    %v648 = vpop.f32.mrf.mxu0
    %v649 = vadd.f32 %v181, %v648
    %650 = vmatmul.bf16.gmra.mxu0 %v261
    %v651 = vpop.f32.mrf.mxu0
    %v652 = vadd.f32 %v181, %v651
    %v653 = vpop.f32.mrf.mxu0
    %v654 = vadd.f32 %v181, %v653
    %655 = vmatmul.bf16.gmra.mxu0 %v262
    %v656 = vpop.f32.mrf.mxu0
    %v657 = vadd.f32 %v181, %v656
    %v658 = vpop.f32.mrf.mxu0
    %v659 = vadd.f32 %v181, %v658
    %660 = vmatmul.bf16.gmra.mxu0 %v263
    %v661 = vpop.f32.mrf.mxu0
    %v662 = vadd.f32 %v181, %v661
    %v663 = vpop.f32.mrf.mxu0
    %v664 = vadd.f32 %v181, %v663
    %665 = vmatmul.bf16.gmra.mxu0 %v264
    %v666 = vpop.f32.mrf.mxu0
    %v667 = vadd.f32 %v181, %v666
    %v668 = vpop.f32.mrf.mxu0
    %v669 = vadd.f32 %v181, %v668
    %670 = vmatmul.bf16.gmra.mxu0 %v265
    %v671 = vpop.f32.mrf.mxu0
    %v672 = vadd.f32 %v181, %v671
    %v673 = vpop.f32.mrf.mxu0
    %v674 = vadd.f32 %v181, %v673
    %675 = vmatmul.bf16.gmra.mxu0 %v266
    %v676 = vpop.f32.mrf.mxu0
    %v677 = vadd.f32 %v181, %v676
    %v678 = vpop.f32.mrf.mxu0
    %v679 = vadd.f32 %v181, %v678
    %680 = vmatmul.bf16.gmra.mxu0 %v267
    %v681 = vpop.f32.mrf.mxu0
    %v682 = vadd.f32 %v181, %v681
    %v683 = vpop.f32.mrf.mxu0
    %v684 = vadd.f32 %v181, %v683
    %685 = vmatmul.bf16.gmra.mxu0 %v268
    %v686 = vpop.f32.mrf.mxu0
    %v687 = vadd.f32 %v181, %v686
    %v688 = vpop.f32.mrf.mxu0
    %v689 = vadd.f32 %v181, %v688
    %690 = vmatmul.bf16.gmra.mxu0 %v269
    %v691 = vpop.f32.mrf.mxu0
    %v692 = vadd.f32 %v181, %v691
    %v693 = vpop.f32.mrf.mxu0
    %v694 = vadd.f32 %v181, %v693
    %695 = vmatmul.bf16.gmra.mxu0 %v270
    %v696 = vpop.f32.mrf.mxu0
    %v697 = vadd.f32 %v181, %v696
    %v698 = vpop.f32.mrf.mxu0
    %v699 = vadd.f32 %v181, %v698
    %700 = vmatmul.bf16.gmra.mxu0 %v271
    %v701 = vpop.f32.mrf.mxu0
    %v702 = vadd.f32 %v181, %v701
    %v703 = vpop.f32.mrf.mxu0
    %v704 = vadd.f32 %v181, %v703
    %705 = vdwg.mxu0
    %706 = vmatpush.bf16.msra.mxu0 %v476
    %707 = vmatpush.bf16.msra.mxu0 %v470
    %708 = vmatpush.bf16.msra.mxu0 %v464
    %709 = vmatpush.bf16.msra.mxu0 %v458
    %710 = vmatpush.bf16.msra.mxu0 %v452
    %711 = vmatpush.bf16.msra.mxu0 %v446
    %712 = vmatpush.bf16.msra.mxu0 %v440
    %713 = vmatpush.bf16.msra.mxu0 %v434
    %714 = vmatmul.bf16.gmra.mxu0 %v256
    %v715 = vpop.f32.mrf.mxu0
    %v716 = vadd.f32 %v182, %v715
    %v717 = vpop.f32.mrf.mxu0
    %v718 = vadd.f32 %v182, %v717
    %719 = vmatmul.bf16.gmra.mxu0 %v257
    %v720 = vpop.f32.mrf.mxu0
    %v721 = vadd.f32 %v182, %v720
    %v722 = vpop.f32.mrf.mxu0
    %v723 = vadd.f32 %v182, %v722
    %724 = vmatmul.bf16.gmra.mxu0 %v258
    %v725 = vpop.f32.mrf.mxu0
    %v726 = vadd.f32 %v182, %v725
    %v727 = vpop.f32.mrf.mxu0
    %v728 = vadd.f32 %v182, %v727
    %729 = vmatmul.bf16.gmra.mxu0 %v259
    %v730 = vpop.f32.mrf.mxu0
    %v731 = vadd.f32 %v182, %v730
    %v732 = vpop.f32.mrf.mxu0
    %v733 = vadd.f32 %v182, %v732
    %734 = vmatmul.bf16.gmra.mxu0 %v260
    %v735 = vpop.f32.mrf.mxu0
    %v736 = vadd.f32 %v182, %v735
    %v737 = vpop.f32.mrf.mxu0
    %v738 = vadd.f32 %v182, %v737
    %739 = vmatmul.bf16.gmra.mxu0 %v261
    %v740 = vpop.f32.mrf.mxu0
    %v741 = vadd.f32 %v182, %v740
    %v742 = vpop.f32.mrf.mxu0
    %v743 = vadd.f32 %v182, %v742
    %744 = vmatmul.bf16.gmra.mxu0 %v262
    %v745 = vpop.f32.mrf.mxu0
    %v746 = vadd.f32 %v182, %v745
    %v747 = vpop.f32.mrf.mxu0
    %v748 = vadd.f32 %v182, %v747
    %749 = vmatmul.bf16.gmra.mxu0 %v263
    %v750 = vpop.f32.mrf.mxu0
    %v751 = vadd.f32 %v182, %v750
    %v752 = vpop.f32.mrf.mxu0
    %v753 = vadd.f32 %v182, %v752
    %754 = vmatmul.bf16.gmra.mxu0 %v264
    %v755 = vpop.f32.mrf.mxu0
    %v756 = vadd.f32 %v182, %v755
    %v757 = vpop.f32.mrf.mxu0
    %v758 = vadd.f32 %v182, %v757
    %759 = vmatmul.bf16.gmra.mxu0 %v265
    %v760 = vpop.f32.mrf.mxu0
    %v761 = vadd.f32 %v182, %v760
    %v762 = vpop.f32.mrf.mxu0
    %v763 = vadd.f32 %v182, %v762
    %764 = vmatmul.bf16.gmra.mxu0 %v266
    %v765 = vpop.f32.mrf.mxu0
    %v766 = vadd.f32 %v182, %v765
    %v767 = vpop.f32.mrf.mxu0
    %v768 = vadd.f32 %v182, %v767
    %769 = vmatmul.bf16.gmra.mxu0 %v267
    %v770 = vpop.f32.mrf.mxu0
    %v771 = vadd.f32 %v182, %v770
    %v772 = vpop.f32.mrf.mxu0
    %v773 = vadd.f32 %v182, %v772
    %774 = vmatmul.bf16.gmra.mxu0 %v268
    %v775 = vpop.f32.mrf.mxu0
    %v776 = vadd.f32 %v182, %v775
    %v777 = vpop.f32.mrf.mxu0
    %v778 = vadd.f32 %v182, %v777
    %779 = vmatmul.bf16.gmra.mxu0 %v269
    %v780 = vpop.f32.mrf.mxu0
    %v781 = vadd.f32 %v182, %v780
    %v782 = vpop.f32.mrf.mxu0
    %v783 = vadd.f32 %v182, %v782
    %784 = vmatmul.bf16.gmra.mxu0 %v270
    %v785 = vpop.f32.mrf.mxu0
    %v786 = vadd.f32 %v182, %v785
    %v787 = vpop.f32.mrf.mxu0
    %v788 = vadd.f32 %v182, %v787
    %789 = vmatmul.bf16.gmra.mxu0 %v271
    %v790 = vpop.f32.mrf.mxu0
    %v791 = vadd.f32 %v182, %v790
    %v792 = vpop.f32.mrf.mxu0
    %v793 = vadd.f32 %v182, %v792
    %794 = vdwg.mxu0
    %795 = vmatpush.bf16.msra.mxu0 %v477
    %796 = vmatpush.bf16.msra.mxu0 %v471
    %797 = vmatpush.bf16.msra.mxu0 %v465
    %798 = vmatpush.bf16.msra.mxu0 %v459
    %799 = vmatpush.bf16.msra.mxu0 %v453
    %800 = vmatpush.bf16.msra.mxu0 %v447
    %801 = vmatpush.bf16.msra.mxu0 %v441
    %802 = vmatpush.bf16.msra.mxu0 %v435
    %803 = vmatmul.bf16.gmra.mxu0 %v256
    %v804 = vpop.f32.mrf.mxu0
    %v805 = vadd.f32 %v183, %v804
    %v806 = vpop.f32.mrf.mxu0
    %v807 = vadd.f32 %v183, %v806
    %808 = vmatmul.bf16.gmra.mxu0 %v257
    %v809 = vpop.f32.mrf.mxu0
    %v810 = vadd.f32 %v183, %v809
    %v811 = vpop.f32.mrf.mxu0
    %v812 = vadd.f32 %v183, %v811
    %813 = vmatmul.bf16.gmra.mxu0 %v258
    %v814 = vpop.f32.mrf.mxu0
    %v815 = vadd.f32 %v183, %v814
    %v816 = vpop.f32.mrf.mxu0
    %v817 = vadd.f32 %v183, %v816
    %818 = vmatmul.bf16.gmra.mxu0 %v259
    %v819 = vpop.f32.mrf.mxu0
    %v820 = vadd.f32 %v183, %v819
    %v821 = vpop.f32.mrf.mxu0
    %v822 = vadd.f32 %v183, %v821
    %823 = vmatmul.bf16.gmra.mxu0 %v260
    %v824 = vpop.f32.mrf.mxu0
    %v825 = vadd.f32 %v183, %v824
    %v826 = vpop.f32.mrf.mxu0
    %v827 = vadd.f32 %v183, %v826
    %828 = vmatmul.bf16.gmra.mxu0 %v261
    %v829 = vpop.f32.mrf.mxu0
    %v830 = vadd.f32 %v183, %v829
    %v831 = vpop.f32.mrf.mxu0
    %v832 = vadd.f32 %v183, %v831
    %833 = vmatmul.bf16.gmra.mxu0 %v262
    %v834 = vpop.f32.mrf.mxu0
    %v835 = vadd.f32 %v183, %v834
    %v836 = vpop.f32.mrf.mxu0
    %v837 = vadd.f32 %v183, %v836
    %838 = vmatmul.bf16.gmra.mxu0 %v263
    %v839 = vpop.f32.mrf.mxu0
    %v840 = vadd.f32 %v183, %v839
    %v841 = vpop.f32.mrf.mxu0
    %v842 = vadd.f32 %v183, %v841
    %843 = vmatmul.bf16.gmra.mxu0 %v264
    %v844 = vpop.f32.mrf.mxu0
    %v845 = vadd.f32 %v183, %v844
    %v846 = vpop.f32.mrf.mxu0
    %v847 = vadd.f32 %v183, %v846
    %848 = vmatmul.bf16.gmra.mxu0 %v265
    %v849 = vpop.f32.mrf.mxu0
    %v850 = vadd.f32 %v183, %v849
    %v851 = vpop.f32.mrf.mxu0
    %v852 = vadd.f32 %v183, %v851
    %853 = vmatmul.bf16.gmra.mxu0 %v266
    %v854 = vpop.f32.mrf.mxu0
    %v855 = vadd.f32 %v183, %v854
    %v856 = vpop.f32.mrf.mxu0
    %v857 = vadd.f32 %v183, %v856
    %858 = vmatmul.bf16.gmra.mxu0 %v267
    %v859 = vpop.f32.mrf.mxu0
    %v860 = vadd.f32 %v183, %v859
    %v861 = vpop.f32.mrf.mxu0
    %v862 = vadd.f32 %v183, %v861
    %863 = vmatmul.bf16.gmra.mxu0 %v268
    %v864 = vpop.f32.mrf.mxu0
    %v865 = vadd.f32 %v183, %v864
    %v866 = vpop.f32.mrf.mxu0
    %v867 = vadd.f32 %v183, %v866
    %868 = vmatmul.bf16.gmra.mxu0 %v269
    %v869 = vpop.f32.mrf.mxu0
    %v870 = vadd.f32 %v183, %v869
    %v871 = vpop.f32.mrf.mxu0
    %v872 = vadd.f32 %v183, %v871
    %873 = vmatmul.bf16.gmra.mxu0 %v270
    %v874 = vpop.f32.mrf.mxu0
    %v875 = vadd.f32 %v183, %v874
    %v876 = vpop.f32.mrf.mxu0
    %v877 = vadd.f32 %v183, %v876
    %878 = vmatmul.bf16.gmra.mxu0 %v271
    %v879 = vpop.f32.mrf.mxu0
    %v880 = vadd.f32 %v183, %v879
    %v881 = vpop.f32.mrf.mxu0
    %v882 = vadd.f32 %v183, %v881
    %883 = vdwg.mxu0
    %884 = vmatpush.bf16.msra.mxu0 %v478
    %885 = vmatpush.bf16.msra.mxu0 %v472
    %886 = vmatpush.bf16.msra.mxu0 %v466
    %887 = vmatpush.bf16.msra.mxu0 %v460
    %888 = vmatpush.bf16.msra.mxu0 %v454
    %889 = vmatpush.bf16.msra.mxu0 %v448
    %890 = vmatpush.bf16.msra.mxu0 %v442
    %891 = vmatpush.bf16.msra.mxu0 %v436
    %892 = vmatmul.bf16.gmra.mxu0 %v256
    %v893 = vpop.f32.mrf.mxu0
    %v894 = vadd.f32 %v184, %v893
    %v895 = vpop.f32.mrf.mxu0
    %v896 = vadd.f32 %v184, %v895
    %897 = vmatmul.bf16.gmra.mxu0 %v257
    %v898 = vpop.f32.mrf.mxu0
    %v899 = vadd.f32 %v184, %v898
    %v900 = vpop.f32.mrf.mxu0
    %v901 = vadd.f32 %v184, %v900
    %902 = vmatmul.bf16.gmra.mxu0 %v258
    %v903 = vpop.f32.mrf.mxu0
    %v904 = vadd.f32 %v184, %v903
    %v905 = vpop.f32.mrf.mxu0
    %v906 = vadd.f32 %v184, %v905
    %907 = vmatmul.bf16.gmra.mxu0 %v259
    %v908 = vpop.f32.mrf.mxu0
    %v909 = vadd.f32 %v184, %v908
    %v910 = vpop.f32.mrf.mxu0
    %v911 = vadd.f32 %v184, %v910
    %912 = vmatmul.bf16.gmra.mxu0 %v260
    %v913 = vpop.f32.mrf.mxu0
    %v914 = vadd.f32 %v184, %v913
    %v915 = vpop.f32.mrf.mxu0
    %v916 = vadd.f32 %v184, %v915
    %917 = vmatmul.bf16.gmra.mxu0 %v261
    %v918 = vpop.f32.mrf.mxu0
    %v919 = vadd.f32 %v184, %v918
    %v920 = vpop.f32.mrf.mxu0
    %v921 = vadd.f32 %v184, %v920
    %922 = vmatmul.bf16.gmra.mxu0 %v262
    %v923 = vpop.f32.mrf.mxu0
    %v924 = vadd.f32 %v184, %v923
    %v925 = vpop.f32.mrf.mxu0
    %v926 = vadd.f32 %v184, %v925
    %927 = vmatmul.bf16.gmra.mxu0 %v263
    %v928 = vpop.f32.mrf.mxu0
    %v929 = vadd.f32 %v184, %v928
    %v930 = vpop.f32.mrf.mxu0
    %v931 = vadd.f32 %v184, %v930
    %932 = vmatmul.bf16.gmra.mxu0 %v264
    %v933 = vpop.f32.mrf.mxu0
    %v934 = vadd.f32 %v184, %v933
    %v935 = vpop.f32.mrf.mxu0
    %v936 = vadd.f32 %v184, %v935
    %937 = vmatmul.bf16.gmra.mxu0 %v265
    %v938 = vpop.f32.mrf.mxu0
    %v939 = vadd.f32 %v184, %v938
    %v940 = vpop.f32.mrf.mxu0
    %v941 = vadd.f32 %v184, %v940
    %942 = vmatmul.bf16.gmra.mxu0 %v266
    %v943 = vpop.f32.mrf.mxu0
    %v944 = vadd.f32 %v184, %v943
    %v945 = vpop.f32.mrf.mxu0
    %v946 = vadd.f32 %v184, %v945
    %947 = vmatmul.bf16.gmra.mxu0 %v267
    %v948 = vpop.f32.mrf.mxu0
    %v949 = vadd.f32 %v184, %v948
    %v950 = vpop.f32.mrf.mxu0
    %v951 = vadd.f32 %v184, %v950
    %952 = vmatmul.bf16.gmra.mxu0 %v268
    %v953 = vpop.f32.mrf.mxu0
    %v954 = vadd.f32 %v184, %v953
    %v955 = vpop.f32.mrf.mxu0
    %v956 = vadd.f32 %v184, %v955
    %957 = vmatmul.bf16.gmra.mxu0 %v269
    %v958 = vpop.f32.mrf.mxu0
    %v959 = vadd.f32 %v184, %v958
    %v960 = vpop.f32.mrf.mxu0
    %v961 = vadd.f32 %v184, %v960
    %962 = vmatmul.bf16.gmra.mxu0 %v270
    %v963 = vpop.f32.mrf.mxu0
    %v964 = vadd.f32 %v184, %v963
    %v965 = vpop.f32.mrf.mxu0
    %v966 = vadd.f32 %v184, %v965
    %967 = vmatmul.bf16.gmra.mxu0 %v271
    %v968 = vpop.f32.mrf.mxu0
    %v969 = vadd.f32 %v184, %v968
    %v970 = vpop.f32.mrf.mxu0
    %v971 = vadd.f32 %v184, %v970
    %972 = vdwg.mxu0
    %973 = vmatpush.bf16.msra.mxu0 %v479
    %974 = vmatpush.bf16.msra.mxu0 %v473
    %975 = vmatpush.bf16.msra.mxu0 %v467
    %976 = vmatpush.bf16.msra.mxu0 %v461
    %977 = vmatpush.bf16.msra.mxu0 %v455
    %978 = vmatpush.bf16.msra.mxu0 %v449
    %979 = vmatpush.bf16.msra.mxu0 %v443
    %980 = vmatpush.bf16.msra.mxu0 %v437
    %981 = vmatmul.bf16.gmra.mxu0 %v256
    %v982 = vpop.f32.mrf.mxu0
    %v983 = vadd.f32 %v185, %v982
    %v984 = vpop.f32.mrf.mxu0
    %v985 = vadd.f32 %v185, %v984
    %986 = vmatmul.bf16.gmra.mxu0 %v257
    %v987 = vpop.f32.mrf.mxu0
    %v988 = vadd.f32 %v185, %v987
    %v989 = vpop.f32.mrf.mxu0
    %v990 = vadd.f32 %v185, %v989
    %991 = vmatmul.bf16.gmra.mxu0 %v258
    %v992 = vpop.f32.mrf.mxu0
    %v993 = vadd.f32 %v185, %v992
    %v994 = vpop.f32.mrf.mxu0
    %v995 = vadd.f32 %v185, %v994
    %996 = vmatmul.bf16.gmra.mxu0 %v259
    %v997 = vpop.f32.mrf.mxu0
    %v998 = vadd.f32 %v185, %v997
    %v999 = vpop.f32.mrf.mxu0
    %v1000 = vadd.f32 %v185, %v999
    %1001 = vmatmul.bf16.gmra.mxu0 %v260
    %v1002 = vpop.f32.mrf.mxu0
    %v1003 = vadd.f32 %v185, %v1002
    %v1004 = vpop.f32.mrf.mxu0
    %v1005 = vadd.f32 %v185, %v1004
    %1006 = vmatmul.bf16.gmra.mxu0 %v261
    %v1007 = vpop.f32.mrf.mxu0
    %v1008 = vadd.f32 %v185, %v1007
    %v1009 = vpop.f32.mrf.mxu0
    %v1010 = vadd.f32 %v185, %v1009
    %1011 = vmatmul.bf16.gmra.mxu0 %v262
    %v1012 = vpop.f32.mrf.mxu0
    %v1013 = vadd.f32 %v185, %v1012
    %v1014 = vpop.f32.mrf.mxu0
    %v1015 = vadd.f32 %v185, %v1014
    %1016 = vmatmul.bf16.gmra.mxu0 %v263
    %v1017 = vpop.f32.mrf.mxu0
    %v1018 = vadd.f32 %v185, %v1017
    %v1019 = vpop.f32.mrf.mxu0
    %v1020 = vadd.f32 %v185, %v1019
    %1021 = vmatmul.bf16.gmra.mxu0 %v264
    %v1022 = vpop.f32.mrf.mxu0
    %v1023 = vadd.f32 %v185, %v1022
    %v1024 = vpop.f32.mrf.mxu0
    %v1025 = vadd.f32 %v185, %v1024
    %1026 = vmatmul.bf16.gmra.mxu0 %v265
    %v1027 = vpop.f32.mrf.mxu0
    %v1028 = vadd.f32 %v185, %v1027
    %v1029 = vpop.f32.mrf.mxu0
    %v1030 = vadd.f32 %v185, %v1029
    %1031 = vmatmul.bf16.gmra.mxu0 %v266
    %v1032 = vpop.f32.mrf.mxu0
    %v1033 = vadd.f32 %v185, %v1032
    %v1034 = vpop.f32.mrf.mxu0
    %v1035 = vadd.f32 %v185, %v1034
    %1036 = vmatmul.bf16.gmra.mxu0 %v267
    %v1037 = vpop.f32.mrf.mxu0
    %v1038 = vadd.f32 %v185, %v1037
    %v1039 = vpop.f32.mrf.mxu0
    %v1040 = vadd.f32 %v185, %v1039
    %1041 = vmatmul.bf16.gmra.mxu0 %v268
    %v1042 = vpop.f32.mrf.mxu0
    %v1043 = vadd.f32 %v185, %v1042
    %v1044 = vpop.f32.mrf.mxu0
    %v1045 = vadd.f32 %v185, %v1044
    %1046 = vmatmul.bf16.gmra.mxu0 %v269
    %v1047 = vpop.f32.mrf.mxu0
    %v1048 = vadd.f32 %v185, %v1047
    %v1049 = vpop.f32.mrf.mxu0
    %v1050 = vadd.f32 %v185, %v1049
    %1051 = vmatmul.bf16.gmra.mxu0 %v270
    %v1052 = vpop.f32.mrf.mxu0
    %v1053 = vadd.f32 %v185, %v1052
    %v1054 = vpop.f32.mrf.mxu0
    %v1055 = vadd.f32 %v185, %v1054
    %1056 = vmatmul.bf16.gmra.mxu0 %v271
    %v1057 = vpop.f32.mrf.mxu0
    %v1058 = vadd.f32 %v185, %v1057
    %v1059 = vpop.f32.mrf.mxu0
    %v1060 = vadd.f32 %v185, %v1059
    %1061 = vdwg.mxu0
    %v1062 = vld [vmem:[%s1] sm:$0xff]
    %v1063 = vld [vmem:[%s1 + $0x8] sm:$0xff]
    %v1066 = vrot.slane %v1062, 1
    %v1067 = vrot.slane %v1062, 2
    %v1068 = vrot.slane %v1062, 3
    %v1069 = vrot.slane %v1062, 4
    %v1070 = vrot.slane %v1062, 5
    %v1071 = vrot.slane %v1062, 6
    %v1072 = vrot.slane %v1062, 7
    %v1073 = vrot.slane %v1063, 1
    %v1074 = vrot.slane %v1063, 2
    %v1075 = vrot.slane %v1063, 3
    %v1076 = vrot.slane %v1063, 4
    %v1077 = vrot.slane %v1063, 5
    %v1078 = vrot.slane %v1063, 6
    %v1079 = vrot.slane %v1063, 7
    %v1080 = vperm.slane %v1062, 0
    %v1081 = vperm.slane %v1066, 0
    %v1082 = vperm.slane %v1067, 0
    %v1083 = vperm.slane %v1068, 0
    %v1084 = vperm.slane %v1069, 0
    %v1085 = vperm.slane %v1070, 0
    %v1086 = vperm.slane %v1071, 0
    %v1087 = vperm.slane %v1072, 0
    %v1088 = vperm.slane %v1063, 0
    %v1089 = vperm.slane %v1073, 0
    %v1090 = vperm.slane %v1074, 0
    %v1091 = vperm.slane %v1075, 0
    %v1092 = vperm.slane %v1076, 0
    %v1093 = vperm.slane %v1077, 0
    %v1094 = vperm.slane %v1078, 0
    %v1095 = vperm.slane %v1079, 0
    %v1112 = vld [vmem:[#allocation7] sm:$0xf]
    %v1113 = vld [vmem:[#allocation7 + $0x4] sm:$0xf]
    %v1114 = vld [vmem:[#allocation7 + $0x8] sm:$0xf]
    %v1115 = vld [vmem:[#allocation7 + $0xc] sm:$0xf]
    %v1116 = vld [vmem:[#allocation7 + $0x10] sm:$0xf]
    %v1117 = vld [vmem:[#allocation7 + $0x14] sm:$0xf]
    %v1118 = vld [vmem:[#allocation7 + $0x18] sm:$0xf]
    %v1119 = vld [vmem:[#allocation7 + $0x1c] sm:$0xf]
    %v1120 = vld [vmem:[#allocation7 + $0x20] sm:$0xf]
    %v1121 = vld [vmem:[#allocation7 + $0x24] sm:$0xf]
    %v1122 = vld [vmem:[#allocation7 + $0x28] sm:$0xf]
    %v1123 = vld [vmem:[#allocation7 + $0x2c] sm:$0xf]
    %v1124 = vld [vmem:[#allocation7 + $0x30] sm:$0xf]
    %v1125 = vld [vmem:[#allocation7 + $0x34] sm:$0xf]
    %v1126 = vld [vmem:[#allocation7 + $0x38] sm:$0xf]
    %v1127 = vld [vmem:[#allocation7 + $0x3c] sm:$0xf]
    %v1128 = vld [vmem:[#allocation7 + $0x40] sm:$0xf]
    %v1129 = vld [vmem:[#allocation7 + $0x44] sm:$0xf]
    %v1130 = vld [vmem:[#allocation7 + $0x48] sm:$0xf]
    %v1131 = vld [vmem:[#allocation7 + $0x4c] sm:$0xf]
    %v1132 = vld [vmem:[#allocation7 + $0x50] sm:$0xf]
    %v1133 = vld [vmem:[#allocation7 + $0x54] sm:$0xf]
    %v1134 = vld [vmem:[#allocation7 + $0x58] sm:$0xf]
    %v1135 = vld [vmem:[#allocation7 + $0x5c] sm:$0xf]
    %v1136 = vld [vmem:[#allocation7 + $0x60] sm:$0xf]
    %v1137 = vld [vmem:[#allocation7 + $0x64] sm:$0xf]
    %v1138 = vld [vmem:[#allocation7 + $0x68] sm:$0xf]
    %v1139 = vld [vmem:[#allocation7 + $0x6c] sm:$0xf]
    %v1140 = vld [vmem:[#allocation7 + $0x70] sm:$0xf]
    %v1141 = vld [vmem:[#allocation7 + $0x74] sm:$0xf]
    %v1142 = vld [vmem:[#allocation7 + $0x78] sm:$0xf]
    %v1143 = vld [vmem:[#allocation7 + $0x7c] sm:$0xf]
    %v1144 = vpack.c.bf16 %v538, %v538
    %v1145 = vpack.c.bf16 %v540, %v540
    %v1146 = vpack.c.bf16 %v543, %v543
    %v1147 = vpack.c.bf16 %v545, %v545
    %v1148 = vpack.c.bf16 %v548, %v548
    %v1149 = vpack.c.bf16 %v550, %v550
    %v1150 = vpack.c.bf16 %v553, %v553
    %v1151 = vpack.c.bf16 %v555, %v555
    %v1152 = vpack.c.bf16 %v558, %v558
    %v1153 = vpack.c.bf16 %v560, %v560
    %v1154 = vpack.c.bf16 %v563, %v563
    %v1155 = vpack.c.bf16 %v565, %v565
    %v1156 = vpack.c.bf16 %v568, %v568
    %v1157 = vpack.c.bf16 %v570, %v570
    %v1158 = vpack.c.bf16 %v573, %v573
    %v1159 = vpack.c.bf16 %v575, %v575
    %v1160 = vpack.c.bf16 %v578, %v578
    %v1161 = vpack.c.bf16 %v580, %v580
    %v1162 = vpack.c.bf16 %v583, %v583
    %v1163 = vpack.c.bf16 %v585, %v585
    %v1164 = vpack.c.bf16 %v588, %v588
    %v1165 = vpack.c.bf16 %v590, %v590
    %v1166 = vpack.c.bf16 %v593, %v593
    %v1167 = vpack.c.bf16 %v595, %v595
    %v1168 = vpack.c.bf16 %v598, %v598
    %v1169 = vpack.c.bf16 %v600, %v600
    %v1170 = vpack.c.bf16 %v603, %v603
    %v1171 = vpack.c.bf16 %v605, %v605
    %v1172 = vpack.c.bf16 %v608, %v608
    %v1173 = vpack.c.bf16 %v610, %v610
    %v1174 = vpack.c.bf16 %v613, %v613
    %v1175 = vpack.c.bf16 %v615, %v615
    %v1176 = vpack.c.bf16 %v716, %v716
    %v1177 = vpack.c.bf16 %v718, %v718
    %v1178 = vpack.c.bf16 %v721, %v721
    %v1179 = vpack.c.bf16 %v723, %v723
    %v1180 = vpack.c.bf16 %v726, %v726
    %v1181 = vpack.c.bf16 %v728, %v728
    %v1182 = vpack.c.bf16 %v731, %v731
    %v1183 = vpack.c.bf16 %v733, %v733
    %v1184 = vpack.c.bf16 %v736, %v736
    %v1185 = vpack.c.bf16 %v738, %v738
    %v1186 = vpack.c.bf16 %v741, %v741
    %v1187 = vpack.c.bf16 %v743, %v743
    %v1188 = vpack.c.bf16 %v746, %v746
    %v1189 = vpack.c.bf16 %v748, %v748
    %v1190 = vpack.c.bf16 %v751, %v751
    %v1191 = vpack.c.bf16 %v753, %v753
    %v1192 = vpack.c.bf16 %v756, %v756
    %v1193 = vpack.c.bf16 %v758, %v758
    %v1194 = vpack.c.bf16 %v761, %v761
    %v1195 = vpack.c.bf16 %v763, %v763
    %v1196 = vpack.c.bf16 %v766, %v766
    %v1197 = vpack.c.bf16 %v768, %v768
    %v1198 = vpack.c.bf16 %v771, %v771
    %v1199 = vpack.c.bf16 %v773, %v773
    %v1200 = vpack.c.bf16 %v776, %v776
    %v1201 = vpack.c.bf16 %v778, %v778
    %v1202 = vpack.c.bf16 %v781, %v781
    %v1203 = vpack.c.bf16 %v783, %v783
    %v1204 = vpack.c.bf16 %v786, %v786
    %v1205 = vpack.c.bf16 %v788, %v788
    %v1206 = vpack.c.bf16 %v791, %v791
    %v1207 = vpack.c.bf16 %v793, %v793
    %v1208 = vpack.c.bf16 %v894, %v894
    %v1209 = vpack.c.bf16 %v896, %v896
    %v1210 = vpack.c.bf16 %v899, %v899
    %v1211 = vpack.c.bf16 %v901, %v901
    %v1212 = vpack.c.bf16 %v904, %v904
    %v1213 = vpack.c.bf16 %v906, %v906
    %v1214 = vpack.c.bf16 %v909, %v909
    %v1215 = vpack.c.bf16 %v911, %v911
    %v1216 = vpack.c.bf16 %v914, %v914
    %v1217 = vpack.c.bf16 %v916, %v916
    %v1218 = vpack.c.bf16 %v919, %v919
    %v1219 = vpack.c.bf16 %v921, %v921
    %v1220 = vpack.c.bf16 %v924, %v924
    %v1221 = vpack.c.bf16 %v926, %v926
    %v1222 = vpack.c.bf16 %v929, %v929
    %v1223 = vpack.c.bf16 %v931, %v931
    %v1224 = vpack.c.bf16 %v934, %v934
    %v1225 = vpack.c.bf16 %v936, %v936
    %v1226 = vpack.c.bf16 %v939, %v939
    %v1227 = vpack.c.bf16 %v941, %v941
    %v1228 = vpack.c.bf16 %v944, %v944
    %v1229 = vpack.c.bf16 %v946, %v946
    %v1230 = vpack.c.bf16 %v949, %v949
    %v1231 = vpack.c.bf16 %v951, %v951
    %v1232 = vpack.c.bf16 %v954, %v954
    %v1233 = vpack.c.bf16 %v956, %v956
    %v1234 = vpack.c.bf16 %v959, %v959
    %v1235 = vpack.c.bf16 %v961, %v961
    %v1236 = vpack.c.bf16 %v964, %v964
    %v1237 = vpack.c.bf16 %v966, %v966
    %v1238 = vpack.c.bf16 %v969, %v969
    %v1239 = vpack.c.bf16 %v971, %v971
    %v1242 = vunpack.c.l.b16 %v1144
    %v1243 = vunpack.c.l.b16 %v1145
    %v1244 = vpack.c.b16 %v1243, %v1242
    %v1248 = vunpack.c.l.b16 %v1176
    %v1249 = vunpack.c.l.b16 %v1177
    %v1250 = vpack.c.b16 %v1249, %v1248
    %1252 = vmatpush.bf16.xpose.msra.mxu0 0
    %1253 = vmatpush.bf16.xpose.msra.mxu0 0
    %1254 = vmatpush.bf16.xpose.msra.mxu0 0
    %1255 = vmatpush.bf16.xpose.msra.mxu0 0
    %1256 = vmatpush.bf16.xpose.msra.mxu0 0
    %1257 = vmatpush.bf16.xpose.msra.mxu0 0
    %1258 = vmatpush.bf16.xpose.msra.mxu0 0
    %1259 = vmatpush.bf16.xpose.msra.mxu0 %v1250
    %1260 = vmatmul.bf16.gmra.mxu0 %v1244
    %v1261 = vpop.f32.mrf.mxu0
    %v1262 = vadd.f32 0.0, %v1261
    %v1263 = vpop.f32.mrf.mxu0
    %v1264 = vadd.f32 0.0, %v1263
    %1265 = vdwg.mxu0
    %v1268 = vunpack.c.l.b16 %v1146
    %v1269 = vunpack.c.l.b16 %v1147
    %v1270 = vpack.c.b16 %v1269, %v1268
    %v1274 = vunpack.c.l.b16 %v1178
    %v1275 = vunpack.c.l.b16 %v1179
    %v1276 = vpack.c.b16 %v1275, %v1274
    %1278 = vmatpush.bf16.xpose.msra.mxu0 0
    %1279 = vmatpush.bf16.xpose.msra.mxu0 0
    %1280 = vmatpush.bf16.xpose.msra.mxu0 0
    %1281 = vmatpush.bf16.xpose.msra.mxu0 0
    %1282 = vmatpush.bf16.xpose.msra.mxu0 0
    %1283 = vmatpush.bf16.xpose.msra.mxu0 0
    %1284 = vmatpush.bf16.xpose.msra.mxu0 0
    %1285 = vmatpush.bf16.xpose.msra.mxu0 %v1276
    %1286 = vmatmul.bf16.gmra.mxu0 %v1270
    %v1287 = vpop.f32.mrf.mxu0
    %v1288 = vadd.f32 0.0, %v1287
    %v1289 = vpop.f32.mrf.mxu0
    %v1290 = vadd.f32 0.0, %v1289
    %1291 = vdwg.mxu0
    %v1294 = vunpack.c.l.b16 %v1148
    %v1295 = vunpack.c.l.b16 %v1149
    %v1296 = vpack.c.b16 %v1295, %v1294
    %v1300 = vunpack.c.l.b16 %v1180
    %v1301 = vunpack.c.l.b16 %v1181
    %v1302 = vpack.c.b16 %v1301, %v1300
    %1304 = vmatpush.bf16.xpose.msra.mxu0 0
    %1305 = vmatpush.bf16.xpose.msra.mxu0 0
    %1306 = vmatpush.bf16.xpose.msra.mxu0 0
    %1307 = vmatpush.bf16.xpose.msra.mxu0 0
    %1308 = vmatpush.bf16.xpose.msra.mxu0 0
    %1309 = vmatpush.bf16.xpose.msra.mxu0 0
    %1310 = vmatpush.bf16.xpose.msra.mxu0 0
    %1311 = vmatpush.bf16.xpose.msra.mxu0 %v1302
    %1312 = vmatmul.bf16.gmra.mxu0 %v1296
    %v1313 = vpop.f32.mrf.mxu0
    %v1314 = vadd.f32 0.0, %v1313
    %v1315 = vpop.f32.mrf.mxu0
    %v1316 = vadd.f32 0.0, %v1315
    %1317 = vdwg.mxu0
    %v1320 = vunpack.c.l.b16 %v1150
    %v1321 = vunpack.c.l.b16 %v1151
    %v1322 = vpack.c.b16 %v1321, %v1320
    %v1326 = vunpack.c.l.b16 %v1182
    %v1327 = vunpack.c.l.b16 %v1183
    %v1328 = vpack.c.b16 %v1327, %v1326
    %1330 = vmatpush.bf16.xpose.msra.mxu0 0
    %1331 = vmatpush.bf16.xpose.msra.mxu0 0
    %1332 = vmatpush.bf16.xpose.msra.mxu0 0
    %1333 = vmatpush.bf16.xpose.msra.mxu0 0
    %1334 = vmatpush.bf16.xpose.msra.mxu0 0
    %1335 = vmatpush.bf16.xpose.msra.mxu0 0
    %1336 = vmatpush.bf16.xpose.msra.mxu0 0
    %1337 = vmatpush.bf16.xpose.msra.mxu0 %v1328
    %1338 = vmatmul.bf16.gmra.mxu0 %v1322
    %v1339 = vpop.f32.mrf.mxu0
    %v1340 = vadd.f32 0.0, %v1339
    %v1341 = vpop.f32.mrf.mxu0
    %v1342 = vadd.f32 0.0, %v1341
    %1343 = vdwg.mxu0
    %v1346 = vunpack.c.l.b16 %v1152
    %v1347 = vunpack.c.l.b16 %v1153
    %v1348 = vpack.c.b16 %v1347, %v1346
    %v1352 = vunpack.c.l.b16 %v1184
    %v1353 = vunpack.c.l.b16 %v1185
    %v1354 = vpack.c.b16 %v1353, %v1352
    %1356 = vmatpush.bf16.xpose.msra.mxu0 0
    %1357 = vmatpush.bf16.xpose.msra.mxu0 0
    %1358 = vmatpush.bf16.xpose.msra.mxu0 0
    %1359 = vmatpush.bf16.xpose.msra.mxu0 0
    %1360 = vmatpush.bf16.xpose.msra.mxu0 0
    %1361 = vmatpush.bf16.xpose.msra.mxu0 0
    %1362 = vmatpush.bf16.xpose.msra.mxu0 0
    %1363 = vmatpush.bf16.xpose.msra.mxu0 %v1354
    %1364 = vmatmul.bf16.gmra.mxu0 %v1348
    %v1365 = vpop.f32.mrf.mxu0
    %v1366 = vadd.f32 0.0, %v1365
    %v1367 = vpop.f32.mrf.mxu0
    %v1368 = vadd.f32 0.0, %v1367
    %1369 = vdwg.mxu0
    %v1372 = vunpack.c.l.b16 %v1154
    %v1373 = vunpack.c.l.b16 %v1155
    %v1374 = vpack.c.b16 %v1373, %v1372
    %v1378 = vunpack.c.l.b16 %v1186
    %v1379 = vunpack.c.l.b16 %v1187
    %v1380 = vpack.c.b16 %v1379, %v1378
    %1382 = vmatpush.bf16.xpose.msra.mxu0 0
    %1383 = vmatpush.bf16.xpose.msra.mxu0 0
    %1384 = vmatpush.bf16.xpose.msra.mxu0 0
    %1385 = vmatpush.bf16.xpose.msra.mxu0 0
    %1386 = vmatpush.bf16.xpose.msra.mxu0 0
    %1387 = vmatpush.bf16.xpose.msra.mxu0 0
    %1388 = vmatpush.bf16.xpose.msra.mxu0 0
    %1389 = vmatpush.bf16.xpose.msra.mxu0 %v1380
    %1390 = vmatmul.bf16.gmra.mxu0 %v1374
    %v1391 = vpop.f32.mrf.mxu0
    %v1392 = vadd.f32 0.0, %v1391
    %v1393 = vpop.f32.mrf.mxu0
    %v1394 = vadd.f32 0.0, %v1393
    %1395 = vdwg.mxu0
    %v1398 = vunpack.c.l.b16 %v1156
    %v1399 = vunpack.c.l.b16 %v1157
    %v1400 = vpack.c.b16 %v1399, %v1398
    %v1404 = vunpack.c.l.b16 %v1188
    %v1405 = vunpack.c.l.b16 %v1189
    %v1406 = vpack.c.b16 %v1405, %v1404
    %1408 = vmatpush.bf16.xpose.msra.mxu0 0
    %1409 = vmatpush.bf16.xpose.msra.mxu0 0
    %1410 = vmatpush.bf16.xpose.msra.mxu0 0
    %1411 = vmatpush.bf16.xpose.msra.mxu0 0
    %1412 = vmatpush.bf16.xpose.msra.mxu0 0
    %1413 = vmatpush.bf16.xpose.msra.mxu0 0
    %1414 = vmatpush.bf16.xpose.msra.mxu0 0
    %1415 = vmatpush.bf16.xpose.msra.mxu0 %v1406
    %1416 = vmatmul.bf16.gmra.mxu0 %v1400
    %v1417 = vpop.f32.mrf.mxu0
    %v1418 = vadd.f32 0.0, %v1417
    %v1419 = vpop.f32.mrf.mxu0
    %v1420 = vadd.f32 0.0, %v1419
    %1421 = vdwg.mxu0
    %v1424 = vunpack.c.l.b16 %v1158
    %v1425 = vunpack.c.l.b16 %v1159
    %v1426 = vpack.c.b16 %v1425, %v1424
    %v1430 = vunpack.c.l.b16 %v1190
    %v1431 = vunpack.c.l.b16 %v1191
    %v1432 = vpack.c.b16 %v1431, %v1430
    %1434 = vmatpush.bf16.xpose.msra.mxu0 0
    %1435 = vmatpush.bf16.xpose.msra.mxu0 0
    %1436 = vmatpush.bf16.xpose.msra.mxu0 0
    %1437 = vmatpush.bf16.xpose.msra.mxu0 0
    %1438 = vmatpush.bf16.xpose.msra.mxu0 0
    %1439 = vmatpush.bf16.xpose.msra.mxu0 0
    %1440 = vmatpush.bf16.xpose.msra.mxu0 0
    %1441 = vmatpush.bf16.xpose.msra.mxu0 %v1432
    %1442 = vmatmul.bf16.gmra.mxu0 %v1426
    %v1443 = vpop.f32.mrf.mxu0
    %v1444 = vadd.f32 0.0, %v1443
    %v1445 = vpop.f32.mrf.mxu0
    %v1446 = vadd.f32 0.0, %v1445
    %1447 = vdwg.mxu0
    %v1450 = vunpack.c.l.b16 %v1160
    %v1451 = vunpack.c.l.b16 %v1161
    %v1452 = vpack.c.b16 %v1451, %v1450
    %v1456 = vunpack.c.l.b16 %v1192
    %v1457 = vunpack.c.l.b16 %v1193
    %v1458 = vpack.c.b16 %v1457, %v1456
    %1460 = vmatpush.bf16.xpose.msra.mxu0 0
    %1461 = vmatpush.bf16.xpose.msra.mxu0 0
    %1462 = vmatpush.bf16.xpose.msra.mxu0 0
    %1463 = vmatpush.bf16.xpose.msra.mxu0 0
    %1464 = vmatpush.bf16.xpose.msra.mxu0 0
    %1465 = vmatpush.bf16.xpose.msra.mxu0 0
    %1466 = vmatpush.bf16.xpose.msra.mxu0 0
    %1467 = vmatpush.bf16.xpose.msra.mxu0 %v1458
    %1468 = vmatmul.bf16.gmra.mxu0 %v1452
    %v1469 = vpop.f32.mrf.mxu0
    %v1470 = vadd.f32 0.0, %v1469
    %v1471 = vpop.f32.mrf.mxu0
    %v1472 = vadd.f32 0.0, %v1471
    %1473 = vdwg.mxu0
    %v1476 = vunpack.c.l.b16 %v1162
    %v1477 = vunpack.c.l.b16 %v1163
    %v1478 = vpack.c.b16 %v1477, %v1476
    %v1482 = vunpack.c.l.b16 %v1194
    %v1483 = vunpack.c.l.b16 %v1195
    %v1484 = vpack.c.b16 %v1483, %v1482
    %1486 = vmatpush.bf16.xpose.msra.mxu0 0
    %1487 = vmatpush.bf16.xpose.msra.mxu0 0
    %1488 = vmatpush.bf16.xpose.msra.mxu0 0
    %1489 = vmatpush.bf16.xpose.msra.mxu0 0
    %1490 = vmatpush.bf16.xpose.msra.mxu0 0
    %1491 = vmatpush.bf16.xpose.msra.mxu0 0
    %1492 = vmatpush.bf16.xpose.msra.mxu0 0
    %1493 = vmatpush.bf16.xpose.msra.mxu0 %v1484
    %1494 = vmatmul.bf16.gmra.mxu0 %v1478
    %v1495 = vpop.f32.mrf.mxu0
    %v1496 = vadd.f32 0.0, %v1495
    %v1497 = vpop.f32.mrf.mxu0
    %v1498 = vadd.f32 0.0, %v1497
    %1499 = vdwg.mxu0
    %v1502 = vunpack.c.l.b16 %v1164
    %v1503 = vunpack.c.l.b16 %v1165
    %v1504 = vpack.c.b16 %v1503, %v1502
    %v1508 = vunpack.c.l.b16 %v1196
    %v1509 = vunpack.c.l.b16 %v1197
    %v1510 = vpack.c.b16 %v1509, %v1508
    %1512 = vmatpush.bf16.xpose.msra.mxu0 0
    %1513 = vmatpush.bf16.xpose.msra.mxu0 0
    %1514 = vmatpush.bf16.xpose.msra.mxu0 0
    %1515 = vmatpush.bf16.xpose.msra.mxu0 0
    %1516 = vmatpush.bf16.xpose.msra.mxu0 0
    %1517 = vmatpush.bf16.xpose.msra.mxu0 0
    %1518 = vmatpush.bf16.xpose.msra.mxu0 0
    %1519 = vmatpush.bf16.xpose.msra.mxu0 %v1510
    %1520 = vmatmul.bf16.gmra.mxu0 %v1504
    %v1521 = vpop.f32.mrf.mxu0
    %v1522 = vadd.f32 0.0, %v1521
    %v1523 = vpop.f32.mrf.mxu0
    %v1524 = vadd.f32 0.0, %v1523
    %1525 = vdwg.mxu0
    %v1528 = vunpack.c.l.b16 %v1166
    %v1529 = vunpack.c.l.b16 %v1167
    %v1530 = vpack.c.b16 %v1529, %v1528
    %v1534 = vunpack.c.l.b16 %v1198
    %v1535 = vunpack.c.l.b16 %v1199
    %v1536 = vpack.c.b16 %v1535, %v1534
    %1538 = vmatpush.bf16.xpose.msra.mxu0 0
    %1539 = vmatpush.bf16.xpose.msra.mxu0 0
    %1540 = vmatpush.bf16.xpose.msra.mxu0 0
    %1541 = vmatpush.bf16.xpose.msra.mxu0 0
    %1542 = vmatpush.bf16.xpose.msra.mxu0 0
    %1543 = vmatpush.bf16.xpose.msra.mxu0 0
    %1544 = vmatpush.bf16.xpose.msra.mxu0 0
    %1545 = vmatpush.bf16.xpose.msra.mxu0 %v1536
    %1546 = vmatmul.bf16.gmra.mxu0 %v1530
    %v1547 = vpop.f32.mrf.mxu0
    %v1548 = vadd.f32 0.0, %v1547
    %v1549 = vpop.f32.mrf.mxu0
    %v1550 = vadd.f32 0.0, %v1549
    %1551 = vdwg.mxu0
    %v1554 = vunpack.c.l.b16 %v1168
    %v1555 = vunpack.c.l.b16 %v1169
    %v1556 = vpack.c.b16 %v1555, %v1554
    %v1560 = vunpack.c.l.b16 %v1200
    %v1561 = vunpack.c.l.b16 %v1201
    %v1562 = vpack.c.b16 %v1561, %v1560
    %1564 = vmatpush.bf16.xpose.msra.mxu0 0
    %1565 = vmatpush.bf16.xpose.msra.mxu0 0
    %1566 = vmatpush.bf16.xpose.msra.mxu0 0
    %1567 = vmatpush.bf16.xpose.msra.mxu0 0
    %1568 = vmatpush.bf16.xpose.msra.mxu0 0
    %1569 = vmatpush.bf16.xpose.msra.mxu0 0
    %1570 = vmatpush.bf16.xpose.msra.mxu0 0
    %1571 = vmatpush.bf16.xpose.msra.mxu0 %v1562
    %1572 = vmatmul.bf16.gmra.mxu0 %v1556
    %v1573 = vpop.f32.mrf.mxu0
    %v1574 = vadd.f32 0.0, %v1573
    %v1575 = vpop.f32.mrf.mxu0
    %v1576 = vadd.f32 0.0, %v1575
    %1577 = vdwg.mxu0
    %v1580 = vunpack.c.l.b16 %v1170
    %v1581 = vunpack.c.l.b16 %v1171
    %v1582 = vpack.c.b16 %v1581, %v1580
    %v1586 = vunpack.c.l.b16 %v1202
    %v1587 = vunpack.c.l.b16 %v1203
    %v1588 = vpack.c.b16 %v1587, %v1586
    %1590 = vmatpush.bf16.xpose.msra.mxu0 0
    %1591 = vmatpush.bf16.xpose.msra.mxu0 0
    %1592 = vmatpush.bf16.xpose.msra.mxu0 0
    %1593 = vmatpush.bf16.xpose.msra.mxu0 0
    %1594 = vmatpush.bf16.xpose.msra.mxu0 0
    %1595 = vmatpush.bf16.xpose.msra.mxu0 0
    %1596 = vmatpush.bf16.xpose.msra.mxu0 0
    %1597 = vmatpush.bf16.xpose.msra.mxu0 %v1588
    %1598 = vmatmul.bf16.gmra.mxu0 %v1582
    %v1599 = vpop.f32.mrf.mxu0
    %v1600 = vadd.f32 0.0, %v1599
    %v1601 = vpop.f32.mrf.mxu0
    %v1602 = vadd.f32 0.0, %v1601
    %1603 = vdwg.mxu0
    %v1606 = vunpack.c.l.b16 %v1172
    %v1607 = vunpack.c.l.b16 %v1173
    %v1608 = vpack.c.b16 %v1607, %v1606
    %v1612 = vunpack.c.l.b16 %v1204
    %v1613 = vunpack.c.l.b16 %v1205
    %v1614 = vpack.c.b16 %v1613, %v1612
    %1616 = vmatpush.bf16.xpose.msra.mxu0 0
    %1617 = vmatpush.bf16.xpose.msra.mxu0 0
    %1618 = vmatpush.bf16.xpose.msra.mxu0 0
    %1619 = vmatpush.bf16.xpose.msra.mxu0 0
    %1620 = vmatpush.bf16.xpose.msra.mxu0 0
    %1621 = vmatpush.bf16.xpose.msra.mxu0 0
    %1622 = vmatpush.bf16.xpose.msra.mxu0 0
    %1623 = vmatpush.bf16.xpose.msra.mxu0 %v1614
    %1624 = vmatmul.bf16.gmra.mxu0 %v1608
    %v1625 = vpop.f32.mrf.mxu0
    %v1626 = vadd.f32 0.0, %v1625
    %v1627 = vpop.f32.mrf.mxu0
    %v1628 = vadd.f32 0.0, %v1627
    %1629 = vdwg.mxu0
    %v1632 = vunpack.c.l.b16 %v1174
    %v1633 = vunpack.c.l.b16 %v1175
    %v1634 = vpack.c.b16 %v1633, %v1632
    %v1638 = vunpack.c.l.b16 %v1206
    %v1639 = vunpack.c.l.b16 %v1207
    %v1640 = vpack.c.b16 %v1639, %v1638
    %1642 = vmatpush.bf16.xpose.msra.mxu0 0
    %1643 = vmatpush.bf16.xpose.msra.mxu0 0
    %1644 = vmatpush.bf16.xpose.msra.mxu0 0
    %1645 = vmatpush.bf16.xpose.msra.mxu0 0
    %1646 = vmatpush.bf16.xpose.msra.mxu0 0
    %1647 = vmatpush.bf16.xpose.msra.mxu0 0
    %1648 = vmatpush.bf16.xpose.msra.mxu0 0
    %1649 = vmatpush.bf16.xpose.msra.mxu0 %v1640
    %1650 = vmatmul.bf16.gmra.mxu0 %v1634
    %v1651 = vpop.f32.mrf.mxu0
    %v1652 = vadd.f32 0.0, %v1651
    %v1653 = vpop.f32.mrf.mxu0
    %v1654 = vadd.f32 0.0, %v1653
    %1655 = vdwg.mxu0
    %v1656 = vmul.f32 %v1262, 0.25
    %v1657 = vmul.f32 %v1264, 0.25
    %v1658 = vmul.f32 %v1288, 0.25
    %v1659 = vmul.f32 %v1290, 0.25
    %v1660 = vmul.f32 %v1314, 0.25
    %v1661 = vmul.f32 %v1316, 0.25
    %v1662 = vmul.f32 %v1340, 0.25
    %v1663 = vmul.f32 %v1342, 0.25
    %v1664 = vmul.f32 %v1366, 0.25
    %v1665 = vmul.f32 %v1368, 0.25
    %v1666 = vmul.f32 %v1392, 0.25
    %v1667 = vmul.f32 %v1394, 0.25
    %v1668 = vmul.f32 %v1418, 0.25
    %v1669 = vmul.f32 %v1420, 0.25
    %v1670 = vmul.f32 %v1444, 0.25
    %v1671 = vmul.f32 %v1446, 0.25
    %v1672 = vmul.f32 %v1470, 0.25
    %v1673 = vmul.f32 %v1472, 0.25
    %v1674 = vmul.f32 %v1496, 0.25
    %v1675 = vmul.f32 %v1498, 0.25
    %v1676 = vmul.f32 %v1522, 0.25
    %v1677 = vmul.f32 %v1524, 0.25
    %v1678 = vmul.f32 %v1548, 0.25
    %v1679 = vmul.f32 %v1550, 0.25
    %v1680 = vmul.f32 %v1574, 0.25
    %v1681 = vmul.f32 %v1576, 0.25
    %v1682 = vmul.f32 %v1600, 0.25
    %v1683 = vmul.f32 %v1602, 0.25
    %v1684 = vmul.f32 %v1626, 0.25
    %v1685 = vmul.f32 %v1628, 0.25
    %v1686 = vmul.f32 %v1652, 0.25
    %v1687 = vmul.f32 %v1654, 0.25
    %v1688 = vadd.f32 %v1656, %v1080
    %v1689 = vadd.f32 %v1657, %v1080
    %v1690 = vadd.f32 %v1658, %v1081
    %v1691 = vadd.f32 %v1659, %v1081
    %v1692 = vadd.f32 %v1660, %v1082
    %v1693 = vadd.f32 %v1661, %v1082
    %v1694 = vadd.f32 %v1662, %v1083
    %v1695 = vadd.f32 %v1663, %v1083
    %v1696 = vadd.f32 %v1664, %v1084
    %v1697 = vadd.f32 %v1665, %v1084
    %v1698 = vadd.f32 %v1666, %v1085
    %v1699 = vadd.f32 %v1667, %v1085
    %v1700 = vadd.f32 %v1668, %v1086
    %v1701 = vadd.f32 %v1669, %v1086
    %v1702 = vadd.f32 %v1670, %v1087
    %v1703 = vadd.f32 %v1671, %v1087
    %v1704 = vadd.f32 %v1672, %v1088
    %v1705 = vadd.f32 %v1673, %v1088
    %v1706 = vadd.f32 %v1674, %v1089
    %v1707 = vadd.f32 %v1675, %v1089
    %v1708 = vadd.f32 %v1676, %v1090
    %v1709 = vadd.f32 %v1677, %v1090
    %v1710 = vadd.f32 %v1678, %v1091
    %v1711 = vadd.f32 %v1679, %v1091
    %v1712 = vadd.f32 %v1680, %v1092
    %v1713 = vadd.f32 %v1681, %v1092
    %v1714 = vadd.f32 %v1682, %v1093
    %v1715 = vadd.f32 %v1683, %v1093
    %v1716 = vadd.f32 %v1684, %v1094
    %v1717 = vadd.f32 %v1685, %v1094
    %v1718 = vadd.f32 %v1686, %v1095
    %v1719 = vadd.f32 %v1687, %v1095
    %vm1720 = vcmask 130048
    %v1721 = vsel %vm1720, %v1688, -inf
    %1722 = vmax.xlane.f32.xlu0 %v1721
    %v1723 = vpop.xlane.xlu0 %1722
    %v1724 = vsel %vm1720, %v1689, -inf
    %1725 = vmax.xlane.f32.xlu0 %v1724
    %v1726 = vpop.xlane.xlu0 %1725
    %v1727 = vsel %vm1720, %v1690, -inf
    %1728 = vmax.xlane.f32.xlu0 %v1727
    %v1729 = vpop.xlane.xlu0 %1728
    %v1730 = vsel %vm1720, %v1691, -inf
    %1731 = vmax.xlane.f32.xlu0 %v1730
    %v1732 = vpop.xlane.xlu0 %1731
    %v1733 = vsel %vm1720, %v1692, -inf
    %1734 = vmax.xlane.f32.xlu0 %v1733
    %v1735 = vpop.xlane.xlu0 %1734
    %v1736 = vsel %vm1720, %v1693, -inf
    %1737 = vmax.xlane.f32.xlu0 %v1736
    %v1738 = vpop.xlane.xlu0 %1737
    %v1739 = vsel %vm1720, %v1694, -inf
    %1740 = vmax.xlane.f32.xlu0 %v1739
    %v1741 = vpop.xlane.xlu0 %1740
    %v1742 = vsel %vm1720, %v1695, -inf
    %1743 = vmax.xlane.f32.xlu0 %v1742
    %v1744 = vpop.xlane.xlu0 %1743
    %v1745 = vsel %vm1720, %v1696, -inf
    %1746 = vmax.xlane.f32.xlu0 %v1745
    %v1747 = vpop.xlane.xlu0 %1746
    %v1748 = vsel %vm1720, %v1697, -inf
    %1749 = vmax.xlane.f32.xlu0 %v1748
    %v1750 = vpop.xlane.xlu0 %1749
    %v1751 = vsel %vm1720, %v1698, -inf
    %1752 = vmax.xlane.f32.xlu0 %v1751
    %v1753 = vpop.xlane.xlu0 %1752
    %v1754 = vsel %vm1720, %v1699, -inf
    %1755 = vmax.xlane.f32.xlu0 %v1754
    %v1756 = vpop.xlane.xlu0 %1755
    %v1757 = vsel %vm1720, %v1700, -inf
    %1758 = vmax.xlane.f32.xlu0 %v1757
    %v1759 = vpop.xlane.xlu0 %1758
    %v1760 = vsel %vm1720, %v1701, -inf
    %1761 = vmax.xlane.f32.xlu0 %v1760
    %v1762 = vpop.xlane.xlu0 %1761
    %v1763 = vsel %vm1720, %v1702, -inf
    %1764 = vmax.xlane.f32.xlu0 %v1763
    %v1765 = vpop.xlane.xlu0 %1764
    %v1766 = vsel %vm1720, %v1703, -inf
    %1767 = vmax.xlane.f32.xlu0 %v1766
    %v1768 = vpop.xlane.xlu0 %1767
    %v1769 = vsel %vm1720, %v1704, -inf
    %1770 = vmax.xlane.f32.xlu0 %v1769
    %v1771 = vpop.xlane.xlu0 %1770
    %v1772 = vsel %vm1720, %v1705, -inf
    %1773 = vmax.xlane.f32.xlu0 %v1772
    %v1774 = vpop.xlane.xlu0 %1773
    %v1775 = vsel %vm1720, %v1706, -inf
    %1776 = vmax.xlane.f32.xlu0 %v1775
    %v1777 = vpop.xlane.xlu0 %1776
    %v1778 = vsel %vm1720, %v1707, -inf
    %1779 = vmax.xlane.f32.xlu0 %v1778
    %v1780 = vpop.xlane.xlu0 %1779
    %v1781 = vsel %vm1720, %v1708, -inf
    %1782 = vmax.xlane.f32.xlu0 %v1781
    %v1783 = vpop.xlane.xlu0 %1782
    %v1784 = vsel %vm1720, %v1709, -inf
    %1785 = vmax.xlane.f32.xlu0 %v1784
    %v1786 = vpop.xlane.xlu0 %1785
    %v1787 = vsel %vm1720, %v1710, -inf
    %1788 = vmax.xlane.f32.xlu0 %v1787
    %v1789 = vpop.xlane.xlu0 %1788
    %v1790 = vsel %vm1720, %v1711, -inf
    %1791 = vmax.xlane.f32.xlu0 %v1790
    %v1792 = vpop.xlane.xlu0 %1791
    %v1793 = vsel %vm1720, %v1712, -inf
    %1794 = vmax.xlane.f32.xlu0 %v1793
    %v1795 = vpop.xlane.xlu0 %1794
    %v1796 = vsel %vm1720, %v1713, -inf
    %1797 = vmax.xlane.f32.xlu0 %v1796
    %v1798 = vpop.xlane.xlu0 %1797
    %v1799 = vsel %vm1720, %v1714, -inf
    %1800 = vmax.xlane.f32.xlu0 %v1799
    %v1801 = vpop.xlane.xlu0 %1800
    %v1802 = vsel %vm1720, %v1715, -inf
    %1803 = vmax.xlane.f32.xlu0 %v1802
    %v1804 = vpop.xlane.xlu0 %1803
    %v1805 = vsel %vm1720, %v1716, -inf
    %1806 = vmax.xlane.f32.xlu0 %v1805
    %v1807 = vpop.xlane.xlu0 %1806
    %v1808 = vsel %vm1720, %v1717, -inf
    %1809 = vmax.xlane.f32.xlu0 %v1808
    %v1810 = vpop.xlane.xlu0 %1809
    %v1811 = vsel %vm1720, %v1718, -inf
    %1812 = vmax.xlane.f32.xlu0 %v1811
    %v1813 = vpop.xlane.xlu0 %1812
    %v1814 = vsel %vm1720, %v1719, -inf
    %1815 = vmax.xlane.f32.xlu0 %v1814
    %v1816 = vpop.xlane.xlu0 %1815
    %v1817 = vsub.f32 %v1688, %v1723
    %v1818 = vsub.f32 %v1689, %v1726
    %v1819 = vsub.f32 %v1690, %v1729
    %v1820 = vsub.f32 %v1691, %v1732
    %v1821 = vsub.f32 %v1692, %v1735
    %v1822 = vsub.f32 %v1693, %v1738
    %v1823 = vsub.f32 %v1694, %v1741
    %v1824 = vsub.f32 %v1695, %v1744
    %v1825 = vsub.f32 %v1696, %v1747
    %v1826 = vsub.f32 %v1697, %v1750
    %v1827 = vsub.f32 %v1698, %v1753
    %v1828 = vsub.f32 %v1699, %v1756
    %v1829 = vsub.f32 %v1700, %v1759
    %v1830 = vsub.f32 %v1701, %v1762
    %v1831 = vsub.f32 %v1702, %v1765
    %v1832 = vsub.f32 %v1703, %v1768
    %v1833 = vsub.f32 %v1704, %v1771
    %v1834 = vsub.f32 %v1705, %v1774
    %v1835 = vsub.f32 %v1706, %v1777
    %v1836 = vsub.f32 %v1707, %v1780
    %v1837 = vsub.f32 %v1708, %v1783
    %v1838 = vsub.f32 %v1709, %v1786
    %v1839 = vsub.f32 %v1710, %v1789
    %v1840 = vsub.f32 %v1711, %v1792
    %v1841 = vsub.f32 %v1712, %v1795
    %v1842 = vsub.f32 %v1713, %v1798
    %v1843 = vsub.f32 %v1714, %v1801
    %v1844 = vsub.f32 %v1715, %v1804
    %v1845 = vsub.f32 %v1716, %v1807
    %v1846 = vsub.f32 %v1717, %v1810
    %v1847 = vsub.f32 %v1718, %v1813
    %v1848 = vsub.f32 %v1719, %v1816
    %v1849 = vmul.f32 %v1817, 1.442695
    %v1850 = vpow.pop %v1849
    %v1851 = vmul.f32 %v1818, 1.442695
    %v1852 = vpow.pop %v1851
    %v1853 = vmul.f32 %v1819, 1.442695
    %v1854 = vpow.pop %v1853
    %v1855 = vmul.f32 %v1820, 1.442695
    %v1856 = vpow.pop %v1855
    %v1857 = vmul.f32 %v1821, 1.442695
    %v1858 = vpow.pop %v1857
    %v1859 = vmul.f32 %v1822, 1.442695
    %v1860 = vpow.pop %v1859
    %v1861 = vmul.f32 %v1823, 1.442695
    %v1862 = vpow.pop %v1861
    %v1863 = vmul.f32 %v1824, 1.442695
    %v1864 = vpow.pop %v1863
    %v1865 = vmul.f32 %v1825, 1.442695
    %v1866 = vpow.pop %v1865
    %v1867 = vmul.f32 %v1826, 1.442695
    %v1868 = vpow.pop %v1867
    %v1869 = vmul.f32 %v1827, 1.442695
    %v1870 = vpow.pop %v1869
    %v1871 = vmul.f32 %v1828, 1.442695
    %v1872 = vpow.pop %v1871
    %v1873 = vmul.f32 %v1829, 1.442695
    %v1874 = vpow.pop %v1873
    %v1875 = vmul.f32 %v1830, 1.442695
    %v1876 = vpow.pop %v1875
    %v1877 = vmul.f32 %v1831, 1.442695
    %v1878 = vpow.pop %v1877
    %v1879 = vmul.f32 %v1832, 1.442695
    %v1880 = vpow.pop %v1879
    %v1881 = vmul.f32 %v1833, 1.442695
    %v1882 = vpow.pop %v1881
    %v1883 = vmul.f32 %v1834, 1.442695
    %v1884 = vpow.pop %v1883
    %v1885 = vmul.f32 %v1835, 1.442695
    %v1886 = vpow.pop %v1885
    %v1887 = vmul.f32 %v1836, 1.442695
    %v1888 = vpow.pop %v1887
    %v1889 = vmul.f32 %v1837, 1.442695
    %v1890 = vpow.pop %v1889
    %v1891 = vmul.f32 %v1838, 1.442695
    %v1892 = vpow.pop %v1891
    %v1893 = vmul.f32 %v1839, 1.442695
    %v1894 = vpow.pop %v1893
    %v1895 = vmul.f32 %v1840, 1.442695
    %v1896 = vpow.pop %v1895
    %v1897 = vmul.f32 %v1841, 1.442695
    %v1898 = vpow.pop %v1897
    %v1899 = vmul.f32 %v1842, 1.442695
    %v1900 = vpow.pop %v1899
    %v1901 = vmul.f32 %v1843, 1.442695
    %v1902 = vpow.pop %v1901
    %v1903 = vmul.f32 %v1844, 1.442695
    %v1904 = vpow.pop %v1903
    %v1905 = vmul.f32 %v1845, 1.442695
    %v1906 = vpow.pop %v1905
    %v1907 = vmul.f32 %v1846, 1.442695
    %v1908 = vpow.pop %v1907
    %v1909 = vmul.f32 %v1847, 1.442695
    %v1910 = vpow.pop %v1909
    %v1911 = vmul.f32 %v1848, 1.442695
    %v1912 = vpow.pop %v1911
    %v1913 = vsel %vm1720, %v1850, 0.0
    %1914 = vadd.xlane.f32.xlu0 %v1913
    %v1915 = vpop.xlane.xlu0 %1914
    %v1916 = vsel %vm1720, %v1852, 0.0
    %1917 = vadd.xlane.f32.xlu0 %v1916
    %v1918 = vpop.xlane.xlu0 %1917
    %v1919 = vsel %vm1720, %v1854, 0.0
    %1920 = vadd.xlane.f32.xlu0 %v1919
    %v1921 = vpop.xlane.xlu0 %1920
    %v1922 = vsel %vm1720, %v1856, 0.0
    %1923 = vadd.xlane.f32.xlu0 %v1922
    %v1924 = vpop.xlane.xlu0 %1923
    %v1925 = vsel %vm1720, %v1858, 0.0
    %1926 = vadd.xlane.f32.xlu0 %v1925
    %v1927 = vpop.xlane.xlu0 %1926
    %v1928 = vsel %vm1720, %v1860, 0.0
    %1929 = vadd.xlane.f32.xlu0 %v1928
    %v1930 = vpop.xlane.xlu0 %1929
    %v1931 = vsel %vm1720, %v1862, 0.0
    %1932 = vadd.xlane.f32.xlu0 %v1931
    %v1933 = vpop.xlane.xlu0 %1932
    %v1934 = vsel %vm1720, %v1864, 0.0
    %1935 = vadd.xlane.f32.xlu0 %v1934
    %v1936 = vpop.xlane.xlu0 %1935
    %v1937 = vsel %vm1720, %v1866, 0.0
    %1938 = vadd.xlane.f32.xlu0 %v1937
    %v1939 = vpop.xlane.xlu0 %1938
    %v1940 = vsel %vm1720, %v1868, 0.0
    %1941 = vadd.xlane.f32.xlu0 %v1940
    %v1942 = vpop.xlane.xlu0 %1941
    %v1943 = vsel %vm1720, %v1870, 0.0
    %1944 = vadd.xlane.f32.xlu0 %v1943
    %v1945 = vpop.xlane.xlu0 %1944
    %v1946 = vsel %vm1720, %v1872, 0.0
    %1947 = vadd.xlane.f32.xlu0 %v1946
    %v1948 = vpop.xlane.xlu0 %1947
    %v1949 = vsel %vm1720, %v1874, 0.0
    %1950 = vadd.xlane.f32.xlu0 %v1949
    %v1951 = vpop.xlane.xlu0 %1950
    %v1952 = vsel %vm1720, %v1876, 0.0
    %1953 = vadd.xlane.f32.xlu0 %v1952
    %v1954 = vpop.xlane.xlu0 %1953
    %v1955 = vsel %vm1720, %v1878, 0.0
    %1956 = vadd.xlane.f32.xlu0 %v1955
    %v1957 = vpop.xlane.xlu0 %1956
    %v1958 = vsel %vm1720, %v1880, 0.0
    %1959 = vadd.xlane.f32.xlu0 %v1958
    %v1960 = vpop.xlane.xlu0 %1959
    %v1961 = vsel %vm1720, %v1882, 0.0
    %1962 = vadd.xlane.f32.xlu0 %v1961
    %v1963 = vpop.xlane.xlu0 %1962
    %v1964 = vsel %vm1720, %v1884, 0.0
    %1965 = vadd.xlane.f32.xlu0 %v1964
    %v1966 = vpop.xlane.xlu0 %1965
    %v1967 = vsel %vm1720, %v1886, 0.0
    %1968 = vadd.xlane.f32.xlu0 %v1967
    %v1969 = vpop.xlane.xlu0 %1968
    %v1970 = vsel %vm1720, %v1888, 0.0
    %1971 = vadd.xlane.f32.xlu0 %v1970
    %v1972 = vpop.xlane.xlu0 %1971
    %v1973 = vsel %vm1720, %v1890, 0.0
    %1974 = vadd.xlane.f32.xlu0 %v1973
    %v1975 = vpop.xlane.xlu0 %1974
    %v1976 = vsel %vm1720, %v1892, 0.0
    %1977 = vadd.xlane.f32.xlu0 %v1976
    %v1978 = vpop.xlane.xlu0 %1977
    %v1979 = vsel %vm1720, %v1894, 0.0
    %1980 = vadd.xlane.f32.xlu0 %v1979
    %v1981 = vpop.xlane.xlu0 %1980
    %v1982 = vsel %vm1720, %v1896, 0.0
    %1983 = vadd.xlane.f32.xlu0 %v1982
    %v1984 = vpop.xlane.xlu0 %1983
    %v1985 = vsel %vm1720, %v1898, 0.0
    %1986 = vadd.xlane.f32.xlu0 %v1985
    %v1987 = vpop.xlane.xlu0 %1986
    %v1988 = vsel %vm1720, %v1900, 0.0
    %1989 = vadd.xlane.f32.xlu0 %v1988
    %v1990 = vpop.xlane.xlu0 %1989
    %v1991 = vsel %vm1720, %v1902, 0.0
    %1992 = vadd.xlane.f32.xlu0 %v1991
    %v1993 = vpop.xlane.xlu0 %1992
    %v1994 = vsel %vm1720, %v1904, 0.0
    %1995 = vadd.xlane.f32.xlu0 %v1994
    %v1996 = vpop.xlane.xlu0 %1995
    %v1997 = vsel %vm1720, %v1906, 0.0
    %1998 = vadd.xlane.f32.xlu0 %v1997
    %v1999 = vpop.xlane.xlu0 %1998
    %v2000 = vsel %vm1720, %v1908, 0.0
    %2001 = vadd.xlane.f32.xlu0 %v2000
    %v2002 = vpop.xlane.xlu0 %2001
    %v2003 = vsel %vm1720, %v1910, 0.0
    %2004 = vadd.xlane.f32.xlu0 %v2003
    %v2005 = vpop.xlane.xlu0 %2004
    %v2006 = vsel %vm1720, %v1912, 0.0
    %2007 = vadd.xlane.f32.xlu0 %v2006
    %v2008 = vpop.xlane.xlu0 %2007
    %v2009 = vrcp.pop %v1915
    %v2010 = vrcp.pop %v1918
    %v2011 = vrcp.pop %v1921
    %v2012 = vrcp.pop %v1924
    %v2013 = vrcp.pop %v1927
    %v2014 = vrcp.pop %v1930
    %v2015 = vrcp.pop %v1933
    %v2016 = vrcp.pop %v1936
    %v2017 = vrcp.pop %v1939
    %v2018 = vrcp.pop %v1942
    %v2019 = vrcp.pop %v1945
    %v2020 = vrcp.pop %v1948
    %v2021 = vrcp.pop %v1951
    %v2022 = vrcp.pop %v1954
    %v2023 = vrcp.pop %v1957
    %v2024 = vrcp.pop %v1960
    %v2025 = vrcp.pop %v1963
    %v2026 = vrcp.pop %v1966
    %v2027 = vrcp.pop %v1969
    %v2028 = vrcp.pop %v1972
    %v2029 = vrcp.pop %v1975
    %v2030 = vrcp.pop %v1978
    %v2031 = vrcp.pop %v1981
    %v2032 = vrcp.pop %v1984
    %v2033 = vrcp.pop %v1987
    %v2034 = vrcp.pop %v1990
    %v2035 = vrcp.pop %v1993
    %v2036 = vrcp.pop %v1996
    %v2037 = vrcp.pop %v1999
    %v2038 = vrcp.pop %v2002
    %v2039 = vrcp.pop %v2005
    %v2040 = vrcp.pop %v2008
    %v2041 = vmul.f32 %v1850, %v2009
    %v2042 = vmul.f32 %v1852, %v2010
    %v2043 = vmul.f32 %v1854, %v2011
    %v2044 = vmul.f32 %v1856, %v2012
    %v2045 = vmul.f32 %v1858, %v2013
    %v2046 = vmul.f32 %v1860, %v2014
    %v2047 = vmul.f32 %v1862, %v2015
    %v2048 = vmul.f32 %v1864, %v2016
    %v2049 = vmul.f32 %v1866, %v2017
    %v2050 = vmul.f32 %v1868, %v2018
    %v2051 = vmul.f32 %v1870, %v2019
    %v2052 = vmul.f32 %v1872, %v2020
    %v2053 = vmul.f32 %v1874, %v2021
    %v2054 = vmul.f32 %v1876, %v2022
    %v2055 = vmul.f32 %v1878, %v2023
    %v2056 = vmul.f32 %v1880, %v2024
    %v2057 = vmul.f32 %v1882, %v2025
    %v2058 = vmul.f32 %v1884, %v2026
    %v2059 = vmul.f32 %v1886, %v2027
    %v2060 = vmul.f32 %v1888, %v2028
    %v2061 = vmul.f32 %v1890, %v2029
    %v2062 = vmul.f32 %v1892, %v2030
    %v2063 = vmul.f32 %v1894, %v2031
    %v2064 = vmul.f32 %v1896, %v2032
    %v2065 = vmul.f32 %v1898, %v2033
    %v2066 = vmul.f32 %v1900, %v2034
    %v2067 = vmul.f32 %v1902, %v2035
    %v2068 = vmul.f32 %v1904, %v2036
    %v2069 = vmul.f32 %v1906, %v2037
    %v2070 = vmul.f32 %v1908, %v2038
    %v2071 = vmul.f32 %v1910, %v2039
    %v2072 = vmul.f32 %v1912, %v2040
    %v2073 = vpack.c.bf16 %v2041, %v2041
    %v2074 = vpack.c.bf16 %v2042, %v2042
    %v2075 = vpack.c.bf16 %v2043, %v2043
    %v2076 = vpack.c.bf16 %v2044, %v2044
    %v2077 = vpack.c.bf16 %v2045, %v2045
    %v2078 = vpack.c.bf16 %v2046, %v2046
    %v2079 = vpack.c.bf16 %v2047, %v2047
    %v2080 = vpack.c.bf16 %v2048, %v2048
    %v2081 = vpack.c.bf16 %v2049, %v2049
    %v2082 = vpack.c.bf16 %v2050, %v2050
    %v2083 = vpack.c.bf16 %v2051, %v2051
    %v2084 = vpack.c.bf16 %v2052, %v2052
    %v2085 = vpack.c.bf16 %v2053, %v2053
    %v2086 = vpack.c.bf16 %v2054, %v2054
    %v2087 = vpack.c.bf16 %v2055, %v2055
    %v2088 = vpack.c.bf16 %v2056, %v2056
    %v2089 = vpack.c.bf16 %v2057, %v2057
    %v2090 = vpack.c.bf16 %v2058, %v2058
    %v2091 = vpack.c.bf16 %v2059, %v2059
    %v2092 = vpack.c.bf16 %v2060, %v2060
    %v2093 = vpack.c.bf16 %v2061, %v2061
    %v2094 = vpack.c.bf16 %v2062, %v2062
    %v2095 = vpack.c.bf16 %v2063, %v2063
    %v2096 = vpack.c.bf16 %v2064, %v2064
    %v2097 = vpack.c.bf16 %v2065, %v2065
    %v2098 = vpack.c.bf16 %v2066, %v2066
    %v2099 = vpack.c.bf16 %v2067, %v2067
    %v2100 = vpack.c.bf16 %v2068, %v2068
    %v2101 = vpack.c.bf16 %v2069, %v2069
    %v2102 = vpack.c.bf16 %v2070, %v2070
    %v2103 = vpack.c.bf16 %v2071, %v2071
    %v2104 = vpack.c.bf16 %v2072, %v2072
    %v2107 = vunpack.c.l.b16 %v2073
    %v2108 = vunpack.c.l.b16 %v2074
    %v2109 = vpack.c.b16 %v2108, %v2107
    %v2112 = vunpack.c.l.b16 %v1208
    %v2113 = vunpack.c.l.b16 %v1209
    %v2114 = vpack.c.b16 %v2113, %v2112
    %v2117 = vsel %vm1720, %v2109, 0
    %2119 = vmatpush.bf16.msra.mxu0 0
    %2120 = vmatpush.bf16.msra.mxu0 0
    %2121 = vmatpush.bf16.msra.mxu0 0
    %2122 = vmatpush.bf16.msra.mxu0 0
    %2123 = vmatpush.bf16.msra.mxu0 0
    %2124 = vmatpush.bf16.msra.mxu0 0
    %2125 = vmatpush.bf16.msra.mxu0 0
    %2126 = vmatpush.bf16.msra.mxu0 %v2114
    %2127 = vmatmul.bf16.gmra.mxu0 %v2117
    %v2128 = vpop.f32.mrf.mxu0
    %v2129 = vadd.f32 0.0, %v2128
    %v2130 = vpop.f32.mrf.mxu0
    %v2131 = vadd.f32 0.0, %v2130
    %2132 = vdwg.mxu0
    %v2135 = vunpack.c.l.b16 %v2075
    %v2136 = vunpack.c.l.b16 %v2076
    %v2137 = vpack.c.b16 %v2136, %v2135
    %v2140 = vunpack.c.l.b16 %v1210
    %v2141 = vunpack.c.l.b16 %v1211
    %v2142 = vpack.c.b16 %v2141, %v2140
    %v2145 = vsel %vm1720, %v2137, 0
    %2147 = vmatpush.bf16.msra.mxu0 0
    %2148 = vmatpush.bf16.msra.mxu0 0
    %2149 = vmatpush.bf16.msra.mxu0 0
    %2150 = vmatpush.bf16.msra.mxu0 0
    %2151 = vmatpush.bf16.msra.mxu0 0
    %2152 = vmatpush.bf16.msra.mxu0 0
    %2153 = vmatpush.bf16.msra.mxu0 0
    %2154 = vmatpush.bf16.msra.mxu0 %v2142
    %2155 = vmatmul.bf16.gmra.mxu0 %v2145
    %v2156 = vpop.f32.mrf.mxu0
    %v2157 = vadd.f32 0.0, %v2156
    %v2158 = vpop.f32.mrf.mxu0
    %v2159 = vadd.f32 0.0, %v2158
    %2160 = vdwg.mxu0
    %v2163 = vunpack.c.l.b16 %v2077
    %v2164 = vunpack.c.l.b16 %v2078
    %v2165 = vpack.c.b16 %v2164, %v2163
    %v2168 = vunpack.c.l.b16 %v1212
    %v2169 = vunpack.c.l.b16 %v1213
    %v2170 = vpack.c.b16 %v2169, %v2168
    %v2173 = vsel %vm1720, %v2165, 0
    %2175 = vmatpush.bf16.msra.mxu0 0
    %2176 = vmatpush.bf16.msra.mxu0 0
    %2177 = vmatpush.bf16.msra.mxu0 0
    %2178 = vmatpush.bf16.msra.mxu0 0
    %2179 = vmatpush.bf16.msra.mxu0 0
    %2180 = vmatpush.bf16.msra.mxu0 0
    %2181 = vmatpush.bf16.msra.mxu0 0
    %2182 = vmatpush.bf16.msra.mxu0 %v2170
    %2183 = vmatmul.bf16.gmra.mxu0 %v2173
    %v2184 = vpop.f32.mrf.mxu0
    %v2185 = vadd.f32 0.0, %v2184
    %v2186 = vpop.f32.mrf.mxu0
    %v2187 = vadd.f32 0.0, %v2186
    %2188 = vdwg.mxu0
    %v2191 = vunpack.c.l.b16 %v2079
    %v2192 = vunpack.c.l.b16 %v2080
    %v2193 = vpack.c.b16 %v2192, %v2191
    %v2196 = vunpack.c.l.b16 %v1214
    %v2197 = vunpack.c.l.b16 %v1215
    %v2198 = vpack.c.b16 %v2197, %v2196
    %v2201 = vsel %vm1720, %v2193, 0
    %2203 = vmatpush.bf16.msra.mxu0 0
    %2204 = vmatpush.bf16.msra.mxu0 0
    %2205 = vmatpush.bf16.msra.mxu0 0
    %2206 = vmatpush.bf16.msra.mxu0 0
    %2207 = vmatpush.bf16.msra.mxu0 0
    %2208 = vmatpush.bf16.msra.mxu0 0
    %2209 = vmatpush.bf16.msra.mxu0 0
    %2210 = vmatpush.bf16.msra.mxu0 %v2198
    %2211 = vmatmul.bf16.gmra.mxu0 %v2201
    %v2212 = vpop.f32.mrf.mxu0
    %v2213 = vadd.f32 0.0, %v2212
    %v2214 = vpop.f32.mrf.mxu0
    %v2215 = vadd.f32 0.0, %v2214
    %2216 = vdwg.mxu0
    %v2219 = vunpack.c.l.b16 %v2081
    %v2220 = vunpack.c.l.b16 %v2082
    %v2221 = vpack.c.b16 %v2220, %v2219
    %v2224 = vunpack.c.l.b16 %v1216
    %v2225 = vunpack.c.l.b16 %v1217
    %v2226 = vpack.c.b16 %v2225, %v2224
    %v2229 = vsel %vm1720, %v2221, 0
    %2231 = vmatpush.bf16.msra.mxu0 0
    %2232 = vmatpush.bf16.msra.mxu0 0
    %2233 = vmatpush.bf16.msra.mxu0 0
    %2234 = vmatpush.bf16.msra.mxu0 0
    %2235 = vmatpush.bf16.msra.mxu0 0
    %2236 = vmatpush.bf16.msra.mxu0 0
    %2237 = vmatpush.bf16.msra.mxu0 0
    %2238 = vmatpush.bf16.msra.mxu0 %v2226
    %2239 = vmatmul.bf16.gmra.mxu0 %v2229
    %v2240 = vpop.f32.mrf.mxu0
    %v2241 = vadd.f32 0.0, %v2240
    %v2242 = vpop.f32.mrf.mxu0
    %v2243 = vadd.f32 0.0, %v2242
    %2244 = vdwg.mxu0
    %v2247 = vunpack.c.l.b16 %v2083
    %v2248 = vunpack.c.l.b16 %v2084
    %v2249 = vpack.c.b16 %v2248, %v2247
    %v2252 = vunpack.c.l.b16 %v1218
    %v2253 = vunpack.c.l.b16 %v1219
    %v2254 = vpack.c.b16 %v2253, %v2252
    %v2257 = vsel %vm1720, %v2249, 0
    %2259 = vmatpush.bf16.msra.mxu0 0
    %2260 = vmatpush.bf16.msra.mxu0 0
    %2261 = vmatpush.bf16.msra.mxu0 0
    %2262 = vmatpush.bf16.msra.mxu0 0
    %2263 = vmatpush.bf16.msra.mxu0 0
    %2264 = vmatpush.bf16.msra.mxu0 0
    %2265 = vmatpush.bf16.msra.mxu0 0
    %2266 = vmatpush.bf16.msra.mxu0 %v2254
    %2267 = vmatmul.bf16.gmra.mxu0 %v2257
    %v2268 = vpop.f32.mrf.mxu0
    %v2269 = vadd.f32 0.0, %v2268
    %v2270 = vpop.f32.mrf.mxu0
    %v2271 = vadd.f32 0.0, %v2270
    %2272 = vdwg.mxu0
    %v2275 = vunpack.c.l.b16 %v2085
    %v2276 = vunpack.c.l.b16 %v2086
    %v2277 = vpack.c.b16 %v2276, %v2275
    %v2280 = vunpack.c.l.b16 %v1220
    %v2281 = vunpack.c.l.b16 %v1221
    %v2282 = vpack.c.b16 %v2281, %v2280
    %v2285 = vsel %vm1720, %v2277, 0
    %2287 = vmatpush.bf16.msra.mxu0 0
    %2288 = vmatpush.bf16.msra.mxu0 0
    %2289 = vmatpush.bf16.msra.mxu0 0
    %2290 = vmatpush.bf16.msra.mxu0 0
    %2291 = vmatpush.bf16.msra.mxu0 0
    %2292 = vmatpush.bf16.msra.mxu0 0
    %2293 = vmatpush.bf16.msra.mxu0 0
    %2294 = vmatpush.bf16.msra.mxu0 %v2282
    %2295 = vmatmul.bf16.gmra.mxu0 %v2285
    %v2296 = vpop.f32.mrf.mxu0
    %v2297 = vadd.f32 0.0, %v2296
    %v2298 = vpop.f32.mrf.mxu0
    %v2299 = vadd.f32 0.0, %v2298
    %2300 = vdwg.mxu0
    %v2303 = vunpack.c.l.b16 %v2087
    %v2304 = vunpack.c.l.b16 %v2088
    %v2305 = vpack.c.b16 %v2304, %v2303
    %v2308 = vunpack.c.l.b16 %v1222
    %v2309 = vunpack.c.l.b16 %v1223
    %v2310 = vpack.c.b16 %v2309, %v2308
    %v2313 = vsel %vm1720, %v2305, 0
    %2315 = vmatpush.bf16.msra.mxu0 0
    %2316 = vmatpush.bf16.msra.mxu0 0
    %2317 = vmatpush.bf16.msra.mxu0 0
    %2318 = vmatpush.bf16.msra.mxu0 0
    %2319 = vmatpush.bf16.msra.mxu0 0
    %2320 = vmatpush.bf16.msra.mxu0 0
    %2321 = vmatpush.bf16.msra.mxu0 0
    %2322 = vmatpush.bf16.msra.mxu0 %v2310
    %2323 = vmatmul.bf16.gmra.mxu0 %v2313
    %v2324 = vpop.f32.mrf.mxu0
    %v2325 = vadd.f32 0.0, %v2324
    %v2326 = vpop.f32.mrf.mxu0
    %v2327 = vadd.f32 0.0, %v2326
    %2328 = vdwg.mxu0
    %v2331 = vunpack.c.l.b16 %v2089
    %v2332 = vunpack.c.l.b16 %v2090
    %v2333 = vpack.c.b16 %v2332, %v2331
    %v2336 = vunpack.c.l.b16 %v1224
    %v2337 = vunpack.c.l.b16 %v1225
    %v2338 = vpack.c.b16 %v2337, %v2336
    %v2341 = vsel %vm1720, %v2333, 0
    %2343 = vmatpush.bf16.msra.mxu0 0
    %2344 = vmatpush.bf16.msra.mxu0 0
    %2345 = vmatpush.bf16.msra.mxu0 0
    %2346 = vmatpush.bf16.msra.mxu0 0
    %2347 = vmatpush.bf16.msra.mxu0 0
    %2348 = vmatpush.bf16.msra.mxu0 0
    %2349 = vmatpush.bf16.msra.mxu0 0
    %2350 = vmatpush.bf16.msra.mxu0 %v2338
    %2351 = vmatmul.bf16.gmra.mxu0 %v2341
    %v2352 = vpop.f32.mrf.mxu0
    %v2353 = vadd.f32 0.0, %v2352
    %v2354 = vpop.f32.mrf.mxu0
    %v2355 = vadd.f32 0.0, %v2354
    %2356 = vdwg.mxu0
    %v2359 = vunpack.c.l.b16 %v2091
    %v2360 = vunpack.c.l.b16 %v2092
    %v2361 = vpack.c.b16 %v2360, %v2359
    %v2364 = vunpack.c.l.b16 %v1226
    %v2365 = vunpack.c.l.b16 %v1227
    %v2366 = vpack.c.b16 %v2365, %v2364
    %v2369 = vsel %vm1720, %v2361, 0
    %2371 = vmatpush.bf16.msra.mxu0 0
    %2372 = vmatpush.bf16.msra.mxu0 0
    %2373 = vmatpush.bf16.msra.mxu0 0
    %2374 = vmatpush.bf16.msra.mxu0 0
    %2375 = vmatpush.bf16.msra.mxu0 0
    %2376 = vmatpush.bf16.msra.mxu0 0
    %2377 = vmatpush.bf16.msra.mxu0 0
    %2378 = vmatpush.bf16.msra.mxu0 %v2366
    %2379 = vmatmul.bf16.gmra.mxu0 %v2369
    %v2380 = vpop.f32.mrf.mxu0
    %v2381 = vadd.f32 0.0, %v2380
    %v2382 = vpop.f32.mrf.mxu0
    %v2383 = vadd.f32 0.0, %v2382
    %2384 = vdwg.mxu0
    %v2387 = vunpack.c.l.b16 %v2093
    %v2388 = vunpack.c.l.b16 %v2094
    %v2389 = vpack.c.b16 %v2388, %v2387
    %v2392 = vunpack.c.l.b16 %v1228
    %v2393 = vunpack.c.l.b16 %v1229
    %v2394 = vpack.c.b16 %v2393, %v2392
    %v2397 = vsel %vm1720, %v2389, 0
    %2399 = vmatpush.bf16.msra.mxu0 0
    %2400 = vmatpush.bf16.msra.mxu0 0
    %2401 = vmatpush.bf16.msra.mxu0 0
    %2402 = vmatpush.bf16.msra.mxu0 0
    %2403 = vmatpush.bf16.msra.mxu0 0
    %2404 = vmatpush.bf16.msra.mxu0 0
    %2405 = vmatpush.bf16.msra.mxu0 0
    %2406 = vmatpush.bf16.msra.mxu0 %v2394
    %2407 = vmatmul.bf16.gmra.mxu0 %v2397
    %v2408 = vpop.f32.mrf.mxu0
    %v2409 = vadd.f32 0.0, %v2408
    %v2410 = vpop.f32.mrf.mxu0
    %v2411 = vadd.f32 0.0, %v2410
    %2412 = vdwg.mxu0
    %v2415 = vunpack.c.l.b16 %v2095
    %v2416 = vunpack.c.l.b16 %v2096
    %v2417 = vpack.c.b16 %v2416, %v2415
    %v2420 = vunpack.c.l.b16 %v1230
    %v2421 = vunpack.c.l.b16 %v1231
    %v2422 = vpack.c.b16 %v2421, %v2420
    %v2425 = vsel %vm1720, %v2417, 0
    %2427 = vmatpush.bf16.msra.mxu0 0
    %2428 = vmatpush.bf16.msra.mxu0 0
    %2429 = vmatpush.bf16.msra.mxu0 0
    %2430 = vmatpush.bf16.msra.mxu0 0
    %2431 = vmatpush.bf16.msra.mxu0 0
    %2432 = vmatpush.bf16.msra.mxu0 0
    %2433 = vmatpush.bf16.msra.mxu0 0
    %2434 = vmatpush.bf16.msra.mxu0 %v2422
    %2435 = vmatmul.bf16.gmra.mxu0 %v2425
    %v2436 = vpop.f32.mrf.mxu0
    %v2437 = vadd.f32 0.0, %v2436
    %v2438 = vpop.f32.mrf.mxu0
    %v2439 = vadd.f32 0.0, %v2438
    %2440 = vdwg.mxu0
    %v2443 = vunpack.c.l.b16 %v2097
    %v2444 = vunpack.c.l.b16 %v2098
    %v2445 = vpack.c.b16 %v2444, %v2443
    %v2448 = vunpack.c.l.b16 %v1232
    %v2449 = vunpack.c.l.b16 %v1233
    %v2450 = vpack.c.b16 %v2449, %v2448
    %v2453 = vsel %vm1720, %v2445, 0
    %2455 = vmatpush.bf16.msra.mxu0 0
    %2456 = vmatpush.bf16.msra.mxu0 0
    %2457 = vmatpush.bf16.msra.mxu0 0
    %2458 = vmatpush.bf16.msra.mxu0 0
    %2459 = vmatpush.bf16.msra.mxu0 0
    %2460 = vmatpush.bf16.msra.mxu0 0
    %2461 = vmatpush.bf16.msra.mxu0 0
    %2462 = vmatpush.bf16.msra.mxu0 %v2450
    %2463 = vmatmul.bf16.gmra.mxu0 %v2453
    %v2464 = vpop.f32.mrf.mxu0
    %v2465 = vadd.f32 0.0, %v2464
    %v2466 = vpop.f32.mrf.mxu0
    %v2467 = vadd.f32 0.0, %v2466
    %2468 = vdwg.mxu0
    %v2471 = vunpack.c.l.b16 %v2099
    %v2472 = vunpack.c.l.b16 %v2100
    %v2473 = vpack.c.b16 %v2472, %v2471
    %v2476 = vunpack.c.l.b16 %v1234
    %v2477 = vunpack.c.l.b16 %v1235
    %v2478 = vpack.c.b16 %v2477, %v2476
    %v2481 = vsel %vm1720, %v2473, 0
    %2483 = vmatpush.bf16.msra.mxu0 0
    %2484 = vmatpush.bf16.msra.mxu0 0
    %2485 = vmatpush.bf16.msra.mxu0 0
    %2486 = vmatpush.bf16.msra.mxu0 0
    %2487 = vmatpush.bf16.msra.mxu0 0
    %2488 = vmatpush.bf16.msra.mxu0 0
    %2489 = vmatpush.bf16.msra.mxu0 0
    %2490 = vmatpush.bf16.msra.mxu0 %v2478
    %2491 = vmatmul.bf16.gmra.mxu0 %v2481
    %v2492 = vpop.f32.mrf.mxu0
    %v2493 = vadd.f32 0.0, %v2492
    %v2494 = vpop.f32.mrf.mxu0
    %v2495 = vadd.f32 0.0, %v2494
    %2496 = vdwg.mxu0
    %v2499 = vunpack.c.l.b16 %v2101
    %v2500 = vunpack.c.l.b16 %v2102
    %v2501 = vpack.c.b16 %v2500, %v2499
    %v2504 = vunpack.c.l.b16 %v1236
    %v2505 = vunpack.c.l.b16 %v1237
    %v2506 = vpack.c.b16 %v2505, %v2504
    %v2509 = vsel %vm1720, %v2501, 0
    %2511 = vmatpush.bf16.msra.mxu0 0
    %2512 = vmatpush.bf16.msra.mxu0 0
    %2513 = vmatpush.bf16.msra.mxu0 0
    %2514 = vmatpush.bf16.msra.mxu0 0
    %2515 = vmatpush.bf16.msra.mxu0 0
    %2516 = vmatpush.bf16.msra.mxu0 0
    %2517 = vmatpush.bf16.msra.mxu0 0
    %2518 = vmatpush.bf16.msra.mxu0 %v2506
    %2519 = vmatmul.bf16.gmra.mxu0 %v2509
    %v2520 = vpop.f32.mrf.mxu0
    %v2521 = vadd.f32 0.0, %v2520
    %v2522 = vpop.f32.mrf.mxu0
    %v2523 = vadd.f32 0.0, %v2522
    %2524 = vdwg.mxu0
    %v2527 = vunpack.c.l.b16 %v2103
    %v2528 = vunpack.c.l.b16 %v2104
    %v2529 = vpack.c.b16 %v2528, %v2527
    %v2532 = vunpack.c.l.b16 %v1238
    %v2533 = vunpack.c.l.b16 %v1239
    %v2534 = vpack.c.b16 %v2533, %v2532
    %v2537 = vsel %vm1720, %v2529, 0
    %2539 = vmatpush.bf16.msra.mxu0 0
    %2540 = vmatpush.bf16.msra.mxu0 0
    %2541 = vmatpush.bf16.msra.mxu0 0
    %2542 = vmatpush.bf16.msra.mxu0 0
    %2543 = vmatpush.bf16.msra.mxu0 0
    %2544 = vmatpush.bf16.msra.mxu0 0
    %2545 = vmatpush.bf16.msra.mxu0 0
    %2546 = vmatpush.bf16.msra.mxu0 %v2534
    %2547 = vmatmul.bf16.gmra.mxu0 %v2537
    %v2548 = vpop.f32.mrf.mxu0
    %v2549 = vadd.f32 0.0, %v2548
    %v2550 = vpop.f32.mrf.mxu0
    %v2551 = vadd.f32 0.0, %v2550
    %2552 = vdwg.mxu0
    %v2553 = vpack.c.bf16 %v2131, %v2129
    %v2554 = vpack.c.bf16 %v2159, %v2157
    %v2555 = vpack.c.bf16 %v2187, %v2185
    %v2556 = vpack.c.bf16 %v2215, %v2213
    %v2557 = vpack.c.bf16 %v2243, %v2241
    %v2558 = vpack.c.bf16 %v2271, %v2269
    %v2559 = vpack.c.bf16 %v2299, %v2297
    %v2560 = vpack.c.bf16 %v2327, %v2325
    %v2561 = vpack.c.bf16 %v2355, %v2353
    %v2562 = vpack.c.bf16 %v2383, %v2381
    %v2563 = vpack.c.bf16 %v2411, %v2409
    %v2564 = vpack.c.bf16 %v2439, %v2437
    %v2565 = vpack.c.bf16 %v2467, %v2465
    %v2566 = vpack.c.bf16 %v2495, %v2493
    %v2567 = vpack.c.bf16 %v2523, %v2521
    %v2568 = vpack.c.bf16 %v2551, %v2549
    %v2569 = vpack.c.bf16 %v627, %v627
    %v2570 = vpack.c.bf16 %v629, %v629
    %v2571 = vpack.c.bf16 %v632, %v632
    %v2572 = vpack.c.bf16 %v634, %v634
    %v2573 = vpack.c.bf16 %v637, %v637
    %v2574 = vpack.c.bf16 %v639, %v639
    %v2575 = vpack.c.bf16 %v642, %v642
    %v2576 = vpack.c.bf16 %v644, %v644
    %v2577 = vpack.c.bf16 %v647, %v647
    %v2578 = vpack.c.bf16 %v649, %v649
    %v2579 = vpack.c.bf16 %v652, %v652
    %v2580 = vpack.c.bf16 %v654, %v654
    %v2581 = vpack.c.bf16 %v657, %v657
    %v2582 = vpack.c.bf16 %v659, %v659
    %v2583 = vpack.c.bf16 %v662, %v662
    %v2584 = vpack.c.bf16 %v664, %v664
    %v2585 = vpack.c.bf16 %v667, %v667
    %v2586 = vpack.c.bf16 %v669, %v669
    %v2587 = vpack.c.bf16 %v672, %v672
    %v2588 = vpack.c.bf16 %v674, %v674
    %v2589 = vpack.c.bf16 %v677, %v677
    %v2590 = vpack.c.bf16 %v679, %v679
    %v2591 = vpack.c.bf16 %v682, %v682
    %v2592 = vpack.c.bf16 %v684, %v684
    %v2593 = vpack.c.bf16 %v687, %v687
    %v2594 = vpack.c.bf16 %v689, %v689
    %v2595 = vpack.c.bf16 %v692, %v692
    %v2596 = vpack.c.bf16 %v694, %v694
    %v2597 = vpack.c.bf16 %v697, %v697
    %v2598 = vpack.c.bf16 %v699, %v699
    %v2599 = vpack.c.bf16 %v702, %v702
    %v2600 = vpack.c.bf16 %v704, %v704
    %v2601 = vpack.c.bf16 %v805, %v805
    %v2602 = vpack.c.bf16 %v807, %v807
    %v2603 = vpack.c.bf16 %v810, %v810
    %v2604 = vpack.c.bf16 %v812, %v812
    %v2605 = vpack.c.bf16 %v815, %v815
    %v2606 = vpack.c.bf16 %v817, %v817
    %v2607 = vpack.c.bf16 %v820, %v820
    %v2608 = vpack.c.bf16 %v822, %v822
    %v2609 = vpack.c.bf16 %v825, %v825
    %v2610 = vpack.c.bf16 %v827, %v827
    %v2611 = vpack.c.bf16 %v830, %v830
    %v2612 = vpack.c.bf16 %v832, %v832
    %v2613 = vpack.c.bf16 %v835, %v835
    %v2614 = vpack.c.bf16 %v837, %v837
    %v2615 = vpack.c.bf16 %v840, %v840
    %v2616 = vpack.c.bf16 %v842, %v842
    %v2617 = vpack.c.bf16 %v845, %v845
    %v2618 = vpack.c.bf16 %v847, %v847
    %v2619 = vpack.c.bf16 %v850, %v850
    %v2620 = vpack.c.bf16 %v852, %v852
    %v2621 = vpack.c.bf16 %v855, %v855
    %v2622 = vpack.c.bf16 %v857, %v857
    %v2623 = vpack.c.bf16 %v860, %v860
    %v2624 = vpack.c.bf16 %v862, %v862
    %v2625 = vpack.c.bf16 %v865, %v865
    %v2626 = vpack.c.bf16 %v867, %v867
    %v2627 = vpack.c.bf16 %v870, %v870
    %v2628 = vpack.c.bf16 %v872, %v872
    %v2629 = vpack.c.bf16 %v875, %v875
    %v2630 = vpack.c.bf16 %v877, %v877
    %v2631 = vpack.c.bf16 %v880, %v880
    %v2632 = vpack.c.bf16 %v882, %v882
    %v2633 = vpack.c.bf16 %v983, %v983
    %v2634 = vpack.c.bf16 %v985, %v985
    %v2635 = vpack.c.bf16 %v988, %v988
    %v2636 = vpack.c.bf16 %v990, %v990
    %v2637 = vpack.c.bf16 %v993, %v993
    %v2638 = vpack.c.bf16 %v995, %v995
    %v2639 = vpack.c.bf16 %v998, %v998
    %v2640 = vpack.c.bf16 %v1000, %v1000
    %v2641 = vpack.c.bf16 %v1003, %v1003
    %v2642 = vpack.c.bf16 %v1005, %v1005
    %v2643 = vpack.c.bf16 %v1008, %v1008
    %v2644 = vpack.c.bf16 %v1010, %v1010
    %v2645 = vpack.c.bf16 %v1013, %v1013
    %v2646 = vpack.c.bf16 %v1015, %v1015
    %v2647 = vpack.c.bf16 %v1018, %v1018
    %v2648 = vpack.c.bf16 %v1020, %v1020
    %v2649 = vpack.c.bf16 %v1023, %v1023
    %v2650 = vpack.c.bf16 %v1025, %v1025
    %v2651 = vpack.c.bf16 %v1028, %v1028
    %v2652 = vpack.c.bf16 %v1030, %v1030
    %v2653 = vpack.c.bf16 %v1033, %v1033
    %v2654 = vpack.c.bf16 %v1035, %v1035
    %v2655 = vpack.c.bf16 %v1038, %v1038
    %v2656 = vpack.c.bf16 %v1040, %v1040
    %v2657 = vpack.c.bf16 %v1043, %v1043
    %v2658 = vpack.c.bf16 %v1045, %v1045
    %v2659 = vpack.c.bf16 %v1048, %v1048
    %v2660 = vpack.c.bf16 %v1050, %v1050
    %v2661 = vpack.c.bf16 %v1053, %v1053
    %v2662 = vpack.c.bf16 %v1055, %v1055
    %v2663 = vpack.c.bf16 %v1058, %v1058
    %v2664 = vpack.c.bf16 %v1060, %v1060
    %v2667 = vunpack.c.l.b16 %v2569
    %v2668 = vunpack.c.l.b16 %v2570
    %v2669 = vpack.c.b16 %v2668, %v2667
    %v2673 = vunpack.c.l.b16 %v2601
    %v2674 = vunpack.c.l.b16 %v2602
    %v2675 = vpack.c.b16 %v2674, %v2673
    %2677 = vmatpush.bf16.xpose.msra.mxu0 0
    %2678 = vmatpush.bf16.xpose.msra.mxu0 0
    %2679 = vmatpush.bf16.xpose.msra.mxu0 0
    %2680 = vmatpush.bf16.xpose.msra.mxu0 0
    %2681 = vmatpush.bf16.xpose.msra.mxu0 0
    %2682 = vmatpush.bf16.xpose.msra.mxu0 0
    %2683 = vmatpush.bf16.xpose.msra.mxu0 0
    %2684 = vmatpush.bf16.xpose.msra.mxu0 %v2675
    %2685 = vmatmul.bf16.gmra.mxu0 %v2669
    %v2686 = vpop.f32.mrf.mxu0
    %v2687 = vadd.f32 0.0, %v2686
    %v2688 = vpop.f32.mrf.mxu0
    %v2689 = vadd.f32 0.0, %v2688
    %2690 = vdwg.mxu0
    %v2693 = vunpack.c.l.b16 %v2571
    %v2694 = vunpack.c.l.b16 %v2572
    %v2695 = vpack.c.b16 %v2694, %v2693
    %v2699 = vunpack.c.l.b16 %v2603
    %v2700 = vunpack.c.l.b16 %v2604
    %v2701 = vpack.c.b16 %v2700, %v2699
    %2703 = vmatpush.bf16.xpose.msra.mxu0 0
    %2704 = vmatpush.bf16.xpose.msra.mxu0 0
    %2705 = vmatpush.bf16.xpose.msra.mxu0 0
    %2706 = vmatpush.bf16.xpose.msra.mxu0 0
    %2707 = vmatpush.bf16.xpose.msra.mxu0 0
    %2708 = vmatpush.bf16.xpose.msra.mxu0 0
    %2709 = vmatpush.bf16.xpose.msra.mxu0 0
    %2710 = vmatpush.bf16.xpose.msra.mxu0 %v2701
    %2711 = vmatmul.bf16.gmra.mxu0 %v2695
    %v2712 = vpop.f32.mrf.mxu0
    %v2713 = vadd.f32 0.0, %v2712
    %v2714 = vpop.f32.mrf.mxu0
    %v2715 = vadd.f32 0.0, %v2714
    %2716 = vdwg.mxu0
    %v2719 = vunpack.c.l.b16 %v2573
    %v2720 = vunpack.c.l.b16 %v2574
    %v2721 = vpack.c.b16 %v2720, %v2719
    %v2725 = vunpack.c.l.b16 %v2605
    %v2726 = vunpack.c.l.b16 %v2606
    %v2727 = vpack.c.b16 %v2726, %v2725
    %2729 = vmatpush.bf16.xpose.msra.mxu0 0
    %2730 = vmatpush.bf16.xpose.msra.mxu0 0
    %2731 = vmatpush.bf16.xpose.msra.mxu0 0
    %2732 = vmatpush.bf16.xpose.msra.mxu0 0
    %2733 = vmatpush.bf16.xpose.msra.mxu0 0
    %2734 = vmatpush.bf16.xpose.msra.mxu0 0
    %2735 = vmatpush.bf16.xpose.msra.mxu0 0
    %2736 = vmatpush.bf16.xpose.msra.mxu0 %v2727
    %2737 = vmatmul.bf16.gmra.mxu0 %v2721
    %v2738 = vpop.f32.mrf.mxu0
    %v2739 = vadd.f32 0.0, %v2738
    %v2740 = vpop.f32.mrf.mxu0
    %v2741 = vadd.f32 0.0, %v2740
    %2742 = vdwg.mxu0
    %v2745 = vunpack.c.l.b16 %v2575
    %v2746 = vunpack.c.l.b16 %v2576
    %v2747 = vpack.c.b16 %v2746, %v2745
    %v2751 = vunpack.c.l.b16 %v2607
    %v2752 = vunpack.c.l.b16 %v2608
    %v2753 = vpack.c.b16 %v2752, %v2751
    %2755 = vmatpush.bf16.xpose.msra.mxu0 0
    %2756 = vmatpush.bf16.xpose.msra.mxu0 0
    %2757 = vmatpush.bf16.xpose.msra.mxu0 0
    %2758 = vmatpush.bf16.xpose.msra.mxu0 0
    %2759 = vmatpush.bf16.xpose.msra.mxu0 0
    %2760 = vmatpush.bf16.xpose.msra.mxu0 0
    %2761 = vmatpush.bf16.xpose.msra.mxu0 0
    %2762 = vmatpush.bf16.xpose.msra.mxu0 %v2753
    %2763 = vmatmul.bf16.gmra.mxu0 %v2747
    %v2764 = vpop.f32.mrf.mxu0
    %v2765 = vadd.f32 0.0, %v2764
    %v2766 = vpop.f32.mrf.mxu0
    %v2767 = vadd.f32 0.0, %v2766
    %2768 = vdwg.mxu0
    %v2771 = vunpack.c.l.b16 %v2577
    %v2772 = vunpack.c.l.b16 %v2578
    %v2773 = vpack.c.b16 %v2772, %v2771
    %v2777 = vunpack.c.l.b16 %v2609
    %v2778 = vunpack.c.l.b16 %v2610
    %v2779 = vpack.c.b16 %v2778, %v2777
    %2781 = vmatpush.bf16.xpose.msra.mxu0 0
    %2782 = vmatpush.bf16.xpose.msra.mxu0 0
    %2783 = vmatpush.bf16.xpose.msra.mxu0 0
    %2784 = vmatpush.bf16.xpose.msra.mxu0 0
    %2785 = vmatpush.bf16.xpose.msra.mxu0 0
    %2786 = vmatpush.bf16.xpose.msra.mxu0 0
    %2787 = vmatpush.bf16.xpose.msra.mxu0 0
    %2788 = vmatpush.bf16.xpose.msra.mxu0 %v2779
    %2789 = vmatmul.bf16.gmra.mxu0 %v2773
    %v2790 = vpop.f32.mrf.mxu0
    %v2791 = vadd.f32 0.0, %v2790
    %v2792 = vpop.f32.mrf.mxu0
    %v2793 = vadd.f32 0.0, %v2792
    %2794 = vdwg.mxu0
    %v2797 = vunpack.c.l.b16 %v2579
    %v2798 = vunpack.c.l.b16 %v2580
    %v2799 = vpack.c.b16 %v2798, %v2797
    %v2803 = vunpack.c.l.b16 %v2611
    %v2804 = vunpack.c.l.b16 %v2612
    %v2805 = vpack.c.b16 %v2804, %v2803
    %2807 = vmatpush.bf16.xpose.msra.mxu0 0
    %2808 = vmatpush.bf16.xpose.msra.mxu0 0
    %2809 = vmatpush.bf16.xpose.msra.mxu0 0
    %2810 = vmatpush.bf16.xpose.msra.mxu0 0
    %2811 = vmatpush.bf16.xpose.msra.mxu0 0
    %2812 = vmatpush.bf16.xpose.msra.mxu0 0
    %2813 = vmatpush.bf16.xpose.msra.mxu0 0
    %2814 = vmatpush.bf16.xpose.msra.mxu0 %v2805
    %2815 = vmatmul.bf16.gmra.mxu0 %v2799
    %v2816 = vpop.f32.mrf.mxu0
    %v2817 = vadd.f32 0.0, %v2816
    %v2818 = vpop.f32.mrf.mxu0
    %v2819 = vadd.f32 0.0, %v2818
    %2820 = vdwg.mxu0
    %v2823 = vunpack.c.l.b16 %v2581
    %v2824 = vunpack.c.l.b16 %v2582
    %v2825 = vpack.c.b16 %v2824, %v2823
    %v2829 = vunpack.c.l.b16 %v2613
    %v2830 = vunpack.c.l.b16 %v2614
    %v2831 = vpack.c.b16 %v2830, %v2829
    %2833 = vmatpush.bf16.xpose.msra.mxu0 0
    %2834 = vmatpush.bf16.xpose.msra.mxu0 0
    %2835 = vmatpush.bf16.xpose.msra.mxu0 0
    %2836 = vmatpush.bf16.xpose.msra.mxu0 0
    %2837 = vmatpush.bf16.xpose.msra.mxu0 0
    %2838 = vmatpush.bf16.xpose.msra.mxu0 0
    %2839 = vmatpush.bf16.xpose.msra.mxu0 0
    %2840 = vmatpush.bf16.xpose.msra.mxu0 %v2831
    %2841 = vmatmul.bf16.gmra.mxu0 %v2825
    %v2842 = vpop.f32.mrf.mxu0
    %v2843 = vadd.f32 0.0, %v2842
    %v2844 = vpop.f32.mrf.mxu0
    %v2845 = vadd.f32 0.0, %v2844
    %2846 = vdwg.mxu0
    %v2849 = vunpack.c.l.b16 %v2583
    %v2850 = vunpack.c.l.b16 %v2584
    %v2851 = vpack.c.b16 %v2850, %v2849
    %v2855 = vunpack.c.l.b16 %v2615
    %v2856 = vunpack.c.l.b16 %v2616
    %v2857 = vpack.c.b16 %v2856, %v2855
    %2859 = vmatpush.bf16.xpose.msra.mxu0 0
    %2860 = vmatpush.bf16.xpose.msra.mxu0 0
    %2861 = vmatpush.bf16.xpose.msra.mxu0 0
    %2862 = vmatpush.bf16.xpose.msra.mxu0 0
    %2863 = vmatpush.bf16.xpose.msra.mxu0 0
    %2864 = vmatpush.bf16.xpose.msra.mxu0 0
    %2865 = vmatpush.bf16.xpose.msra.mxu0 0
    %2866 = vmatpush.bf16.xpose.msra.mxu0 %v2857
    %2867 = vmatmul.bf16.gmra.mxu0 %v2851
    %v2868 = vpop.f32.mrf.mxu0
    %v2869 = vadd.f32 0.0, %v2868
    %v2870 = vpop.f32.mrf.mxu0
    %v2871 = vadd.f32 0.0, %v2870
    %2872 = vdwg.mxu0
    %v2875 = vunpack.c.l.b16 %v2585
    %v2876 = vunpack.c.l.b16 %v2586
    %v2877 = vpack.c.b16 %v2876, %v2875
    %v2881 = vunpack.c.l.b16 %v2617
    %v2882 = vunpack.c.l.b16 %v2618
    %v2883 = vpack.c.b16 %v2882, %v2881
    %2885 = vmatpush.bf16.xpose.msra.mxu0 0
    %2886 = vmatpush.bf16.xpose.msra.mxu0 0
    %2887 = vmatpush.bf16.xpose.msra.mxu0 0
    %2888 = vmatpush.bf16.xpose.msra.mxu0 0
    %2889 = vmatpush.bf16.xpose.msra.mxu0 0
    %2890 = vmatpush.bf16.xpose.msra.mxu0 0
    %2891 = vmatpush.bf16.xpose.msra.mxu0 0
    %2892 = vmatpush.bf16.xpose.msra.mxu0 %v2883
    %2893 = vmatmul.bf16.gmra.mxu0 %v2877
    %v2894 = vpop.f32.mrf.mxu0
    %v2895 = vadd.f32 0.0, %v2894
    %v2896 = vpop.f32.mrf.mxu0
    %v2897 = vadd.f32 0.0, %v2896
    %2898 = vdwg.mxu0
    %v2901 = vunpack.c.l.b16 %v2587
    %v2902 = vunpack.c.l.b16 %v2588
    %v2903 = vpack.c.b16 %v2902, %v2901
    %v2907 = vunpack.c.l.b16 %v2619
    %v2908 = vunpack.c.l.b16 %v2620
    %v2909 = vpack.c.b16 %v2908, %v2907
    %2911 = vmatpush.bf16.xpose.msra.mxu0 0
    %2912 = vmatpush.bf16.xpose.msra.mxu0 0
    %2913 = vmatpush.bf16.xpose.msra.mxu0 0
    %2914 = vmatpush.bf16.xpose.msra.mxu0 0
    %2915 = vmatpush.bf16.xpose.msra.mxu0 0
    %2916 = vmatpush.bf16.xpose.msra.mxu0 0
    %2917 = vmatpush.bf16.xpose.msra.mxu0 0
    %2918 = vmatpush.bf16.xpose.msra.mxu0 %v2909
    %2919 = vmatmul.bf16.gmra.mxu0 %v2903
    %v2920 = vpop.f32.mrf.mxu0
    %v2921 = vadd.f32 0.0, %v2920
    %v2922 = vpop.f32.mrf.mxu0
    %v2923 = vadd.f32 0.0, %v2922
    %2924 = vdwg.mxu0
    %v2927 = vunpack.c.l.b16 %v2589
    %v2928 = vunpack.c.l.b16 %v2590
    %v2929 = vpack.c.b16 %v2928, %v2927
    %v2933 = vunpack.c.l.b16 %v2621
    %v2934 = vunpack.c.l.b16 %v2622
    %v2935 = vpack.c.b16 %v2934, %v2933
    %2937 = vmatpush.bf16.xpose.msra.mxu0 0
    %2938 = vmatpush.bf16.xpose.msra.mxu0 0
    %2939 = vmatpush.bf16.xpose.msra.mxu0 0
    %2940 = vmatpush.bf16.xpose.msra.mxu0 0
    %2941 = vmatpush.bf16.xpose.msra.mxu0 0
    %2942 = vmatpush.bf16.xpose.msra.mxu0 0
    %2943 = vmatpush.bf16.xpose.msra.mxu0 0
    %2944 = vmatpush.bf16.xpose.msra.mxu0 %v2935
    %2945 = vmatmul.bf16.gmra.mxu0 %v2929
    %v2946 = vpop.f32.mrf.mxu0
    %v2947 = vadd.f32 0.0, %v2946
    %v2948 = vpop.f32.mrf.mxu0
    %v2949 = vadd.f32 0.0, %v2948
    %2950 = vdwg.mxu0
    %v2953 = vunpack.c.l.b16 %v2591
    %v2954 = vunpack.c.l.b16 %v2592
    %v2955 = vpack.c.b16 %v2954, %v2953
    %v2959 = vunpack.c.l.b16 %v2623
    %v2960 = vunpack.c.l.b16 %v2624
    %v2961 = vpack.c.b16 %v2960, %v2959
    %2963 = vmatpush.bf16.xpose.msra.mxu0 0
    %2964 = vmatpush.bf16.xpose.msra.mxu0 0
    %2965 = vmatpush.bf16.xpose.msra.mxu0 0
    %2966 = vmatpush.bf16.xpose.msra.mxu0 0
    %2967 = vmatpush.bf16.xpose.msra.mxu0 0
    %2968 = vmatpush.bf16.xpose.msra.mxu0 0
    %2969 = vmatpush.bf16.xpose.msra.mxu0 0
    %2970 = vmatpush.bf16.xpose.msra.mxu0 %v2961
    %2971 = vmatmul.bf16.gmra.mxu0 %v2955
    %v2972 = vpop.f32.mrf.mxu0
    %v2973 = vadd.f32 0.0, %v2972
    %v2974 = vpop.f32.mrf.mxu0
    %v2975 = vadd.f32 0.0, %v2974
    %2976 = vdwg.mxu0
    %v2979 = vunpack.c.l.b16 %v2593
    %v2980 = vunpack.c.l.b16 %v2594
    %v2981 = vpack.c.b16 %v2980, %v2979
    %v2985 = vunpack.c.l.b16 %v2625
    %v2986 = vunpack.c.l.b16 %v2626
    %v2987 = vpack.c.b16 %v2986, %v2985
    %2989 = vmatpush.bf16.xpose.msra.mxu0 0
    %2990 = vmatpush.bf16.xpose.msra.mxu0 0
    %2991 = vmatpush.bf16.xpose.msra.mxu0 0
    %2992 = vmatpush.bf16.xpose.msra.mxu0 0
    %2993 = vmatpush.bf16.xpose.msra.mxu0 0
    %2994 = vmatpush.bf16.xpose.msra.mxu0 0
    %2995 = vmatpush.bf16.xpose.msra.mxu0 0
    %2996 = vmatpush.bf16.xpose.msra.mxu0 %v2987
    %2997 = vmatmul.bf16.gmra.mxu0 %v2981
    %v2998 = vpop.f32.mrf.mxu0
    %v2999 = vadd.f32 0.0, %v2998
    %v3000 = vpop.f32.mrf.mxu0
    %v3001 = vadd.f32 0.0, %v3000
    %3002 = vdwg.mxu0
    %v3005 = vunpack.c.l.b16 %v2595
    %v3006 = vunpack.c.l.b16 %v2596
    %v3007 = vpack.c.b16 %v3006, %v3005
    %v3011 = vunpack.c.l.b16 %v2627
    %v3012 = vunpack.c.l.b16 %v2628
    %v3013 = vpack.c.b16 %v3012, %v3011
    %3015 = vmatpush.bf16.xpose.msra.mxu0 0
    %3016 = vmatpush.bf16.xpose.msra.mxu0 0
    %3017 = vmatpush.bf16.xpose.msra.mxu0 0
    %3018 = vmatpush.bf16.xpose.msra.mxu0 0
    %3019 = vmatpush.bf16.xpose.msra.mxu0 0
    %3020 = vmatpush.bf16.xpose.msra.mxu0 0
    %3021 = vmatpush.bf16.xpose.msra.mxu0 0
    %3022 = vmatpush.bf16.xpose.msra.mxu0 %v3013
    %3023 = vmatmul.bf16.gmra.mxu0 %v3007
    %v3024 = vpop.f32.mrf.mxu0
    %v3025 = vadd.f32 0.0, %v3024
    %v3026 = vpop.f32.mrf.mxu0
    %v3027 = vadd.f32 0.0, %v3026
    %3028 = vdwg.mxu0
    %v3031 = vunpack.c.l.b16 %v2597
    %v3032 = vunpack.c.l.b16 %v2598
    %v3033 = vpack.c.b16 %v3032, %v3031
    %v3037 = vunpack.c.l.b16 %v2629
    %v3038 = vunpack.c.l.b16 %v2630
    %v3039 = vpack.c.b16 %v3038, %v3037
    %3041 = vmatpush.bf16.xpose.msra.mxu0 0
    %3042 = vmatpush.bf16.xpose.msra.mxu0 0
    %3043 = vmatpush.bf16.xpose.msra.mxu0 0
    %3044 = vmatpush.bf16.xpose.msra.mxu0 0
    %3045 = vmatpush.bf16.xpose.msra.mxu0 0
    %3046 = vmatpush.bf16.xpose.msra.mxu0 0
    %3047 = vmatpush.bf16.xpose.msra.mxu0 0
    %3048 = vmatpush.bf16.xpose.msra.mxu0 %v3039
    %3049 = vmatmul.bf16.gmra.mxu0 %v3033
    %v3050 = vpop.f32.mrf.mxu0
    %v3051 = vadd.f32 0.0, %v3050
    %v3052 = vpop.f32.mrf.mxu0
    %v3053 = vadd.f32 0.0, %v3052
    %3054 = vdwg.mxu0
    %v3057 = vunpack.c.l.b16 %v2599
    %v3058 = vunpack.c.l.b16 %v2600
    %v3059 = vpack.c.b16 %v3058, %v3057
    %v3063 = vunpack.c.l.b16 %v2631
    %v3064 = vunpack.c.l.b16 %v2632
    %v3065 = vpack.c.b16 %v3064, %v3063
    %3067 = vmatpush.bf16.xpose.msra.mxu0 0
    %3068 = vmatpush.bf16.xpose.msra.mxu0 0
    %3069 = vmatpush.bf16.xpose.msra.mxu0 0
    %3070 = vmatpush.bf16.xpose.msra.mxu0 0
    %3071 = vmatpush.bf16.xpose.msra.mxu0 0
    %3072 = vmatpush.bf16.xpose.msra.mxu0 0
    %3073 = vmatpush.bf16.xpose.msra.mxu0 0
    %3074 = vmatpush.bf16.xpose.msra.mxu0 %v3065
    %3075 = vmatmul.bf16.gmra.mxu0 %v3059
    %v3076 = vpop.f32.mrf.mxu0
    %v3077 = vadd.f32 0.0, %v3076
    %v3078 = vpop.f32.mrf.mxu0
    %v3079 = vadd.f32 0.0, %v3078
    %3080 = vdwg.mxu0
    %v3081 = vmul.f32 %v2687, 0.25
    %v3082 = vmul.f32 %v2689, 0.25
    %v3083 = vmul.f32 %v2713, 0.25
    %v3084 = vmul.f32 %v2715, 0.25
    %v3085 = vmul.f32 %v2739, 0.25
    %v3086 = vmul.f32 %v2741, 0.25
    %v3087 = vmul.f32 %v2765, 0.25
    %v3088 = vmul.f32 %v2767, 0.25
    %v3089 = vmul.f32 %v2791, 0.25
    %v3090 = vmul.f32 %v2793, 0.25
    %v3091 = vmul.f32 %v2817, 0.25
    %v3092 = vmul.f32 %v2819, 0.25
    %v3093 = vmul.f32 %v2843, 0.25
    %v3094 = vmul.f32 %v2845, 0.25
    %v3095 = vmul.f32 %v2869, 0.25
    %v3096 = vmul.f32 %v2871, 0.25
    %v3097 = vmul.f32 %v2895, 0.25
    %v3098 = vmul.f32 %v2897, 0.25
    %v3099 = vmul.f32 %v2921, 0.25
    %v3100 = vmul.f32 %v2923, 0.25
    %v3101 = vmul.f32 %v2947, 0.25
    %v3102 = vmul.f32 %v2949, 0.25
    %v3103 = vmul.f32 %v2973, 0.25
    %v3104 = vmul.f32 %v2975, 0.25
    %v3105 = vmul.f32 %v2999, 0.25
    %v3106 = vmul.f32 %v3001, 0.25
    %v3107 = vmul.f32 %v3025, 0.25
    %v3108 = vmul.f32 %v3027, 0.25
    %v3109 = vmul.f32 %v3051, 0.25
    %v3110 = vmul.f32 %v3053, 0.25
    %v3111 = vmul.f32 %v3077, 0.25
    %v3112 = vmul.f32 %v3079, 0.25
    %v3113 = vadd.f32 %v3081, %v1080
    %v3114 = vadd.f32 %v3082, %v1080
    %v3115 = vadd.f32 %v3083, %v1081
    %v3116 = vadd.f32 %v3084, %v1081
    %v3117 = vadd.f32 %v3085, %v1082
    %v3118 = vadd.f32 %v3086, %v1082
    %v3119 = vadd.f32 %v3087, %v1083
    %v3120 = vadd.f32 %v3088, %v1083
    %v3121 = vadd.f32 %v3089, %v1084
    %v3122 = vadd.f32 %v3090, %v1084
    %v3123 = vadd.f32 %v3091, %v1085
    %v3124 = vadd.f32 %v3092, %v1085
    %v3125 = vadd.f32 %v3093, %v1086
    %v3126 = vadd.f32 %v3094, %v1086
    %v3127 = vadd.f32 %v3095, %v1087
    %v3128 = vadd.f32 %v3096, %v1087
    %v3129 = vadd.f32 %v3097, %v1088
    %v3130 = vadd.f32 %v3098, %v1088
    %v3131 = vadd.f32 %v3099, %v1089
    %v3132 = vadd.f32 %v3100, %v1089
    %v3133 = vadd.f32 %v3101, %v1090
    %v3134 = vadd.f32 %v3102, %v1090
    %v3135 = vadd.f32 %v3103, %v1091
    %v3136 = vadd.f32 %v3104, %v1091
    %v3137 = vadd.f32 %v3105, %v1092
    %v3138 = vadd.f32 %v3106, %v1092
    %v3139 = vadd.f32 %v3107, %v1093
    %v3140 = vadd.f32 %v3108, %v1093
    %v3141 = vadd.f32 %v3109, %v1094
    %v3142 = vadd.f32 %v3110, %v1094
    %v3143 = vadd.f32 %v3111, %v1095
    %v3144 = vadd.f32 %v3112, %v1095
    %v3145 = vsel %vm1720, %v3113, -inf
    %3146 = vmax.xlane.f32.xlu0 %v3145
    %v3147 = vpop.xlane.xlu0 %3146
    %v3148 = vsel %vm1720, %v3114, -inf
    %3149 = vmax.xlane.f32.xlu0 %v3148
    %v3150 = vpop.xlane.xlu0 %3149
    %v3151 = vsel %vm1720, %v3115, -inf
    %3152 = vmax.xlane.f32.xlu0 %v3151
    %v3153 = vpop.xlane.xlu0 %3152
    %v3154 = vsel %vm1720, %v3116, -inf
    %3155 = vmax.xlane.f32.xlu0 %v3154
    %v3156 = vpop.xlane.xlu0 %3155
    %v3157 = vsel %vm1720, %v3117, -inf
    %3158 = vmax.xlane.f32.xlu0 %v3157
    %v3159 = vpop.xlane.xlu0 %3158
    %v3160 = vsel %vm1720, %v3118, -inf
    %3161 = vmax.xlane.f32.xlu0 %v3160
    %v3162 = vpop.xlane.xlu0 %3161
    %v3163 = vsel %vm1720, %v3119, -inf
    %3164 = vmax.xlane.f32.xlu0 %v3163
    %v3165 = vpop.xlane.xlu0 %3164
    %v3166 = vsel %vm1720, %v3120, -inf
    %3167 = vmax.xlane.f32.xlu0 %v3166
    %v3168 = vpop.xlane.xlu0 %3167
    %v3169 = vsel %vm1720, %v3121, -inf
    %3170 = vmax.xlane.f32.xlu0 %v3169
    %v3171 = vpop.xlane.xlu0 %3170
    %v3172 = vsel %vm1720, %v3122, -inf
    %3173 = vmax.xlane.f32.xlu0 %v3172
    %v3174 = vpop.xlane.xlu0 %3173
    %v3175 = vsel %vm1720, %v3123, -inf
    %3176 = vmax.xlane.f32.xlu0 %v3175
    %v3177 = vpop.xlane.xlu0 %3176
    %v3178 = vsel %vm1720, %v3124, -inf
    %3179 = vmax.xlane.f32.xlu0 %v3178
    %v3180 = vpop.xlane.xlu0 %3179
    %v3181 = vsel %vm1720, %v3125, -inf
    %3182 = vmax.xlane.f32.xlu0 %v3181
    %v3183 = vpop.xlane.xlu0 %3182
    %v3184 = vsel %vm1720, %v3126, -inf
    %3185 = vmax.xlane.f32.xlu0 %v3184
    %v3186 = vpop.xlane.xlu0 %3185
    %v3187 = vsel %vm1720, %v3127, -inf
    %3188 = vmax.xlane.f32.xlu0 %v3187
    %v3189 = vpop.xlane.xlu0 %3188
    %v3190 = vsel %vm1720, %v3128, -inf
    %3191 = vmax.xlane.f32.xlu0 %v3190
    %v3192 = vpop.xlane.xlu0 %3191
    %v3193 = vsel %vm1720, %v3129, -inf
    %3194 = vmax.xlane.f32.xlu0 %v3193
    %v3195 = vpop.xlane.xlu0 %3194
    %v3196 = vsel %vm1720, %v3130, -inf
    %3197 = vmax.xlane.f32.xlu0 %v3196
    %v3198 = vpop.xlane.xlu0 %3197
    %v3199 = vsel %vm1720, %v3131, -inf
    %3200 = vmax.xlane.f32.xlu0 %v3199
    %v3201 = vpop.xlane.xlu0 %3200
    %v3202 = vsel %vm1720, %v3132, -inf
    %3203 = vmax.xlane.f32.xlu0 %v3202
    %v3204 = vpop.xlane.xlu0 %3203
    %v3205 = vsel %vm1720, %v3133, -inf
    %3206 = vmax.xlane.f32.xlu0 %v3205
    %v3207 = vpop.xlane.xlu0 %3206
    %v3208 = vsel %vm1720, %v3134, -inf
    %3209 = vmax.xlane.f32.xlu0 %v3208
    %v3210 = vpop.xlane.xlu0 %3209
    %v3211 = vsel %vm1720, %v3135, -inf
    %3212 = vmax.xlane.f32.xlu0 %v3211
    %v3213 = vpop.xlane.xlu0 %3212
    %v3214 = vsel %vm1720, %v3136, -inf
    %3215 = vmax.xlane.f32.xlu0 %v3214
    %v3216 = vpop.xlane.xlu0 %3215
    %v3217 = vsel %vm1720, %v3137, -inf
    %3218 = vmax.xlane.f32.xlu0 %v3217
    %v3219 = vpop.xlane.xlu0 %3218
    %v3220 = vsel %vm1720, %v3138, -inf
    %3221 = vmax.xlane.f32.xlu0 %v3220
    %v3222 = vpop.xlane.xlu0 %3221
    %v3223 = vsel %vm1720, %v3139, -inf
    %3224 = vmax.xlane.f32.xlu0 %v3223
    %v3225 = vpop.xlane.xlu0 %3224
    %v3226 = vsel %vm1720, %v3140, -inf
    %3227 = vmax.xlane.f32.xlu0 %v3226
    %v3228 = vpop.xlane.xlu0 %3227
    %v3229 = vsel %vm1720, %v3141, -inf
    %3230 = vmax.xlane.f32.xlu0 %v3229
    %v3231 = vpop.xlane.xlu0 %3230
    %v3232 = vsel %vm1720, %v3142, -inf
    %3233 = vmax.xlane.f32.xlu0 %v3232
    %v3234 = vpop.xlane.xlu0 %3233
    %v3235 = vsel %vm1720, %v3143, -inf
    %3236 = vmax.xlane.f32.xlu0 %v3235
    %v3237 = vpop.xlane.xlu0 %3236
    %v3238 = vsel %vm1720, %v3144, -inf
    %3239 = vmax.xlane.f32.xlu0 %v3238
    %v3240 = vpop.xlane.xlu0 %3239
    %v3241 = vsub.f32 %v3113, %v3147
    %v3242 = vsub.f32 %v3114, %v3150
    %v3243 = vsub.f32 %v3115, %v3153
    %v3244 = vsub.f32 %v3116, %v3156
    %v3245 = vsub.f32 %v3117, %v3159
    %v3246 = vsub.f32 %v3118, %v3162
    %v3247 = vsub.f32 %v3119, %v3165
    %v3248 = vsub.f32 %v3120, %v3168
    %v3249 = vsub.f32 %v3121, %v3171
    %v3250 = vsub.f32 %v3122, %v3174
    %v3251 = vsub.f32 %v3123, %v3177
    %v3252 = vsub.f32 %v3124, %v3180
    %v3253 = vsub.f32 %v3125, %v3183
    %v3254 = vsub.f32 %v3126, %v3186
    %v3255 = vsub.f32 %v3127, %v3189
    %v3256 = vsub.f32 %v3128, %v3192
    %v3257 = vsub.f32 %v3129, %v3195
    %v3258 = vsub.f32 %v3130, %v3198
    %v3259 = vsub.f32 %v3131, %v3201
    %v3260 = vsub.f32 %v3132, %v3204
    %v3261 = vsub.f32 %v3133, %v3207
    %v3262 = vsub.f32 %v3134, %v3210
    %v3263 = vsub.f32 %v3135, %v3213
    %v3264 = vsub.f32 %v3136, %v3216
    %v3265 = vsub.f32 %v3137, %v3219
    %v3266 = vsub.f32 %v3138, %v3222
    %v3267 = vsub.f32 %v3139, %v3225
    %v3268 = vsub.f32 %v3140, %v3228
    %v3269 = vsub.f32 %v3141, %v3231
    %v3270 = vsub.f32 %v3142, %v3234
    %v3271 = vsub.f32 %v3143, %v3237
    %v3272 = vsub.f32 %v3144, %v3240
    %v3273 = vmul.f32 %v3241, 1.442695
    %v3274 = vpow.pop %v3273
    %v3275 = vmul.f32 %v3242, 1.442695
    %v3276 = vpow.pop %v3275
    %v3277 = vmul.f32 %v3243, 1.442695
    %v3278 = vpow.pop %v3277
    %v3279 = vmul.f32 %v3244, 1.442695
    %v3280 = vpow.pop %v3279
    %v3281 = vmul.f32 %v3245, 1.442695
    %v3282 = vpow.pop %v3281
    %v3283 = vmul.f32 %v3246, 1.442695
    %v3284 = vpow.pop %v3283
    %v3285 = vmul.f32 %v3247, 1.442695
    %v3286 = vpow.pop %v3285
    %v3287 = vmul.f32 %v3248, 1.442695
    %v3288 = vpow.pop %v3287
    %v3289 = vmul.f32 %v3249, 1.442695
    %v3290 = vpow.pop %v3289
    %v3291 = vmul.f32 %v3250, 1.442695
    %v3292 = vpow.pop %v3291
    %v3293 = vmul.f32 %v3251, 1.442695
    %v3294 = vpow.pop %v3293
    %v3295 = vmul.f32 %v3252, 1.442695
    %v3296 = vpow.pop %v3295
    %v3297 = vmul.f32 %v3253, 1.442695
    %v3298 = vpow.pop %v3297
    %v3299 = vmul.f32 %v3254, 1.442695
    %v3300 = vpow.pop %v3299
    %v3301 = vmul.f32 %v3255, 1.442695
    %v3302 = vpow.pop %v3301
    %v3303 = vmul.f32 %v3256, 1.442695
    %v3304 = vpow.pop %v3303
    %v3305 = vmul.f32 %v3257, 1.442695
    %v3306 = vpow.pop %v3305
    %v3307 = vmul.f32 %v3258, 1.442695
    %v3308 = vpow.pop %v3307
    %v3309 = vmul.f32 %v3259, 1.442695
    %v3310 = vpow.pop %v3309
    %v3311 = vmul.f32 %v3260, 1.442695
    %v3312 = vpow.pop %v3311
    %v3313 = vmul.f32 %v3261, 1.442695
    %v3314 = vpow.pop %v3313
    %v3315 = vmul.f32 %v3262, 1.442695
    %v3316 = vpow.pop %v3315
    %v3317 = vmul.f32 %v3263, 1.442695
    %v3318 = vpow.pop %v3317
    %v3319 = vmul.f32 %v3264, 1.442695
    %v3320 = vpow.pop %v3319
    %v3321 = vmul.f32 %v3265, 1.442695
    %v3322 = vpow.pop %v3321
    %v3323 = vmul.f32 %v3266, 1.442695
    %v3324 = vpow.pop %v3323
    %v3325 = vmul.f32 %v3267, 1.442695
    %v3326 = vpow.pop %v3325
    %v3327 = vmul.f32 %v3268, 1.442695
    %v3328 = vpow.pop %v3327
    %v3329 = vmul.f32 %v3269, 1.442695
    %v3330 = vpow.pop %v3329
    %v3331 = vmul.f32 %v3270, 1.442695
    %v3332 = vpow.pop %v3331
    %v3333 = vmul.f32 %v3271, 1.442695
    %v3334 = vpow.pop %v3333
    %v3335 = vmul.f32 %v3272, 1.442695
    %v3336 = vpow.pop %v3335
    %v3337 = vsel %vm1720, %v3274, 0.0
    %3338 = vadd.xlane.f32.xlu0 %v3337
    %v3339 = vpop.xlane.xlu0 %3338
    %v3340 = vsel %vm1720, %v3276, 0.0
    %3341 = vadd.xlane.f32.xlu0 %v3340
    %v3342 = vpop.xlane.xlu0 %3341
    %v3343 = vsel %vm1720, %v3278, 0.0
    %3344 = vadd.xlane.f32.xlu0 %v3343
    %v3345 = vpop.xlane.xlu0 %3344
    %v3346 = vsel %vm1720, %v3280, 0.0
    %3347 = vadd.xlane.f32.xlu0 %v3346
    %v3348 = vpop.xlane.xlu0 %3347
    %v3349 = vsel %vm1720, %v3282, 0.0
    %3350 = vadd.xlane.f32.xlu0 %v3349
    %v3351 = vpop.xlane.xlu0 %3350
    %v3352 = vsel %vm1720, %v3284, 0.0
    %3353 = vadd.xlane.f32.xlu0 %v3352
    %v3354 = vpop.xlane.xlu0 %3353
    %v3355 = vsel %vm1720, %v3286, 0.0
    %3356 = vadd.xlane.f32.xlu0 %v3355
    %v3357 = vpop.xlane.xlu0 %3356
    %v3358 = vsel %vm1720, %v3288, 0.0
    %3359 = vadd.xlane.f32.xlu0 %v3358
    %v3360 = vpop.xlane.xlu0 %3359
    %v3361 = vsel %vm1720, %v3290, 0.0
    %3362 = vadd.xlane.f32.xlu0 %v3361
    %v3363 = vpop.xlane.xlu0 %3362
    %v3364 = vsel %vm1720, %v3292, 0.0
    %3365 = vadd.xlane.f32.xlu0 %v3364
    %v3366 = vpop.xlane.xlu0 %3365
    %v3367 = vsel %vm1720, %v3294, 0.0
    %3368 = vadd.xlane.f32.xlu0 %v3367
    %v3369 = vpop.xlane.xlu0 %3368
    %v3370 = vsel %vm1720, %v3296, 0.0
    %3371 = vadd.xlane.f32.xlu0 %v3370
    %v3372 = vpop.xlane.xlu0 %3371
    %v3373 = vsel %vm1720, %v3298, 0.0
    %3374 = vadd.xlane.f32.xlu0 %v3373
    %v3375 = vpop.xlane.xlu0 %3374
    %v3376 = vsel %vm1720, %v3300, 0.0
    %3377 = vadd.xlane.f32.xlu0 %v3376
    %v3378 = vpop.xlane.xlu0 %3377
    %v3379 = vsel %vm1720, %v3302, 0.0
    %3380 = vadd.xlane.f32.xlu0 %v3379
    %v3381 = vpop.xlane.xlu0 %3380
    %v3382 = vsel %vm1720, %v3304, 0.0
    %3383 = vadd.xlane.f32.xlu0 %v3382
    %v3384 = vpop.xlane.xlu0 %3383
    %v3385 = vsel %vm1720, %v3306, 0.0
    %3386 = vadd.xlane.f32.xlu0 %v3385
    %v3387 = vpop.xlane.xlu0 %3386
    %v3388 = vsel %vm1720, %v3308, 0.0
    %3389 = vadd.xlane.f32.xlu0 %v3388
    %v3390 = vpop.xlane.xlu0 %3389
    %v3391 = vsel %vm1720, %v3310, 0.0
    %3392 = vadd.xlane.f32.xlu0 %v3391
    %v3393 = vpop.xlane.xlu0 %3392
    %v3394 = vsel %vm1720, %v3312, 0.0
    %3395 = vadd.xlane.f32.xlu0 %v3394
    %v3396 = vpop.xlane.xlu0 %3395
    %v3397 = vsel %vm1720, %v3314, 0.0
    %3398 = vadd.xlane.f32.xlu0 %v3397
    %v3399 = vpop.xlane.xlu0 %3398
    %v3400 = vsel %vm1720, %v3316, 0.0
    %3401 = vadd.xlane.f32.xlu0 %v3400
    %v3402 = vpop.xlane.xlu0 %3401
    %v3403 = vsel %vm1720, %v3318, 0.0
    %3404 = vadd.xlane.f32.xlu0 %v3403
    %v3405 = vpop.xlane.xlu0 %3404
    %v3406 = vsel %vm1720, %v3320, 0.0
    %3407 = vadd.xlane.f32.xlu0 %v3406
    %v3408 = vpop.xlane.xlu0 %3407
    %v3409 = vsel %vm1720, %v3322, 0.0
    %3410 = vadd.xlane.f32.xlu0 %v3409
    %v3411 = vpop.xlane.xlu0 %3410
    %v3412 = vsel %vm1720, %v3324, 0.0
    %3413 = vadd.xlane.f32.xlu0 %v3412
    %v3414 = vpop.xlane.xlu0 %3413
    %v3415 = vsel %vm1720, %v3326, 0.0
    %3416 = vadd.xlane.f32.xlu0 %v3415
    %v3417 = vpop.xlane.xlu0 %3416
    %v3418 = vsel %vm1720, %v3328, 0.0
    %3419 = vadd.xlane.f32.xlu0 %v3418
    %v3420 = vpop.xlane.xlu0 %3419
    %v3421 = vsel %vm1720, %v3330, 0.0
    %3422 = vadd.xlane.f32.xlu0 %v3421
    %v3423 = vpop.xlane.xlu0 %3422
    %v3424 = vsel %vm1720, %v3332, 0.0
    %3425 = vadd.xlane.f32.xlu0 %v3424
    %v3426 = vpop.xlane.xlu0 %3425
    %v3427 = vsel %vm1720, %v3334, 0.0
    %3428 = vadd.xlane.f32.xlu0 %v3427
    %v3429 = vpop.xlane.xlu0 %3428
    %v3430 = vsel %vm1720, %v3336, 0.0
    %3431 = vadd.xlane.f32.xlu0 %v3430
    %v3432 = vpop.xlane.xlu0 %3431
    %v3433 = vrcp.pop %v3339
    %v3434 = vrcp.pop %v3342
    %v3435 = vrcp.pop %v3345
    %v3436 = vrcp.pop %v3348
    %v3437 = vrcp.pop %v3351
    %v3438 = vrcp.pop %v3354
    %v3439 = vrcp.pop %v3357
    %v3440 = vrcp.pop %v3360
    %v3441 = vrcp.pop %v3363
    %v3442 = vrcp.pop %v3366
    %v3443 = vrcp.pop %v3369
    %v3444 = vrcp.pop %v3372
    %v3445 = vrcp.pop %v3375
    %v3446 = vrcp.pop %v3378
    %v3447 = vrcp.pop %v3381
    %v3448 = vrcp.pop %v3384
    %v3449 = vrcp.pop %v3387
    %v3450 = vrcp.pop %v3390
    %v3451 = vrcp.pop %v3393
    %v3452 = vrcp.pop %v3396
    %v3453 = vrcp.pop %v3399
    %v3454 = vrcp.pop %v3402
    %v3455 = vrcp.pop %v3405
    %v3456 = vrcp.pop %v3408
    %v3457 = vrcp.pop %v3411
    %v3458 = vrcp.pop %v3414
    %v3459 = vrcp.pop %v3417
    %v3460 = vrcp.pop %v3420
    %v3461 = vrcp.pop %v3423
    %v3462 = vrcp.pop %v3426
    %v3463 = vrcp.pop %v3429
    %v3464 = vrcp.pop %v3432
    %v3465 = vmul.f32 %v3274, %v3433
    %v3466 = vmul.f32 %v3276, %v3434
    %v3467 = vmul.f32 %v3278, %v3435
    %v3468 = vmul.f32 %v3280, %v3436
    %v3469 = vmul.f32 %v3282, %v3437
    %v3470 = vmul.f32 %v3284, %v3438
    %v3471 = vmul.f32 %v3286, %v3439
    %v3472 = vmul.f32 %v3288, %v3440
    %v3473 = vmul.f32 %v3290, %v3441
    %v3474 = vmul.f32 %v3292, %v3442
    %v3475 = vmul.f32 %v3294, %v3443
    %v3476 = vmul.f32 %v3296, %v3444
    %v3477 = vmul.f32 %v3298, %v3445
    %v3478 = vmul.f32 %v3300, %v3446
    %v3479 = vmul.f32 %v3302, %v3447
    %v3480 = vmul.f32 %v3304, %v3448
    %v3481 = vmul.f32 %v3306, %v3449
    %v3482 = vmul.f32 %v3308, %v3450
    %v3483 = vmul.f32 %v3310, %v3451
    %v3484 = vmul.f32 %v3312, %v3452
    %v3485 = vmul.f32 %v3314, %v3453
    %v3486 = vmul.f32 %v3316, %v3454
    %v3487 = vmul.f32 %v3318, %v3455
    %v3488 = vmul.f32 %v3320, %v3456
    %v3489 = vmul.f32 %v3322, %v3457
    %v3490 = vmul.f32 %v3324, %v3458
    %v3491 = vmul.f32 %v3326, %v3459
    %v3492 = vmul.f32 %v3328, %v3460
    %v3493 = vmul.f32 %v3330, %v3461
    %v3494 = vmul.f32 %v3332, %v3462
    %v3495 = vmul.f32 %v3334, %v3463
    %v3496 = vmul.f32 %v3336, %v3464
    %v3497 = vpack.c.bf16 %v3465, %v3465
    %v3498 = vpack.c.bf16 %v3466, %v3466
    %v3499 = vpack.c.bf16 %v3467, %v3467
    %v3500 = vpack.c.bf16 %v3468, %v3468
    %v3501 = vpack.c.bf16 %v3469, %v3469
    %v3502 = vpack.c.bf16 %v3470, %v3470
    %v3503 = vpack.c.bf16 %v3471, %v3471
    %v3504 = vpack.c.bf16 %v3472, %v3472
    %v3505 = vpack.c.bf16 %v3473, %v3473
    %v3506 = vpack.c.bf16 %v3474, %v3474
    %v3507 = vpack.c.bf16 %v3475, %v3475
    %v3508 = vpack.c.bf16 %v3476, %v3476
    %v3509 = vpack.c.bf16 %v3477, %v3477
    %v3510 = vpack.c.bf16 %v3478, %v3478
    %v3511 = vpack.c.bf16 %v3479, %v3479
    %v3512 = vpack.c.bf16 %v3480, %v3480
    %v3513 = vpack.c.bf16 %v3481, %v3481
    %v3514 = vpack.c.bf16 %v3482, %v3482
    %v3515 = vpack.c.bf16 %v3483, %v3483
    %v3516 = vpack.c.bf16 %v3484, %v3484
    %v3517 = vpack.c.bf16 %v3485, %v3485
    %v3518 = vpack.c.bf16 %v3486, %v3486
    %v3519 = vpack.c.bf16 %v3487, %v3487
    %v3520 = vpack.c.bf16 %v3488, %v3488
    %v3521 = vpack.c.bf16 %v3489, %v3489
    %v3522 = vpack.c.bf16 %v3490, %v3490
    %v3523 = vpack.c.bf16 %v3491, %v3491
    %v3524 = vpack.c.bf16 %v3492, %v3492
    %v3525 = vpack.c.bf16 %v3493, %v3493
    %v3526 = vpack.c.bf16 %v3494, %v3494
    %v3527 = vpack.c.bf16 %v3495, %v3495
    %v3528 = vpack.c.bf16 %v3496, %v3496
    %v3531 = vunpack.c.l.b16 %v3497
    %v3532 = vunpack.c.l.b16 %v3498
    %v3533 = vpack.c.b16 %v3532, %v3531
    %v3536 = vunpack.c.l.b16 %v2633
    %v3537 = vunpack.c.l.b16 %v2634
    %v3538 = vpack.c.b16 %v3537, %v3536
    %v3541 = vsel %vm1720, %v3533, 0
    %3543 = vmatpush.bf16.msra.mxu0 0
    %3544 = vmatpush.bf16.msra.mxu0 0
    %3545 = vmatpush.bf16.msra.mxu0 0
    %3546 = vmatpush.bf16.msra.mxu0 0
    %3547 = vmatpush.bf16.msra.mxu0 0
    %3548 = vmatpush.bf16.msra.mxu0 0
    %3549 = vmatpush.bf16.msra.mxu0 0
    %3550 = vmatpush.bf16.msra.mxu0 %v3538
    %3551 = vmatmul.bf16.gmra.mxu0 %v3541
    %v3552 = vpop.f32.mrf.mxu0
    %v3553 = vadd.f32 0.0, %v3552
    %v3554 = vpop.f32.mrf.mxu0
    %v3555 = vadd.f32 0.0, %v3554
    %3556 = vdwg.mxu0
    %v3559 = vunpack.c.l.b16 %v3499
    %v3560 = vunpack.c.l.b16 %v3500
    %v3561 = vpack.c.b16 %v3560, %v3559
    %v3564 = vunpack.c.l.b16 %v2635
    %v3565 = vunpack.c.l.b16 %v2636
    %v3566 = vpack.c.b16 %v3565, %v3564
    %v3569 = vsel %vm1720, %v3561, 0
    %3571 = vmatpush.bf16.msra.mxu0 0
    %3572 = vmatpush.bf16.msra.mxu0 0
    %3573 = vmatpush.bf16.msra.mxu0 0
    %3574 = vmatpush.bf16.msra.mxu0 0
    %3575 = vmatpush.bf16.msra.mxu0 0
    %3576 = vmatpush.bf16.msra.mxu0 0
    %3577 = vmatpush.bf16.msra.mxu0 0
    %3578 = vmatpush.bf16.msra.mxu0 %v3566
    %3579 = vmatmul.bf16.gmra.mxu0 %v3569
    %v3580 = vpop.f32.mrf.mxu0
    %v3581 = vadd.f32 0.0, %v3580
    %v3582 = vpop.f32.mrf.mxu0
    %v3583 = vadd.f32 0.0, %v3582
    %3584 = vdwg.mxu0
    %v3587 = vunpack.c.l.b16 %v3501
    %v3588 = vunpack.c.l.b16 %v3502
    %v3589 = vpack.c.b16 %v3588, %v3587
    %v3592 = vunpack.c.l.b16 %v2637
    %v3593 = vunpack.c.l.b16 %v2638
    %v3594 = vpack.c.b16 %v3593, %v3592
    %v3597 = vsel %vm1720, %v3589, 0
    %3599 = vmatpush.bf16.msra.mxu0 0
    %3600 = vmatpush.bf16.msra.mxu0 0
    %3601 = vmatpush.bf16.msra.mxu0 0
    %3602 = vmatpush.bf16.msra.mxu0 0
    %3603 = vmatpush.bf16.msra.mxu0 0
    %3604 = vmatpush.bf16.msra.mxu0 0
    %3605 = vmatpush.bf16.msra.mxu0 0
    %3606 = vmatpush.bf16.msra.mxu0 %v3594
    %3607 = vmatmul.bf16.gmra.mxu0 %v3597
    %v3608 = vpop.f32.mrf.mxu0
    %v3609 = vadd.f32 0.0, %v3608
    %v3610 = vpop.f32.mrf.mxu0
    %v3611 = vadd.f32 0.0, %v3610
    %3612 = vdwg.mxu0
    %v3615 = vunpack.c.l.b16 %v3503
    %v3616 = vunpack.c.l.b16 %v3504
    %v3617 = vpack.c.b16 %v3616, %v3615
    %v3620 = vunpack.c.l.b16 %v2639
    %v3621 = vunpack.c.l.b16 %v2640
    %v3622 = vpack.c.b16 %v3621, %v3620
    %v3625 = vsel %vm1720, %v3617, 0
    %3627 = vmatpush.bf16.msra.mxu0 0
    %3628 = vmatpush.bf16.msra.mxu0 0
    %3629 = vmatpush.bf16.msra.mxu0 0
    %3630 = vmatpush.bf16.msra.mxu0 0
    %3631 = vmatpush.bf16.msra.mxu0 0
    %3632 = vmatpush.bf16.msra.mxu0 0
    %3633 = vmatpush.bf16.msra.mxu0 0
    %3634 = vmatpush.bf16.msra.mxu0 %v3622
    %3635 = vmatmul.bf16.gmra.mxu0 %v3625
    %v3636 = vpop.f32.mrf.mxu0
    %v3637 = vadd.f32 0.0, %v3636
    %v3638 = vpop.f32.mrf.mxu0
    %v3639 = vadd.f32 0.0, %v3638
    %3640 = vdwg.mxu0
    %v3643 = vunpack.c.l.b16 %v3505
    %v3644 = vunpack.c.l.b16 %v3506
    %v3645 = vpack.c.b16 %v3644, %v3643
    %v3648 = vunpack.c.l.b16 %v2641
    %v3649 = vunpack.c.l.b16 %v2642
    %v3650 = vpack.c.b16 %v3649, %v3648
    %v3653 = vsel %vm1720, %v3645, 0
    %3655 = vmatpush.bf16.msra.mxu0 0
    %3656 = vmatpush.bf16.msra.mxu0 0
    %3657 = vmatpush.bf16.msra.mxu0 0
    %3658 = vmatpush.bf16.msra.mxu0 0
    %3659 = vmatpush.bf16.msra.mxu0 0
    %3660 = vmatpush.bf16.msra.mxu0 0
    %3661 = vmatpush.bf16.msra.mxu0 0
    %3662 = vmatpush.bf16.msra.mxu0 %v3650
    %3663 = vmatmul.bf16.gmra.mxu0 %v3653
    %v3664 = vpop.f32.mrf.mxu0
    %v3665 = vadd.f32 0.0, %v3664
    %v3666 = vpop.f32.mrf.mxu0
    %v3667 = vadd.f32 0.0, %v3666
    %3668 = vdwg.mxu0
    %v3671 = vunpack.c.l.b16 %v3507
    %v3672 = vunpack.c.l.b16 %v3508
    %v3673 = vpack.c.b16 %v3672, %v3671
    %v3676 = vunpack.c.l.b16 %v2643
    %v3677 = vunpack.c.l.b16 %v2644
    %v3678 = vpack.c.b16 %v3677, %v3676
    %v3681 = vsel %vm1720, %v3673, 0
    %3683 = vmatpush.bf16.msra.mxu0 0
    %3684 = vmatpush.bf16.msra.mxu0 0
    %3685 = vmatpush.bf16.msra.mxu0 0
    %3686 = vmatpush.bf16.msra.mxu0 0
    %3687 = vmatpush.bf16.msra.mxu0 0
    %3688 = vmatpush.bf16.msra.mxu0 0
    %3689 = vmatpush.bf16.msra.mxu0 0
    %3690 = vmatpush.bf16.msra.mxu0 %v3678
    %3691 = vmatmul.bf16.gmra.mxu0 %v3681
    %v3692 = vpop.f32.mrf.mxu0
    %v3693 = vadd.f32 0.0, %v3692
    %v3694 = vpop.f32.mrf.mxu0
    %v3695 = vadd.f32 0.0, %v3694
    %3696 = vdwg.mxu0
    %v3699 = vunpack.c.l.b16 %v3509
    %v3700 = vunpack.c.l.b16 %v3510
    %v3701 = vpack.c.b16 %v3700, %v3699
    %v3704 = vunpack.c.l.b16 %v2645
    %v3705 = vunpack.c.l.b16 %v2646
    %v3706 = vpack.c.b16 %v3705, %v3704
    %v3709 = vsel %vm1720, %v3701, 0
    %3711 = vmatpush.bf16.msra.mxu0 0
    %3712 = vmatpush.bf16.msra.mxu0 0
    %3713 = vmatpush.bf16.msra.mxu0 0
    %3714 = vmatpush.bf16.msra.mxu0 0
    %3715 = vmatpush.bf16.msra.mxu0 0
    %3716 = vmatpush.bf16.msra.mxu0 0
    %3717 = vmatpush.bf16.msra.mxu0 0
    %3718 = vmatpush.bf16.msra.mxu0 %v3706
    %3719 = vmatmul.bf16.gmra.mxu0 %v3709
    %v3720 = vpop.f32.mrf.mxu0
    %v3721 = vadd.f32 0.0, %v3720
    %v3722 = vpop.f32.mrf.mxu0
    %v3723 = vadd.f32 0.0, %v3722
    %3724 = vdwg.mxu0
    %v3727 = vunpack.c.l.b16 %v3511
    %v3728 = vunpack.c.l.b16 %v3512
    %v3729 = vpack.c.b16 %v3728, %v3727
    %v3732 = vunpack.c.l.b16 %v2647
    %v3733 = vunpack.c.l.b16 %v2648
    %v3734 = vpack.c.b16 %v3733, %v3732
    %v3737 = vsel %vm1720, %v3729, 0
    %3739 = vmatpush.bf16.msra.mxu0 0
    %3740 = vmatpush.bf16.msra.mxu0 0
    %3741 = vmatpush.bf16.msra.mxu0 0
    %3742 = vmatpush.bf16.msra.mxu0 0
    %3743 = vmatpush.bf16.msra.mxu0 0
    %3744 = vmatpush.bf16.msra.mxu0 0
    %3745 = vmatpush.bf16.msra.mxu0 0
    %3746 = vmatpush.bf16.msra.mxu0 %v3734
    %3747 = vmatmul.bf16.gmra.mxu0 %v3737
    %v3748 = vpop.f32.mrf.mxu0
    %v3749 = vadd.f32 0.0, %v3748
    %v3750 = vpop.f32.mrf.mxu0
    %v3751 = vadd.f32 0.0, %v3750
    %3752 = vdwg.mxu0
    %v3755 = vunpack.c.l.b16 %v3513
    %v3756 = vunpack.c.l.b16 %v3514
    %v3757 = vpack.c.b16 %v3756, %v3755
    %v3760 = vunpack.c.l.b16 %v2649
    %v3761 = vunpack.c.l.b16 %v2650
    %v3762 = vpack.c.b16 %v3761, %v3760
    %v3765 = vsel %vm1720, %v3757, 0
    %3767 = vmatpush.bf16.msra.mxu0 0
    %3768 = vmatpush.bf16.msra.mxu0 0
    %3769 = vmatpush.bf16.msra.mxu0 0
    %3770 = vmatpush.bf16.msra.mxu0 0
    %3771 = vmatpush.bf16.msra.mxu0 0
    %3772 = vmatpush.bf16.msra.mxu0 0
    %3773 = vmatpush.bf16.msra.mxu0 0
    %3774 = vmatpush.bf16.msra.mxu0 %v3762
    %3775 = vmatmul.bf16.gmra.mxu0 %v3765
    %v3776 = vpop.f32.mrf.mxu0
    %v3777 = vadd.f32 0.0, %v3776
    %v3778 = vpop.f32.mrf.mxu0
    %v3779 = vadd.f32 0.0, %v3778
    %3780 = vdwg.mxu0
    %v3783 = vunpack.c.l.b16 %v3515
    %v3784 = vunpack.c.l.b16 %v3516
    %v3785 = vpack.c.b16 %v3784, %v3783
    %v3788 = vunpack.c.l.b16 %v2651
    %v3789 = vunpack.c.l.b16 %v2652
    %v3790 = vpack.c.b16 %v3789, %v3788
    %v3793 = vsel %vm1720, %v3785, 0
    %3795 = vmatpush.bf16.msra.mxu0 0
    %3796 = vmatpush.bf16.msra.mxu0 0
    %3797 = vmatpush.bf16.msra.mxu0 0
    %3798 = vmatpush.bf16.msra.mxu0 0
    %3799 = vmatpush.bf16.msra.mxu0 0
    %3800 = vmatpush.bf16.msra.mxu0 0
    %3801 = vmatpush.bf16.msra.mxu0 0
    %3802 = vmatpush.bf16.msra.mxu0 %v3790
    %3803 = vmatmul.bf16.gmra.mxu0 %v3793
    %v3804 = vpop.f32.mrf.mxu0
    %v3805 = vadd.f32 0.0, %v3804
    %v3806 = vpop.f32.mrf.mxu0
    %v3807 = vadd.f32 0.0, %v3806
    %3808 = vdwg.mxu0
    %v3811 = vunpack.c.l.b16 %v3517
    %v3812 = vunpack.c.l.b16 %v3518
    %v3813 = vpack.c.b16 %v3812, %v3811
    %v3816 = vunpack.c.l.b16 %v2653
    %v3817 = vunpack.c.l.b16 %v2654
    %v3818 = vpack.c.b16 %v3817, %v3816
    %v3821 = vsel %vm1720, %v3813, 0
    %3823 = vmatpush.bf16.msra.mxu0 0
    %3824 = vmatpush.bf16.msra.mxu0 0
    %3825 = vmatpush.bf16.msra.mxu0 0
    %3826 = vmatpush.bf16.msra.mxu0 0
    %3827 = vmatpush.bf16.msra.mxu0 0
    %3828 = vmatpush.bf16.msra.mxu0 0
    %3829 = vmatpush.bf16.msra.mxu0 0
    %3830 = vmatpush.bf16.msra.mxu0 %v3818
    %3831 = vmatmul.bf16.gmra.mxu0 %v3821
    %v3832 = vpop.f32.mrf.mxu0
    %v3833 = vadd.f32 0.0, %v3832
    %v3834 = vpop.f32.mrf.mxu0
    %v3835 = vadd.f32 0.0, %v3834
    %3836 = vdwg.mxu0
    %v3839 = vunpack.c.l.b16 %v3519
    %v3840 = vunpack.c.l.b16 %v3520
    %v3841 = vpack.c.b16 %v3840, %v3839
    %v3844 = vunpack.c.l.b16 %v2655
    %v3845 = vunpack.c.l.b16 %v2656
    %v3846 = vpack.c.b16 %v3845, %v3844
    %v3849 = vsel %vm1720, %v3841, 0
    %3851 = vmatpush.bf16.msra.mxu0 0
    %3852 = vmatpush.bf16.msra.mxu0 0
    %3853 = vmatpush.bf16.msra.mxu0 0
    %3854 = vmatpush.bf16.msra.mxu0 0
    %3855 = vmatpush.bf16.msra.mxu0 0
    %3856 = vmatpush.bf16.msra.mxu0 0
    %3857 = vmatpush.bf16.msra.mxu0 0
    %3858 = vmatpush.bf16.msra.mxu0 %v3846
    %3859 = vmatmul.bf16.gmra.mxu0 %v3849
    %v3860 = vpop.f32.mrf.mxu0
    %v3861 = vadd.f32 0.0, %v3860
    %v3862 = vpop.f32.mrf.mxu0
    %v3863 = vadd.f32 0.0, %v3862
    %3864 = vdwg.mxu0
    %v3867 = vunpack.c.l.b16 %v3521
    %v3868 = vunpack.c.l.b16 %v3522
    %v3869 = vpack.c.b16 %v3868, %v3867
    %v3872 = vunpack.c.l.b16 %v2657
    %v3873 = vunpack.c.l.b16 %v2658
    %v3874 = vpack.c.b16 %v3873, %v3872
    %v3877 = vsel %vm1720, %v3869, 0
    %3879 = vmatpush.bf16.msra.mxu0 0
    %3880 = vmatpush.bf16.msra.mxu0 0
    %3881 = vmatpush.bf16.msra.mxu0 0
    %3882 = vmatpush.bf16.msra.mxu0 0
    %3883 = vmatpush.bf16.msra.mxu0 0
    %3884 = vmatpush.bf16.msra.mxu0 0
    %3885 = vmatpush.bf16.msra.mxu0 0
    %3886 = vmatpush.bf16.msra.mxu0 %v3874
    %3887 = vmatmul.bf16.gmra.mxu0 %v3877
    %v3888 = vpop.f32.mrf.mxu0
    %v3889 = vadd.f32 0.0, %v3888
    %v3890 = vpop.f32.mrf.mxu0
    %v3891 = vadd.f32 0.0, %v3890
    %3892 = vdwg.mxu0
    %v3895 = vunpack.c.l.b16 %v3523
    %v3896 = vunpack.c.l.b16 %v3524
    %v3897 = vpack.c.b16 %v3896, %v3895
    %v3900 = vunpack.c.l.b16 %v2659
    %v3901 = vunpack.c.l.b16 %v2660
    %v3902 = vpack.c.b16 %v3901, %v3900
    %v3905 = vsel %vm1720, %v3897, 0
    %3907 = vmatpush.bf16.msra.mxu0 0
    %3908 = vmatpush.bf16.msra.mxu0 0
    %3909 = vmatpush.bf16.msra.mxu0 0
    %3910 = vmatpush.bf16.msra.mxu0 0
    %3911 = vmatpush.bf16.msra.mxu0 0
    %3912 = vmatpush.bf16.msra.mxu0 0
    %3913 = vmatpush.bf16.msra.mxu0 0
    %3914 = vmatpush.bf16.msra.mxu0 %v3902
    %3915 = vmatmul.bf16.gmra.mxu0 %v3905
    %v3916 = vpop.f32.mrf.mxu0
    %v3917 = vadd.f32 0.0, %v3916
    %v3918 = vpop.f32.mrf.mxu0
    %v3919 = vadd.f32 0.0, %v3918
    %3920 = vdwg.mxu0
    %v3923 = vunpack.c.l.b16 %v3525
    %v3924 = vunpack.c.l.b16 %v3526
    %v3925 = vpack.c.b16 %v3924, %v3923
    %v3928 = vunpack.c.l.b16 %v2661
    %v3929 = vunpack.c.l.b16 %v2662
    %v3930 = vpack.c.b16 %v3929, %v3928
    %v3933 = vsel %vm1720, %v3925, 0
    %3935 = vmatpush.bf16.msra.mxu0 0
    %3936 = vmatpush.bf16.msra.mxu0 0
    %3937 = vmatpush.bf16.msra.mxu0 0
    %3938 = vmatpush.bf16.msra.mxu0 0
    %3939 = vmatpush.bf16.msra.mxu0 0
    %3940 = vmatpush.bf16.msra.mxu0 0
    %3941 = vmatpush.bf16.msra.mxu0 0
    %3942 = vmatpush.bf16.msra.mxu0 %v3930
    %3943 = vmatmul.bf16.gmra.mxu0 %v3933
    %v3944 = vpop.f32.mrf.mxu0
    %v3945 = vadd.f32 0.0, %v3944
    %v3946 = vpop.f32.mrf.mxu0
    %v3947 = vadd.f32 0.0, %v3946
    %3948 = vdwg.mxu0
    %v3951 = vunpack.c.l.b16 %v3527
    %v3952 = vunpack.c.l.b16 %v3528
    %v3953 = vpack.c.b16 %v3952, %v3951
    %v3956 = vunpack.c.l.b16 %v2663
    %v3957 = vunpack.c.l.b16 %v2664
    %v3958 = vpack.c.b16 %v3957, %v3956
    %v3961 = vsel %vm1720, %v3953, 0
    %3963 = vmatpush.bf16.msra.mxu0 0
    %3964 = vmatpush.bf16.msra.mxu0 0
    %3965 = vmatpush.bf16.msra.mxu0 0
    %3966 = vmatpush.bf16.msra.mxu0 0
    %3967 = vmatpush.bf16.msra.mxu0 0
    %3968 = vmatpush.bf16.msra.mxu0 0
    %3969 = vmatpush.bf16.msra.mxu0 0
    %3970 = vmatpush.bf16.msra.mxu0 %v3958
    %3971 = vmatmul.bf16.gmra.mxu0 %v3961
    %v3972 = vpop.f32.mrf.mxu0
    %v3973 = vadd.f32 0.0, %v3972
    %v3974 = vpop.f32.mrf.mxu0
    %v3975 = vadd.f32 0.0, %v3974
    %3976 = vdwg.mxu0
    %v3977 = vpack.c.bf16 %v3555, %v3553
    %v3978 = vpack.c.bf16 %v3583, %v3581
    %v3979 = vpack.c.bf16 %v3611, %v3609
    %v3980 = vpack.c.bf16 %v3639, %v3637
    %v3981 = vpack.c.bf16 %v3667, %v3665
    %v3982 = vpack.c.bf16 %v3695, %v3693
    %v3983 = vpack.c.bf16 %v3723, %v3721
    %v3984 = vpack.c.bf16 %v3751, %v3749
    %v3985 = vpack.c.bf16 %v3779, %v3777
    %v3986 = vpack.c.bf16 %v3807, %v3805
    %v3987 = vpack.c.bf16 %v3835, %v3833
    %v3988 = vpack.c.bf16 %v3863, %v3861
    %v3989 = vpack.c.bf16 %v3891, %v3889
    %v3990 = vpack.c.bf16 %v3919, %v3917
    %v3991 = vpack.c.bf16 %v3947, %v3945
    %v3992 = vpack.c.bf16 %v3975, %v3973
    %v4009 = vunpack.c.l.b16 %v1128
    %v4010 = vunpack.c.l.b16 %v1129
    %v4011 = vunpack.c.l.b16 %v1130
    %v4012 = vunpack.c.l.b16 %v1131
    %v4013 = vunpack.c.l.b16 %v1132
    %v4014 = vunpack.c.l.b16 %v1133
    %v4015 = vunpack.c.l.b16 %v1134
    %v4016 = vunpack.c.l.b16 %v1135
    %v4017 = vunpack.c.l.b16 %v1136
    %v4018 = vunpack.c.l.b16 %v1137
    %v4019 = vunpack.c.l.b16 %v1138
    %v4020 = vunpack.c.l.b16 %v1139
    %v4021 = vunpack.c.l.b16 %v1140
    %v4022 = vunpack.c.l.b16 %v1141
    %v4023 = vunpack.c.l.b16 %v1142
    %v4024 = vunpack.c.l.b16 %v1143
    %v4025 = vpack.c.b16 %v4010, %v4009
    %v4026 = vpack.c.b16 %v4012, %v4011
    %v4027 = vpack.c.b16 %v4014, %v4013
    %v4028 = vpack.c.b16 %v4016, %v4015
    %v4029 = vpack.c.b16 %v4018, %v4017
    %v4030 = vpack.c.b16 %v4020, %v4019
    %v4031 = vpack.c.b16 %v4022, %v4021
    %v4032 = vpack.c.b16 %v4024, %v4023
    %4041 = vmatpush.bf16.msra.mxu0 %v4032
    %4042 = vmatpush.bf16.msra.mxu0 %v4031
    %4043 = vmatpush.bf16.msra.mxu0 %v4030
    %4044 = vmatpush.bf16.msra.mxu0 %v4029
    %4045 = vmatpush.bf16.msra.mxu0 %v4028
    %4046 = vmatpush.bf16.msra.mxu0 %v4027
    %4047 = vmatpush.bf16.msra.mxu0 %v4026
    %4048 = vmatpush.bf16.msra.mxu0 %v4025
    %4049 = vmatmul.bf16.gmra.mxu0 %v3977
    %v4050 = vpop.f32.mrf.mxu0
    %v4051 = vadd.f32 0.0, %v4050
    %v4052 = vpop.f32.mrf.mxu0
    %v4053 = vadd.f32 0.0, %v4052
    %4054 = vmatmul.bf16.gmra.mxu0 %v3978
    %v4055 = vpop.f32.mrf.mxu0
    %v4056 = vadd.f32 0.0, %v4055
    %v4057 = vpop.f32.mrf.mxu0
    %v4058 = vadd.f32 0.0, %v4057
    %4059 = vmatmul.bf16.gmra.mxu0 %v3979
    %v4060 = vpop.f32.mrf.mxu0
    %v4061 = vadd.f32 0.0, %v4060
    %v4062 = vpop.f32.mrf.mxu0
    %v4063 = vadd.f32 0.0, %v4062
    %4064 = vmatmul.bf16.gmra.mxu0 %v3980
    %v4065 = vpop.f32.mrf.mxu0
    %v4066 = vadd.f32 0.0, %v4065
    %v4067 = vpop.f32.mrf.mxu0
    %v4068 = vadd.f32 0.0, %v4067
    %4069 = vmatmul.bf16.gmra.mxu0 %v3981
    %v4070 = vpop.f32.mrf.mxu0
    %v4071 = vadd.f32 0.0, %v4070
    %v4072 = vpop.f32.mrf.mxu0
    %v4073 = vadd.f32 0.0, %v4072
    %4074 = vmatmul.bf16.gmra.mxu0 %v3982
    %v4075 = vpop.f32.mrf.mxu0
    %v4076 = vadd.f32 0.0, %v4075
    %v4077 = vpop.f32.mrf.mxu0
    %v4078 = vadd.f32 0.0, %v4077
    %4079 = vmatmul.bf16.gmra.mxu0 %v3983
    %v4080 = vpop.f32.mrf.mxu0
    %v4081 = vadd.f32 0.0, %v4080
    %v4082 = vpop.f32.mrf.mxu0
    %v4083 = vadd.f32 0.0, %v4082
    %4084 = vmatmul.bf16.gmra.mxu0 %v3984
    %v4085 = vpop.f32.mrf.mxu0
    %v4086 = vadd.f32 0.0, %v4085
    %v4087 = vpop.f32.mrf.mxu0
    %v4088 = vadd.f32 0.0, %v4087
    %4089 = vmatmul.bf16.gmra.mxu0 %v3985
    %v4090 = vpop.f32.mrf.mxu0
    %v4091 = vadd.f32 0.0, %v4090
    %v4092 = vpop.f32.mrf.mxu0
    %v4093 = vadd.f32 0.0, %v4092
    %4094 = vmatmul.bf16.gmra.mxu0 %v3986
    %v4095 = vpop.f32.mrf.mxu0
    %v4096 = vadd.f32 0.0, %v4095
    %v4097 = vpop.f32.mrf.mxu0
    %v4098 = vadd.f32 0.0, %v4097
    %4099 = vmatmul.bf16.gmra.mxu0 %v3987
    %v4100 = vpop.f32.mrf.mxu0
    %v4101 = vadd.f32 0.0, %v4100
    %v4102 = vpop.f32.mrf.mxu0
    %v4103 = vadd.f32 0.0, %v4102
    %4104 = vmatmul.bf16.gmra.mxu0 %v3988
    %v4105 = vpop.f32.mrf.mxu0
    %v4106 = vadd.f32 0.0, %v4105
    %v4107 = vpop.f32.mrf.mxu0
    %v4108 = vadd.f32 0.0, %v4107
    %4109 = vmatmul.bf16.gmra.mxu0 %v3989
    %v4110 = vpop.f32.mrf.mxu0
    %v4111 = vadd.f32 0.0, %v4110
    %v4112 = vpop.f32.mrf.mxu0
    %v4113 = vadd.f32 0.0, %v4112
    %4114 = vmatmul.bf16.gmra.mxu0 %v3990
    %v4115 = vpop.f32.mrf.mxu0
    %v4116 = vadd.f32 0.0, %v4115
    %v4117 = vpop.f32.mrf.mxu0
    %v4118 = vadd.f32 0.0, %v4117
    %4119 = vmatmul.bf16.gmra.mxu0 %v3991
    %v4120 = vpop.f32.mrf.mxu0
    %v4121 = vadd.f32 0.0, %v4120
    %v4122 = vpop.f32.mrf.mxu0
    %v4123 = vadd.f32 0.0, %v4122
    %4124 = vmatmul.bf16.gmra.mxu0 %v3992
    %v4125 = vpop.f32.mrf.mxu0
    %v4126 = vadd.f32 0.0, %v4125
    %v4127 = vpop.f32.mrf.mxu0
    %v4128 = vadd.f32 0.0, %v4127
    %4129 = vdwg.mxu0
    %v4146 = vunpack.c.l.b16 %v1112
    %v4147 = vunpack.c.l.b16 %v1113
    %v4148 = vunpack.c.l.b16 %v1114
    %v4149 = vunpack.c.l.b16 %v1115
    %v4150 = vunpack.c.l.b16 %v1116
    %v4151 = vunpack.c.l.b16 %v1117
    %v4152 = vunpack.c.l.b16 %v1118
    %v4153 = vunpack.c.l.b16 %v1119
    %v4154 = vunpack.c.l.b16 %v1120
    %v4155 = vunpack.c.l.b16 %v1121
    %v4156 = vunpack.c.l.b16 %v1122
    %v4157 = vunpack.c.l.b16 %v1123
    %v4158 = vunpack.c.l.b16 %v1124
    %v4159 = vunpack.c.l.b16 %v1125
    %v4160 = vunpack.c.l.b16 %v1126
    %v4161 = vunpack.c.l.b16 %v1127
    %v4162 = vpack.c.b16 %v4147, %v4146
    %v4163 = vpack.c.b16 %v4149, %v4148
    %v4164 = vpack.c.b16 %v4151, %v4150
    %v4165 = vpack.c.b16 %v4153, %v4152
    %v4166 = vpack.c.b16 %v4155, %v4154
    %v4167 = vpack.c.b16 %v4157, %v4156
    %v4168 = vpack.c.b16 %v4159, %v4158
    %v4169 = vpack.c.b16 %v4161, %v4160
    %4178 = vmatpush.bf16.msra.mxu0 %v4169
    %4179 = vmatpush.bf16.msra.mxu0 %v4168
    %4180 = vmatpush.bf16.msra.mxu0 %v4167
    %4181 = vmatpush.bf16.msra.mxu0 %v4166
    %4182 = vmatpush.bf16.msra.mxu0 %v4165
    %4183 = vmatpush.bf16.msra.mxu0 %v4164
    %4184 = vmatpush.bf16.msra.mxu0 %v4163
    %4185 = vmatpush.bf16.msra.mxu0 %v4162
    %4186 = vmatmul.bf16.gmra.mxu0 %v2553
    %v4187 = vpop.f32.mrf.mxu0
    %v4188 = vadd.f32 %v4051, %v4187
    %v4189 = vpop.f32.mrf.mxu0
    %v4190 = vadd.f32 %v4053, %v4189
    %4191 = vmatmul.bf16.gmra.mxu0 %v2554
    %v4192 = vpop.f32.mrf.mxu0
    %v4193 = vadd.f32 %v4056, %v4192
    %v4194 = vpop.f32.mrf.mxu0
    %v4195 = vadd.f32 %v4058, %v4194
    %4196 = vmatmul.bf16.gmra.mxu0 %v2555
    %v4197 = vpop.f32.mrf.mxu0
    %v4198 = vadd.f32 %v4061, %v4197
    %v4199 = vpop.f32.mrf.mxu0
    %v4200 = vadd.f32 %v4063, %v4199
    %4201 = vmatmul.bf16.gmra.mxu0 %v2556
    %v4202 = vpop.f32.mrf.mxu0
    %v4203 = vadd.f32 %v4066, %v4202
    %v4204 = vpop.f32.mrf.mxu0
    %v4205 = vadd.f32 %v4068, %v4204
    %4206 = vmatmul.bf16.gmra.mxu0 %v2557
    %v4207 = vpop.f32.mrf.mxu0
    %v4208 = vadd.f32 %v4071, %v4207
    %v4209 = vpop.f32.mrf.mxu0
    %v4210 = vadd.f32 %v4073, %v4209
    %4211 = vmatmul.bf16.gmra.mxu0 %v2558
    %v4212 = vpop.f32.mrf.mxu0
    %v4213 = vadd.f32 %v4076, %v4212
    %v4214 = vpop.f32.mrf.mxu0
    %v4215 = vadd.f32 %v4078, %v4214
    %4216 = vmatmul.bf16.gmra.mxu0 %v2559
    %v4217 = vpop.f32.mrf.mxu0
    %v4218 = vadd.f32 %v4081, %v4217
    %v4219 = vpop.f32.mrf.mxu0
    %v4220 = vadd.f32 %v4083, %v4219
    %4221 = vmatmul.bf16.gmra.mxu0 %v2560
    %v4222 = vpop.f32.mrf.mxu0
    %v4223 = vadd.f32 %v4086, %v4222
    %v4224 = vpop.f32.mrf.mxu0
    %v4225 = vadd.f32 %v4088, %v4224
    %4226 = vmatmul.bf16.gmra.mxu0 %v2561
    %v4227 = vpop.f32.mrf.mxu0
    %v4228 = vadd.f32 %v4091, %v4227
    %v4229 = vpop.f32.mrf.mxu0
    %v4230 = vadd.f32 %v4093, %v4229
    %4231 = vmatmul.bf16.gmra.mxu0 %v2562
    %v4232 = vpop.f32.mrf.mxu0
    %v4233 = vadd.f32 %v4096, %v4232
    %v4234 = vpop.f32.mrf.mxu0
    %v4235 = vadd.f32 %v4098, %v4234
    %4236 = vmatmul.bf16.gmra.mxu0 %v2563
    %v4237 = vpop.f32.mrf.mxu0
    %v4238 = vadd.f32 %v4101, %v4237
    %v4239 = vpop.f32.mrf.mxu0
    %v4240 = vadd.f32 %v4103, %v4239
    %4241 = vmatmul.bf16.gmra.mxu0 %v2564
    %v4242 = vpop.f32.mrf.mxu0
    %v4243 = vadd.f32 %v4106, %v4242
    %v4244 = vpop.f32.mrf.mxu0
    %v4245 = vadd.f32 %v4108, %v4244
    %4246 = vmatmul.bf16.gmra.mxu0 %v2565
    %v4247 = vpop.f32.mrf.mxu0
    %v4248 = vadd.f32 %v4111, %v4247
    %v4249 = vpop.f32.mrf.mxu0
    %v4250 = vadd.f32 %v4113, %v4249
    %4251 = vmatmul.bf16.gmra.mxu0 %v2566
    %v4252 = vpop.f32.mrf.mxu0
    %v4253 = vadd.f32 %v4116, %v4252
    %v4254 = vpop.f32.mrf.mxu0
    %v4255 = vadd.f32 %v4118, %v4254
    %4256 = vmatmul.bf16.gmra.mxu0 %v2567
    %v4257 = vpop.f32.mrf.mxu0
    %v4258 = vadd.f32 %v4121, %v4257
    %v4259 = vpop.f32.mrf.mxu0
    %v4260 = vadd.f32 %v4123, %v4259
    %4261 = vmatmul.bf16.gmra.mxu0 %v2568
    %v4262 = vpop.f32.mrf.mxu0
    %v4263 = vadd.f32 %v4126, %v4262
    %v4264 = vpop.f32.mrf.mxu0
    %v4265 = vadd.f32 %v4128, %v4264
    %4266 = vdwg.mxu0
    %v4267 = vld [vmem:[%s6] sm:$0x1]
    %v4269 = vperm.slane %v4267, 0
    %v4271 = vadd.f32 %v4188, %v4269
    %v4272 = vadd.f32 %v4190, %v4269
    %v4273 = vadd.f32 %v4193, %v4269
    %v4274 = vadd.f32 %v4195, %v4269
    %v4275 = vadd.f32 %v4198, %v4269
    %v4276 = vadd.f32 %v4200, %v4269
    %v4277 = vadd.f32 %v4203, %v4269
    %v4278 = vadd.f32 %v4205, %v4269
    %v4279 = vadd.f32 %v4208, %v4269
    %v4280 = vadd.f32 %v4210, %v4269
    %v4281 = vadd.f32 %v4213, %v4269
    %v4282 = vadd.f32 %v4215, %v4269
    %v4283 = vadd.f32 %v4218, %v4269
    %v4284 = vadd.f32 %v4220, %v4269
    %v4285 = vadd.f32 %v4223, %v4269
    %v4286 = vadd.f32 %v4225, %v4269
    %v4287 = vadd.f32 %v4228, %v4269
    %v4288 = vadd.f32 %v4230, %v4269
    %v4289 = vadd.f32 %v4233, %v4269
    %v4290 = vadd.f32 %v4235, %v4269
    %v4291 = vadd.f32 %v4238, %v4269
    %v4292 = vadd.f32 %v4240, %v4269
    %v4293 = vadd.f32 %v4243, %v4269
    %v4294 = vadd.f32 %v4245, %v4269
    %v4295 = vadd.f32 %v4248, %v4269
    %v4296 = vadd.f32 %v4250, %v4269
    %v4297 = vadd.f32 %v4253, %v4269
    %v4298 = vadd.f32 %v4255, %v4269
    %v4299 = vadd.f32 %v4258, %v4269
    %v4300 = vadd.f32 %v4260, %v4269
    %v4301 = vadd.f32 %v4263, %v4269
    %v4302 = vadd.f32 %v4265, %v4269
    %v4303 = vld [vmem:[#allocation8] sm:$0xff]
    %v4304 = vld [vmem:[#allocation8 + $0x8] sm:$0xff]
    %v4305 = vld [vmem:[#allocation8 + $0x10] sm:$0xff]
    %v4306 = vld [vmem:[#allocation8 + $0x18] sm:$0xff]
    %v4307 = vld [vmem:[#allocation8 + $0x20] sm:$0xff]
    %v4308 = vld [vmem:[#allocation8 + $0x28] sm:$0xff]
    %v4309 = vld [vmem:[#allocation8 + $0x30] sm:$0xff]
    %v4310 = vld [vmem:[#allocation8 + $0x38] sm:$0xff]
    %v4311 = vld [vmem:[#allocation8 + $0x40] sm:$0xff]
    %v4312 = vld [vmem:[#allocation8 + $0x48] sm:$0xff]
    %v4313 = vld [vmem:[#allocation8 + $0x50] sm:$0xff]
    %v4314 = vld [vmem:[#allocation8 + $0x58] sm:$0xff]
    %v4315 = vld [vmem:[#allocation8 + $0x60] sm:$0xff]
    %v4316 = vld [vmem:[#allocation8 + $0x68] sm:$0xff]
    %v4317 = vld [vmem:[#allocation8 + $0x70] sm:$0xff]
    %v4318 = vld [vmem:[#allocation8 + $0x78] sm:$0xff]
    %v4319 = vld [vmem:[%s8] sm:$0x1]
    %v4321 = vperm.slane %v4319, 0
    %4323 = vmatpush.msra.mxu0 %v4318
    %4324 = vmatpush.msra.mxu0 %v4317
    %4325 = vmatpush.msra.mxu0 %v4316
    %4326 = vmatpush.msra.mxu0 %v4315
    %4327 = vmatpush.msra.mxu0 %v4314
    %4328 = vmatpush.msra.mxu0 %v4313
    %4329 = vmatpush.msra.mxu0 %v4312
    %4330 = vmatpush.msra.mxu0 %v4311
    %4331 = vmatpush.msra.mxu0 %v4310
    %4332 = vmatpush.msra.mxu0 %v4309
    %4333 = vmatpush.msra.mxu0 %v4308
    %4334 = vmatpush.msra.mxu0 %v4307
    %4335 = vmatpush.msra.mxu0 %v4306
    %4336 = vmatpush.msra.mxu0 %v4305
    %4337 = vmatpush.msra.mxu0 %v4304
    %4338 = vmatpush.msra.mxu0 %v4303
    %4339 = vmatmul.f32.gmra.mxu0 %v4271
    %v4340 = vpop.f32.mrf.mxu0
    %v4341 = vadd.f32 %v4321, %v4340
    %4342 = vmatmul.f32.gmra.mxu0 %v4272
    %v4343 = vpop.f32.mrf.mxu0
    %v4344 = vadd.f32 %v4321, %v4343
    %4345 = vmatmul.f32.gmra.mxu0 %v4273
    %v4346 = vpop.f32.mrf.mxu0
    %v4347 = vadd.f32 %v4321, %v4346
    %4348 = vmatmul.f32.gmra.mxu0 %v4274
    %v4349 = vpop.f32.mrf.mxu0
    %v4350 = vadd.f32 %v4321, %v4349
    %4351 = vmatmul.f32.gmra.mxu0 %v4275
    %v4352 = vpop.f32.mrf.mxu0
    %v4353 = vadd.f32 %v4321, %v4352
    %4354 = vmatmul.f32.gmra.mxu0 %v4276
    %v4355 = vpop.f32.mrf.mxu0
    %v4356 = vadd.f32 %v4321, %v4355
    %4357 = vmatmul.f32.gmra.mxu0 %v4277
    %v4358 = vpop.f32.mrf.mxu0
    %v4359 = vadd.f32 %v4321, %v4358
    %4360 = vmatmul.f32.gmra.mxu0 %v4278
    %v4361 = vpop.f32.mrf.mxu0
    %v4362 = vadd.f32 %v4321, %v4361
    %4363 = vmatmul.f32.gmra.mxu0 %v4279
    %v4364 = vpop.f32.mrf.mxu0
    %v4365 = vadd.f32 %v4321, %v4364
    %4366 = vmatmul.f32.gmra.mxu0 %v4280
    %v4367 = vpop.f32.mrf.mxu0
    %v4368 = vadd.f32 %v4321, %v4367
    %4369 = vmatmul.f32.gmra.mxu0 %v4281
    %v4370 = vpop.f32.mrf.mxu0
    %v4371 = vadd.f32 %v4321, %v4370
    %4372 = vmatmul.f32.gmra.mxu0 %v4282
    %v4373 = vpop.f32.mrf.mxu0
    %v4374 = vadd.f32 %v4321, %v4373
    %4375 = vmatmul.f32.gmra.mxu0 %v4283
    %v4376 = vpop.f32.mrf.mxu0
    %v4377 = vadd.f32 %v4321, %v4376
    %4378 = vmatmul.f32.gmra.mxu0 %v4284
    %v4379 = vpop.f32.mrf.mxu0
    %v4380 = vadd.f32 %v4321, %v4379
    %4381 = vmatmul.f32.gmra.mxu0 %v4285
    %v4382 = vpop.f32.mrf.mxu0
    %v4383 = vadd.f32 %v4321, %v4382
    %4384 = vmatmul.f32.gmra.mxu0 %v4286
    %v4385 = vpop.f32.mrf.mxu0
    %v4386 = vadd.f32 %v4321, %v4385
    %4387 = vmatmul.f32.gmra.mxu0 %v4287
    %v4388 = vpop.f32.mrf.mxu0
    %v4389 = vadd.f32 %v4321, %v4388
    %4390 = vmatmul.f32.gmra.mxu0 %v4288
    %v4391 = vpop.f32.mrf.mxu0
    %v4392 = vadd.f32 %v4321, %v4391
    %4393 = vmatmul.f32.gmra.mxu0 %v4289
    %v4394 = vpop.f32.mrf.mxu0
    %v4395 = vadd.f32 %v4321, %v4394
    %4396 = vmatmul.f32.gmra.mxu0 %v4290
    %v4397 = vpop.f32.mrf.mxu0
    %v4398 = vadd.f32 %v4321, %v4397
    %4399 = vmatmul.f32.gmra.mxu0 %v4291
    %v4400 = vpop.f32.mrf.mxu0
    %v4401 = vadd.f32 %v4321, %v4400
    %4402 = vmatmul.f32.gmra.mxu0 %v4292
    %v4403 = vpop.f32.mrf.mxu0
    %v4404 = vadd.f32 %v4321, %v4403
    %4405 = vmatmul.f32.gmra.mxu0 %v4293
    %v4406 = vpop.f32.mrf.mxu0
    %v4407 = vadd.f32 %v4321, %v4406
    %4408 = vmatmul.f32.gmra.mxu0 %v4294
    %v4409 = vpop.f32.mrf.mxu0
    %v4410 = vadd.f32 %v4321, %v4409
    %4411 = vmatmul.f32.gmra.mxu0 %v4295
    %v4412 = vpop.f32.mrf.mxu0
    %v4413 = vadd.f32 %v4321, %v4412
    %4414 = vmatmul.f32.gmra.mxu0 %v4296
    %v4415 = vpop.f32.mrf.mxu0
    %v4416 = vadd.f32 %v4321, %v4415
    %4417 = vmatmul.f32.gmra.mxu0 %v4297
    %v4418 = vpop.f32.mrf.mxu0
    %v4419 = vadd.f32 %v4321, %v4418
    %4420 = vmatmul.f32.gmra.mxu0 %v4298
    %v4421 = vpop.f32.mrf.mxu0
    %v4422 = vadd.f32 %v4321, %v4421
    %4423 = vmatmul.f32.gmra.mxu0 %v4299
    %v4424 = vpop.f32.mrf.mxu0
    %v4425 = vadd.f32 %v4321, %v4424
    %4426 = vmatmul.f32.gmra.mxu0 %v4300
    %v4427 = vpop.f32.mrf.mxu0
    %v4428 = vadd.f32 %v4321, %v4427
    %4429 = vmatmul.f32.gmra.mxu0 %v4301
    %v4430 = vpop.f32.mrf.mxu0
    %v4431 = vadd.f32 %v4321, %v4430
    %4432 = vmatmul.f32.gmra.mxu0 %v4302
    %v4433 = vpop.f32.mrf.mxu0
    %v4434 = vadd.f32 %v4321, %v4433
    %4435 = vdwg.mxu0
    %v4436 = vtanh.pop %v4341
    %v4437 = vtanh.pop %v4344
    %v4438 = vtanh.pop %v4347
    %v4439 = vtanh.pop %v4350
    %v4440 = vtanh.pop %v4353
    %v4441 = vtanh.pop %v4356
    %v4442 = vtanh.pop %v4359
    %v4443 = vtanh.pop %v4362
    %v4444 = vtanh.pop %v4365
    %v4445 = vtanh.pop %v4368
    %v4446 = vtanh.pop %v4371
    %v4447 = vtanh.pop %v4374
    %v4448 = vtanh.pop %v4377
    %v4449 = vtanh.pop %v4380
    %v4450 = vtanh.pop %v4383
    %v4451 = vtanh.pop %v4386
    %v4452 = vtanh.pop %v4389
    %v4453 = vtanh.pop %v4392
    %v4454 = vtanh.pop %v4395
    %v4455 = vtanh.pop %v4398
    %v4456 = vtanh.pop %v4401
    %v4457 = vtanh.pop %v4404
    %v4458 = vtanh.pop %v4407
    %v4459 = vtanh.pop %v4410
    %v4460 = vtanh.pop %v4413
    %v4461 = vtanh.pop %v4416
    %v4462 = vtanh.pop %v4419
    %v4463 = vtanh.pop %v4422
    %v4464 = vtanh.pop %v4425
    %v4465 = vtanh.pop %v4428
    %v4466 = vtanh.pop %v4431
    %v4467 = vtanh.pop %v4434
    %v4468 = vld [vmem:[%s9] sm:$0xff]
    %v4469 = vld [vmem:[%s9 + $0x8] sm:$0xff]
    %v4470 = vld [vmem:[%s9 + $0x10] sm:$0xff]
    %v4471 = vld [vmem:[%s9 + $0x18] sm:$0xff]
    %v4472 = vld [vmem:[%s9 + $0x20] sm:$0xff]
    %v4473 = vld [vmem:[%s9 + $0x28] sm:$0xff]
    %v4474 = vld [vmem:[%s9 + $0x30] sm:$0xff]
    %v4475 = vld [vmem:[%s9 + $0x38] sm:$0xff]
    %v4476 = vld [vmem:[%s9 + $0x40] sm:$0xff]
    %v4477 = vld [vmem:[%s9 + $0x48] sm:$0xff]
    %v4478 = vld [vmem:[%s9 + $0x50] sm:$0xff]
    %v4479 = vld [vmem:[%s9 + $0x58] sm:$0xff]
    %v4480 = vld [vmem:[%s9 + $0x60] sm:$0xff]
    %v4481 = vld [vmem:[%s9 + $0x68] sm:$0xff]
    %v4482 = vld [vmem:[%s9 + $0x70] sm:$0xff]
    %v4483 = vld [vmem:[%s9 + $0x78] sm:$0xff]
    %4484 = vmatpush.msra.mxu0 %v4483
    %4485 = vmatpush.msra.mxu0 %v4482
    %4486 = vmatpush.msra.mxu0 %v4481
    %4487 = vmatpush.msra.mxu0 %v4480
    %4488 = vmatpush.msra.mxu0 %v4479
    %4489 = vmatpush.msra.mxu0 %v4478
    %4490 = vmatpush.msra.mxu0 %v4477
    %4491 = vmatpush.msra.mxu0 %v4476
    %4492 = vmatpush.msra.mxu0 %v4475
    %4493 = vmatpush.msra.mxu0 %v4474
    %4494 = vmatpush.msra.mxu0 %v4473
    %4495 = vmatpush.msra.mxu0 %v4472
    %4496 = vmatpush.msra.mxu0 %v4471
    %4497 = vmatpush.msra.mxu0 %v4470
    %4498 = vmatpush.msra.mxu0 %v4469
    %4499 = vmatpush.msra.mxu0 %v4468
    %4500 = vmatmul.f32.gmra.mxu0 %v4436
    %v4501 = vpop.f32.mrf.mxu0
    %v4502 = vadd.f32 0.0, %v4501
    %4503 = vmatmul.f32.gmra.mxu0 %v4437
    %v4504 = vpop.f32.mrf.mxu0
    %v4505 = vadd.f32 0.0, %v4504
    %4506 = vmatmul.f32.gmra.mxu0 %v4438
    %v4507 = vpop.f32.mrf.mxu0
    %v4508 = vadd.f32 0.0, %v4507
    %4509 = vmatmul.f32.gmra.mxu0 %v4439
    %v4510 = vpop.f32.mrf.mxu0
    %v4511 = vadd.f32 0.0, %v4510
    %4512 = vmatmul.f32.gmra.mxu0 %v4440
    %v4513 = vpop.f32.mrf.mxu0
    %v4514 = vadd.f32 0.0, %v4513
    %4515 = vmatmul.f32.gmra.mxu0 %v4441
    %v4516 = vpop.f32.mrf.mxu0
    %v4517 = vadd.f32 0.0, %v4516
    %4518 = vmatmul.f32.gmra.mxu0 %v4442
    %v4519 = vpop.f32.mrf.mxu0
    %v4520 = vadd.f32 0.0, %v4519
    %4521 = vmatmul.f32.gmra.mxu0 %v4443
    %v4522 = vpop.f32.mrf.mxu0
    %v4523 = vadd.f32 0.0, %v4522
    %4524 = vmatmul.f32.gmra.mxu0 %v4444
    %v4525 = vpop.f32.mrf.mxu0
    %v4526 = vadd.f32 0.0, %v4525
    %4527 = vmatmul.f32.gmra.mxu0 %v4445
    %v4528 = vpop.f32.mrf.mxu0
    %v4529 = vadd.f32 0.0, %v4528
    %4530 = vmatmul.f32.gmra.mxu0 %v4446
    %v4531 = vpop.f32.mrf.mxu0
    %v4532 = vadd.f32 0.0, %v4531
    %4533 = vmatmul.f32.gmra.mxu0 %v4447
    %v4534 = vpop.f32.mrf.mxu0
    %v4535 = vadd.f32 0.0, %v4534
    %4536 = vmatmul.f32.gmra.mxu0 %v4448
    %v4537 = vpop.f32.mrf.mxu0
    %v4538 = vadd.f32 0.0, %v4537
    %4539 = vmatmul.f32.gmra.mxu0 %v4449
    %v4540 = vpop.f32.mrf.mxu0
    %v4541 = vadd.f32 0.0, %v4540
    %4542 = vmatmul.f32.gmra.mxu0 %v4450
    %v4543 = vpop.f32.mrf.mxu0
    %v4544 = vadd.f32 0.0, %v4543
    %4545 = vmatmul.f32.gmra.mxu0 %v4451
    %v4546 = vpop.f32.mrf.mxu0
    %v4547 = vadd.f32 0.0, %v4546
    %4548 = vmatmul.f32.gmra.mxu0 %v4452
    %v4549 = vpop.f32.mrf.mxu0
    %v4550 = vadd.f32 0.0, %v4549
    %4551 = vmatmul.f32.gmra.mxu0 %v4453
    %v4552 = vpop.f32.mrf.mxu0
    %v4553 = vadd.f32 0.0, %v4552
    %4554 = vmatmul.f32.gmra.mxu0 %v4454
    %v4555 = vpop.f32.mrf.mxu0
    %v4556 = vadd.f32 0.0, %v4555
    %4557 = vmatmul.f32.gmra.mxu0 %v4455
    %v4558 = vpop.f32.mrf.mxu0
    %v4559 = vadd.f32 0.0, %v4558
    %4560 = vmatmul.f32.gmra.mxu0 %v4456
    %v4561 = vpop.f32.mrf.mxu0
    %v4562 = vadd.f32 0.0, %v4561
    %4563 = vmatmul.f32.gmra.mxu0 %v4457
    %v4564 = vpop.f32.mrf.mxu0
    %v4565 = vadd.f32 0.0, %v4564
    %4566 = vmatmul.f32.gmra.mxu0 %v4458
    %v4567 = vpop.f32.mrf.mxu0
    %v4568 = vadd.f32 0.0, %v4567
    %4569 = vmatmul.f32.gmra.mxu0 %v4459
    %v4570 = vpop.f32.mrf.mxu0
    %v4571 = vadd.f32 0.0, %v4570
    %4572 = vmatmul.f32.gmra.mxu0 %v4460
    %v4573 = vpop.f32.mrf.mxu0
    %v4574 = vadd.f32 0.0, %v4573
    %4575 = vmatmul.f32.gmra.mxu0 %v4461
    %v4576 = vpop.f32.mrf.mxu0
    %v4577 = vadd.f32 0.0, %v4576
    %4578 = vmatmul.f32.gmra.mxu0 %v4462
    %v4579 = vpop.f32.mrf.mxu0
    %v4580 = vadd.f32 0.0, %v4579
    %4581 = vmatmul.f32.gmra.mxu0 %v4463
    %v4582 = vpop.f32.mrf.mxu0
    %v4583 = vadd.f32 0.0, %v4582
    %4584 = vmatmul.f32.gmra.mxu0 %v4464
    %v4585 = vpop.f32.mrf.mxu0
    %v4586 = vadd.f32 0.0, %v4585
    %4587 = vmatmul.f32.gmra.mxu0 %v4465
    %v4588 = vpop.f32.mrf.mxu0
    %v4589 = vadd.f32 0.0, %v4588
    %4590 = vmatmul.f32.gmra.mxu0 %v4466
    %v4591 = vpop.f32.mrf.mxu0
    %v4592 = vadd.f32 0.0, %v4591
    %4593 = vmatmul.f32.gmra.mxu0 %v4467
    %v4594 = vpop.f32.mrf.mxu0
    %v4595 = vadd.f32 0.0, %v4594
    %4596 = vdwg.mxu0
    %v4597 = vld [vmem:[%s2] sm:$0xff]
    %v4598 = vld [vmem:[%s2 + $0x8] sm:$0xff]
    %v4599 = vadd.f32 %v4502, %v4597
    %v4600 = vadd.f32 %v4505, %v4598
    %v4601 = vadd.f32 %v4508, %v4597
    %v4602 = vadd.f32 %v4511, %v4598
    %v4603 = vadd.f32 %v4514, %v4597
    %v4604 = vadd.f32 %v4517, %v4598
    %v4605 = vadd.f32 %v4520, %v4597
    %v4606 = vadd.f32 %v4523, %v4598
    %v4607 = vadd.f32 %v4526, %v4597
    %v4608 = vadd.f32 %v4529, %v4598
    %v4609 = vadd.f32 %v4532, %v4597
    %v4610 = vadd.f32 %v4535, %v4598
    %v4611 = vadd.f32 %v4538, %v4597
    %v4612 = vadd.f32 %v4541, %v4598
    %v4613 = vadd.f32 %v4544, %v4597
    %v4614 = vadd.f32 %v4547, %v4598
    %v4615 = vadd.f32 %v4550, %v4597
    %v4616 = vadd.f32 %v4553, %v4598
    %v4617 = vadd.f32 %v4556, %v4597
    %v4618 = vadd.f32 %v4559, %v4598
    %v4619 = vadd.f32 %v4562, %v4597
    %v4620 = vadd.f32 %v4565, %v4598
    %v4621 = vadd.f32 %v4568, %v4597
    %v4622 = vadd.f32 %v4571, %v4598
    %v4623 = vadd.f32 %v4574, %v4597
    %v4624 = vadd.f32 %v4577, %v4598
    %v4625 = vadd.f32 %v4580, %v4597
    %v4626 = vadd.f32 %v4583, %v4598
    %v4627 = vadd.f32 %v4586, %v4597
    %v4628 = vadd.f32 %v4589, %v4598
    %v4629 = vadd.f32 %v4592, %v4597
    %v4630 = vadd.f32 %v4595, %v4598
    %vm4631 = vcmask 7168
    %v4632 = vsel %vm4631, %v4599, -inf
    %v4633 = vsel %vm4631, %v4600, -inf
    %v4634 = vmax.f32 %v4632, %v4633
    %v4635 = vrot.slane %v4634, 4
    %v4636 = vmax.f32 %v4634, %v4635
    %v4637 = vrot.slane %v4636, 2
    %v4638 = vmax.f32 %v4636, %v4637
    %v4639 = vrot.slane %v4638, 1
    %v4640 = vmax.f32 %v4638, %v4639
    %v4641 = vsel %vm4631, %v4601, -inf
    %v4642 = vsel %vm4631, %v4602, -inf
    %v4643 = vmax.f32 %v4641, %v4642
    %v4644 = vrot.slane %v4643, 4
    %v4645 = vmax.f32 %v4643, %v4644
    %v4646 = vrot.slane %v4645, 2
    %v4647 = vmax.f32 %v4645, %v4646
    %v4648 = vrot.slane %v4647, 1
    %v4649 = vmax.f32 %v4647, %v4648
    %v4650 = vsel %vm4631, %v4603, -inf
    %v4651 = vsel %vm4631, %v4604, -inf
    %v4652 = vmax.f32 %v4650, %v4651
    %v4653 = vrot.slane %v4652, 4
    %v4654 = vmax.f32 %v4652, %v4653
    %v4655 = vrot.slane %v4654, 2
    %v4656 = vmax.f32 %v4654, %v4655
    %v4657 = vrot.slane %v4656, 1
    %v4658 = vmax.f32 %v4656, %v4657
    %v4659 = vsel %vm4631, %v4605, -inf
    %v4660 = vsel %vm4631, %v4606, -inf
    %v4661 = vmax.f32 %v4659, %v4660
    %v4662 = vrot.slane %v4661, 4
    %v4663 = vmax.f32 %v4661, %v4662
    %v4664 = vrot.slane %v4663, 2
    %v4665 = vmax.f32 %v4663, %v4664
    %v4666 = vrot.slane %v4665, 1
    %v4667 = vmax.f32 %v4665, %v4666
    %v4668 = vsel %vm4631, %v4607, -inf
    %v4669 = vsel %vm4631, %v4608, -inf
    %v4670 = vmax.f32 %v4668, %v4669
    %v4671 = vrot.slane %v4670, 4
    %v4672 = vmax.f32 %v4670, %v4671
    %v4673 = vrot.slane %v4672, 2
    %v4674 = vmax.f32 %v4672, %v4673
    %v4675 = vrot.slane %v4674, 1
    %v4676 = vmax.f32 %v4674, %v4675
    %v4677 = vsel %vm4631, %v4609, -inf
    %v4678 = vsel %vm4631, %v4610, -inf
    %v4679 = vmax.f32 %v4677, %v4678
    %v4680 = vrot.slane %v4679, 4
    %v4681 = vmax.f32 %v4679, %v4680
    %v4682 = vrot.slane %v4681, 2
    %v4683 = vmax.f32 %v4681, %v4682
    %v4684 = vrot.slane %v4683, 1
    %v4685 = vmax.f32 %v4683, %v4684
    %v4686 = vsel %vm4631, %v4611, -inf
    %v4687 = vsel %vm4631, %v4612, -inf
    %v4688 = vmax.f32 %v4686, %v4687
    %v4689 = vrot.slane %v4688, 4
    %v4690 = vmax.f32 %v4688, %v4689
    %v4691 = vrot.slane %v4690, 2
    %v4692 = vmax.f32 %v4690, %v4691
    %v4693 = vrot.slane %v4692, 1
    %v4694 = vmax.f32 %v4692, %v4693
    %v4695 = vsel %vm4631, %v4613, -inf
    %v4696 = vsel %vm4631, %v4614, -inf
    %v4697 = vmax.f32 %v4695, %v4696
    %v4698 = vrot.slane %v4697, 4
    %v4699 = vmax.f32 %v4697, %v4698
    %v4700 = vrot.slane %v4699, 2
    %v4701 = vmax.f32 %v4699, %v4700
    %v4702 = vrot.slane %v4701, 1
    %v4703 = vmax.f32 %v4701, %v4702
    %v4704 = vsel %vm4631, %v4615, -inf
    %v4705 = vsel %vm4631, %v4616, -inf
    %v4706 = vmax.f32 %v4704, %v4705
    %v4707 = vrot.slane %v4706, 4
    %v4708 = vmax.f32 %v4706, %v4707
    %v4709 = vrot.slane %v4708, 2
    %v4710 = vmax.f32 %v4708, %v4709
    %v4711 = vrot.slane %v4710, 1
    %v4712 = vmax.f32 %v4710, %v4711
    %v4713 = vsel %vm4631, %v4617, -inf
    %v4714 = vsel %vm4631, %v4618, -inf
    %v4715 = vmax.f32 %v4713, %v4714
    %v4716 = vrot.slane %v4715, 4
    %v4717 = vmax.f32 %v4715, %v4716
    %v4718 = vrot.slane %v4717, 2
    %v4719 = vmax.f32 %v4717, %v4718
    %v4720 = vrot.slane %v4719, 1
    %v4721 = vmax.f32 %v4719, %v4720
    %v4722 = vsel %vm4631, %v4619, -inf
    %v4723 = vsel %vm4631, %v4620, -inf
    %v4724 = vmax.f32 %v4722, %v4723
    %v4725 = vrot.slane %v4724, 4
    %v4726 = vmax.f32 %v4724, %v4725
    %v4727 = vrot.slane %v4726, 2
    %v4728 = vmax.f32 %v4726, %v4727
    %v4729 = vrot.slane %v4728, 1
    %v4730 = vmax.f32 %v4728, %v4729
    %v4731 = vsel %vm4631, %v4621, -inf
    %v4732 = vsel %vm4631, %v4622, -inf
    %v4733 = vmax.f32 %v4731, %v4732
    %v4734 = vrot.slane %v4733, 4
    %v4735 = vmax.f32 %v4733, %v4734
    %v4736 = vrot.slane %v4735, 2
    %v4737 = vmax.f32 %v4735, %v4736
    %v4738 = vrot.slane %v4737, 1
    %v4739 = vmax.f32 %v4737, %v4738
    %v4740 = vsel %vm4631, %v4623, -inf
    %v4741 = vsel %vm4631, %v4624, -inf
    %v4742 = vmax.f32 %v4740, %v4741
    %v4743 = vrot.slane %v4742, 4
    %v4744 = vmax.f32 %v4742, %v4743
    %v4745 = vrot.slane %v4744, 2
    %v4746 = vmax.f32 %v4744, %v4745
    %v4747 = vrot.slane %v4746, 1
    %v4748 = vmax.f32 %v4746, %v4747
    %v4749 = vsel %vm4631, %v4625, -inf
    %v4750 = vsel %vm4631, %v4626, -inf
    %v4751 = vmax.f32 %v4749, %v4750
    %v4752 = vrot.slane %v4751, 4
    %v4753 = vmax.f32 %v4751, %v4752
    %v4754 = vrot.slane %v4753, 2
    %v4755 = vmax.f32 %v4753, %v4754
    %v4756 = vrot.slane %v4755, 1
    %v4757 = vmax.f32 %v4755, %v4756
    %v4758 = vsel %vm4631, %v4627, -inf
    %v4759 = vsel %vm4631, %v4628, -inf
    %v4760 = vmax.f32 %v4758, %v4759
    %v4761 = vrot.slane %v4760, 4
    %v4762 = vmax.f32 %v4760, %v4761
    %v4763 = vrot.slane %v4762, 2
    %v4764 = vmax.f32 %v4762, %v4763
    %v4765 = vrot.slane %v4764, 1
    %v4766 = vmax.f32 %v4764, %v4765
    %v4767 = vsel %vm4631, %v4629, -inf
    %v4768 = vsel %vm4631, %v4630, -inf
    %v4769 = vmax.f32 %v4767, %v4768
    %v4770 = vrot.slane %v4769, 4
    %v4771 = vmax.f32 %v4769, %v4770
    %v4772 = vrot.slane %v4771, 2
    %v4773 = vmax.f32 %v4771, %v4772
    %v4774 = vrot.slane %v4773, 1
    %v4775 = vmax.f32 %v4773, %v4774
    %v4776 = vsub.f32 %v4599, %v4640
    %v4777 = vsub.f32 %v4600, %v4640
    %v4778 = vsub.f32 %v4601, %v4649
    %v4779 = vsub.f32 %v4602, %v4649
    %v4780 = vsub.f32 %v4603, %v4658
    %v4781 = vsub.f32 %v4604, %v4658
    %v4782 = vsub.f32 %v4605, %v4667
    %v4783 = vsub.f32 %v4606, %v4667
    %v4784 = vsub.f32 %v4607, %v4676
    %v4785 = vsub.f32 %v4608, %v4676
    %v4786 = vsub.f32 %v4609, %v4685
    %v4787 = vsub.f32 %v4610, %v4685
    %v4788 = vsub.f32 %v4611, %v4694
    %v4789 = vsub.f32 %v4612, %v4694
    %v4790 = vsub.f32 %v4613, %v4703
    %v4791 = vsub.f32 %v4614, %v4703
    %v4792 = vsub.f32 %v4615, %v4712
    %v4793 = vsub.f32 %v4616, %v4712
    %v4794 = vsub.f32 %v4617, %v4721
    %v4795 = vsub.f32 %v4618, %v4721
    %v4796 = vsub.f32 %v4619, %v4730
    %v4797 = vsub.f32 %v4620, %v4730
    %v4798 = vsub.f32 %v4621, %v4739
    %v4799 = vsub.f32 %v4622, %v4739
    %v4800 = vsub.f32 %v4623, %v4748
    %v4801 = vsub.f32 %v4624, %v4748
    %v4802 = vsub.f32 %v4625, %v4757
    %v4803 = vsub.f32 %v4626, %v4757
    %v4804 = vsub.f32 %v4627, %v4766
    %v4805 = vsub.f32 %v4628, %v4766
    %v4806 = vsub.f32 %v4629, %v4775
    %v4807 = vsub.f32 %v4630, %v4775
    %v4808 = vmul.f32 %v4776, 1.442695
    %v4809 = vpow.pop %v4808
    %v4810 = vmul.f32 %v4777, 1.442695
    %v4811 = vpow.pop %v4810
    %v4812 = vmul.f32 %v4778, 1.442695
    %v4813 = vpow.pop %v4812
    %v4814 = vmul.f32 %v4779, 1.442695
    %v4815 = vpow.pop %v4814
    %v4816 = vmul.f32 %v4780, 1.442695
    %v4817 = vpow.pop %v4816
    %v4818 = vmul.f32 %v4781, 1.442695
    %v4819 = vpow.pop %v4818
    %v4820 = vmul.f32 %v4782, 1.442695
    %v4821 = vpow.pop %v4820
    %v4822 = vmul.f32 %v4783, 1.442695
    %v4823 = vpow.pop %v4822
    %v4824 = vmul.f32 %v4784, 1.442695
    %v4825 = vpow.pop %v4824
    %v4826 = vmul.f32 %v4785, 1.442695
    %v4827 = vpow.pop %v4826
    %v4828 = vmul.f32 %v4786, 1.442695
    %v4829 = vpow.pop %v4828
    %v4830 = vmul.f32 %v4787, 1.442695
    %v4831 = vpow.pop %v4830
    %v4832 = vmul.f32 %v4788, 1.442695
    %v4833 = vpow.pop %v4832
    %v4834 = vmul.f32 %v4789, 1.442695
    %v4835 = vpow.pop %v4834
    %v4836 = vmul.f32 %v4790, 1.442695
    %v4837 = vpow.pop %v4836
    %v4838 = vmul.f32 %v4791, 1.442695
    %v4839 = vpow.pop %v4838
    %v4840 = vmul.f32 %v4792, 1.442695
    %v4841 = vpow.pop %v4840
    %v4842 = vmul.f32 %v4793, 1.442695
    %v4843 = vpow.pop %v4842
    %v4844 = vmul.f32 %v4794, 1.442695
    %v4845 = vpow.pop %v4844
    %v4846 = vmul.f32 %v4795, 1.442695
    %v4847 = vpow.pop %v4846
    %v4848 = vmul.f32 %v4796, 1.442695
    %v4849 = vpow.pop %v4848
    %v4850 = vmul.f32 %v4797, 1.442695
    %v4851 = vpow.pop %v4850
    %v4852 = vmul.f32 %v4798, 1.442695
    %v4853 = vpow.pop %v4852
    %v4854 = vmul.f32 %v4799, 1.442695
    %v4855 = vpow.pop %v4854
    %v4856 = vmul.f32 %v4800, 1.442695
    %v4857 = vpow.pop %v4856
    %v4858 = vmul.f32 %v4801, 1.442695
    %v4859 = vpow.pop %v4858
    %v4860 = vmul.f32 %v4802, 1.442695
    %v4861 = vpow.pop %v4860
    %v4862 = vmul.f32 %v4803, 1.442695
    %v4863 = vpow.pop %v4862
    %v4864 = vmul.f32 %v4804, 1.442695
    %v4865 = vpow.pop %v4864
    %v4866 = vmul.f32 %v4805, 1.442695
    %v4867 = vpow.pop %v4866
    %v4868 = vmul.f32 %v4806, 1.442695
    %v4869 = vpow.pop %v4868
    %v4870 = vmul.f32 %v4807, 1.442695
    %v4871 = vpow.pop %v4870
    %v4872 = vsel %vm4631, %v4809, 0.0
    %v4873 = vsel %vm4631, %v4811, 0.0
    %v4874 = vadd.f32 %v4872, %v4873
    %v4875 = vrot.slane %v4874, 4
    %v4876 = vadd.f32 %v4874, %v4875
    %v4877 = vrot.slane %v4876, 2
    %v4878 = vadd.f32 %v4876, %v4877
    %v4879 = vrot.slane %v4878, 1
    %v4880 = vadd.f32 %v4878, %v4879
    %v4881 = vsel %vm4631, %v4813, 0.0
    %v4882 = vsel %vm4631, %v4815, 0.0
    %v4883 = vadd.f32 %v4881, %v4882
    %v4884 = vrot.slane %v4883, 4
    %v4885 = vadd.f32 %v4883, %v4884
    %v4886 = vrot.slane %v4885, 2
    %v4887 = vadd.f32 %v4885, %v4886
    %v4888 = vrot.slane %v4887, 1
    %v4889 = vadd.f32 %v4887, %v4888
    %v4890 = vsel %vm4631, %v4817, 0.0
    %v4891 = vsel %vm4631, %v4819, 0.0
    %v4892 = vadd.f32 %v4890, %v4891
    %v4893 = vrot.slane %v4892, 4
    %v4894 = vadd.f32 %v4892, %v4893
    %v4895 = vrot.slane %v4894, 2
    %v4896 = vadd.f32 %v4894, %v4895
    %v4897 = vrot.slane %v4896, 1
    %v4898 = vadd.f32 %v4896, %v4897
    %v4899 = vsel %vm4631, %v4821, 0.0
    %v4900 = vsel %vm4631, %v4823, 0.0
    %v4901 = vadd.f32 %v4899, %v4900
    %v4902 = vrot.slane %v4901, 4
    %v4903 = vadd.f32 %v4901, %v4902
    %v4904 = vrot.slane %v4903, 2
    %v4905 = vadd.f32 %v4903, %v4904
    %v4906 = vrot.slane %v4905, 1
    %v4907 = vadd.f32 %v4905, %v4906
    %v4908 = vsel %vm4631, %v4825, 0.0
    %v4909 = vsel %vm4631, %v4827, 0.0
    %v4910 = vadd.f32 %v4908, %v4909
    %v4911 = vrot.slane %v4910, 4
    %v4912 = vadd.f32 %v4910, %v4911
    %v4913 = vrot.slane %v4912, 2
    %v4914 = vadd.f32 %v4912, %v4913
    %v4915 = vrot.slane %v4914, 1
    %v4916 = vadd.f32 %v4914, %v4915
    %v4917 = vsel %vm4631, %v4829, 0.0
    %v4918 = vsel %vm4631, %v4831, 0.0
    %v4919 = vadd.f32 %v4917, %v4918
    %v4920 = vrot.slane %v4919, 4
    %v4921 = vadd.f32 %v4919, %v4920
    %v4922 = vrot.slane %v4921, 2
    %v4923 = vadd.f32 %v4921, %v4922
    %v4924 = vrot.slane %v4923, 1
    %v4925 = vadd.f32 %v4923, %v4924
    %v4926 = vsel %vm4631, %v4833, 0.0
    %v4927 = vsel %vm4631, %v4835, 0.0
    %v4928 = vadd.f32 %v4926, %v4927
    %v4929 = vrot.slane %v4928, 4
    %v4930 = vadd.f32 %v4928, %v4929
    %v4931 = vrot.slane %v4930, 2
    %v4932 = vadd.f32 %v4930, %v4931
    %v4933 = vrot.slane %v4932, 1
    %v4934 = vadd.f32 %v4932, %v4933
    %v4935 = vsel %vm4631, %v4837, 0.0
    %v4936 = vsel %vm4631, %v4839, 0.0
    %v4937 = vadd.f32 %v4935, %v4936
    %v4938 = vrot.slane %v4937, 4
    %v4939 = vadd.f32 %v4937, %v4938
    %v4940 = vrot.slane %v4939, 2
    %v4941 = vadd.f32 %v4939, %v4940
    %v4942 = vrot.slane %v4941, 1
    %v4943 = vadd.f32 %v4941, %v4942
    %v4944 = vsel %vm4631, %v4841, 0.0
    %v4945 = vsel %vm4631, %v4843, 0.0
    %v4946 = vadd.f32 %v4944, %v4945
    %v4947 = vrot.slane %v4946, 4
    %v4948 = vadd.f32 %v4946, %v4947
    %v4949 = vrot.slane %v4948, 2
    %v4950 = vadd.f32 %v4948, %v4949
    %v4951 = vrot.slane %v4950, 1
    %v4952 = vadd.f32 %v4950, %v4951
    %v4953 = vsel %vm4631, %v4845, 0.0
    %v4954 = vsel %vm4631, %v4847, 0.0
    %v4955 = vadd.f32 %v4953, %v4954
    %v4956 = vrot.slane %v4955, 4
    %v4957 = vadd.f32 %v4955, %v4956
    %v4958 = vrot.slane %v4957, 2
    %v4959 = vadd.f32 %v4957, %v4958
    %v4960 = vrot.slane %v4959, 1
    %v4961 = vadd.f32 %v4959, %v4960
    %v4962 = vsel %vm4631, %v4849, 0.0
    %v4963 = vsel %vm4631, %v4851, 0.0
    %v4964 = vadd.f32 %v4962, %v4963
    %v4965 = vrot.slane %v4964, 4
    %v4966 = vadd.f32 %v4964, %v4965
    %v4967 = vrot.slane %v4966, 2
    %v4968 = vadd.f32 %v4966, %v4967
    %v4969 = vrot.slane %v4968, 1
    %v4970 = vadd.f32 %v4968, %v4969
    %v4971 = vsel %vm4631, %v4853, 0.0
    %v4972 = vsel %vm4631, %v4855, 0.0
    %v4973 = vadd.f32 %v4971, %v4972
    %v4974 = vrot.slane %v4973, 4
    %v4975 = vadd.f32 %v4973, %v4974
    %v4976 = vrot.slane %v4975, 2
    %v4977 = vadd.f32 %v4975, %v4976
    %v4978 = vrot.slane %v4977, 1
    %v4979 = vadd.f32 %v4977, %v4978
    %v4980 = vsel %vm4631, %v4857, 0.0
    %v4981 = vsel %vm4631, %v4859, 0.0
    %v4982 = vadd.f32 %v4980, %v4981
    %v4983 = vrot.slane %v4982, 4
    %v4984 = vadd.f32 %v4982, %v4983
    %v4985 = vrot.slane %v4984, 2
    %v4986 = vadd.f32 %v4984, %v4985
    %v4987 = vrot.slane %v4986, 1
    %v4988 = vadd.f32 %v4986, %v4987
    %v4989 = vsel %vm4631, %v4861, 0.0
    %v4990 = vsel %vm4631, %v4863, 0.0
    %v4991 = vadd.f32 %v4989, %v4990
    %v4992 = vrot.slane %v4991, 4
    %v4993 = vadd.f32 %v4991, %v4992
    %v4994 = vrot.slane %v4993, 2
    %v4995 = vadd.f32 %v4993, %v4994
    %v4996 = vrot.slane %v4995, 1
    %v4997 = vadd.f32 %v4995, %v4996
    %v4998 = vsel %vm4631, %v4865, 0.0
    %v4999 = vsel %vm4631, %v4867, 0.0
    %v5000 = vadd.f32 %v4998, %v4999
    %v5001 = vrot.slane %v5000, 4
    %v5002 = vadd.f32 %v5000, %v5001
    %v5003 = vrot.slane %v5002, 2
    %v5004 = vadd.f32 %v5002, %v5003
    %v5005 = vrot.slane %v5004, 1
    %v5006 = vadd.f32 %v5004, %v5005
    %v5007 = vsel %vm4631, %v4869, 0.0
    %v5008 = vsel %vm4631, %v4871, 0.0
    %v5009 = vadd.f32 %v5007, %v5008
    %v5010 = vrot.slane %v5009, 4
    %v5011 = vadd.f32 %v5009, %v5010
    %v5012 = vrot.slane %v5011, 2
    %v5013 = vadd.f32 %v5011, %v5012
    %v5014 = vrot.slane %v5013, 1
    %v5015 = vadd.f32 %v5013, %v5014
    %v5016 = vrcp.pop %v4880
    %v5017 = vrcp.pop %v4889
    %v5018 = vrcp.pop %v4898
    %v5019 = vrcp.pop %v4907
    %v5020 = vrcp.pop %v4916
    %v5021 = vrcp.pop %v4925
    %v5022 = vrcp.pop %v4934
    %v5023 = vrcp.pop %v4943
    %v5024 = vrcp.pop %v4952
    %v5025 = vrcp.pop %v4961
    %v5026 = vrcp.pop %v4970
    %v5027 = vrcp.pop %v4979
    %v5028 = vrcp.pop %v4988
    %v5029 = vrcp.pop %v4997
    %v5030 = vrcp.pop %v5006
    %v5031 = vrcp.pop %v5015
    %v5032 = vmul.f32 %v4809, %v5016
    %v5033 = vmul.f32 %v4811, %v5016
    %v5034 = vmul.f32 %v4813, %v5017
    %v5035 = vmul.f32 %v4815, %v5017
    %v5036 = vmul.f32 %v4817, %v5018
    %v5037 = vmul.f32 %v4819, %v5018
    %v5038 = vmul.f32 %v4821, %v5019
    %v5039 = vmul.f32 %v4823, %v5019
    %v5040 = vmul.f32 %v4825, %v5020
    %v5041 = vmul.f32 %v4827, %v5020
    %v5042 = vmul.f32 %v4829, %v5021
    %v5043 = vmul.f32 %v4831, %v5021
    %v5044 = vmul.f32 %v4833, %v5022
    %v5045 = vmul.f32 %v4835, %v5022
    %v5046 = vmul.f32 %v4837, %v5023
    %v5047 = vmul.f32 %v4839, %v5023
    %v5048 = vmul.f32 %v4841, %v5024
    %v5049 = vmul.f32 %v4843, %v5024
    %v5050 = vmul.f32 %v4845, %v5025
    %v5051 = vmul.f32 %v4847, %v5025
    %v5052 = vmul.f32 %v4849, %v5026
    %v5053 = vmul.f32 %v4851, %v5026
    %v5054 = vmul.f32 %v4853, %v5027
    %v5055 = vmul.f32 %v4855, %v5027
    %v5056 = vmul.f32 %v4857, %v5028
    %v5057 = vmul.f32 %v4859, %v5028
    %v5058 = vmul.f32 %v4861, %v5029
    %v5059 = vmul.f32 %v4863, %v5029
    %v5060 = vmul.f32 %v4865, %v5030
    %v5061 = vmul.f32 %v4867, %v5030
    %v5062 = vmul.f32 %v4869, %v5031
    %v5063 = vmul.f32 %v4871, %v5031
    %5065 = vset.pattern.permute.xlu0 0
    %5066 = vperm.xlu0 %5065, %v5032
    %v5067 = vpop.permute.xlu0 %5066
    %5070 = vset.pattern.permute.xlu0 0
    %5071 = vperm.xlu0 %5070, %v5033
    %v5072 = vpop.permute.xlu0 %5071
    %5075 = vset.pattern.permute.xlu0 0
    %5076 = vperm.xlu0 %5075, %v5034
    %v5077 = vpop.permute.xlu0 %5076
    %5080 = vset.pattern.permute.xlu0 0
    %5081 = vperm.xlu0 %5080, %v5035
    %v5082 = vpop.permute.xlu0 %5081
    %5085 = vset.pattern.permute.xlu0 0
    %5086 = vperm.xlu0 %5085, %v5036
    %v5087 = vpop.permute.xlu0 %5086
    %5090 = vset.pattern.permute.xlu0 0
    %5091 = vperm.xlu0 %5090, %v5037
    %v5092 = vpop.permute.xlu0 %5091
    %5095 = vset.pattern.permute.xlu0 0
    %5096 = vperm.xlu0 %5095, %v5038
    %v5097 = vpop.permute.xlu0 %5096
    %5100 = vset.pattern.permute.xlu0 0
    %5101 = vperm.xlu0 %5100, %v5039
    %v5102 = vpop.permute.xlu0 %5101
    %5105 = vset.pattern.permute.xlu0 0
    %5106 = vperm.xlu0 %5105, %v5040
    %v5107 = vpop.permute.xlu0 %5106
    %5110 = vset.pattern.permute.xlu0 0
    %5111 = vperm.xlu0 %5110, %v5041
    %v5112 = vpop.permute.xlu0 %5111
    %5115 = vset.pattern.permute.xlu0 0
    %5116 = vperm.xlu0 %5115, %v5042
    %v5117 = vpop.permute.xlu0 %5116
    %5120 = vset.pattern.permute.xlu0 0
    %5121 = vperm.xlu0 %5120, %v5043
    %v5122 = vpop.permute.xlu0 %5121
    %5125 = vset.pattern.permute.xlu0 0
    %5126 = vperm.xlu0 %5125, %v5044
    %v5127 = vpop.permute.xlu0 %5126
    %5130 = vset.pattern.permute.xlu0 0
    %5131 = vperm.xlu0 %5130, %v5045
    %v5132 = vpop.permute.xlu0 %5131
    %5135 = vset.pattern.permute.xlu0 0
    %5136 = vperm.xlu0 %5135, %v5046
    %v5137 = vpop.permute.xlu0 %5136
    %5140 = vset.pattern.permute.xlu0 0
    %5141 = vperm.xlu0 %5140, %v5047
    %v5142 = vpop.permute.xlu0 %5141
    %5145 = vset.pattern.permute.xlu0 0
    %5146 = vperm.xlu0 %5145, %v5048
    %v5147 = vpop.permute.xlu0 %5146
    %5150 = vset.pattern.permute.xlu0 0
    %5151 = vperm.xlu0 %5150, %v5049
    %v5152 = vpop.permute.xlu0 %5151
    %5155 = vset.pattern.permute.xlu0 0
    %5156 = vperm.xlu0 %5155, %v5050
    %v5157 = vpop.permute.xlu0 %5156
    %5160 = vset.pattern.permute.xlu0 0
    %5161 = vperm.xlu0 %5160, %v5051
    %v5162 = vpop.permute.xlu0 %5161
    %5165 = vset.pattern.permute.xlu0 0
    %5166 = vperm.xlu0 %5165, %v5052
    %v5167 = vpop.permute.xlu0 %5166
    %5170 = vset.pattern.permute.xlu0 0
    %5171 = vperm.xlu0 %5170, %v5053
    %v5172 = vpop.permute.xlu0 %5171
    %5175 = vset.pattern.permute.xlu0 0
    %5176 = vperm.xlu0 %5175, %v5054
    %v5177 = vpop.permute.xlu0 %5176
    %5180 = vset.pattern.permute.xlu0 0
    %5181 = vperm.xlu0 %5180, %v5055
    %v5182 = vpop.permute.xlu0 %5181
    %5185 = vset.pattern.permute.xlu0 0
    %5186 = vperm.xlu0 %5185, %v5056
    %v5187 = vpop.permute.xlu0 %5186
    %5190 = vset.pattern.permute.xlu0 0
    %5191 = vperm.xlu0 %5190, %v5057
    %v5192 = vpop.permute.xlu0 %5191
    %5195 = vset.pattern.permute.xlu0 0
    %5196 = vperm.xlu0 %5195, %v5058
    %v5197 = vpop.permute.xlu0 %5196
    %5200 = vset.pattern.permute.xlu0 0
    %5201 = vperm.xlu0 %5200, %v5059
    %v5202 = vpop.permute.xlu0 %5201
    %5205 = vset.pattern.permute.xlu0 0
    %5206 = vperm.xlu0 %5205, %v5060
    %v5207 = vpop.permute.xlu0 %5206
    %5210 = vset.pattern.permute.xlu0 0
    %5211 = vperm.xlu0 %5210, %v5061
    %v5212 = vpop.permute.xlu0 %5211
    %5215 = vset.pattern.permute.xlu0 0
    %5216 = vperm.xlu0 %5215, %v5062
    %v5217 = vpop.permute.xlu0 %5216
    %5220 = vset.pattern.permute.xlu0 0
    %5221 = vperm.xlu0 %5220, %v5063
    %v5222 = vpop.permute.xlu0 %5221
    %v5224 = vmul.f32 %v5067, %v4271
    %v5225 = vmul.f32 %v5072, %v4272
    %v5226 = vmul.f32 %v5077, %v4273
    %v5227 = vmul.f32 %v5082, %v4274
    %v5228 = vmul.f32 %v5087, %v4275
    %v5229 = vmul.f32 %v5092, %v4276
    %v5230 = vmul.f32 %v5097, %v4277
    %v5231 = vmul.f32 %v5102, %v4278
    %v5232 = vmul.f32 %v5107, %v4279
    %v5233 = vmul.f32 %v5112, %v4280
    %v5234 = vmul.f32 %v5117, %v4281
    %v5235 = vmul.f32 %v5122, %v4282
    %v5236 = vmul.f32 %v5127, %v4283
    %v5237 = vmul.f32 %v5132, %v4284
    %v5238 = vmul.f32 %v5137, %v4285
    %v5239 = vmul.f32 %v5142, %v4286
    %v5240 = vmul.f32 %v5147, %v4287
    %v5241 = vmul.f32 %v5152, %v4288
    %v5242 = vmul.f32 %v5157, %v4289
    %v5243 = vmul.f32 %v5162, %v4290
    %v5244 = vmul.f32 %v5167, %v4291
    %v5245 = vmul.f32 %v5172, %v4292
    %v5246 = vmul.f32 %v5177, %v4293
    %v5247 = vmul.f32 %v5182, %v4294
    %v5248 = vmul.f32 %v5187, %v4295
    %v5249 = vmul.f32 %v5192, %v4296
    %v5250 = vmul.f32 %v5197, %v4297
    %v5251 = vmul.f32 %v5202, %v4298
    %v5252 = vmul.f32 %v5207, %v4299
    %v5253 = vmul.f32 %v5212, %v4300
    %v5254 = vmul.f32 %v5217, %v4301
    %v5255 = vmul.f32 %v5222, %v4302
    %v5256 = vadd.f32 %v5224, %v5225
    %v5257 = vrot.slane %v5256, 4
    %v5258 = vadd.f32 %v5256, %v5257
    %v5259 = vrot.slane %v5258, 2
    %v5260 = vadd.f32 %v5258, %v5259
    %v5261 = vrot.slane %v5260, 1
    %v5262 = vadd.f32 %v5260, %v5261
    %v5263 = vadd.f32 %v5226, %v5227
    %v5264 = vrot.slane %v5263, 4
    %v5265 = vadd.f32 %v5263, %v5264
    %v5266 = vrot.slane %v5265, 2
    %v5267 = vadd.f32 %v5265, %v5266
    %v5268 = vrot.slane %v5267, 1
    %v5269 = vadd.f32 %v5267, %v5268
    %v5270 = vadd.f32 %v5228, %v5229
    %v5271 = vrot.slane %v5270, 4
    %v5272 = vadd.f32 %v5270, %v5271
    %v5273 = vrot.slane %v5272, 2
    %v5274 = vadd.f32 %v5272, %v5273
    %v5275 = vrot.slane %v5274, 1
    %v5276 = vadd.f32 %v5274, %v5275
    %v5277 = vadd.f32 %v5230, %v5231
    %v5278 = vrot.slane %v5277, 4
    %v5279 = vadd.f32 %v5277, %v5278
    %v5280 = vrot.slane %v5279, 2
    %v5281 = vadd.f32 %v5279, %v5280
    %v5282 = vrot.slane %v5281, 1
    %v5283 = vadd.f32 %v5281, %v5282
    %v5284 = vadd.f32 %v5232, %v5233
    %v5285 = vrot.slane %v5284, 4
    %v5286 = vadd.f32 %v5284, %v5285
    %v5287 = vrot.slane %v5286, 2
    %v5288 = vadd.f32 %v5286, %v5287
    %v5289 = vrot.slane %v5288, 1
    %v5290 = vadd.f32 %v5288, %v5289
    %v5291 = vadd.f32 %v5234, %v5235
    %v5292 = vrot.slane %v5291, 4
    %v5293 = vadd.f32 %v5291, %v5292
    %v5294 = vrot.slane %v5293, 2
    %v5295 = vadd.f32 %v5293, %v5294
    %v5296 = vrot.slane %v5295, 1
    %v5297 = vadd.f32 %v5295, %v5296
    %v5298 = vadd.f32 %v5236, %v5237
    %v5299 = vrot.slane %v5298, 4
    %v5300 = vadd.f32 %v5298, %v5299
    %v5301 = vrot.slane %v5300, 2
    %v5302 = vadd.f32 %v5300, %v5301
    %v5303 = vrot.slane %v5302, 1
    %v5304 = vadd.f32 %v5302, %v5303
    %v5305 = vadd.f32 %v5238, %v5239
    %v5306 = vrot.slane %v5305, 4
    %v5307 = vadd.f32 %v5305, %v5306
    %v5308 = vrot.slane %v5307, 2
    %v5309 = vadd.f32 %v5307, %v5308
    %v5310 = vrot.slane %v5309, 1
    %v5311 = vadd.f32 %v5309, %v5310
    %v5312 = vadd.f32 %v5240, %v5241
    %v5313 = vrot.slane %v5312, 4
    %v5314 = vadd.f32 %v5312, %v5313
    %v5315 = vrot.slane %v5314, 2
    %v5316 = vadd.f32 %v5314, %v5315
    %v5317 = vrot.slane %v5316, 1
    %v5318 = vadd.f32 %v5316, %v5317
    %v5319 = vadd.f32 %v5242, %v5243
    %v5320 = vrot.slane %v5319, 4
    %v5321 = vadd.f32 %v5319, %v5320
    %v5322 = vrot.slane %v5321, 2
    %v5323 = vadd.f32 %v5321, %v5322
    %v5324 = vrot.slane %v5323, 1
    %v5325 = vadd.f32 %v5323, %v5324
    %v5326 = vadd.f32 %v5244, %v5245
    %v5327 = vrot.slane %v5326, 4
    %v5328 = vadd.f32 %v5326, %v5327
    %v5329 = vrot.slane %v5328, 2
    %v5330 = vadd.f32 %v5328, %v5329
    %v5331 = vrot.slane %v5330, 1
    %v5332 = vadd.f32 %v5330, %v5331
    %v5333 = vadd.f32 %v5246, %v5247
    %v5334 = vrot.slane %v5333, 4
    %v5335 = vadd.f32 %v5333, %v5334
    %v5336 = vrot.slane %v5335, 2
    %v5337 = vadd.f32 %v5335, %v5336
    %v5338 = vrot.slane %v5337, 1
    %v5339 = vadd.f32 %v5337, %v5338
    %v5340 = vadd.f32 %v5248, %v5249
    %v5341 = vrot.slane %v5340, 4
    %v5342 = vadd.f32 %v5340, %v5341
    %v5343 = vrot.slane %v5342, 2
    %v5344 = vadd.f32 %v5342, %v5343
    %v5345 = vrot.slane %v5344, 1
    %v5346 = vadd.f32 %v5344, %v5345
    %v5347 = vadd.f32 %v5250, %v5251
    %v5348 = vrot.slane %v5347, 4
    %v5349 = vadd.f32 %v5347, %v5348
    %v5350 = vrot.slane %v5349, 2
    %v5351 = vadd.f32 %v5349, %v5350
    %v5352 = vrot.slane %v5351, 1
    %v5353 = vadd.f32 %v5351, %v5352
    %v5354 = vadd.f32 %v5252, %v5253
    %v5355 = vrot.slane %v5354, 4
    %v5356 = vadd.f32 %v5354, %v5355
    %v5357 = vrot.slane %v5356, 2
    %v5358 = vadd.f32 %v5356, %v5357
    %v5359 = vrot.slane %v5358, 1
    %v5360 = vadd.f32 %v5358, %v5359
    %v5361 = vadd.f32 %v5254, %v5255
    %v5362 = vrot.slane %v5361, 4
    %v5363 = vadd.f32 %v5361, %v5362
    %v5364 = vrot.slane %v5363, 2
    %v5365 = vadd.f32 %v5363, %v5364
    %v5366 = vrot.slane %v5365, 1
    %v5367 = vadd.f32 %v5365, %v5366
    %vm5384 = vcmask 1041409
    %v5385 = vsel %vm5384, %v5269, %v5262
    %vm5386 = vcmask 1042434
    %v5387 = vsel %vm5386, %v5276, %v5385
    %vm5388 = vcmask 1043459
    %v5389 = vsel %vm5388, %v5283, %v5387
    %vm5390 = vcmask 1044484
    %v5391 = vsel %vm5390, %v5290, %v5389
    %vm5392 = vcmask 1045509
    %v5393 = vsel %vm5392, %v5297, %v5391
    %vm5394 = vcmask 1046534
    %v5395 = vsel %vm5394, %v5304, %v5393
    %vm5396 = vcmask 1047559
    %v5397 = vsel %vm5396, %v5311, %v5395
    %v5398 = vsel %vm5384, %v5325, %v5318
    %v5399 = vsel %vm5386, %v5332, %v5398
    %v5400 = vsel %vm5388, %v5339, %v5399
    %v5401 = vsel %vm5390, %v5346, %v5400
    %v5402 = vsel %vm5392, %v5353, %v5401
    %v5403 = vsel %vm5394, %v5360, %v5402
    %v5404 = vsel %vm5396, %v5367, %v5403
    %5407 = vst [vmem:[#allocation10] sm:$0xff] %v5397
    %5408 = vst [vmem:[#allocation10 + $0x8] sm:$0xff] %v5404
    // Predicated region
    $region58: #{tpu_custom_call.1} parent=1 // pred_check
      _
    $region59: #{tpu_custom_call.1} parent=1 // pred_check_branch
      %5410 = sbr.rel (0) target = $region61
    $region60: #{tpu_custom_call.1} parent=1 // pred_region
      %5412 = vsyncadd [#allocation4], 0
      %s5413 = sshll.u32 [#allocation10], 4
      %s5414 = int_to_ptr.vmem [resolvable:$true] %s5413
      %s5415 = sshll.u32 %s10, 4
      %s5416 = int_to_ptr.hbm [resolvable:$true] %s5415
      %5421 = dma.vmem_to_hbm [thread:$0]  %s5414, 256, %s5416, [#allocation4], 128, 128, 8
    $region61: #{tpu_custom_call.1} parent=1 // pred_fallthru
      _
    // Predicated region
    $region62: #{tpu_custom_call.1} parent=1 // pred_check
      _
    $region63: #{tpu_custom_call.1} parent=1 // pred_check_branch
      %5423 = sbr.rel (0) target = $region65
    $region64: #{tpu_custom_call.1} parent=1 // pred_region
      %5425 = dma.done [#allocation4], 256
    $region65: #{tpu_custom_call.1} parent=1 // pred_fallthru
      _
    %5426 = vsyncpa [#allocation3], 1
    %5427 = vsyncpa [#allocation6], 1
    %5428 = vsyncpa [#allocation9], 1
    %5429 = vsyncpa [#allocation4], 1

</llo_original>
